<compile_context>
chip_gen: v7x
topology: tpu7x:2x2x1
jax: 0.10.0
libtpu: 0.0.40
codegen_flags: <defaults>
</compile_context>

<pallas_src>
import math
from functools import partial

import jax
import jax.numpy as jnp
from jax.experimental import pallas as pl
from jax.experimental.pallas import tpu as pltpu

_LANE = 512        # lane axis of each block (multiple of 128)
_TILE_ROWS = 512   # sublane rows per block (multiple of 8)
_N_SPLIT = 2       # parallel grid axis: 2 TensorCores on v7x, serial elsewhere


def _masked_l1_kernel(x_ref, y_ref, m_ref, abs_out_ref, msk_out_ref,
                      acc_ref, macc_ref):
    """Accumulate sum(|x*m - y*m|) and sum(m) over the reduction grid axis."""
    k = pl.program_id(1)

    @pl.when(k == 0)
    def _init():
        acc_ref[...] = jnp.zeros_like(acc_ref)
        macc_ref[...] = jnp.zeros_like(macc_ref)

    # Upcast after the (possibly low-precision) DMA; accumulate in f32.
    m = m_ref[...].astype(jnp.float32)
    xm = x_ref[...].astype(jnp.float32) * m
    ym = y_ref[...].astype(jnp.float32) * m
    acc_ref[...] += jnp.abs(xm - ym)
    macc_ref[...] += m

    @pl.when(k == pl.num_programs(1) - 1)
    def _finalize():
        # One cross-lane/sublane reduction in the epilogue only.
        s = jnp.sum(acc_ref[...], axis=1, keepdims=True)   # (TILE_ROWS, 1)
        s = jnp.sum(s, axis=0, keepdims=True)               # (1, 1)
        abs_out_ref[...] = jnp.broadcast_to(s, abs_out_ref.shape)
        ms = jnp.sum(macc_ref[...], axis=1, keepdims=True)
        ms = jnp.sum(ms, axis=0, keepdims=True)
        msk_out_ref[...] = jnp.broadcast_to(ms, msk_out_ref.shape)


def _flatten_pad(a, padded_total):
    flat = a.reshape(-1)
    pad = padded_total - flat.shape[0]
    if pad:  # only materializes a copy when the size is not already aligned
        flat = jnp.pad(flat, (0, pad))
    return flat.reshape(padded_total // _LANE, _LANE)


@partial(jax.jit, static_argnames=("normalize_over_valid",))
def masked_l1_loss(x, y, mask, normalize_over_valid=False):
    assert x.shape == y.shape, (x.shape, y.shape)

    # mask.expand_as(x); keep floating masks in native dtype (upcast in-kernel).
    m = jnp.broadcast_to(mask, x.shape)
    if not jnp.issubdtype(m.dtype, jnp.floating):
        m = m.astype(jnp.float32)

    total = math.prod(x.shape)
    block_elems = _N_SPLIT * _TILE_ROWS * _LANE
    padded_total = ((total + block_elems - 1) // block_elems) * block_elems

    xk = _flatten_pad(x, padded_total)
    yk = _flatten_pad(y, padded_total)
    mk = _flatten_pad(m, padded_total)

    rows = padded_total // _LANE
    k_steps = rows // (_N_SPLIT * _TILE_ROWS)

    def in_map(c, k):
        return (c * k_steps + k, 0)

    in_spec = pl.BlockSpec((_TILE_ROWS, _LANE), in_map)
    out_spec = pl.BlockSpec((8, 128), lambda c, k: (c, 0))

    out_abs, out_msk = pl.pallas_call(
        _masked_l1_kernel,
        out_shape=(
            jax.ShapeDtypeStruct((_N_SPLIT * 8, 128), jnp.float32),
            jax.ShapeDtypeStruct((_N_SPLIT * 8, 128), jnp.float32),
        ),
        grid_spec=pltpu.PrefetchScalarGridSpec(
            num_scalar_prefetch=0,
            grid=(_N_SPLIT, k_steps),
            in_specs=[in_spec, in_spec, in_spec],
            out_specs=[out_spec, out_spec],
            scratch_shapes=[pltpu.VMEM((_TILE_ROWS, _LANE), jnp.float32),
                            pltpu.VMEM((_TILE_ROWS, _LANE), jnp.float32)],
        ),
        compiler_params=pltpu.CompilerParams(
            dimension_semantics=("parallel", "arbitrary")),
    )(xk, yk, mk)

    # Combine the per-core partial sums (each core's (8,128) block is a
    # broadcast of its scalar partial) and apply the global mean.
    s_abs = out_abs.reshape(_N_SPLIT, 8, 128)[:, 0, 0].sum()
    loss = s_abs / jnp.float32(total)
    if normalize_over_valid:
        s_msk = out_msk.reshape(_N_SPLIT, 8, 128)[:, 0, 0].sum()
        loss = loss * jnp.float32(total) / (s_msk + 1e-6)
    return loss


if __name__ == "__main__":
    key = jax.random.PRNGKey(0)
    k1, k2, k3 = jax.random.split(key, 3)
    # x/y: (N=2, C=4, H=16, W=16); mask: (N, 1, H, W) broadcast via expand_as.
    x = jax.random.uniform(k1, (2, 4, 16, 16), dtype=jnp.float32)
    y = jax.random.uniform(k2, (2, 4, 16, 16), dtype=jnp.float32)
    mask = (jax.random.uniform(k3, (2, 1, 16, 16)) > 0.3).astype(jnp.float32)

    out = jax.block_until_ready(masked_l1_loss(x, y, mask))

    # Pure-JAX reference mirroring the PyTorch forward.
    mb = jnp.broadcast_to(mask, x.shape)
    ref = jnp.mean(jnp.abs(x * mb - y * mb))
    assert jnp.allclose(out, ref, atol=1e-5, rtol=1e-5), (out, ref)

    # normalize_over_valid=True branch.
    out_n = jax.block_until_ready(
        masked_l1_loss(x, y, mask, normalize_over_valid=True))
    ref_n = ref * mb.size / (jnp.sum(mb) + 1e-6)
    assert jnp.allclose(out_n, ref_n, atol=1e-5, rtol=1e-5), (out_n, ref_n)

    print("KERNEL_OK")
</pallas_src>

<mosaic_0001>
module attributes {stable_mosaic.version = 11 : i64} {
  func.func @_masked_l1_kernel(%arg0: i32, %arg1: i32, %arg2: memref<512x512xf32, #tpu.memory_space<vmem>>, %arg3: memref<512x512xf32, #tpu.memory_space<vmem>>, %arg4: memref<512x512xf32, #tpu.memory_space<vmem>>, %arg5: memref<8x128xf32, #tpu.memory_space<vmem>>, %arg6: memref<8x128xf32, #tpu.memory_space<vmem>>, %arg7: memref<512x512xf32, #tpu.memory_space<vmem>>, %arg8: memref<512x512xf32, #tpu.memory_space<vmem>>) attributes {dimension_semantics = [#tpu.dimension_semantics<parallel>, #tpu.dimension_semantics<arbitrary>], iteration_bounds = array<i64: 2, 1>, scalar_prefetch = 0 : i64, scratch_operands = 2 : i64, tpu.core_type = #tpu.core_type<tc>, window_params = [{transform_indices = @transform_0, window_bounds = array<i64: 512, 512>}, {transform_indices = @transform_1, window_bounds = array<i64: 512, 512>}, {transform_indices = @transform_2, window_bounds = array<i64: 512, 512>}, {transform_indices = @transform_3, window_bounds = array<i64: 8, 128>}, {transform_indices = @transform_4, window_bounds = array<i64: 8, 128>}]} {
    %c0_i32 = arith.constant 0 : i32
    %0 = arith.cmpi eq, %arg1, %c0_i32 : i32
    %1 = arith.extui %0 : i1 to i32
    %c0_i32_0 = arith.constant 0 : i32
    %2 = arith.cmpi ne, %1, %c0_i32_0 : i32
    scf.if %2 {
      %cst = arith.constant 0.000000e+00 : f32
      %19 = vector.broadcast %cst : f32 to vector<512x512xf32>
      %c0_16 = arith.constant 0 : index
      %c0_17 = arith.constant 0 : index
      %20 = vector.load %arg7[%c0_16, %c0_17] : memref<512x512xf32, #tpu.memory_space<vmem>>, vector<512x512xf32>
      tpu.vector_store %arg7[%c0_16, %c0_17], %19 {strides = array<i32>} : memref<512x512xf32, #tpu.memory_space<vmem>>, vector<512x512xf32>,
      %cst_18 = arith.constant 0.000000e+00 : f32
      %21 = vector.broadcast %cst_18 : f32 to vector<512x512xf32>
      %c0_19 = arith.constant 0 : index
      %c0_20 = arith.constant 0 : index
      %22 = vector.load %arg8[%c0_19, %c0_20] : memref<512x512xf32, #tpu.memory_space<vmem>>, vector<512x512xf32>
      tpu.vector_store %arg8[%c0_19, %c0_20], %21 {strides = array<i32>} : memref<512x512xf32, #tpu.memory_space<vmem>>, vector<512x512xf32>,
    } else {
    }
    %c0 = arith.constant 0 : index
    %c0_1 = arith.constant 0 : index
    %3 = vector.load %arg4[%c0, %c0_1] : memref<512x512xf32, #tpu.memory_space<vmem>>, vector<512x512xf32>
    %c0_2 = arith.constant 0 : index
    %c0_3 = arith.constant 0 : index
    %4 = vector.load %arg2[%c0_2, %c0_3] : memref<512x512xf32, #tpu.memory_space<vmem>>, vector<512x512xf32>
    %5 = arith.mulf %4, %3 : vector<512x512xf32>
    %c0_4 = arith.constant 0 : index
    %c0_5 = arith.constant 0 : index
    %6 = vector.load %arg3[%c0_4, %c0_5] : memref<512x512xf32, #tpu.memory_space<vmem>>, vector<512x512xf32>
    %7 = arith.mulf %6, %3 : vector<512x512xf32>
    %c0_6 = arith.constant 0 : index
    %c0_7 = arith.constant 0 : index
    %8 = vector.load %arg7[%c0_6, %c0_7] : memref<512x512xf32, #tpu.memory_space<vmem>>, vector<512x512xf32>
    %9 = arith.subf %5, %7 : vector<512x512xf32>
    %10 = math.absf %9 : vector<512x512xf32>
    %11 = arith.addf %8, %10 : vector<512x512xf32>
    %c0_8 = arith.constant 0 : index
    %c0_9 = arith.constant 0 : index
    %12 = vector.load %arg7[%c0_8, %c0_9] : memref<512x512xf32, #tpu.memory_space<vmem>>, vector<512x512xf32>
    tpu.vector_store %arg7[%c0_8, %c0_9], %11 {strides = array<i32>} : memref<512x512xf32, #tpu.memory_space<vmem>>, vector<512x512xf32>,
    %c0_10 = arith.constant 0 : index
    %c0_11 = arith.constant 0 : index
    %13 = vector.load %arg8[%c0_10, %c0_11] : memref<512x512xf32, #tpu.memory_space<vmem>>, vector<512x512xf32>
    %14 = arith.addf %13, %3 : vector<512x512xf32>
    %c0_12 = arith.constant 0 : index
    %c0_13 = arith.constant 0 : index
    %15 = vector.load %arg8[%c0_12, %c0_13] : memref<512x512xf32, #tpu.memory_space<vmem>>, vector<512x512xf32>
    tpu.vector_store %arg8[%c0_12, %c0_13], %14 {strides = array<i32>} : memref<512x512xf32, #tpu.memory_space<vmem>>, vector<512x512xf32>,
    %c0_i32_14 = arith.constant 0 : i32
    %16 = arith.cmpi eq, %arg1, %c0_i32_14 : i32
    %17 = arith.extui %16 : i1 to i32
    %c0_i32_15 = arith.constant 0 : i32
    %18 = arith.cmpi ne, %17, %c0_i32_15 : i32
    scf.if %18 {
      %c0_16 = arith.constant 0 : index
      %c0_17 = arith.constant 0 : index
      %19 = vector.load %arg7[%c0_16, %c0_17] : memref<512x512xf32, #tpu.memory_space<vmem>>, vector<512x512xf32>
      %cst = arith.constant dense<0.000000e+00> : vector<512xf32>
      %20 = vector.multi_reduction <add>, %19, %cst [1] : vector<512x512xf32> to vector<512xf32>
      %21 = vector.shape_cast %20 : vector<512xf32> to vector<512x1xf32>
      %cst_18 = arith.constant dense<0.000000e+00> : vector<1xf32>
      %22 = vector.multi_reduction <add>, %21, %cst_18 [0] : vector<512x1xf32> to vector<1xf32>
      %23 = vector.shape_cast %22 : vector<1xf32> to vector<1x1xf32>
      %24 = vector.shape_cast %23 : vector<1x1xf32> to vector<1x1xf32>
      %25 = vector.broadcast %24 : vector<1x1xf32> to vector<8x128xf32>
      %c0_19 = arith.constant 0 : index
      %c0_20 = arith.constant 0 : index
      %26 = vector.load %arg5[%c0_19, %c0_20] : memref<8x128xf32, #tpu.memory_space<vmem>>, vector<8x128xf32>
      tpu.vector_store %arg5[%c0_19, %c0_20], %25 {strides = array<i32>} : memref<8x128xf32, #tpu.memory_space<vmem>>, vector<8x128xf32>,
      %c0_21 = arith.constant 0 : index
      %c0_22 = arith.constant 0 : index
      %27 = vector.load %arg8[%c0_21, %c0_22] : memref<512x512xf32, #tpu.memory_space<vmem>>, vector<512x512xf32>
      %cst_23 = arith.constant dense<0.000000e+00> : vector<512xf32>
      %28 = vector.multi_reduction <add>, %27, %cst_23 [1] : vector<512x512xf32> to vector<512xf32>
      %29 = vector.shape_cast %28 : vector<512xf32> to vector<512x1xf32>
      %cst_24 = arith.constant dense<0.000000e+00> : vector<1xf32>
      %30 = vector.multi_reduction <add>, %29, %cst_24 [0] : vector<512x1xf32> to vector<1xf32>
      %31 = vector.shape_cast %30 : vector<1xf32> to vector<1x1xf32>
      %32 = vector.shape_cast %31 : vector<1x1xf32> to vector<1x1xf32>
      %33 = vector.broadcast %32 : vector<1x1xf32> to vector<8x128xf32>
      %c0_25 = arith.constant 0 : index
      %c0_26 = arith.constant 0 : index
      %34 = vector.load %arg6[%c0_25, %c0_26] : memref<8x128xf32, #tpu.memory_space<vmem>>, vector<8x128xf32>
      tpu.vector_store %arg6[%c0_25, %c0_26], %33 {strides = array<i32>} : memref<8x128xf32, #tpu.memory_space<vmem>>, vector<8x128xf32>,
    } else {
    }
    return
  }
  func.func @transform_0(%arg0: i32, %arg1: i32) -> (i32, i32) {
    %c1_i32 = arith.constant 1 : i32
    %0 = arith.muli %arg0, %c1_i32 : i32
    %1 = arith.addi %0, %arg1 : i32
    %c0_i32 = arith.constant 0 : i32
    %c0_i32_0 = arith.constant 0 : i32
    return %1, %c0_i32 : i32, i32
  }
  func.func @transform_1(%arg0: i32, %arg1: i32) -> (i32, i32) {
    %c1_i32 = arith.constant 1 : i32
    %0 = arith.muli %arg0, %c1_i32 : i32
    %1 = arith.addi %0, %arg1 : i32
    %c0_i32 = arith.constant 0 : i32
    %c0_i32_0 = arith.constant 0 : i32
    return %1, %c0_i32 : i32, i32
  }
  func.func @transform_2(%arg0: i32, %arg1: i32) -> (i32, i32) {
    %c1_i32 = arith.constant 1 : i32
    %0 = arith.muli %arg0, %c1_i32 : i32
    %1 = arith.addi %0, %arg1 : i32
    %c0_i32 = arith.constant 0 : i32
    %c0_i32_0 = arith.constant 0 : i32
    return %1, %c0_i32 : i32, i32
  }
  func.func @transform_3(%arg0: i32, %arg1: i32) -> (i32, i32) {
    %c0_i32 = arith.constant 0 : i32
    %c0_i32_0 = arith.constant 0 : i32
    return %arg0, %c0_i32 : i32, i32
  }
  func.func @transform_4(%arg0: i32, %arg1: i32) -> (i32, i32) {
    %c0_i32 = arith.constant 0 : i32
    %c0_i32_0 = arith.constant 0 : i32
    return %arg0, %c0_i32 : i32, i32
  }
}

</mosaic_0001>

<llo_original>
// kernel: masked_l1_loss.1
$region0: #{masked_l1_loss.1}
  #allocation0 [shape = 'u32[]', space=smem, size = 0x4, offset = 0x4, fixed_abs, tag = 'smem constant byte address 0x4 - core index']
  #allocation1 [shape = 'u32[144,128]{1,0:T(1,128)}', space=vmem, size = 0x12000, scoped, tag = 'internal scratch']
  #allocation2 [shape = 'f32[512,512]{1,0:T(8,128)}', space=vmem, size = 0x100000, scoped, tag = 'scratch operand']
  #allocation3 [shape = 'f32[512,512]{1,0:T(8,128)}', space=vmem, size = 0x100000, scoped, tag = 'scratch operand']
  %s0 = inlined_call_operand.vmem [shape: f32[1024,512], index: 0, kind: input, shape index: {}]
  %s1 = inlined_call_operand.vmem [shape: f32[1024,512], index: 1, kind: input, shape index: {}]
  %s2 = inlined_call_operand.vmem [shape: f32[1024,512], index: 2, kind: input, shape index: {}]
  %s3 = inlined_call_operand.vmem [shape: f32[16,128], index: 3, kind: output, shape index: {0}]
  %s4 = inlined_call_operand.hbm [shape: f32[16,128], index: 4, kind: output, shape index: {1}]
  %5 = xla_tuple %s3, %s4
  %s6 = sld [smem:[#allocation0]]
  $region61: #{masked_l1_loss.1} parent=0
    _
  %s8 = ssub.s32 1, %s6
  %s9 = scalar_select 0, %s8, %s6
  $region1: #{masked_l1_loss.1} parent=0
    #allocation4 [shape = 'u8[8192]{0}', space=vmem, size = 0x2000, scoped, tag = 'output window, operand 1']
    #allocation5 [shape = 's32[2]{0}', space=sflag, size = 0x8, scoped, tag = 'scoped memory for masked_l1_loss.1']
    %10 = vsyncpa [#allocation5], 0
    %s11 = scalar_lea.sflag [#allocation5], 1
    %12 = vsyncpa %s11, 0
    loop: start=0, step=1, limit=4
    $region2: #{masked_l1_loss.1} parent=1 // loop_pre_header
      _
    $region3: #{masked_l1_loss.1} parent=1 // loop_header
      %s14 = sphi 0, %s18
      %p15 = scmp.ge.s32.totalorder %s14, 4
      %s21 = sphi 0, %s33
      %s22 = sphi 0, %s29
      %s23 = sphi 0, %s21
      %s24 = sphi 0, %s22
      %s25 = sphi 0, %s23
      %s26 = sphi 0, %s24
      %s38 = sphi 0, %s40
      %s41 = sphi 0, %s38
      %s42 = sphi 0, %s41
      %s58 = sphi 0, %s42
      %s66 = sphi 0, %s68
      %s69 = sphi 0, %s66
      %s70 = sphi 0, %s69
      %s86 = sphi 0, %s70
      %s94 = sphi 0, %s96
      %s97 = sphi 0, %s94
      %s98 = sphi 0, %s97
      %s114 = sphi 0, %s98
      %s120 = sphi 0, %s122
      %s123 = sphi 0, %s120
      %s124 = sphi 0, %s123
      %s140 = sphi 0, %s124
      %s146 = sphi 0, %s148
      %s149 = sphi 0, %s146
      %s150 = sphi 0, %s149
      %s166 = sphi 0, %s150
    $region4: #{masked_l1_loss.1} parent=1 // loop_header_branch
      %17 = sbr.rel (%p15) target = $region8
    $region5: #{masked_l1_loss.1} parent=1 // loop_body
      %s19 = ssub.s32 %s14, 1
      %s20 = ssub.s32 %s14, 2
      %s27 = sadd.s32 1, %s22
      %p28 = scmp.ge.s32.totalorder %s27, 1
      %s29 = scalar_select %p28, 0, %s27
      %s30 = sadd.s32 1, %s21
      %s31 = scalar_select %p28, %s30, %s21
      %p32 = scmp.ge.s32.totalorder %s31, 2
      %s33 = scalar_select %p32, 0, %s31
      %s34 = sadd.s32 %s21, %s22
      %s35 = sadd.s32 %s33, %s29
      %s36 = ssub.s32 %s34, %s35
      %p37 = scmp.eq.s32.totalorder %s36, 0
      %s39 = sadd.s32 %s38, 1
      %s40 = scalar_select %p37, %s38, %s39
      %p43 = pneg %p37
      %p44 = scmp.eq.s32.totalorder %s14, 1
      %p45 = por %p43, %p44
      %p46 = scmp.ne.s32.totalorder %s38, %s41
      %p47 = scmp.eq.s32.totalorder %s14, 0
      %p48 = por %p46, %p47
      %p49 = scmp.ne.s32.totalorder %s38, %s41
      %p50 = scmp.eq.s32.totalorder %s19, 1
      %p51 = por %p49, %p50
      %p52 = scmp.ne.s32.totalorder %s41, %s42
      %p53 = scmp.eq.s32.totalorder %s19, 0
      %p54 = por %p52, %p53
      %p55 = scmp.ne.s32.totalorder %s41, %s42
      %p56 = scmp.eq.s32.totalorder %s20, 1
      %p57 = por %p55, %p56
      %p59 = scmp.ne.s32.totalorder %s42, %s58
      %p60 = scmp.eq.s32.totalorder %s20, 0
      %p61 = por %p59, %p60
      %s62 = sadd.s32 %s21, %s22
      %s63 = sadd.s32 %s33, %s29
      %s64 = ssub.s32 %s62, %s63
      %p65 = scmp.eq.s32.totalorder %s64, 0
      %s67 = sadd.s32 %s66, 1
      %s68 = scalar_select %p65, %s66, %s67
      %p71 = pneg %p65
      %p72 = scmp.eq.s32.totalorder %s14, 1
      %p73 = por %p71, %p72
      %p74 = scmp.ne.s32.totalorder %s66, %s69
      %p75 = scmp.eq.s32.totalorder %s14, 0
      %p76 = por %p74, %p75
      %p77 = scmp.ne.s32.totalorder %s66, %s69
      %p78 = scmp.eq.s32.totalorder %s19, 1
      %p79 = por %p77, %p78
      %p80 = scmp.ne.s32.totalorder %s69, %s70
      %p81 = scmp.eq.s32.totalorder %s19, 0
      %p82 = por %p80, %p81
      %p83 = scmp.ne.s32.totalorder %s69, %s70
      %p84 = scmp.eq.s32.totalorder %s20, 1
      %p85 = por %p83, %p84
      %p87 = scmp.ne.s32.totalorder %s70, %s86
      %p88 = scmp.eq.s32.totalorder %s20, 0
      %p89 = por %p87, %p88
      %s90 = sadd.s32 %s21, %s22
      %s91 = sadd.s32 %s33, %s29
      %s92 = ssub.s32 %s90, %s91
      %p93 = scmp.eq.s32.totalorder %s92, 0
      %s95 = sadd.s32 %s94, 1
      %s96 = scalar_select %p93, %s94, %s95
      %p99 = pneg %p93
      %p100 = scmp.eq.s32.totalorder %s14, 1
      %p101 = por %p99, %p100
      %p102 = scmp.ne.s32.totalorder %s94, %s97
      %p103 = scmp.eq.s32.totalorder %s14, 0
      %p104 = por %p102, %p103
      %p105 = scmp.ne.s32.totalorder %s94, %s97
      %p106 = scmp.eq.s32.totalorder %s19, 1
      %p107 = por %p105, %p106
      %p108 = scmp.ne.s32.totalorder %s97, %s98
      %p109 = scmp.eq.s32.totalorder %s19, 0
      %p110 = por %p108, %p109
      %p111 = scmp.ne.s32.totalorder %s97, %s98
      %p112 = scmp.eq.s32.totalorder %s20, 1
      %p113 = por %p111, %p112
      %p115 = scmp.ne.s32.totalorder %s98, %s114
      %p116 = scmp.eq.s32.totalorder %s20, 0
      %p117 = por %p115, %p116
      %s118 = ssub.s32 %s21, %s33
      %p119 = scmp.eq.s32.totalorder %s118, 0
      %s121 = sadd.s32 %s120, 1
      %s122 = scalar_select %p119, %s120, %s121
      %p125 = pneg %p119
      %p126 = scmp.eq.s32.totalorder %s14, 1
      %p127 = por %p125, %p126
      %p128 = scmp.ne.s32.totalorder %s120, %s123
      %p129 = scmp.eq.s32.totalorder %s14, 0
      %p130 = por %p128, %p129
      %p131 = scmp.ne.s32.totalorder %s120, %s123
      %p132 = scmp.eq.s32.totalorder %s19, 1
      %p133 = por %p131, %p132
      %p134 = scmp.ne.s32.totalorder %s123, %s124
      %p135 = scmp.eq.s32.totalorder %s19, 0
      %p136 = por %p134, %p135
      %p137 = scmp.ne.s32.totalorder %s123, %s124
      %p138 = scmp.eq.s32.totalorder %s20, 1
      %p139 = por %p137, %p138
      %p141 = scmp.ne.s32.totalorder %s124, %s140
      %p142 = scmp.eq.s32.totalorder %s20, 0
      %p143 = por %p141, %p142
      %s144 = ssub.s32 %s21, %s33
      %p145 = scmp.eq.s32.totalorder %s144, 0
      %s147 = sadd.s32 %s146, 1
      %s148 = scalar_select %p145, %s146, %s147
      %p151 = pneg %p145
      %p152 = scmp.eq.s32.totalorder %s14, 1
      %p153 = por %p151, %p152
      %p154 = scmp.ne.s32.totalorder %s146, %s149
      %p155 = scmp.eq.s32.totalorder %s14, 0
      %p156 = por %p154, %p155
      %p157 = scmp.ne.s32.totalorder %s146, %s149
      %p158 = scmp.eq.s32.totalorder %s19, 1
      %p159 = por %p157, %p158
      %p160 = scmp.ne.s32.totalorder %s149, %s150
      %p161 = scmp.eq.s32.totalorder %s19, 0
      %p162 = por %p160, %p161
      %p163 = scmp.ne.s32.totalorder %s149, %s150
      %p164 = scmp.eq.s32.totalorder %s20, 1
      %p165 = por %p163, %p164
      %p167 = scmp.ne.s32.totalorder %s150, %s166
      %p168 = scmp.eq.s32.totalorder %s20, 0
      %p169 = por %p167, %p168
      %p170 = scmp.le.s32.totalorder 1, %s14
      %p171 = scmp.lt.s32.totalorder %s14, 3
      %p172 = pnand %p170, %p171
      %p173 = pneg %p172
      // Predicated region
      $region9: #{masked_l1_loss.1} parent=5 // pred_check
        _
      $region10: #{masked_l1_loss.1} parent=5 // pred_check_branch
        %175 = sbr.rel (%p172) target = $region12
      $region11: #{masked_l1_loss.1} parent=5 // pred_region
        %s176 = ssub.s32 %s14, 1
      $region12: #{masked_l1_loss.1} parent=5 // pred_fallthru
        _
      %p177 = scmp.lt.s32.totalorder %s14, 2
      // Predicated region
      $region13: #{masked_l1_loss.1} parent=5 // pred_check
        %p178 = pneg %p177
      $region14: #{masked_l1_loss.1} parent=5 // pred_check_branch
        %180 = sbr.rel (%p178) target = $region16
      $region15: #{masked_l1_loss.1} parent=5 // pred_region
        // Predicated region
        $region17: #{masked_l1_loss.1} parent=15 // pred_check
          %p181 = pneg %p48
        $region18: #{masked_l1_loss.1} parent=15 // pred_check_branch
          %183 = sbr.rel (%p181) target = $region20
        $region19: #{masked_l1_loss.1} parent=15 // pred_region
          %s184 = sadd.s32 %s21, %s22
          %s185 = smul.u32 64, %s184
          %p186 = scmp.lt.s32.totalorder %s185, 127
          %s187 = scalar_select %p186, %s185, 127
          %s188 = smul.addr %s187, 4
          %s189 = smul.addr %s188, 8
          %s190 = scalar_lea.vmem %s0, %s189
          %s191 = sadd.s32 %s21, %s22
          %s192 = smul.u32 64, %s191
        $region20: #{masked_l1_loss.1} parent=15 // pred_fallthru
          _
        // Predicated region
        $region21: #{masked_l1_loss.1} parent=15 // pred_check
          %p193 = pneg %p76
        $region22: #{masked_l1_loss.1} parent=15 // pred_check_branch
          %195 = sbr.rel (%p193) target = $region24
        $region23: #{masked_l1_loss.1} parent=15 // pred_region
          %s196 = sadd.s32 %s21, %s22
          %s197 = smul.u32 64, %s196
          %p198 = scmp.lt.s32.totalorder %s197, 127
          %s199 = scalar_select %p198, %s197, 127
          %s200 = smul.addr %s199, 4
          %s201 = smul.addr %s200, 8
          %s202 = scalar_lea.vmem %s1, %s201
          %s203 = sadd.s32 %s21, %s22
          %s204 = smul.u32 64, %s203
        $region24: #{masked_l1_loss.1} parent=15 // pred_fallthru
          _
        // Predicated region
        $region25: #{masked_l1_loss.1} parent=15 // pred_check
          %p205 = pneg %p104
        $region26: #{masked_l1_loss.1} parent=15 // pred_check_branch
          %207 = sbr.rel (%p205) target = $region28
        $region27: #{masked_l1_loss.1} parent=15 // pred_region
          %s208 = sadd.s32 %s21, %s22
          %s209 = smul.u32 64, %s208
          %p210 = scmp.lt.s32.totalorder %s209, 127
          %s211 = scalar_select %p210, %s209, 127
          %s212 = smul.addr %s211, 4
          %s213 = smul.addr %s212, 8
          %s214 = scalar_lea.vmem %s2, %s213
          %s215 = sadd.s32 %s21, %s22
          %s216 = smul.u32 64, %s215
        $region28: #{masked_l1_loss.1} parent=15 // pred_fallthru
          _
      $region16: #{masked_l1_loss.1} parent=5 // pred_fallthru
        _
      %p217 = scmp.le.s32.totalorder 1, %s14
      %p218 = scmp.lt.s32.totalorder %s14, 3
      %p219 = pnand %p217, %p218
      %p220 = pneg %p219
      // Predicated region
      $region29: #{masked_l1_loss.1} parent=5 // pred_check
        _
      $region30: #{masked_l1_loss.1} parent=5 // pred_check_branch
        %222 = sbr.rel (%p219) target = $region32
      $region31: #{masked_l1_loss.1} parent=5 // pred_region
        %s223 = ssub.s32 %s14, 1
        %s224 = sadd.s32 %s23, %s24
        %s225 = smul.u32 64, %s224
        %p226 = scmp.lt.s32.totalorder %s225, 127
        %s227 = scalar_select %p226, %s225, 127
        %s228 = smul.addr %s227, 4
        %s229 = smul.addr %s228, 8
        %s230 = scalar_lea.vmem %s0, %s229
        %p231 = pneg %p54
        %p232 = pneg %p51
        %s233 = sadd.s32 %s23, %s24
        %s234 = smul.u32 64, %s233
        %p235 = scmp.lt.s32.totalorder %s234, 127
        %s236 = scalar_select %p235, %s234, 127
        %s237 = smul.addr %s236, 4
        %s238 = smul.addr %s237, 8
        %s239 = scalar_lea.vmem %s1, %s238
        %p240 = pneg %p82
        %p241 = pneg %p79
        %s242 = sadd.s32 %s23, %s24
        %s243 = smul.u32 64, %s242
        %p244 = scmp.lt.s32.totalorder %s243, 127
        %s245 = scalar_select %p244, %s243, 127
        %s246 = smul.addr %s245, 4
        %s247 = smul.addr %s246, 8
        %s248 = scalar_lea.vmem %s2, %s247
        %p249 = pneg %p110
        %p250 = pneg %p107
        %p251 = pneg %p136
        %p252 = pneg %p133
        %p253 = scmp.lt.s32.totalorder %s23, 1
        %s254 = scalar_select %p253, %s23, 1
        %s255 = smul.addr %s254, 8
        %s256 = scalar_lea.vmem %s3, %s255
        %p257 = pneg %p162
        %p258 = pneg %p159
        %s259 = sand.u32 %s149, 1
        %s260 = scalar_lea.sflag [#allocation5], %s259
        %s261 = sand.u32 %s149, 1
        %s262 = smul.addr %s261, 8
        %s263 = scalar_lea.vmem [#allocation4], %s262
        %s264 = sadd.s32 %s23, %s24
        %s265 = smul.u32 64, %s264
        %p266 = scmp.lt.s32.totalorder %s265, 127
        %s267 = scalar_select %p266, %s265, 127
        %s268 = smul.addr %s267, 4
        %s269 = smul.addr %s268, 8
        %s270 = scalar_lea.vmem %s0, %s269
        %s271 = sadd.s32 %s23, %s24
        %s272 = smul.u32 64, %s271
        %s273 = sadd.s32 %s23, %s24
        %s274 = smul.u32 64, %s273
        %p275 = scmp.lt.s32.totalorder %s274, 127
        %s276 = scalar_select %p275, %s274, 127
        %s277 = smul.addr %s276, 4
        %s278 = smul.addr %s277, 8
        %s279 = scalar_lea.vmem %s1, %s278
        %s280 = sadd.s32 %s23, %s24
        %s281 = smul.u32 64, %s280
        %s282 = sadd.s32 %s23, %s24
        %s283 = smul.u32 64, %s282
        %p284 = scmp.lt.s32.totalorder %s283, 127
        %s285 = scalar_select %p284, %s283, 127
        %s286 = smul.addr %s285, 4
        %s287 = smul.addr %s286, 8
        %s288 = scalar_lea.vmem %s2, %s287
        %s289 = sadd.s32 %s23, %s24
        %s290 = smul.u32 64, %s289
        %p291 = scmp.lt.s32.totalorder %s23, 1
        %s292 = scalar_select %p291, %s23, 1
        %s293 = smul.addr %s292, 8
        %s294 = scalar_lea.vmem %s3, %s293
        %p295 = scmp.eq.s32.totalorder %s24, 0
        // Predicated region
        $region33: #{masked_l1_loss.1} parent=31 // pred_check
          %p296 = pneg %p295
        $region34: #{masked_l1_loss.1} parent=31 // pred_check_branch
          %298 = sbr.rel (%p296) target = $region36
        $region35: #{masked_l1_loss.1} parent=31 // pred_region
          %299 = vst [vmem:[#allocation2] sm:$0xff] 0.0
          %300 = vst [vmem:[#allocation2 + $0x8] sm:$0xff] 0.0
          %301 = vst [vmem:[#allocation2 + $0x10] sm:$0xff] 0.0
          %302 = vst [vmem:[#allocation2 + $0x18] sm:$0xff] 0.0
          %303 = vst [vmem:[#allocation2 + $0x20] sm:$0xff] 0.0
          %304 = vst [vmem:[#allocation2 + $0x28] sm:$0xff] 0.0
          %305 = vst [vmem:[#allocation2 + $0x30] sm:$0xff] 0.0
          %306 = vst [vmem:[#allocation2 + $0x38] sm:$0xff] 0.0
          %307 = vst [vmem:[#allocation2 + $0x40] sm:$0xff] 0.0
          %308 = vst [vmem:[#allocation2 + $0x48] sm:$0xff] 0.0
          %309 = vst [vmem:[#allocation2 + $0x50] sm:$0xff] 0.0
          %310 = vst [vmem:[#allocation2 + $0x58] sm:$0xff] 0.0
          %311 = vst [vmem:[#allocation2 + $0x60] sm:$0xff] 0.0
          %312 = vst [vmem:[#allocation2 + $0x68] sm:$0xff] 0.0
          %313 = vst [vmem:[#allocation2 + $0x70] sm:$0xff] 0.0
          %314 = vst [vmem:[#allocation2 + $0x78] sm:$0xff] 0.0
          %315 = vst [vmem:[#allocation2 + $0x80] sm:$0xff] 0.0
          %316 = vst [vmem:[#allocation2 + $0x88] sm:$0xff] 0.0
          %317 = vst [vmem:[#allocation2 + $0x90] sm:$0xff] 0.0
          %318 = vst [vmem:[#allocation2 + $0x98] sm:$0xff] 0.0
          %319 = vst [vmem:[#allocation2 + $0xa0] sm:$0xff] 0.0
          %320 = vst [vmem:[#allocation2 + $0xa8] sm:$0xff] 0.0
          %321 = vst [vmem:[#allocation2 + $0xb0] sm:$0xff] 0.0
          %322 = vst [vmem:[#allocation2 + $0xb8] sm:$0xff] 0.0
          %323 = vst [vmem:[#allocation2 + $0xc0] sm:$0xff] 0.0
          %324 = vst [vmem:[#allocation2 + $0xc8] sm:$0xff] 0.0
          %325 = vst [vmem:[#allocation2 + $0xd0] sm:$0xff] 0.0
          %326 = vst [vmem:[#allocation2 + $0xd8] sm:$0xff] 0.0
          %327 = vst [vmem:[#allocation2 + $0xe0] sm:$0xff] 0.0
          %328 = vst [vmem:[#allocation2 + $0xe8] sm:$0xff] 0.0
          %329 = vst [vmem:[#allocation2 + $0xf0] sm:$0xff] 0.0
          %330 = vst [vmem:[#allocation2 + $0xf8] sm:$0xff] 0.0
          %331 = vst [vmem:[#allocation2 + $0x100] sm:$0xff] 0.0
          %332 = vst [vmem:[#allocation2 + $0x108] sm:$0xff] 0.0
          %333 = vst [vmem:[#allocation2 + $0x110] sm:$0xff] 0.0
          %334 = vst [vmem:[#allocation2 + $0x118] sm:$0xff] 0.0
          %335 = vst [vmem:[#allocation2 + $0x120] sm:$0xff] 0.0
          %336 = vst [vmem:[#allocation2 + $0x128] sm:$0xff] 0.0
          %337 = vst [vmem:[#allocation2 + $0x130] sm:$0xff] 0.0
          %338 = vst [vmem:[#allocation2 + $0x138] sm:$0xff] 0.0
          %339 = vst [vmem:[#allocation2 + $0x140] sm:$0xff] 0.0
          %340 = vst [vmem:[#allocation2 + $0x148] sm:$0xff] 0.0
          %341 = vst [vmem:[#allocation2 + $0x150] sm:$0xff] 0.0
          %342 = vst [vmem:[#allocation2 + $0x158] sm:$0xff] 0.0
          %343 = vst [vmem:[#allocation2 + $0x160] sm:$0xff] 0.0
          %344 = vst [vmem:[#allocation2 + $0x168] sm:$0xff] 0.0
          %345 = vst [vmem:[#allocation2 + $0x170] sm:$0xff] 0.0
          %346 = vst [vmem:[#allocation2 + $0x178] sm:$0xff] 0.0
          %347 = vst [vmem:[#allocation2 + $0x180] sm:$0xff] 0.0
          %348 = vst [vmem:[#allocation2 + $0x188] sm:$0xff] 0.0
          %349 = vst [vmem:[#allocation2 + $0x190] sm:$0xff] 0.0
          %350 = vst [vmem:[#allocation2 + $0x198] sm:$0xff] 0.0
          %351 = vst [vmem:[#allocation2 + $0x1a0] sm:$0xff] 0.0
          %352 = vst [vmem:[#allocation2 + $0x1a8] sm:$0xff] 0.0
          %353 = vst [vmem:[#allocation2 + $0x1b0] sm:$0xff] 0.0
          %354 = vst [vmem:[#allocation2 + $0x1b8] sm:$0xff] 0.0
          %355 = vst [vmem:[#allocation2 + $0x1c0] sm:$0xff] 0.0
          %356 = vst [vmem:[#allocation2 + $0x1c8] sm:$0xff] 0.0
          %357 = vst [vmem:[#allocation2 + $0x1d0] sm:$0xff] 0.0
          %358 = vst [vmem:[#allocation2 + $0x1d8] sm:$0xff] 0.0
          %359 = vst [vmem:[#allocation2 + $0x1e0] sm:$0xff] 0.0
          %360 = vst [vmem:[#allocation2 + $0x1e8] sm:$0xff] 0.0
          %361 = vst [vmem:[#allocation2 + $0x1f0] sm:$0xff] 0.0
          %362 = vst [vmem:[#allocation2 + $0x1f8] sm:$0xff] 0.0
          %363 = vst [vmem:[#allocation2 + $0x200] sm:$0xff] 0.0
          %364 = vst [vmem:[#allocation2 + $0x208] sm:$0xff] 0.0
          %365 = vst [vmem:[#allocation2 + $0x210] sm:$0xff] 0.0
          %366 = vst [vmem:[#allocation2 + $0x218] sm:$0xff] 0.0
          %367 = vst [vmem:[#allocation2 + $0x220] sm:$0xff] 0.0
          %368 = vst [vmem:[#allocation2 + $0x228] sm:$0xff] 0.0
          %369 = vst [vmem:[#allocation2 + $0x230] sm:$0xff] 0.0
          %370 = vst [vmem:[#allocation2 + $0x238] sm:$0xff] 0.0
          %371 = vst [vmem:[#allocation2 + $0x240] sm:$0xff] 0.0
          %372 = vst [vmem:[#allocation2 + $0x248] sm:$0xff] 0.0
          %373 = vst [vmem:[#allocation2 + $0x250] sm:$0xff] 0.0
          %374 = vst [vmem:[#allocation2 + $0x258] sm:$0xff] 0.0
          %375 = vst [vmem:[#allocation2 + $0x260] sm:$0xff] 0.0
          %376 = vst [vmem:[#allocation2 + $0x268] sm:$0xff] 0.0
          %377 = vst [vmem:[#allocation2 + $0x270] sm:$0xff] 0.0
          %378 = vst [vmem:[#allocation2 + $0x278] sm:$0xff] 0.0
          %379 = vst [vmem:[#allocation2 + $0x280] sm:$0xff] 0.0
          %380 = vst [vmem:[#allocation2 + $0x288] sm:$0xff] 0.0
          %381 = vst [vmem:[#allocation2 + $0x290] sm:$0xff] 0.0
          %382 = vst [vmem:[#allocation2 + $0x298] sm:$0xff] 0.0
          %383 = vst [vmem:[#allocation2 + $0x2a0] sm:$0xff] 0.0
          %384 = vst [vmem:[#allocation2 + $0x2a8] sm:$0xff] 0.0
          %385 = vst [vmem:[#allocation2 + $0x2b0] sm:$0xff] 0.0
          %386 = vst [vmem:[#allocation2 + $0x2b8] sm:$0xff] 0.0
          %387 = vst [vmem:[#allocation2 + $0x2c0] sm:$0xff] 0.0
          %388 = vst [vmem:[#allocation2 + $0x2c8] sm:$0xff] 0.0
          %389 = vst [vmem:[#allocation2 + $0x2d0] sm:$0xff] 0.0
          %390 = vst [vmem:[#allocation2 + $0x2d8] sm:$0xff] 0.0
          %391 = vst [vmem:[#allocation2 + $0x2e0] sm:$0xff] 0.0
          %392 = vst [vmem:[#allocation2 + $0x2e8] sm:$0xff] 0.0
          %393 = vst [vmem:[#allocation2 + $0x2f0] sm:$0xff] 0.0
          %394 = vst [vmem:[#allocation2 + $0x2f8] sm:$0xff] 0.0
          %395 = vst [vmem:[#allocation2 + $0x300] sm:$0xff] 0.0
          %396 = vst [vmem:[#allocation2 + $0x308] sm:$0xff] 0.0
          %397 = vst [vmem:[#allocation2 + $0x310] sm:$0xff] 0.0
          %398 = vst [vmem:[#allocation2 + $0x318] sm:$0xff] 0.0
          %399 = vst [vmem:[#allocation2 + $0x320] sm:$0xff] 0.0
          %400 = vst [vmem:[#allocation2 + $0x328] sm:$0xff] 0.0
          %401 = vst [vmem:[#allocation2 + $0x330] sm:$0xff] 0.0
          %402 = vst [vmem:[#allocation2 + $0x338] sm:$0xff] 0.0
          %403 = vst [vmem:[#allocation2 + $0x340] sm:$0xff] 0.0
          %404 = vst [vmem:[#allocation2 + $0x348] sm:$0xff] 0.0
          %405 = vst [vmem:[#allocation2 + $0x350] sm:$0xff] 0.0
          %406 = vst [vmem:[#allocation2 + $0x358] sm:$0xff] 0.0
          %407 = vst [vmem:[#allocation2 + $0x360] sm:$0xff] 0.0
          %408 = vst [vmem:[#allocation2 + $0x368] sm:$0xff] 0.0
          %409 = vst [vmem:[#allocation2 + $0x370] sm:$0xff] 0.0
          %410 = vst [vmem:[#allocation2 + $0x378] sm:$0xff] 0.0
          %411 = vst [vmem:[#allocation2 + $0x380] sm:$0xff] 0.0
          %412 = vst [vmem:[#allocation2 + $0x388] sm:$0xff] 0.0
          %413 = vst [vmem:[#allocation2 + $0x390] sm:$0xff] 0.0
          %414 = vst [vmem:[#allocation2 + $0x398] sm:$0xff] 0.0
          %415 = vst [vmem:[#allocation2 + $0x3a0] sm:$0xff] 0.0
          %416 = vst [vmem:[#allocation2 + $0x3a8] sm:$0xff] 0.0
          %417 = vst [vmem:[#allocation2 + $0x3b0] sm:$0xff] 0.0
          %418 = vst [vmem:[#allocation2 + $0x3b8] sm:$0xff] 0.0
          %419 = vst [vmem:[#allocation2 + $0x3c0] sm:$0xff] 0.0
          %420 = vst [vmem:[#allocation2 + $0x3c8] sm:$0xff] 0.0
          %421 = vst [vmem:[#allocation2 + $0x3d0] sm:$0xff] 0.0
          %422 = vst [vmem:[#allocation2 + $0x3d8] sm:$0xff] 0.0
          %423 = vst [vmem:[#allocation2 + $0x3e0] sm:$0xff] 0.0
          %424 = vst [vmem:[#allocation2 + $0x3e8] sm:$0xff] 0.0
          %425 = vst [vmem:[#allocation2 + $0x3f0] sm:$0xff] 0.0
          %426 = vst [vmem:[#allocation2 + $0x3f8] sm:$0xff] 0.0
          %427 = vst [vmem:[#allocation2 + $0x400] sm:$0xff] 0.0
          %428 = vst [vmem:[#allocation2 + $0x408] sm:$0xff] 0.0
          %429 = vst [vmem:[#allocation2 + $0x410] sm:$0xff] 0.0
          %430 = vst [vmem:[#allocation2 + $0x418] sm:$0xff] 0.0
          %431 = vst [vmem:[#allocation2 + $0x420] sm:$0xff] 0.0
          %432 = vst [vmem:[#allocation2 + $0x428] sm:$0xff] 0.0
          %433 = vst [vmem:[#allocation2 + $0x430] sm:$0xff] 0.0
          %434 = vst [vmem:[#allocation2 + $0x438] sm:$0xff] 0.0
          %435 = vst [vmem:[#allocation2 + $0x440] sm:$0xff] 0.0
          %436 = vst [vmem:[#allocation2 + $0x448] sm:$0xff] 0.0
          %437 = vst [vmem:[#allocation2 + $0x450] sm:$0xff] 0.0
          %438 = vst [vmem:[#allocation2 + $0x458] sm:$0xff] 0.0
          %439 = vst [vmem:[#allocation2 + $0x460] sm:$0xff] 0.0
          %440 = vst [vmem:[#allocation2 + $0x468] sm:$0xff] 0.0
          %441 = vst [vmem:[#allocation2 + $0x470] sm:$0xff] 0.0
          %442 = vst [vmem:[#allocation2 + $0x478] sm:$0xff] 0.0
          %443 = vst [vmem:[#allocation2 + $0x480] sm:$0xff] 0.0
          %444 = vst [vmem:[#allocation2 + $0x488] sm:$0xff] 0.0
          %445 = vst [vmem:[#allocation2 + $0x490] sm:$0xff] 0.0
          %446 = vst [vmem:[#allocation2 + $0x498] sm:$0xff] 0.0
          %447 = vst [vmem:[#allocation2 + $0x4a0] sm:$0xff] 0.0
          %448 = vst [vmem:[#allocation2 + $0x4a8] sm:$0xff] 0.0
          %449 = vst [vmem:[#allocation2 + $0x4b0] sm:$0xff] 0.0
          %450 = vst [vmem:[#allocation2 + $0x4b8] sm:$0xff] 0.0
          %451 = vst [vmem:[#allocation2 + $0x4c0] sm:$0xff] 0.0
          %452 = vst [vmem:[#allocation2 + $0x4c8] sm:$0xff] 0.0
          %453 = vst [vmem:[#allocation2 + $0x4d0] sm:$0xff] 0.0
          %454 = vst [vmem:[#allocation2 + $0x4d8] sm:$0xff] 0.0
          %455 = vst [vmem:[#allocation2 + $0x4e0] sm:$0xff] 0.0
          %456 = vst [vmem:[#allocation2 + $0x4e8] sm:$0xff] 0.0
          %457 = vst [vmem:[#allocation2 + $0x4f0] sm:$0xff] 0.0
          %458 = vst [vmem:[#allocation2 + $0x4f8] sm:$0xff] 0.0
          %459 = vst [vmem:[#allocation2 + $0x500] sm:$0xff] 0.0
          %460 = vst [vmem:[#allocation2 + $0x508] sm:$0xff] 0.0
          %461 = vst [vmem:[#allocation2 + $0x510] sm:$0xff] 0.0
          %462 = vst [vmem:[#allocation2 + $0x518] sm:$0xff] 0.0
          %463 = vst [vmem:[#allocation2 + $0x520] sm:$0xff] 0.0
          %464 = vst [vmem:[#allocation2 + $0x528] sm:$0xff] 0.0
          %465 = vst [vmem:[#allocation2 + $0x530] sm:$0xff] 0.0
          %466 = vst [vmem:[#allocation2 + $0x538] sm:$0xff] 0.0
          %467 = vst [vmem:[#allocation2 + $0x540] sm:$0xff] 0.0
          %468 = vst [vmem:[#allocation2 + $0x548] sm:$0xff] 0.0
          %469 = vst [vmem:[#allocation2 + $0x550] sm:$0xff] 0.0
          %470 = vst [vmem:[#allocation2 + $0x558] sm:$0xff] 0.0
          %471 = vst [vmem:[#allocation2 + $0x560] sm:$0xff] 0.0
          %472 = vst [vmem:[#allocation2 + $0x568] sm:$0xff] 0.0
          %473 = vst [vmem:[#allocation2 + $0x570] sm:$0xff] 0.0
          %474 = vst [vmem:[#allocation2 + $0x578] sm:$0xff] 0.0
          %475 = vst [vmem:[#allocation2 + $0x580] sm:$0xff] 0.0
          %476 = vst [vmem:[#allocation2 + $0x588] sm:$0xff] 0.0
          %477 = vst [vmem:[#allocation2 + $0x590] sm:$0xff] 0.0
          %478 = vst [vmem:[#allocation2 + $0x598] sm:$0xff] 0.0
          %479 = vst [vmem:[#allocation2 + $0x5a0] sm:$0xff] 0.0
          %480 = vst [vmem:[#allocation2 + $0x5a8] sm:$0xff] 0.0
          %481 = vst [vmem:[#allocation2 + $0x5b0] sm:$0xff] 0.0
          %482 = vst [vmem:[#allocation2 + $0x5b8] sm:$0xff] 0.0
          %483 = vst [vmem:[#allocation2 + $0x5c0] sm:$0xff] 0.0
          %484 = vst [vmem:[#allocation2 + $0x5c8] sm:$0xff] 0.0
          %485 = vst [vmem:[#allocation2 + $0x5d0] sm:$0xff] 0.0
          %486 = vst [vmem:[#allocation2 + $0x5d8] sm:$0xff] 0.0
          %487 = vst [vmem:[#allocation2 + $0x5e0] sm:$0xff] 0.0
          %488 = vst [vmem:[#allocation2 + $0x5e8] sm:$0xff] 0.0
          %489 = vst [vmem:[#allocation2 + $0x5f0] sm:$0xff] 0.0
          %490 = vst [vmem:[#allocation2 + $0x5f8] sm:$0xff] 0.0
          %491 = vst [vmem:[#allocation2 + $0x600] sm:$0xff] 0.0
          %492 = vst [vmem:[#allocation2 + $0x608] sm:$0xff] 0.0
          %493 = vst [vmem:[#allocation2 + $0x610] sm:$0xff] 0.0
          %494 = vst [vmem:[#allocation2 + $0x618] sm:$0xff] 0.0
          %495 = vst [vmem:[#allocation2 + $0x620] sm:$0xff] 0.0
          %496 = vst [vmem:[#allocation2 + $0x628] sm:$0xff] 0.0
          %497 = vst [vmem:[#allocation2 + $0x630] sm:$0xff] 0.0
          %498 = vst [vmem:[#allocation2 + $0x638] sm:$0xff] 0.0
          %499 = vst [vmem:[#allocation2 + $0x640] sm:$0xff] 0.0
          %500 = vst [vmem:[#allocation2 + $0x648] sm:$0xff] 0.0
          %501 = vst [vmem:[#allocation2 + $0x650] sm:$0xff] 0.0
          %502 = vst [vmem:[#allocation2 + $0x658] sm:$0xff] 0.0
          %503 = vst [vmem:[#allocation2 + $0x660] sm:$0xff] 0.0
          %504 = vst [vmem:[#allocation2 + $0x668] sm:$0xff] 0.0
          %505 = vst [vmem:[#allocation2 + $0x670] sm:$0xff] 0.0
          %506 = vst [vmem:[#allocation2 + $0x678] sm:$0xff] 0.0
          %507 = vst [vmem:[#allocation2 + $0x680] sm:$0xff] 0.0
          %508 = vst [vmem:[#allocation2 + $0x688] sm:$0xff] 0.0
          %509 = vst [vmem:[#allocation2 + $0x690] sm:$0xff] 0.0
          %510 = vst [vmem:[#allocation2 + $0x698] sm:$0xff] 0.0
          %511 = vst [vmem:[#allocation2 + $0x6a0] sm:$0xff] 0.0
          %512 = vst [vmem:[#allocation2 + $0x6a8] sm:$0xff] 0.0
          %513 = vst [vmem:[#allocation2 + $0x6b0] sm:$0xff] 0.0
          %514 = vst [vmem:[#allocation2 + $0x6b8] sm:$0xff] 0.0
          %515 = vst [vmem:[#allocation2 + $0x6c0] sm:$0xff] 0.0
          %516 = vst [vmem:[#allocation2 + $0x6c8] sm:$0xff] 0.0
          %517 = vst [vmem:[#allocation2 + $0x6d0] sm:$0xff] 0.0
          %518 = vst [vmem:[#allocation2 + $0x6d8] sm:$0xff] 0.0
          %519 = vst [vmem:[#allocation2 + $0x6e0] sm:$0xff] 0.0
          %520 = vst [vmem:[#allocation2 + $0x6e8] sm:$0xff] 0.0
          %521 = vst [vmem:[#allocation2 + $0x6f0] sm:$0xff] 0.0
          %522 = vst [vmem:[#allocation2 + $0x6f8] sm:$0xff] 0.0
          %523 = vst [vmem:[#allocation2 + $0x700] sm:$0xff] 0.0
          %524 = vst [vmem:[#allocation2 + $0x708] sm:$0xff] 0.0
          %525 = vst [vmem:[#allocation2 + $0x710] sm:$0xff] 0.0
          %526 = vst [vmem:[#allocation2 + $0x718] sm:$0xff] 0.0
          %527 = vst [vmem:[#allocation2 + $0x720] sm:$0xff] 0.0
          %528 = vst [vmem:[#allocation2 + $0x728] sm:$0xff] 0.0
          %529 = vst [vmem:[#allocation2 + $0x730] sm:$0xff] 0.0
          %530 = vst [vmem:[#allocation2 + $0x738] sm:$0xff] 0.0
          %531 = vst [vmem:[#allocation2 + $0x740] sm:$0xff] 0.0
          %532 = vst [vmem:[#allocation2 + $0x748] sm:$0xff] 0.0
          %533 = vst [vmem:[#allocation2 + $0x750] sm:$0xff] 0.0
          %534 = vst [vmem:[#allocation2 + $0x758] sm:$0xff] 0.0
          %535 = vst [vmem:[#allocation2 + $0x760] sm:$0xff] 0.0
          %536 = vst [vmem:[#allocation2 + $0x768] sm:$0xff] 0.0
          %537 = vst [vmem:[#allocation2 + $0x770] sm:$0xff] 0.0
          %538 = vst [vmem:[#allocation2 + $0x778] sm:$0xff] 0.0
          %539 = vst [vmem:[#allocation2 + $0x780] sm:$0xff] 0.0
          %540 = vst [vmem:[#allocation2 + $0x788] sm:$0xff] 0.0
          %541 = vst [vmem:[#allocation2 + $0x790] sm:$0xff] 0.0
          %542 = vst [vmem:[#allocation2 + $0x798] sm:$0xff] 0.0
          %543 = vst [vmem:[#allocation2 + $0x7a0] sm:$0xff] 0.0
          %544 = vst [vmem:[#allocation2 + $0x7a8] sm:$0xff] 0.0
          %545 = vst [vmem:[#allocation2 + $0x7b0] sm:$0xff] 0.0
          %546 = vst [vmem:[#allocation2 + $0x7b8] sm:$0xff] 0.0
          %547 = vst [vmem:[#allocation2 + $0x7c0] sm:$0xff] 0.0
          %548 = vst [vmem:[#allocation2 + $0x7c8] sm:$0xff] 0.0
          %549 = vst [vmem:[#allocation2 + $0x7d0] sm:$0xff] 0.0
          %550 = vst [vmem:[#allocation2 + $0x7d8] sm:$0xff] 0.0
          %551 = vst [vmem:[#allocation2 + $0x7e0] sm:$0xff] 0.0
          %552 = vst [vmem:[#allocation2 + $0x7e8] sm:$0xff] 0.0
          %553 = vst [vmem:[#allocation2 + $0x7f0] sm:$0xff] 0.0
          %554 = vst [vmem:[#allocation2 + $0x7f8] sm:$0xff] 0.0
          %555 = vst [vmem:[#allocation3] sm:$0xff] 0.0
          %556 = vst [vmem:[#allocation3 + $0x8] sm:$0xff] 0.0
          %557 = vst [vmem:[#allocation3 + $0x10] sm:$0xff] 0.0
          %558 = vst [vmem:[#allocation3 + $0x18] sm:$0xff] 0.0
          %559 = vst [vmem:[#allocation3 + $0x20] sm:$0xff] 0.0
          %560 = vst [vmem:[#allocation3 + $0x28] sm:$0xff] 0.0
          %561 = vst [vmem:[#allocation3 + $0x30] sm:$0xff] 0.0
          %562 = vst [vmem:[#allocation3 + $0x38] sm:$0xff] 0.0
          %563 = vst [vmem:[#allocation3 + $0x40] sm:$0xff] 0.0
          %564 = vst [vmem:[#allocation3 + $0x48] sm:$0xff] 0.0
          %565 = vst [vmem:[#allocation3 + $0x50] sm:$0xff] 0.0
          %566 = vst [vmem:[#allocation3 + $0x58] sm:$0xff] 0.0
          %567 = vst [vmem:[#allocation3 + $0x60] sm:$0xff] 0.0
          %568 = vst [vmem:[#allocation3 + $0x68] sm:$0xff] 0.0
          %569 = vst [vmem:[#allocation3 + $0x70] sm:$0xff] 0.0
          %570 = vst [vmem:[#allocation3 + $0x78] sm:$0xff] 0.0
          %571 = vst [vmem:[#allocation3 + $0x80] sm:$0xff] 0.0
          %572 = vst [vmem:[#allocation3 + $0x88] sm:$0xff] 0.0
          %573 = vst [vmem:[#allocation3 + $0x90] sm:$0xff] 0.0
          %574 = vst [vmem:[#allocation3 + $0x98] sm:$0xff] 0.0
          %575 = vst [vmem:[#allocation3 + $0xa0] sm:$0xff] 0.0
          %576 = vst [vmem:[#allocation3 + $0xa8] sm:$0xff] 0.0
          %577 = vst [vmem:[#allocation3 + $0xb0] sm:$0xff] 0.0
          %578 = vst [vmem:[#allocation3 + $0xb8] sm:$0xff] 0.0
          %579 = vst [vmem:[#allocation3 + $0xc0] sm:$0xff] 0.0
          %580 = vst [vmem:[#allocation3 + $0xc8] sm:$0xff] 0.0
          %581 = vst [vmem:[#allocation3 + $0xd0] sm:$0xff] 0.0
          %582 = vst [vmem:[#allocation3 + $0xd8] sm:$0xff] 0.0
          %583 = vst [vmem:[#allocation3 + $0xe0] sm:$0xff] 0.0
          %584 = vst [vmem:[#allocation3 + $0xe8] sm:$0xff] 0.0
          %585 = vst [vmem:[#allocation3 + $0xf0] sm:$0xff] 0.0
          %586 = vst [vmem:[#allocation3 + $0xf8] sm:$0xff] 0.0
          %587 = vst [vmem:[#allocation3 + $0x100] sm:$0xff] 0.0
          %588 = vst [vmem:[#allocation3 + $0x108] sm:$0xff] 0.0
          %589 = vst [vmem:[#allocation3 + $0x110] sm:$0xff] 0.0
          %590 = vst [vmem:[#allocation3 + $0x118] sm:$0xff] 0.0
          %591 = vst [vmem:[#allocation3 + $0x120] sm:$0xff] 0.0
          %592 = vst [vmem:[#allocation3 + $0x128] sm:$0xff] 0.0
          %593 = vst [vmem:[#allocation3 + $0x130] sm:$0xff] 0.0
          %594 = vst [vmem:[#allocation3 + $0x138] sm:$0xff] 0.0
          %595 = vst [vmem:[#allocation3 + $0x140] sm:$0xff] 0.0
          %596 = vst [vmem:[#allocation3 + $0x148] sm:$0xff] 0.0
          %597 = vst [vmem:[#allocation3 + $0x150] sm:$0xff] 0.0
          %598 = vst [vmem:[#allocation3 + $0x158] sm:$0xff] 0.0
          %599 = vst [vmem:[#allocation3 + $0x160] sm:$0xff] 0.0
          %600 = vst [vmem:[#allocation3 + $0x168] sm:$0xff] 0.0
          %601 = vst [vmem:[#allocation3 + $0x170] sm:$0xff] 0.0
          %602 = vst [vmem:[#allocation3 + $0x178] sm:$0xff] 0.0
          %603 = vst [vmem:[#allocation3 + $0x180] sm:$0xff] 0.0
          %604 = vst [vmem:[#allocation3 + $0x188] sm:$0xff] 0.0
          %605 = vst [vmem:[#allocation3 + $0x190] sm:$0xff] 0.0
          %606 = vst [vmem:[#allocation3 + $0x198] sm:$0xff] 0.0
          %607 = vst [vmem:[#allocation3 + $0x1a0] sm:$0xff] 0.0
          %608 = vst [vmem:[#allocation3 + $0x1a8] sm:$0xff] 0.0
          %609 = vst [vmem:[#allocation3 + $0x1b0] sm:$0xff] 0.0
          %610 = vst [vmem:[#allocation3 + $0x1b8] sm:$0xff] 0.0
          %611 = vst [vmem:[#allocation3 + $0x1c0] sm:$0xff] 0.0
          %612 = vst [vmem:[#allocation3 + $0x1c8] sm:$0xff] 0.0
          %613 = vst [vmem:[#allocation3 + $0x1d0] sm:$0xff] 0.0
          %614 = vst [vmem:[#allocation3 + $0x1d8] sm:$0xff] 0.0
          %615 = vst [vmem:[#allocation3 + $0x1e0] sm:$0xff] 0.0
          %616 = vst [vmem:[#allocation3 + $0x1e8] sm:$0xff] 0.0
          %617 = vst [vmem:[#allocation3 + $0x1f0] sm:$0xff] 0.0
          %618 = vst [vmem:[#allocation3 + $0x1f8] sm:$0xff] 0.0
          %619 = vst [vmem:[#allocation3 + $0x200] sm:$0xff] 0.0
          %620 = vst [vmem:[#allocation3 + $0x208] sm:$0xff] 0.0
          %621 = vst [vmem:[#allocation3 + $0x210] sm:$0xff] 0.0
          %622 = vst [vmem:[#allocation3 + $0x218] sm:$0xff] 0.0
          %623 = vst [vmem:[#allocation3 + $0x220] sm:$0xff] 0.0
          %624 = vst [vmem:[#allocation3 + $0x228] sm:$0xff] 0.0
          %625 = vst [vmem:[#allocation3 + $0x230] sm:$0xff] 0.0
          %626 = vst [vmem:[#allocation3 + $0x238] sm:$0xff] 0.0
          %627 = vst [vmem:[#allocation3 + $0x240] sm:$0xff] 0.0
          %628 = vst [vmem:[#allocation3 + $0x248] sm:$0xff] 0.0
          %629 = vst [vmem:[#allocation3 + $0x250] sm:$0xff] 0.0
          %630 = vst [vmem:[#allocation3 + $0x258] sm:$0xff] 0.0
          %631 = vst [vmem:[#allocation3 + $0x260] sm:$0xff] 0.0
          %632 = vst [vmem:[#allocation3 + $0x268] sm:$0xff] 0.0
          %633 = vst [vmem:[#allocation3 + $0x270] sm:$0xff] 0.0
          %634 = vst [vmem:[#allocation3 + $0x278] sm:$0xff] 0.0
          %635 = vst [vmem:[#allocation3 + $0x280] sm:$0xff] 0.0
          %636 = vst [vmem:[#allocation3 + $0x288] sm:$0xff] 0.0
          %637 = vst [vmem:[#allocation3 + $0x290] sm:$0xff] 0.0
          %638 = vst [vmem:[#allocation3 + $0x298] sm:$0xff] 0.0
          %639 = vst [vmem:[#allocation3 + $0x2a0] sm:$0xff] 0.0
          %640 = vst [vmem:[#allocation3 + $0x2a8] sm:$0xff] 0.0
          %641 = vst [vmem:[#allocation3 + $0x2b0] sm:$0xff] 0.0
          %642 = vst [vmem:[#allocation3 + $0x2b8] sm:$0xff] 0.0
          %643 = vst [vmem:[#allocation3 + $0x2c0] sm:$0xff] 0.0
          %644 = vst [vmem:[#allocation3 + $0x2c8] sm:$0xff] 0.0
          %645 = vst [vmem:[#allocation3 + $0x2d0] sm:$0xff] 0.0
          %646 = vst [vmem:[#allocation3 + $0x2d8] sm:$0xff] 0.0
          %647 = vst [vmem:[#allocation3 + $0x2e0] sm:$0xff] 0.0
          %648 = vst [vmem:[#allocation3 + $0x2e8] sm:$0xff] 0.0
          %649 = vst [vmem:[#allocation3 + $0x2f0] sm:$0xff] 0.0
          %650 = vst [vmem:[#allocation3 + $0x2f8] sm:$0xff] 0.0
          %651 = vst [vmem:[#allocation3 + $0x300] sm:$0xff] 0.0
          %652 = vst [vmem:[#allocation3 + $0x308] sm:$0xff] 0.0
          %653 = vst [vmem:[#allocation3 + $0x310] sm:$0xff] 0.0
          %654 = vst [vmem:[#allocation3 + $0x318] sm:$0xff] 0.0
          %655 = vst [vmem:[#allocation3 + $0x320] sm:$0xff] 0.0
          %656 = vst [vmem:[#allocation3 + $0x328] sm:$0xff] 0.0
          %657 = vst [vmem:[#allocation3 + $0x330] sm:$0xff] 0.0
          %658 = vst [vmem:[#allocation3 + $0x338] sm:$0xff] 0.0
          %659 = vst [vmem:[#allocation3 + $0x340] sm:$0xff] 0.0
          %660 = vst [vmem:[#allocation3 + $0x348] sm:$0xff] 0.0
          %661 = vst [vmem:[#allocation3 + $0x350] sm:$0xff] 0.0
          %662 = vst [vmem:[#allocation3 + $0x358] sm:$0xff] 0.0
          %663 = vst [vmem:[#allocation3 + $0x360] sm:$0xff] 0.0
          %664 = vst [vmem:[#allocation3 + $0x368] sm:$0xff] 0.0
          %665 = vst [vmem:[#allocation3 + $0x370] sm:$0xff] 0.0
          %666 = vst [vmem:[#allocation3 + $0x378] sm:$0xff] 0.0
          %667 = vst [vmem:[#allocation3 + $0x380] sm:$0xff] 0.0
          %668 = vst [vmem:[#allocation3 + $0x388] sm:$0xff] 0.0
          %669 = vst [vmem:[#allocation3 + $0x390] sm:$0xff] 0.0
          %670 = vst [vmem:[#allocation3 + $0x398] sm:$0xff] 0.0
          %671 = vst [vmem:[#allocation3 + $0x3a0] sm:$0xff] 0.0
          %672 = vst [vmem:[#allocation3 + $0x3a8] sm:$0xff] 0.0
          %673 = vst [vmem:[#allocation3 + $0x3b0] sm:$0xff] 0.0
          %674 = vst [vmem:[#allocation3 + $0x3b8] sm:$0xff] 0.0
          %675 = vst [vmem:[#allocation3 + $0x3c0] sm:$0xff] 0.0
          %676 = vst [vmem:[#allocation3 + $0x3c8] sm:$0xff] 0.0
          %677 = vst [vmem:[#allocation3 + $0x3d0] sm:$0xff] 0.0
          %678 = vst [vmem:[#allocation3 + $0x3d8] sm:$0xff] 0.0
          %679 = vst [vmem:[#allocation3 + $0x3e0] sm:$0xff] 0.0
          %680 = vst [vmem:[#allocation3 + $0x3e8] sm:$0xff] 0.0
          %681 = vst [vmem:[#allocation3 + $0x3f0] sm:$0xff] 0.0
          %682 = vst [vmem:[#allocation3 + $0x3f8] sm:$0xff] 0.0
          %683 = vst [vmem:[#allocation3 + $0x400] sm:$0xff] 0.0
          %684 = vst [vmem:[#allocation3 + $0x408] sm:$0xff] 0.0
          %685 = vst [vmem:[#allocation3 + $0x410] sm:$0xff] 0.0
          %686 = vst [vmem:[#allocation3 + $0x418] sm:$0xff] 0.0
          %687 = vst [vmem:[#allocation3 + $0x420] sm:$0xff] 0.0
          %688 = vst [vmem:[#allocation3 + $0x428] sm:$0xff] 0.0
          %689 = vst [vmem:[#allocation3 + $0x430] sm:$0xff] 0.0
          %690 = vst [vmem:[#allocation3 + $0x438] sm:$0xff] 0.0
          %691 = vst [vmem:[#allocation3 + $0x440] sm:$0xff] 0.0
          %692 = vst [vmem:[#allocation3 + $0x448] sm:$0xff] 0.0
          %693 = vst [vmem:[#allocation3 + $0x450] sm:$0xff] 0.0
          %694 = vst [vmem:[#allocation3 + $0x458] sm:$0xff] 0.0
          %695 = vst [vmem:[#allocation3 + $0x460] sm:$0xff] 0.0
          %696 = vst [vmem:[#allocation3 + $0x468] sm:$0xff] 0.0
          %697 = vst [vmem:[#allocation3 + $0x470] sm:$0xff] 0.0
          %698 = vst [vmem:[#allocation3 + $0x478] sm:$0xff] 0.0
          %699 = vst [vmem:[#allocation3 + $0x480] sm:$0xff] 0.0
          %700 = vst [vmem:[#allocation3 + $0x488] sm:$0xff] 0.0
          %701 = vst [vmem:[#allocation3 + $0x490] sm:$0xff] 0.0
          %702 = vst [vmem:[#allocation3 + $0x498] sm:$0xff] 0.0
          %703 = vst [vmem:[#allocation3 + $0x4a0] sm:$0xff] 0.0
          %704 = vst [vmem:[#allocation3 + $0x4a8] sm:$0xff] 0.0
          %705 = vst [vmem:[#allocation3 + $0x4b0] sm:$0xff] 0.0
          %706 = vst [vmem:[#allocation3 + $0x4b8] sm:$0xff] 0.0
          %707 = vst [vmem:[#allocation3 + $0x4c0] sm:$0xff] 0.0
          %708 = vst [vmem:[#allocation3 + $0x4c8] sm:$0xff] 0.0
          %709 = vst [vmem:[#allocation3 + $0x4d0] sm:$0xff] 0.0
          %710 = vst [vmem:[#allocation3 + $0x4d8] sm:$0xff] 0.0
          %711 = vst [vmem:[#allocation3 + $0x4e0] sm:$0xff] 0.0
          %712 = vst [vmem:[#allocation3 + $0x4e8] sm:$0xff] 0.0
          %713 = vst [vmem:[#allocation3 + $0x4f0] sm:$0xff] 0.0
          %714 = vst [vmem:[#allocation3 + $0x4f8] sm:$0xff] 0.0
          %715 = vst [vmem:[#allocation3 + $0x500] sm:$0xff] 0.0
          %716 = vst [vmem:[#allocation3 + $0x508] sm:$0xff] 0.0
          %717 = vst [vmem:[#allocation3 + $0x510] sm:$0xff] 0.0
          %718 = vst [vmem:[#allocation3 + $0x518] sm:$0xff] 0.0
          %719 = vst [vmem:[#allocation3 + $0x520] sm:$0xff] 0.0
          %720 = vst [vmem:[#allocation3 + $0x528] sm:$0xff] 0.0
          %721 = vst [vmem:[#allocation3 + $0x530] sm:$0xff] 0.0
          %722 = vst [vmem:[#allocation3 + $0x538] sm:$0xff] 0.0
          %723 = vst [vmem:[#allocation3 + $0x540] sm:$0xff] 0.0
          %724 = vst [vmem:[#allocation3 + $0x548] sm:$0xff] 0.0
          %725 = vst [vmem:[#allocation3 + $0x550] sm:$0xff] 0.0
          %726 = vst [vmem:[#allocation3 + $0x558] sm:$0xff] 0.0
          %727 = vst [vmem:[#allocation3 + $0x560] sm:$0xff] 0.0
          %728 = vst [vmem:[#allocation3 + $0x568] sm:$0xff] 0.0
          %729 = vst [vmem:[#allocation3 + $0x570] sm:$0xff] 0.0
          %730 = vst [vmem:[#allocation3 + $0x578] sm:$0xff] 0.0
          %731 = vst [vmem:[#allocation3 + $0x580] sm:$0xff] 0.0
          %732 = vst [vmem:[#allocation3 + $0x588] sm:$0xff] 0.0
          %733 = vst [vmem:[#allocation3 + $0x590] sm:$0xff] 0.0
          %734 = vst [vmem:[#allocation3 + $0x598] sm:$0xff] 0.0
          %735 = vst [vmem:[#allocation3 + $0x5a0] sm:$0xff] 0.0
          %736 = vst [vmem:[#allocation3 + $0x5a8] sm:$0xff] 0.0
          %737 = vst [vmem:[#allocation3 + $0x5b0] sm:$0xff] 0.0
          %738 = vst [vmem:[#allocation3 + $0x5b8] sm:$0xff] 0.0
          %739 = vst [vmem:[#allocation3 + $0x5c0] sm:$0xff] 0.0
          %740 = vst [vmem:[#allocation3 + $0x5c8] sm:$0xff] 0.0
          %741 = vst [vmem:[#allocation3 + $0x5d0] sm:$0xff] 0.0
          %742 = vst [vmem:[#allocation3 + $0x5d8] sm:$0xff] 0.0
          %743 = vst [vmem:[#allocation3 + $0x5e0] sm:$0xff] 0.0
          %744 = vst [vmem:[#allocation3 + $0x5e8] sm:$0xff] 0.0
          %745 = vst [vmem:[#allocation3 + $0x5f0] sm:$0xff] 0.0
          %746 = vst [vmem:[#allocation3 + $0x5f8] sm:$0xff] 0.0
          %747 = vst [vmem:[#allocation3 + $0x600] sm:$0xff] 0.0
          %748 = vst [vmem:[#allocation3 + $0x608] sm:$0xff] 0.0
          %749 = vst [vmem:[#allocation3 + $0x610] sm:$0xff] 0.0
          %750 = vst [vmem:[#allocation3 + $0x618] sm:$0xff] 0.0
          %751 = vst [vmem:[#allocation3 + $0x620] sm:$0xff] 0.0
          %752 = vst [vmem:[#allocation3 + $0x628] sm:$0xff] 0.0
          %753 = vst [vmem:[#allocation3 + $0x630] sm:$0xff] 0.0
          %754 = vst [vmem:[#allocation3 + $0x638] sm:$0xff] 0.0
          %755 = vst [vmem:[#allocation3 + $0x640] sm:$0xff] 0.0
          %756 = vst [vmem:[#allocation3 + $0x648] sm:$0xff] 0.0
          %757 = vst [vmem:[#allocation3 + $0x650] sm:$0xff] 0.0
          %758 = vst [vmem:[#allocation3 + $0x658] sm:$0xff] 0.0
          %759 = vst [vmem:[#allocation3 + $0x660] sm:$0xff] 0.0
          %760 = vst [vmem:[#allocation3 + $0x668] sm:$0xff] 0.0
          %761 = vst [vmem:[#allocation3 + $0x670] sm:$0xff] 0.0
          %762 = vst [vmem:[#allocation3 + $0x678] sm:$0xff] 0.0
          %763 = vst [vmem:[#allocation3 + $0x680] sm:$0xff] 0.0
          %764 = vst [vmem:[#allocation3 + $0x688] sm:$0xff] 0.0
          %765 = vst [vmem:[#allocation3 + $0x690] sm:$0xff] 0.0
          %766 = vst [vmem:[#allocation3 + $0x698] sm:$0xff] 0.0
          %767 = vst [vmem:[#allocation3 + $0x6a0] sm:$0xff] 0.0
          %768 = vst [vmem:[#allocation3 + $0x6a8] sm:$0xff] 0.0
          %769 = vst [vmem:[#allocation3 + $0x6b0] sm:$0xff] 0.0
          %770 = vst [vmem:[#allocation3 + $0x6b8] sm:$0xff] 0.0
          %771 = vst [vmem:[#allocation3 + $0x6c0] sm:$0xff] 0.0
          %772 = vst [vmem:[#allocation3 + $0x6c8] sm:$0xff] 0.0
          %773 = vst [vmem:[#allocation3 + $0x6d0] sm:$0xff] 0.0
          %774 = vst [vmem:[#allocation3 + $0x6d8] sm:$0xff] 0.0
          %775 = vst [vmem:[#allocation3 + $0x6e0] sm:$0xff] 0.0
          %776 = vst [vmem:[#allocation3 + $0x6e8] sm:$0xff] 0.0
          %777 = vst [vmem:[#allocation3 + $0x6f0] sm:$0xff] 0.0
          %778 = vst [vmem:[#allocation3 + $0x6f8] sm:$0xff] 0.0
          %779 = vst [vmem:[#allocation3 + $0x700] sm:$0xff] 0.0
          %780 = vst [vmem:[#allocation3 + $0x708] sm:$0xff] 0.0
          %781 = vst [vmem:[#allocation3 + $0x710] sm:$0xff] 0.0
          %782 = vst [vmem:[#allocation3 + $0x718] sm:$0xff] 0.0
          %783 = vst [vmem:[#allocation3 + $0x720] sm:$0xff] 0.0
          %784 = vst [vmem:[#allocation3 + $0x728] sm:$0xff] 0.0
          %785 = vst [vmem:[#allocation3 + $0x730] sm:$0xff] 0.0
          %786 = vst [vmem:[#allocation3 + $0x738] sm:$0xff] 0.0
          %787 = vst [vmem:[#allocation3 + $0x740] sm:$0xff] 0.0
          %788 = vst [vmem:[#allocation3 + $0x748] sm:$0xff] 0.0
          %789 = vst [vmem:[#allocation3 + $0x750] sm:$0xff] 0.0
          %790 = vst [vmem:[#allocation3 + $0x758] sm:$0xff] 0.0
          %791 = vst [vmem:[#allocation3 + $0x760] sm:$0xff] 0.0
          %792 = vst [vmem:[#allocation3 + $0x768] sm:$0xff] 0.0
          %793 = vst [vmem:[#allocation3 + $0x770] sm:$0xff] 0.0
          %794 = vst [vmem:[#allocation3 + $0x778] sm:$0xff] 0.0
          %795 = vst [vmem:[#allocation3 + $0x780] sm:$0xff] 0.0
          %796 = vst [vmem:[#allocation3 + $0x788] sm:$0xff] 0.0
          %797 = vst [vmem:[#allocation3 + $0x790] sm:$0xff] 0.0
          %798 = vst [vmem:[#allocation3 + $0x798] sm:$0xff] 0.0
          %799 = vst [vmem:[#allocation3 + $0x7a0] sm:$0xff] 0.0
          %800 = vst [vmem:[#allocation3 + $0x7a8] sm:$0xff] 0.0
          %801 = vst [vmem:[#allocation3 + $0x7b0] sm:$0xff] 0.0
          %802 = vst [vmem:[#allocation3 + $0x7b8] sm:$0xff] 0.0
          %803 = vst [vmem:[#allocation3 + $0x7c0] sm:$0xff] 0.0
          %804 = vst [vmem:[#allocation3 + $0x7c8] sm:$0xff] 0.0
          %805 = vst [vmem:[#allocation3 + $0x7d0] sm:$0xff] 0.0
          %806 = vst [vmem:[#allocation3 + $0x7d8] sm:$0xff] 0.0
          %807 = vst [vmem:[#allocation3 + $0x7e0] sm:$0xff] 0.0
          %808 = vst [vmem:[#allocation3 + $0x7e8] sm:$0xff] 0.0
          %809 = vst [vmem:[#allocation3 + $0x7f0] sm:$0xff] 0.0
          %810 = vst [vmem:[#allocation3 + $0x7f8] sm:$0xff] 0.0
        $region36: #{masked_l1_loss.1} parent=31 // pred_fallthru
          _
        %v811 = vld [vmem:[%s288] sm:$0xff]
        %v812 = vld [vmem:[%s288 + $0x8] sm:$0xff]
        %v813 = vld [vmem:[%s288 + $0x10] sm:$0xff]
        %v814 = vld [vmem:[%s288 + $0x18] sm:$0xff]
        %v815 = vld [vmem:[%s288 + $0x20] sm:$0xff]
        %v816 = vld [vmem:[%s288 + $0x28] sm:$0xff]
        %v817 = vld [vmem:[%s288 + $0x30] sm:$0xff]
        %v818 = vld [vmem:[%s288 + $0x38] sm:$0xff]
        %v819 = vld [vmem:[%s288 + $0x40] sm:$0xff]
        %v820 = vld [vmem:[%s288 + $0x48] sm:$0xff]
        %v821 = vld [vmem:[%s288 + $0x50] sm:$0xff]
        %v822 = vld [vmem:[%s288 + $0x58] sm:$0xff]
        %v823 = vld [vmem:[%s288 + $0x60] sm:$0xff]
        %v824 = vld [vmem:[%s288 + $0x68] sm:$0xff]
        %v825 = vld [vmem:[%s288 + $0x70] sm:$0xff]
        %v826 = vld [vmem:[%s288 + $0x78] sm:$0xff]
        %v827 = vld [vmem:[%s288 + $0x80] sm:$0xff]
        %v828 = vld [vmem:[%s288 + $0x88] sm:$0xff]
        %v829 = vld [vmem:[%s288 + $0x90] sm:$0xff]
        %v830 = vld [vmem:[%s288 + $0x98] sm:$0xff]
        %v831 = vld [vmem:[%s288 + $0xa0] sm:$0xff]
        %v832 = vld [vmem:[%s288 + $0xa8] sm:$0xff]
        %v833 = vld [vmem:[%s288 + $0xb0] sm:$0xff]
        %v834 = vld [vmem:[%s288 + $0xb8] sm:$0xff]
        %v835 = vld [vmem:[%s288 + $0xc0] sm:$0xff]
        %v836 = vld [vmem:[%s288 + $0xc8] sm:$0xff]
        %v837 = vld [vmem:[%s288 + $0xd0] sm:$0xff]
        %v838 = vld [vmem:[%s288 + $0xd8] sm:$0xff]
        %v839 = vld [vmem:[%s288 + $0xe0] sm:$0xff]
        %v840 = vld [vmem:[%s288 + $0xe8] sm:$0xff]
        %v841 = vld [vmem:[%s288 + $0xf0] sm:$0xff]
        %v842 = vld [vmem:[%s288 + $0xf8] sm:$0xff]
        %v843 = vld [vmem:[%s288 + $0x100] sm:$0xff]
        %v844 = vld [vmem:[%s288 + $0x108] sm:$0xff]
        %v845 = vld [vmem:[%s288 + $0x110] sm:$0xff]
        %v846 = vld [vmem:[%s288 + $0x118] sm:$0xff]
        %v847 = vld [vmem:[%s288 + $0x120] sm:$0xff]
        %v848 = vld [vmem:[%s288 + $0x128] sm:$0xff]
        %v849 = vld [vmem:[%s288 + $0x130] sm:$0xff]
        %v850 = vld [vmem:[%s288 + $0x138] sm:$0xff]
        %v851 = vld [vmem:[%s288 + $0x140] sm:$0xff]
        %v852 = vld [vmem:[%s288 + $0x148] sm:$0xff]
        %v853 = vld [vmem:[%s288 + $0x150] sm:$0xff]
        %v854 = vld [vmem:[%s288 + $0x158] sm:$0xff]
        %v855 = vld [vmem:[%s288 + $0x160] sm:$0xff]
        %v856 = vld [vmem:[%s288 + $0x168] sm:$0xff]
        %v857 = vld [vmem:[%s288 + $0x170] sm:$0xff]
        %v858 = vld [vmem:[%s288 + $0x178] sm:$0xff]
        %v859 = vld [vmem:[%s288 + $0x180] sm:$0xff]
        %v860 = vld [vmem:[%s288 + $0x188] sm:$0xff]
        %v861 = vld [vmem:[%s288 + $0x190] sm:$0xff]
        %v862 = vld [vmem:[%s288 + $0x198] sm:$0xff]
        %v863 = vld [vmem:[%s288 + $0x1a0] sm:$0xff]
        %v864 = vld [vmem:[%s288 + $0x1a8] sm:$0xff]
        %v865 = vld [vmem:[%s288 + $0x1b0] sm:$0xff]
        %v866 = vld [vmem:[%s288 + $0x1b8] sm:$0xff]
        %v867 = vld [vmem:[%s288 + $0x1c0] sm:$0xff]
        %v868 = vld [vmem:[%s288 + $0x1c8] sm:$0xff]
        %v869 = vld [vmem:[%s288 + $0x1d0] sm:$0xff]
        %v870 = vld [vmem:[%s288 + $0x1d8] sm:$0xff]
        %v871 = vld [vmem:[%s288 + $0x1e0] sm:$0xff]
        %v872 = vld [vmem:[%s288 + $0x1e8] sm:$0xff]
        %v873 = vld [vmem:[%s288 + $0x1f0] sm:$0xff]
        %v874 = vld [vmem:[%s288 + $0x1f8] sm:$0xff]
        %v875 = vld [vmem:[%s288 + $0x200] sm:$0xff]
        %v876 = vld [vmem:[%s288 + $0x208] sm:$0xff]
        %v877 = vld [vmem:[%s288 + $0x210] sm:$0xff]
        %v878 = vld [vmem:[%s288 + $0x218] sm:$0xff]
        %v879 = vld [vmem:[%s288 + $0x220] sm:$0xff]
        %v880 = vld [vmem:[%s288 + $0x228] sm:$0xff]
        %v881 = vld [vmem:[%s288 + $0x230] sm:$0xff]
        %v882 = vld [vmem:[%s288 + $0x238] sm:$0xff]
        %v883 = vld [vmem:[%s288 + $0x240] sm:$0xff]
        %v884 = vld [vmem:[%s288 + $0x248] sm:$0xff]
        %v885 = vld [vmem:[%s288 + $0x250] sm:$0xff]
        %v886 = vld [vmem:[%s288 + $0x258] sm:$0xff]
        %v887 = vld [vmem:[%s288 + $0x260] sm:$0xff]
        %v888 = vld [vmem:[%s288 + $0x268] sm:$0xff]
        %v889 = vld [vmem:[%s288 + $0x270] sm:$0xff]
        %v890 = vld [vmem:[%s288 + $0x278] sm:$0xff]
        %v891 = vld [vmem:[%s288 + $0x280] sm:$0xff]
        %v892 = vld [vmem:[%s288 + $0x288] sm:$0xff]
        %v893 = vld [vmem:[%s288 + $0x290] sm:$0xff]
        %v894 = vld [vmem:[%s288 + $0x298] sm:$0xff]
        %v895 = vld [vmem:[%s288 + $0x2a0] sm:$0xff]
        %v896 = vld [vmem:[%s288 + $0x2a8] sm:$0xff]
        %v897 = vld [vmem:[%s288 + $0x2b0] sm:$0xff]
        %v898 = vld [vmem:[%s288 + $0x2b8] sm:$0xff]
        %v899 = vld [vmem:[%s288 + $0x2c0] sm:$0xff]
        %v900 = vld [vmem:[%s288 + $0x2c8] sm:$0xff]
        %v901 = vld [vmem:[%s288 + $0x2d0] sm:$0xff]
        %v902 = vld [vmem:[%s288 + $0x2d8] sm:$0xff]
        %v903 = vld [vmem:[%s288 + $0x2e0] sm:$0xff]
        %v904 = vld [vmem:[%s288 + $0x2e8] sm:$0xff]
        %v905 = vld [vmem:[%s288 + $0x2f0] sm:$0xff]
        %v906 = vld [vmem:[%s288 + $0x2f8] sm:$0xff]
        %v907 = vld [vmem:[%s288 + $0x300] sm:$0xff]
        %v908 = vld [vmem:[%s288 + $0x308] sm:$0xff]
        %v909 = vld [vmem:[%s288 + $0x310] sm:$0xff]
        %v910 = vld [vmem:[%s288 + $0x318] sm:$0xff]
        %v911 = vld [vmem:[%s288 + $0x320] sm:$0xff]
        %v912 = vld [vmem:[%s288 + $0x328] sm:$0xff]
        %v913 = vld [vmem:[%s288 + $0x330] sm:$0xff]
        %v914 = vld [vmem:[%s288 + $0x338] sm:$0xff]
        %v915 = vld [vmem:[%s288 + $0x340] sm:$0xff]
        %v916 = vld [vmem:[%s288 + $0x348] sm:$0xff]
        %v917 = vld [vmem:[%s288 + $0x350] sm:$0xff]
        %v918 = vld [vmem:[%s288 + $0x358] sm:$0xff]
        %v919 = vld [vmem:[%s288 + $0x360] sm:$0xff]
        %v920 = vld [vmem:[%s288 + $0x368] sm:$0xff]
        %v921 = vld [vmem:[%s288 + $0x370] sm:$0xff]
        %v922 = vld [vmem:[%s288 + $0x378] sm:$0xff]
        %v923 = vld [vmem:[%s288 + $0x380] sm:$0xff]
        %v924 = vld [vmem:[%s288 + $0x388] sm:$0xff]
        %v925 = vld [vmem:[%s288 + $0x390] sm:$0xff]
        %v926 = vld [vmem:[%s288 + $0x398] sm:$0xff]
        %v927 = vld [vmem:[%s288 + $0x3a0] sm:$0xff]
        %v928 = vld [vmem:[%s288 + $0x3a8] sm:$0xff]
        %v929 = vld [vmem:[%s288 + $0x3b0] sm:$0xff]
        %v930 = vld [vmem:[%s288 + $0x3b8] sm:$0xff]
        %v931 = vld [vmem:[%s288 + $0x3c0] sm:$0xff]
        %v932 = vld [vmem:[%s288 + $0x3c8] sm:$0xff]
        %v933 = vld [vmem:[%s288 + $0x3d0] sm:$0xff]
        %v934 = vld [vmem:[%s288 + $0x3d8] sm:$0xff]
        %v935 = vld [vmem:[%s288 + $0x3e0] sm:$0xff]
        %v936 = vld [vmem:[%s288 + $0x3e8] sm:$0xff]
        %v937 = vld [vmem:[%s288 + $0x3f0] sm:$0xff]
        %v938 = vld [vmem:[%s288 + $0x3f8] sm:$0xff]
        %v939 = vld [vmem:[%s288 + $0x400] sm:$0xff]
        %v940 = vld [vmem:[%s288 + $0x408] sm:$0xff]
        %v941 = vld [vmem:[%s288 + $0x410] sm:$0xff]
        %v942 = vld [vmem:[%s288 + $0x418] sm:$0xff]
        %v943 = vld [vmem:[%s288 + $0x420] sm:$0xff]
        %v944 = vld [vmem:[%s288 + $0x428] sm:$0xff]
        %v945 = vld [vmem:[%s288 + $0x430] sm:$0xff]
        %v946 = vld [vmem:[%s288 + $0x438] sm:$0xff]
        %v947 = vld [vmem:[%s288 + $0x440] sm:$0xff]
        %v948 = vld [vmem:[%s288 + $0x448] sm:$0xff]
        %v949 = vld [vmem:[%s288 + $0x450] sm:$0xff]
        %v950 = vld [vmem:[%s288 + $0x458] sm:$0xff]
        %v951 = vld [vmem:[%s288 + $0x460] sm:$0xff]
        %v952 = vld [vmem:[%s288 + $0x468] sm:$0xff]
        %v953 = vld [vmem:[%s288 + $0x470] sm:$0xff]
        %v954 = vld [vmem:[%s288 + $0x478] sm:$0xff]
        %v955 = vld [vmem:[%s288 + $0x480] sm:$0xff]
        %v956 = vld [vmem:[%s288 + $0x488] sm:$0xff]
        %v957 = vld [vmem:[%s288 + $0x490] sm:$0xff]
        %v958 = vld [vmem:[%s288 + $0x498] sm:$0xff]
        %v959 = vld [vmem:[%s288 + $0x4a0] sm:$0xff]
        %v960 = vld [vmem:[%s288 + $0x4a8] sm:$0xff]
        %v961 = vld [vmem:[%s288 + $0x4b0] sm:$0xff]
        %v962 = vld [vmem:[%s288 + $0x4b8] sm:$0xff]
        %v963 = vld [vmem:[%s288 + $0x4c0] sm:$0xff]
        %v964 = vld [vmem:[%s288 + $0x4c8] sm:$0xff]
        %v965 = vld [vmem:[%s288 + $0x4d0] sm:$0xff]
        %v966 = vld [vmem:[%s288 + $0x4d8] sm:$0xff]
        %v967 = vld [vmem:[%s288 + $0x4e0] sm:$0xff]
        %v968 = vld [vmem:[%s288 + $0x4e8] sm:$0xff]
        %v969 = vld [vmem:[%s288 + $0x4f0] sm:$0xff]
        %v970 = vld [vmem:[%s288 + $0x4f8] sm:$0xff]
        %v971 = vld [vmem:[%s288 + $0x500] sm:$0xff]
        %v972 = vld [vmem:[%s288 + $0x508] sm:$0xff]
        %v973 = vld [vmem:[%s288 + $0x510] sm:$0xff]
        %v974 = vld [vmem:[%s288 + $0x518] sm:$0xff]
        %v975 = vld [vmem:[%s288 + $0x520] sm:$0xff]
        %v976 = vld [vmem:[%s288 + $0x528] sm:$0xff]
        %v977 = vld [vmem:[%s288 + $0x530] sm:$0xff]
        %v978 = vld [vmem:[%s288 + $0x538] sm:$0xff]
        %v979 = vld [vmem:[%s288 + $0x540] sm:$0xff]
        %v980 = vld [vmem:[%s288 + $0x548] sm:$0xff]
        %v981 = vld [vmem:[%s288 + $0x550] sm:$0xff]
        %v982 = vld [vmem:[%s288 + $0x558] sm:$0xff]
        %v983 = vld [vmem:[%s288 + $0x560] sm:$0xff]
        %v984 = vld [vmem:[%s288 + $0x568] sm:$0xff]
        %v985 = vld [vmem:[%s288 + $0x570] sm:$0xff]
        %v986 = vld [vmem:[%s288 + $0x578] sm:$0xff]
        %v987 = vld [vmem:[%s288 + $0x580] sm:$0xff]
        %v988 = vld [vmem:[%s288 + $0x588] sm:$0xff]
        %v989 = vld [vmem:[%s288 + $0x590] sm:$0xff]
        %v990 = vld [vmem:[%s288 + $0x598] sm:$0xff]
        %v991 = vld [vmem:[%s288 + $0x5a0] sm:$0xff]
        %v992 = vld [vmem:[%s288 + $0x5a8] sm:$0xff]
        %v993 = vld [vmem:[%s288 + $0x5b0] sm:$0xff]
        %v994 = vld [vmem:[%s288 + $0x5b8] sm:$0xff]
        %v995 = vld [vmem:[%s288 + $0x5c0] sm:$0xff]
        %v996 = vld [vmem:[%s288 + $0x5c8] sm:$0xff]
        %v997 = vld [vmem:[%s288 + $0x5d0] sm:$0xff]
        %v998 = vld [vmem:[%s288 + $0x5d8] sm:$0xff]
        %v999 = vld [vmem:[%s288 + $0x5e0] sm:$0xff]
        %v1000 = vld [vmem:[%s288 + $0x5e8] sm:$0xff]
        %v1001 = vld [vmem:[%s288 + $0x5f0] sm:$0xff]
        %v1002 = vld [vmem:[%s288 + $0x5f8] sm:$0xff]
        %v1003 = vld [vmem:[%s288 + $0x600] sm:$0xff]
        %v1004 = vld [vmem:[%s288 + $0x608] sm:$0xff]
        %v1005 = vld [vmem:[%s288 + $0x610] sm:$0xff]
        %v1006 = vld [vmem:[%s288 + $0x618] sm:$0xff]
        %v1007 = vld [vmem:[%s288 + $0x620] sm:$0xff]
        %v1008 = vld [vmem:[%s288 + $0x628] sm:$0xff]
        %v1009 = vld [vmem:[%s288 + $0x630] sm:$0xff]
        %v1010 = vld [vmem:[%s288 + $0x638] sm:$0xff]
        %v1011 = vld [vmem:[%s288 + $0x640] sm:$0xff]
        %v1012 = vld [vmem:[%s288 + $0x648] sm:$0xff]
        %v1013 = vld [vmem:[%s288 + $0x650] sm:$0xff]
        %v1014 = vld [vmem:[%s288 + $0x658] sm:$0xff]
        %v1015 = vld [vmem:[%s288 + $0x660] sm:$0xff]
        %v1016 = vld [vmem:[%s288 + $0x668] sm:$0xff]
        %v1017 = vld [vmem:[%s288 + $0x670] sm:$0xff]
        %v1018 = vld [vmem:[%s288 + $0x678] sm:$0xff]
        %v1019 = vld [vmem:[%s288 + $0x680] sm:$0xff]
        %v1020 = vld [vmem:[%s288 + $0x688] sm:$0xff]
        %v1021 = vld [vmem:[%s288 + $0x690] sm:$0xff]
        %v1022 = vld [vmem:[%s288 + $0x698] sm:$0xff]
        %v1023 = vld [vmem:[%s288 + $0x6a0] sm:$0xff]
        %v1024 = vld [vmem:[%s288 + $0x6a8] sm:$0xff]
        %v1025 = vld [vmem:[%s288 + $0x6b0] sm:$0xff]
        %v1026 = vld [vmem:[%s288 + $0x6b8] sm:$0xff]
        %v1027 = vld [vmem:[%s288 + $0x6c0] sm:$0xff]
        %v1028 = vld [vmem:[%s288 + $0x6c8] sm:$0xff]
        %v1029 = vld [vmem:[%s288 + $0x6d0] sm:$0xff]
        %v1030 = vld [vmem:[%s288 + $0x6d8] sm:$0xff]
        %v1031 = vld [vmem:[%s288 + $0x6e0] sm:$0xff]
        %v1032 = vld [vmem:[%s288 + $0x6e8] sm:$0xff]
        %v1033 = vld [vmem:[%s288 + $0x6f0] sm:$0xff]
        %v1034 = vld [vmem:[%s288 + $0x6f8] sm:$0xff]
        %v1035 = vld [vmem:[%s288 + $0x700] sm:$0xff]
        %v1036 = vld [vmem:[%s288 + $0x708] sm:$0xff]
        %v1037 = vld [vmem:[%s288 + $0x710] sm:$0xff]
        %v1038 = vld [vmem:[%s288 + $0x718] sm:$0xff]
        %v1039 = vld [vmem:[%s288 + $0x720] sm:$0xff]
        %v1040 = vld [vmem:[%s288 + $0x728] sm:$0xff]
        %v1041 = vld [vmem:[%s288 + $0x730] sm:$0xff]
        %v1042 = vld [vmem:[%s288 + $0x738] sm:$0xff]
        %v1043 = vld [vmem:[%s288 + $0x740] sm:$0xff]
        %v1044 = vld [vmem:[%s288 + $0x748] sm:$0xff]
        %v1045 = vld [vmem:[%s288 + $0x750] sm:$0xff]
        %v1046 = vld [vmem:[%s288 + $0x758] sm:$0xff]
        %v1047 = vld [vmem:[%s288 + $0x760] sm:$0xff]
        %v1048 = vld [vmem:[%s288 + $0x768] sm:$0xff]
        %v1049 = vld [vmem:[%s288 + $0x770] sm:$0xff]
        %v1050 = vld [vmem:[%s288 + $0x778] sm:$0xff]
        %v1051 = vld [vmem:[%s288 + $0x780] sm:$0xff]
        %v1052 = vld [vmem:[%s288 + $0x788] sm:$0xff]
        %v1053 = vld [vmem:[%s288 + $0x790] sm:$0xff]
        %v1054 = vld [vmem:[%s288 + $0x798] sm:$0xff]
        %v1055 = vld [vmem:[%s288 + $0x7a0] sm:$0xff]
        %v1056 = vld [vmem:[%s288 + $0x7a8] sm:$0xff]
        %v1057 = vld [vmem:[%s288 + $0x7b0] sm:$0xff]
        %v1058 = vld [vmem:[%s288 + $0x7b8] sm:$0xff]
        %v1059 = vld [vmem:[%s288 + $0x7c0] sm:$0xff]
        %v1060 = vld [vmem:[%s288 + $0x7c8] sm:$0xff]
        %v1061 = vld [vmem:[%s288 + $0x7d0] sm:$0xff]
        %v1062 = vld [vmem:[%s288 + $0x7d8] sm:$0xff]
        %v1063 = vld [vmem:[%s288 + $0x7e0] sm:$0xff]
        %v1064 = vld [vmem:[%s288 + $0x7e8] sm:$0xff]
        %v1065 = vld [vmem:[%s288 + $0x7f0] sm:$0xff]
        %v1066 = vld [vmem:[%s288 + $0x7f8] sm:$0xff]
        %v1067 = vld [vmem:[%s270] sm:$0xff]
        %v1068 = vld [vmem:[%s270 + $0x8] sm:$0xff]
        %v1069 = vld [vmem:[%s270 + $0x10] sm:$0xff]
        %v1070 = vld [vmem:[%s270 + $0x18] sm:$0xff]
        %v1071 = vld [vmem:[%s270 + $0x20] sm:$0xff]
        %v1072 = vld [vmem:[%s270 + $0x28] sm:$0xff]
        %v1073 = vld [vmem:[%s270 + $0x30] sm:$0xff]
        %v1074 = vld [vmem:[%s270 + $0x38] sm:$0xff]
        %v1075 = vld [vmem:[%s270 + $0x40] sm:$0xff]
        %v1076 = vld [vmem:[%s270 + $0x48] sm:$0xff]
        %v1077 = vld [vmem:[%s270 + $0x50] sm:$0xff]
        %v1078 = vld [vmem:[%s270 + $0x58] sm:$0xff]
        %v1079 = vld [vmem:[%s270 + $0x60] sm:$0xff]
        %v1080 = vld [vmem:[%s270 + $0x68] sm:$0xff]
        %v1081 = vld [vmem:[%s270 + $0x70] sm:$0xff]
        %v1082 = vld [vmem:[%s270 + $0x78] sm:$0xff]
        %v1083 = vld [vmem:[%s270 + $0x80] sm:$0xff]
        %v1084 = vld [vmem:[%s270 + $0x88] sm:$0xff]
        %v1085 = vld [vmem:[%s270 + $0x90] sm:$0xff]
        %v1086 = vld [vmem:[%s270 + $0x98] sm:$0xff]
        %v1087 = vld [vmem:[%s270 + $0xa0] sm:$0xff]
        %v1088 = vld [vmem:[%s270 + $0xa8] sm:$0xff]
        %v1089 = vld [vmem:[%s270 + $0xb0] sm:$0xff]
        %v1090 = vld [vmem:[%s270 + $0xb8] sm:$0xff]
        %v1091 = vld [vmem:[%s270 + $0xc0] sm:$0xff]
        %v1092 = vld [vmem:[%s270 + $0xc8] sm:$0xff]
        %v1093 = vld [vmem:[%s270 + $0xd0] sm:$0xff]
        %v1094 = vld [vmem:[%s270 + $0xd8] sm:$0xff]
        %v1095 = vld [vmem:[%s270 + $0xe0] sm:$0xff]
        %v1096 = vld [vmem:[%s270 + $0xe8] sm:$0xff]
        %v1097 = vld [vmem:[%s270 + $0xf0] sm:$0xff]
        %v1098 = vld [vmem:[%s270 + $0xf8] sm:$0xff]
        %v1099 = vld [vmem:[%s270 + $0x100] sm:$0xff]
        %v1100 = vld [vmem:[%s270 + $0x108] sm:$0xff]
        %v1101 = vld [vmem:[%s270 + $0x110] sm:$0xff]
        %v1102 = vld [vmem:[%s270 + $0x118] sm:$0xff]
        %v1103 = vld [vmem:[%s270 + $0x120] sm:$0xff]
        %v1104 = vld [vmem:[%s270 + $0x128] sm:$0xff]
        %v1105 = vld [vmem:[%s270 + $0x130] sm:$0xff]
        %v1106 = vld [vmem:[%s270 + $0x138] sm:$0xff]
        %v1107 = vld [vmem:[%s270 + $0x140] sm:$0xff]
        %v1108 = vld [vmem:[%s270 + $0x148] sm:$0xff]
        %v1109 = vld [vmem:[%s270 + $0x150] sm:$0xff]
        %v1110 = vld [vmem:[%s270 + $0x158] sm:$0xff]
        %v1111 = vld [vmem:[%s270 + $0x160] sm:$0xff]
        %v1112 = vld [vmem:[%s270 + $0x168] sm:$0xff]
        %v1113 = vld [vmem:[%s270 + $0x170] sm:$0xff]
        %v1114 = vld [vmem:[%s270 + $0x178] sm:$0xff]
        %v1115 = vld [vmem:[%s270 + $0x180] sm:$0xff]
        %v1116 = vld [vmem:[%s270 + $0x188] sm:$0xff]
        %v1117 = vld [vmem:[%s270 + $0x190] sm:$0xff]
        %v1118 = vld [vmem:[%s270 + $0x198] sm:$0xff]
        %v1119 = vld [vmem:[%s270 + $0x1a0] sm:$0xff]
        %v1120 = vld [vmem:[%s270 + $0x1a8] sm:$0xff]
        %v1121 = vld [vmem:[%s270 + $0x1b0] sm:$0xff]
        %v1122 = vld [vmem:[%s270 + $0x1b8] sm:$0xff]
        %v1123 = vld [vmem:[%s270 + $0x1c0] sm:$0xff]
        %v1124 = vld [vmem:[%s270 + $0x1c8] sm:$0xff]
        %v1125 = vld [vmem:[%s270 + $0x1d0] sm:$0xff]
        %v1126 = vld [vmem:[%s270 + $0x1d8] sm:$0xff]
        %v1127 = vld [vmem:[%s270 + $0x1e0] sm:$0xff]
        %v1128 = vld [vmem:[%s270 + $0x1e8] sm:$0xff]
        %v1129 = vld [vmem:[%s270 + $0x1f0] sm:$0xff]
        %v1130 = vld [vmem:[%s270 + $0x1f8] sm:$0xff]
        %v1131 = vld [vmem:[%s270 + $0x200] sm:$0xff]
        %v1132 = vld [vmem:[%s270 + $0x208] sm:$0xff]
        %v1133 = vld [vmem:[%s270 + $0x210] sm:$0xff]
        %v1134 = vld [vmem:[%s270 + $0x218] sm:$0xff]
        %v1135 = vld [vmem:[%s270 + $0x220] sm:$0xff]
        %v1136 = vld [vmem:[%s270 + $0x228] sm:$0xff]
        %v1137 = vld [vmem:[%s270 + $0x230] sm:$0xff]
        %v1138 = vld [vmem:[%s270 + $0x238] sm:$0xff]
        %v1139 = vld [vmem:[%s270 + $0x240] sm:$0xff]
        %v1140 = vld [vmem:[%s270 + $0x248] sm:$0xff]
        %v1141 = vld [vmem:[%s270 + $0x250] sm:$0xff]
        %v1142 = vld [vmem:[%s270 + $0x258] sm:$0xff]
        %v1143 = vld [vmem:[%s270 + $0x260] sm:$0xff]
        %v1144 = vld [vmem:[%s270 + $0x268] sm:$0xff]
        %v1145 = vld [vmem:[%s270 + $0x270] sm:$0xff]
        %v1146 = vld [vmem:[%s270 + $0x278] sm:$0xff]
        %v1147 = vld [vmem:[%s270 + $0x280] sm:$0xff]
        %v1148 = vld [vmem:[%s270 + $0x288] sm:$0xff]
        %v1149 = vld [vmem:[%s270 + $0x290] sm:$0xff]
        %v1150 = vld [vmem:[%s270 + $0x298] sm:$0xff]
        %v1151 = vld [vmem:[%s270 + $0x2a0] sm:$0xff]
        %v1152 = vld [vmem:[%s270 + $0x2a8] sm:$0xff]
        %v1153 = vld [vmem:[%s270 + $0x2b0] sm:$0xff]
        %v1154 = vld [vmem:[%s270 + $0x2b8] sm:$0xff]
        %v1155 = vld [vmem:[%s270 + $0x2c0] sm:$0xff]
        %v1156 = vld [vmem:[%s270 + $0x2c8] sm:$0xff]
        %v1157 = vld [vmem:[%s270 + $0x2d0] sm:$0xff]
        %v1158 = vld [vmem:[%s270 + $0x2d8] sm:$0xff]
        %v1159 = vld [vmem:[%s270 + $0x2e0] sm:$0xff]
        %v1160 = vld [vmem:[%s270 + $0x2e8] sm:$0xff]
        %v1161 = vld [vmem:[%s270 + $0x2f0] sm:$0xff]
        %v1162 = vld [vmem:[%s270 + $0x2f8] sm:$0xff]
        %v1163 = vld [vmem:[%s270 + $0x300] sm:$0xff]
        %v1164 = vld [vmem:[%s270 + $0x308] sm:$0xff]
        %v1165 = vld [vmem:[%s270 + $0x310] sm:$0xff]
        %v1166 = vld [vmem:[%s270 + $0x318] sm:$0xff]
        %v1167 = vld [vmem:[%s270 + $0x320] sm:$0xff]
        %v1168 = vld [vmem:[%s270 + $0x328] sm:$0xff]
        %v1169 = vld [vmem:[%s270 + $0x330] sm:$0xff]
        %v1170 = vld [vmem:[%s270 + $0x338] sm:$0xff]
        %v1171 = vld [vmem:[%s270 + $0x340] sm:$0xff]
        %v1172 = vld [vmem:[%s270 + $0x348] sm:$0xff]
        %v1173 = vld [vmem:[%s270 + $0x350] sm:$0xff]
        %v1174 = vld [vmem:[%s270 + $0x358] sm:$0xff]
        %v1175 = vld [vmem:[%s270 + $0x360] sm:$0xff]
        %v1176 = vld [vmem:[%s270 + $0x368] sm:$0xff]
        %v1177 = vld [vmem:[%s270 + $0x370] sm:$0xff]
        %v1178 = vld [vmem:[%s270 + $0x378] sm:$0xff]
        %v1179 = vld [vmem:[%s270 + $0x380] sm:$0xff]
        %v1180 = vld [vmem:[%s270 + $0x388] sm:$0xff]
        %v1181 = vld [vmem:[%s270 + $0x390] sm:$0xff]
        %v1182 = vld [vmem:[%s270 + $0x398] sm:$0xff]
        %v1183 = vld [vmem:[%s270 + $0x3a0] sm:$0xff]
        %v1184 = vld [vmem:[%s270 + $0x3a8] sm:$0xff]
        %v1185 = vld [vmem:[%s270 + $0x3b0] sm:$0xff]
        %v1186 = vld [vmem:[%s270 + $0x3b8] sm:$0xff]
        %v1187 = vld [vmem:[%s270 + $0x3c0] sm:$0xff]
        %v1188 = vld [vmem:[%s270 + $0x3c8] sm:$0xff]
        %v1189 = vld [vmem:[%s270 + $0x3d0] sm:$0xff]
        %v1190 = vld [vmem:[%s270 + $0x3d8] sm:$0xff]
        %v1191 = vld [vmem:[%s270 + $0x3e0] sm:$0xff]
        %v1192 = vld [vmem:[%s270 + $0x3e8] sm:$0xff]
        %v1193 = vld [vmem:[%s270 + $0x3f0] sm:$0xff]
        %v1194 = vld [vmem:[%s270 + $0x3f8] sm:$0xff]
        %v1195 = vld [vmem:[%s270 + $0x400] sm:$0xff]
        %v1196 = vld [vmem:[%s270 + $0x408] sm:$0xff]
        %v1197 = vld [vmem:[%s270 + $0x410] sm:$0xff]
        %v1198 = vld [vmem:[%s270 + $0x418] sm:$0xff]
        %v1199 = vld [vmem:[%s270 + $0x420] sm:$0xff]
        %v1200 = vld [vmem:[%s270 + $0x428] sm:$0xff]
        %v1201 = vld [vmem:[%s270 + $0x430] sm:$0xff]
        %v1202 = vld [vmem:[%s270 + $0x438] sm:$0xff]
        %v1203 = vld [vmem:[%s270 + $0x440] sm:$0xff]
        %v1204 = vld [vmem:[%s270 + $0x448] sm:$0xff]
        %v1205 = vld [vmem:[%s270 + $0x450] sm:$0xff]
        %v1206 = vld [vmem:[%s270 + $0x458] sm:$0xff]
        %v1207 = vld [vmem:[%s270 + $0x460] sm:$0xff]
        %v1208 = vld [vmem:[%s270 + $0x468] sm:$0xff]
        %v1209 = vld [vmem:[%s270 + $0x470] sm:$0xff]
        %v1210 = vld [vmem:[%s270 + $0x478] sm:$0xff]
        %v1211 = vld [vmem:[%s270 + $0x480] sm:$0xff]
        %v1212 = vld [vmem:[%s270 + $0x488] sm:$0xff]
        %v1213 = vld [vmem:[%s270 + $0x490] sm:$0xff]
        %v1214 = vld [vmem:[%s270 + $0x498] sm:$0xff]
        %v1215 = vld [vmem:[%s270 + $0x4a0] sm:$0xff]
        %v1216 = vld [vmem:[%s270 + $0x4a8] sm:$0xff]
        %v1217 = vld [vmem:[%s270 + $0x4b0] sm:$0xff]
        %v1218 = vld [vmem:[%s270 + $0x4b8] sm:$0xff]
        %v1219 = vld [vmem:[%s270 + $0x4c0] sm:$0xff]
        %v1220 = vld [vmem:[%s270 + $0x4c8] sm:$0xff]
        %v1221 = vld [vmem:[%s270 + $0x4d0] sm:$0xff]
        %v1222 = vld [vmem:[%s270 + $0x4d8] sm:$0xff]
        %v1223 = vld [vmem:[%s270 + $0x4e0] sm:$0xff]
        %v1224 = vld [vmem:[%s270 + $0x4e8] sm:$0xff]
        %v1225 = vld [vmem:[%s270 + $0x4f0] sm:$0xff]
        %v1226 = vld [vmem:[%s270 + $0x4f8] sm:$0xff]
        %v1227 = vld [vmem:[%s270 + $0x500] sm:$0xff]
        %v1228 = vld [vmem:[%s270 + $0x508] sm:$0xff]
        %v1229 = vld [vmem:[%s270 + $0x510] sm:$0xff]
        %v1230 = vld [vmem:[%s270 + $0x518] sm:$0xff]
        %v1231 = vld [vmem:[%s270 + $0x520] sm:$0xff]
        %v1232 = vld [vmem:[%s270 + $0x528] sm:$0xff]
        %v1233 = vld [vmem:[%s270 + $0x530] sm:$0xff]
        %v1234 = vld [vmem:[%s270 + $0x538] sm:$0xff]
        %v1235 = vld [vmem:[%s270 + $0x540] sm:$0xff]
        %v1236 = vld [vmem:[%s270 + $0x548] sm:$0xff]
        %v1237 = vld [vmem:[%s270 + $0x550] sm:$0xff]
        %v1238 = vld [vmem:[%s270 + $0x558] sm:$0xff]
        %v1239 = vld [vmem:[%s270 + $0x560] sm:$0xff]
        %v1240 = vld [vmem:[%s270 + $0x568] sm:$0xff]
        %v1241 = vld [vmem:[%s270 + $0x570] sm:$0xff]
        %v1242 = vld [vmem:[%s270 + $0x578] sm:$0xff]
        %v1243 = vld [vmem:[%s270 + $0x580] sm:$0xff]
        %v1244 = vld [vmem:[%s270 + $0x588] sm:$0xff]
        %v1245 = vld [vmem:[%s270 + $0x590] sm:$0xff]
        %v1246 = vld [vmem:[%s270 + $0x598] sm:$0xff]
        %v1247 = vld [vmem:[%s270 + $0x5a0] sm:$0xff]
        %v1248 = vld [vmem:[%s270 + $0x5a8] sm:$0xff]
        %v1249 = vld [vmem:[%s270 + $0x5b0] sm:$0xff]
        %v1250 = vld [vmem:[%s270 + $0x5b8] sm:$0xff]
        %v1251 = vld [vmem:[%s270 + $0x5c0] sm:$0xff]
        %v1252 = vld [vmem:[%s270 + $0x5c8] sm:$0xff]
        %v1253 = vld [vmem:[%s270 + $0x5d0] sm:$0xff]
        %v1254 = vld [vmem:[%s270 + $0x5d8] sm:$0xff]
        %v1255 = vld [vmem:[%s270 + $0x5e0] sm:$0xff]
        %v1256 = vld [vmem:[%s270 + $0x5e8] sm:$0xff]
        %v1257 = vld [vmem:[%s270 + $0x5f0] sm:$0xff]
        %v1258 = vld [vmem:[%s270 + $0x5f8] sm:$0xff]
        %v1259 = vld [vmem:[%s270 + $0x600] sm:$0xff]
        %v1260 = vld [vmem:[%s270 + $0x608] sm:$0xff]
        %v1261 = vld [vmem:[%s270 + $0x610] sm:$0xff]
        %v1262 = vld [vmem:[%s270 + $0x618] sm:$0xff]
        %v1263 = vld [vmem:[%s270 + $0x620] sm:$0xff]
        %v1264 = vld [vmem:[%s270 + $0x628] sm:$0xff]
        %v1265 = vld [vmem:[%s270 + $0x630] sm:$0xff]
        %v1266 = vld [vmem:[%s270 + $0x638] sm:$0xff]
        %v1267 = vld [vmem:[%s270 + $0x640] sm:$0xff]
        %v1268 = vld [vmem:[%s270 + $0x648] sm:$0xff]
        %v1269 = vld [vmem:[%s270 + $0x650] sm:$0xff]
        %v1270 = vld [vmem:[%s270 + $0x658] sm:$0xff]
        %v1271 = vld [vmem:[%s270 + $0x660] sm:$0xff]
        %v1272 = vld [vmem:[%s270 + $0x668] sm:$0xff]
        %v1273 = vld [vmem:[%s270 + $0x670] sm:$0xff]
        %v1274 = vld [vmem:[%s270 + $0x678] sm:$0xff]
        %v1275 = vld [vmem:[%s270 + $0x680] sm:$0xff]
        %v1276 = vld [vmem:[%s270 + $0x688] sm:$0xff]
        %v1277 = vld [vmem:[%s270 + $0x690] sm:$0xff]
        %v1278 = vld [vmem:[%s270 + $0x698] sm:$0xff]
        %v1279 = vld [vmem:[%s270 + $0x6a0] sm:$0xff]
        %v1280 = vld [vmem:[%s270 + $0x6a8] sm:$0xff]
        %v1281 = vld [vmem:[%s270 + $0x6b0] sm:$0xff]
        %v1282 = vld [vmem:[%s270 + $0x6b8] sm:$0xff]
        %v1283 = vld [vmem:[%s270 + $0x6c0] sm:$0xff]
        %v1284 = vld [vmem:[%s270 + $0x6c8] sm:$0xff]
        %v1285 = vld [vmem:[%s270 + $0x6d0] sm:$0xff]
        %v1286 = vld [vmem:[%s270 + $0x6d8] sm:$0xff]
        %v1287 = vld [vmem:[%s270 + $0x6e0] sm:$0xff]
        %v1288 = vld [vmem:[%s270 + $0x6e8] sm:$0xff]
        %v1289 = vld [vmem:[%s270 + $0x6f0] sm:$0xff]
        %v1290 = vld [vmem:[%s270 + $0x6f8] sm:$0xff]
        %v1291 = vld [vmem:[%s270 + $0x700] sm:$0xff]
        %v1292 = vld [vmem:[%s270 + $0x708] sm:$0xff]
        %v1293 = vld [vmem:[%s270 + $0x710] sm:$0xff]
        %v1294 = vld [vmem:[%s270 + $0x718] sm:$0xff]
        %v1295 = vld [vmem:[%s270 + $0x720] sm:$0xff]
        %v1296 = vld [vmem:[%s270 + $0x728] sm:$0xff]
        %v1297 = vld [vmem:[%s270 + $0x730] sm:$0xff]
        %v1298 = vld [vmem:[%s270 + $0x738] sm:$0xff]
        %v1299 = vld [vmem:[%s270 + $0x740] sm:$0xff]
        %v1300 = vld [vmem:[%s270 + $0x748] sm:$0xff]
        %v1301 = vld [vmem:[%s270 + $0x750] sm:$0xff]
        %v1302 = vld [vmem:[%s270 + $0x758] sm:$0xff]
        %v1303 = vld [vmem:[%s270 + $0x760] sm:$0xff]
        %v1304 = vld [vmem:[%s270 + $0x768] sm:$0xff]
        %v1305 = vld [vmem:[%s270 + $0x770] sm:$0xff]
        %v1306 = vld [vmem:[%s270 + $0x778] sm:$0xff]
        %v1307 = vld [vmem:[%s270 + $0x780] sm:$0xff]
        %v1308 = vld [vmem:[%s270 + $0x788] sm:$0xff]
        %v1309 = vld [vmem:[%s270 + $0x790] sm:$0xff]
        %v1310 = vld [vmem:[%s270 + $0x798] sm:$0xff]
        %v1311 = vld [vmem:[%s270 + $0x7a0] sm:$0xff]
        %v1312 = vld [vmem:[%s270 + $0x7a8] sm:$0xff]
        %v1313 = vld [vmem:[%s270 + $0x7b0] sm:$0xff]
        %v1314 = vld [vmem:[%s270 + $0x7b8] sm:$0xff]
        %v1315 = vld [vmem:[%s270 + $0x7c0] sm:$0xff]
        %v1316 = vld [vmem:[%s270 + $0x7c8] sm:$0xff]
        %v1317 = vld [vmem:[%s270 + $0x7d0] sm:$0xff]
        %v1318 = vld [vmem:[%s270 + $0x7d8] sm:$0xff]
        %v1319 = vld [vmem:[%s270 + $0x7e0] sm:$0xff]
        %v1320 = vld [vmem:[%s270 + $0x7e8] sm:$0xff]
        %v1321 = vld [vmem:[%s270 + $0x7f0] sm:$0xff]
        %v1322 = vld [vmem:[%s270 + $0x7f8] sm:$0xff]
        %v1323 = vmul.f32 %v1067, %v811
        %v1324 = vmul.f32 %v1068, %v812
        %v1325 = vmul.f32 %v1069, %v813
        %v1326 = vmul.f32 %v1070, %v814
        %v1327 = vmul.f32 %v1071, %v815
        %v1328 = vmul.f32 %v1072, %v816
        %v1329 = vmul.f32 %v1073, %v817
        %v1330 = vmul.f32 %v1074, %v818
        %v1331 = vmul.f32 %v1075, %v819
        %v1332 = vmul.f32 %v1076, %v820
        %v1333 = vmul.f32 %v1077, %v821
        %v1334 = vmul.f32 %v1078, %v822
        %v1335 = vmul.f32 %v1079, %v823
        %v1336 = vmul.f32 %v1080, %v824
        %v1337 = vmul.f32 %v1081, %v825
        %v1338 = vmul.f32 %v1082, %v826
        %v1339 = vmul.f32 %v1083, %v827
        %v1340 = vmul.f32 %v1084, %v828
        %v1341 = vmul.f32 %v1085, %v829
        %v1342 = vmul.f32 %v1086, %v830
        %v1343 = vmul.f32 %v1087, %v831
        %v1344 = vmul.f32 %v1088, %v832
        %v1345 = vmul.f32 %v1089, %v833
        %v1346 = vmul.f32 %v1090, %v834
        %v1347 = vmul.f32 %v1091, %v835
        %v1348 = vmul.f32 %v1092, %v836
        %v1349 = vmul.f32 %v1093, %v837
        %v1350 = vmul.f32 %v1094, %v838
        %v1351 = vmul.f32 %v1095, %v839
        %v1352 = vmul.f32 %v1096, %v840
        %v1353 = vmul.f32 %v1097, %v841
        %v1354 = vmul.f32 %v1098, %v842
        %v1355 = vmul.f32 %v1099, %v843
        %v1356 = vmul.f32 %v1100, %v844
        %v1357 = vmul.f32 %v1101, %v845
        %v1358 = vmul.f32 %v1102, %v846
        %v1359 = vmul.f32 %v1103, %v847
        %v1360 = vmul.f32 %v1104, %v848
        %v1361 = vmul.f32 %v1105, %v849
        %v1362 = vmul.f32 %v1106, %v850
        %v1363 = vmul.f32 %v1107, %v851
        %v1364 = vmul.f32 %v1108, %v852
        %v1365 = vmul.f32 %v1109, %v853
        %v1366 = vmul.f32 %v1110, %v854
        %v1367 = vmul.f32 %v1111, %v855
        %v1368 = vmul.f32 %v1112, %v856
        %v1369 = vmul.f32 %v1113, %v857
        %v1370 = vmul.f32 %v1114, %v858
        %v1371 = vmul.f32 %v1115, %v859
        %v1372 = vmul.f32 %v1116, %v860
        %v1373 = vmul.f32 %v1117, %v861
        %v1374 = vmul.f32 %v1118, %v862
        %v1375 = vmul.f32 %v1119, %v863
        %v1376 = vmul.f32 %v1120, %v864
        %v1377 = vmul.f32 %v1121, %v865
        %v1378 = vmul.f32 %v1122, %v866
        %v1379 = vmul.f32 %v1123, %v867
        %v1380 = vmul.f32 %v1124, %v868
        %v1381 = vmul.f32 %v1125, %v869
        %v1382 = vmul.f32 %v1126, %v870
        %v1383 = vmul.f32 %v1127, %v871
        %v1384 = vmul.f32 %v1128, %v872
        %v1385 = vmul.f32 %v1129, %v873
        %v1386 = vmul.f32 %v1130, %v874
        %v1387 = vmul.f32 %v1131, %v875
        %v1388 = vmul.f32 %v1132, %v876
        %v1389 = vmul.f32 %v1133, %v877
        %v1390 = vmul.f32 %v1134, %v878
        %v1391 = vmul.f32 %v1135, %v879
        %v1392 = vmul.f32 %v1136, %v880
        %v1393 = vmul.f32 %v1137, %v881
        %v1394 = vmul.f32 %v1138, %v882
        %v1395 = vmul.f32 %v1139, %v883
        %v1396 = vmul.f32 %v1140, %v884
        %v1397 = vmul.f32 %v1141, %v885
        %v1398 = vmul.f32 %v1142, %v886
        %v1399 = vmul.f32 %v1143, %v887
        %v1400 = vmul.f32 %v1144, %v888
        %v1401 = vmul.f32 %v1145, %v889
        %v1402 = vmul.f32 %v1146, %v890
        %v1403 = vmul.f32 %v1147, %v891
        %v1404 = vmul.f32 %v1148, %v892
        %v1405 = vmul.f32 %v1149, %v893
        %v1406 = vmul.f32 %v1150, %v894
        %v1407 = vmul.f32 %v1151, %v895
        %v1408 = vmul.f32 %v1152, %v896
        %v1409 = vmul.f32 %v1153, %v897
        %v1410 = vmul.f32 %v1154, %v898
        %v1411 = vmul.f32 %v1155, %v899
        %v1412 = vmul.f32 %v1156, %v900
        %v1413 = vmul.f32 %v1157, %v901
        %v1414 = vmul.f32 %v1158, %v902
        %v1415 = vmul.f32 %v1159, %v903
        %v1416 = vmul.f32 %v1160, %v904
        %v1417 = vmul.f32 %v1161, %v905
        %v1418 = vmul.f32 %v1162, %v906
        %v1419 = vmul.f32 %v1163, %v907
        %v1420 = vmul.f32 %v1164, %v908
        %v1421 = vmul.f32 %v1165, %v909
        %v1422 = vmul.f32 %v1166, %v910
        %v1423 = vmul.f32 %v1167, %v911
        %v1424 = vmul.f32 %v1168, %v912
        %v1425 = vmul.f32 %v1169, %v913
        %v1426 = vmul.f32 %v1170, %v914
        %v1427 = vmul.f32 %v1171, %v915
        %v1428 = vmul.f32 %v1172, %v916
        %v1429 = vmul.f32 %v1173, %v917
        %v1430 = vmul.f32 %v1174, %v918
        %v1431 = vmul.f32 %v1175, %v919
        %v1432 = vmul.f32 %v1176, %v920
        %v1433 = vmul.f32 %v1177, %v921
        %v1434 = vmul.f32 %v1178, %v922
        %v1435 = vmul.f32 %v1179, %v923
        %v1436 = vmul.f32 %v1180, %v924
        %v1437 = vmul.f32 %v1181, %v925
        %v1438 = vmul.f32 %v1182, %v926
        %v1439 = vmul.f32 %v1183, %v927
        %v1440 = vmul.f32 %v1184, %v928
        %v1441 = vmul.f32 %v1185, %v929
        %v1442 = vmul.f32 %v1186, %v930
        %v1443 = vmul.f32 %v1187, %v931
        %v1444 = vmul.f32 %v1188, %v932
        %v1445 = vmul.f32 %v1189, %v933
        %v1446 = vmul.f32 %v1190, %v934
        %v1447 = vmul.f32 %v1191, %v935
        %v1448 = vmul.f32 %v1192, %v936
        %v1449 = vmul.f32 %v1193, %v937
        %v1450 = vmul.f32 %v1194, %v938
        %v1451 = vmul.f32 %v1195, %v939
        %v1452 = vmul.f32 %v1196, %v940
        %v1453 = vmul.f32 %v1197, %v941
        %v1454 = vmul.f32 %v1198, %v942
        %v1455 = vmul.f32 %v1199, %v943
        %v1456 = vmul.f32 %v1200, %v944
        %v1457 = vmul.f32 %v1201, %v945
        %v1458 = vmul.f32 %v1202, %v946
        %v1459 = vmul.f32 %v1203, %v947
        %v1460 = vmul.f32 %v1204, %v948
        %v1461 = vmul.f32 %v1205, %v949
        %v1462 = vmul.f32 %v1206, %v950
        %v1463 = vmul.f32 %v1207, %v951
        %v1464 = vmul.f32 %v1208, %v952
        %v1465 = vmul.f32 %v1209, %v953
        %v1466 = vmul.f32 %v1210, %v954
        %v1467 = vmul.f32 %v1211, %v955
        %v1468 = vmul.f32 %v1212, %v956
        %v1469 = vmul.f32 %v1213, %v957
        %v1470 = vmul.f32 %v1214, %v958
        %v1471 = vmul.f32 %v1215, %v959
        %v1472 = vmul.f32 %v1216, %v960
        %v1473 = vmul.f32 %v1217, %v961
        %v1474 = vmul.f32 %v1218, %v962
        %v1475 = vmul.f32 %v1219, %v963
        %v1476 = vmul.f32 %v1220, %v964
        %v1477 = vmul.f32 %v1221, %v965
        %v1478 = vmul.f32 %v1222, %v966
        %v1479 = vmul.f32 %v1223, %v967
        %v1480 = vmul.f32 %v1224, %v968
        %v1481 = vmul.f32 %v1225, %v969
        %v1482 = vmul.f32 %v1226, %v970
        %v1483 = vmul.f32 %v1227, %v971
        %v1484 = vmul.f32 %v1228, %v972
        %v1485 = vmul.f32 %v1229, %v973
        %v1486 = vmul.f32 %v1230, %v974
        %v1487 = vmul.f32 %v1231, %v975
        %v1488 = vmul.f32 %v1232, %v976
        %v1489 = vmul.f32 %v1233, %v977
        %v1490 = vmul.f32 %v1234, %v978
        %v1491 = vmul.f32 %v1235, %v979
        %v1492 = vmul.f32 %v1236, %v980
        %v1493 = vmul.f32 %v1237, %v981
        %v1494 = vmul.f32 %v1238, %v982
        %v1495 = vmul.f32 %v1239, %v983
        %v1496 = vmul.f32 %v1240, %v984
        %v1497 = vmul.f32 %v1241, %v985
        %v1498 = vmul.f32 %v1242, %v986
        %v1499 = vmul.f32 %v1243, %v987
        %v1500 = vmul.f32 %v1244, %v988
        %v1501 = vmul.f32 %v1245, %v989
        %v1502 = vmul.f32 %v1246, %v990
        %v1503 = vmul.f32 %v1247, %v991
        %v1504 = vmul.f32 %v1248, %v992
        %v1505 = vmul.f32 %v1249, %v993
        %v1506 = vmul.f32 %v1250, %v994
        %v1507 = vmul.f32 %v1251, %v995
        %v1508 = vmul.f32 %v1252, %v996
        %v1509 = vmul.f32 %v1253, %v997
        %v1510 = vmul.f32 %v1254, %v998
        %v1511 = vmul.f32 %v1255, %v999
        %v1512 = vmul.f32 %v1256, %v1000
        %v1513 = vmul.f32 %v1257, %v1001
        %v1514 = vmul.f32 %v1258, %v1002
        %v1515 = vmul.f32 %v1259, %v1003
        %v1516 = vmul.f32 %v1260, %v1004
        %v1517 = vmul.f32 %v1261, %v1005
        %v1518 = vmul.f32 %v1262, %v1006
        %v1519 = vmul.f32 %v1263, %v1007
        %v1520 = vmul.f32 %v1264, %v1008
        %v1521 = vmul.f32 %v1265, %v1009
        %v1522 = vmul.f32 %v1266, %v1010
        %v1523 = vmul.f32 %v1267, %v1011
        %v1524 = vmul.f32 %v1268, %v1012
        %v1525 = vmul.f32 %v1269, %v1013
        %v1526 = vmul.f32 %v1270, %v1014
        %v1527 = vmul.f32 %v1271, %v1015
        %v1528 = vmul.f32 %v1272, %v1016
        %v1529 = vmul.f32 %v1273, %v1017
        %v1530 = vmul.f32 %v1274, %v1018
        %v1531 = vmul.f32 %v1275, %v1019
        %v1532 = vmul.f32 %v1276, %v1020
        %v1533 = vmul.f32 %v1277, %v1021
        %v1534 = vmul.f32 %v1278, %v1022
        %v1535 = vmul.f32 %v1279, %v1023
        %v1536 = vmul.f32 %v1280, %v1024
        %v1537 = vmul.f32 %v1281, %v1025
        %v1538 = vmul.f32 %v1282, %v1026
        %v1539 = vmul.f32 %v1283, %v1027
        %v1540 = vmul.f32 %v1284, %v1028
        %v1541 = vmul.f32 %v1285, %v1029
        %v1542 = vmul.f32 %v1286, %v1030
        %v1543 = vmul.f32 %v1287, %v1031
        %v1544 = vmul.f32 %v1288, %v1032
        %v1545 = vmul.f32 %v1289, %v1033
        %v1546 = vmul.f32 %v1290, %v1034
        %v1547 = vmul.f32 %v1291, %v1035
        %v1548 = vmul.f32 %v1292, %v1036
        %v1549 = vmul.f32 %v1293, %v1037
        %v1550 = vmul.f32 %v1294, %v1038
        %v1551 = vmul.f32 %v1295, %v1039
        %v1552 = vmul.f32 %v1296, %v1040
        %v1553 = vmul.f32 %v1297, %v1041
        %v1554 = vmul.f32 %v1298, %v1042
        %v1555 = vmul.f32 %v1299, %v1043
        %v1556 = vmul.f32 %v1300, %v1044
        %v1557 = vmul.f32 %v1301, %v1045
        %v1558 = vmul.f32 %v1302, %v1046
        %v1559 = vmul.f32 %v1303, %v1047
        %v1560 = vmul.f32 %v1304, %v1048
        %v1561 = vmul.f32 %v1305, %v1049
        %v1562 = vmul.f32 %v1306, %v1050
        %v1563 = vmul.f32 %v1307, %v1051
        %v1564 = vmul.f32 %v1308, %v1052
        %v1565 = vmul.f32 %v1309, %v1053
        %v1566 = vmul.f32 %v1310, %v1054
        %v1567 = vmul.f32 %v1311, %v1055
        %v1568 = vmul.f32 %v1312, %v1056
        %v1569 = vmul.f32 %v1313, %v1057
        %v1570 = vmul.f32 %v1314, %v1058
        %v1571 = vmul.f32 %v1315, %v1059
        %v1572 = vmul.f32 %v1316, %v1060
        %v1573 = vmul.f32 %v1317, %v1061
        %v1574 = vmul.f32 %v1318, %v1062
        %v1575 = vmul.f32 %v1319, %v1063
        %v1576 = vmul.f32 %v1320, %v1064
        %v1577 = vmul.f32 %v1321, %v1065
        %v1578 = vmul.f32 %v1322, %v1066
        %v1579 = vld [vmem:[%s279] sm:$0xff]
        %v1580 = vld [vmem:[%s279 + $0x8] sm:$0xff]
        %v1581 = vld [vmem:[%s279 + $0x10] sm:$0xff]
        %v1582 = vld [vmem:[%s279 + $0x18] sm:$0xff]
        %v1583 = vld [vmem:[%s279 + $0x20] sm:$0xff]
        %v1584 = vld [vmem:[%s279 + $0x28] sm:$0xff]
        %v1585 = vld [vmem:[%s279 + $0x30] sm:$0xff]
        %v1586 = vld [vmem:[%s279 + $0x38] sm:$0xff]
        %v1587 = vld [vmem:[%s279 + $0x40] sm:$0xff]
        %v1588 = vld [vmem:[%s279 + $0x48] sm:$0xff]
        %v1589 = vld [vmem:[%s279 + $0x50] sm:$0xff]
        %v1590 = vld [vmem:[%s279 + $0x58] sm:$0xff]
        %v1591 = vld [vmem:[%s279 + $0x60] sm:$0xff]
        %v1592 = vld [vmem:[%s279 + $0x68] sm:$0xff]
        %v1593 = vld [vmem:[%s279 + $0x70] sm:$0xff]
        %v1594 = vld [vmem:[%s279 + $0x78] sm:$0xff]
        %v1595 = vld [vmem:[%s279 + $0x80] sm:$0xff]
        %v1596 = vld [vmem:[%s279 + $0x88] sm:$0xff]
        %v1597 = vld [vmem:[%s279 + $0x90] sm:$0xff]
        %v1598 = vld [vmem:[%s279 + $0x98] sm:$0xff]
        %v1599 = vld [vmem:[%s279 + $0xa0] sm:$0xff]
        %v1600 = vld [vmem:[%s279 + $0xa8] sm:$0xff]
        %v1601 = vld [vmem:[%s279 + $0xb0] sm:$0xff]
        %v1602 = vld [vmem:[%s279 + $0xb8] sm:$0xff]
        %v1603 = vld [vmem:[%s279 + $0xc0] sm:$0xff]
        %v1604 = vld [vmem:[%s279 + $0xc8] sm:$0xff]
        %v1605 = vld [vmem:[%s279 + $0xd0] sm:$0xff]
        %v1606 = vld [vmem:[%s279 + $0xd8] sm:$0xff]
        %v1607 = vld [vmem:[%s279 + $0xe0] sm:$0xff]
        %v1608 = vld [vmem:[%s279 + $0xe8] sm:$0xff]
        %v1609 = vld [vmem:[%s279 + $0xf0] sm:$0xff]
        %v1610 = vld [vmem:[%s279 + $0xf8] sm:$0xff]
        %v1611 = vld [vmem:[%s279 + $0x100] sm:$0xff]
        %v1612 = vld [vmem:[%s279 + $0x108] sm:$0xff]
        %v1613 = vld [vmem:[%s279 + $0x110] sm:$0xff]
        %v1614 = vld [vmem:[%s279 + $0x118] sm:$0xff]
        %v1615 = vld [vmem:[%s279 + $0x120] sm:$0xff]
        %v1616 = vld [vmem:[%s279 + $0x128] sm:$0xff]
        %v1617 = vld [vmem:[%s279 + $0x130] sm:$0xff]
        %v1618 = vld [vmem:[%s279 + $0x138] sm:$0xff]
        %v1619 = vld [vmem:[%s279 + $0x140] sm:$0xff]
        %v1620 = vld [vmem:[%s279 + $0x148] sm:$0xff]
        %v1621 = vld [vmem:[%s279 + $0x150] sm:$0xff]
        %v1622 = vld [vmem:[%s279 + $0x158] sm:$0xff]
        %v1623 = vld [vmem:[%s279 + $0x160] sm:$0xff]
        %v1624 = vld [vmem:[%s279 + $0x168] sm:$0xff]
        %v1625 = vld [vmem:[%s279 + $0x170] sm:$0xff]
        %v1626 = vld [vmem:[%s279 + $0x178] sm:$0xff]
        %v1627 = vld [vmem:[%s279 + $0x180] sm:$0xff]
        %v1628 = vld [vmem:[%s279 + $0x188] sm:$0xff]
        %v1629 = vld [vmem:[%s279 + $0x190] sm:$0xff]
        %v1630 = vld [vmem:[%s279 + $0x198] sm:$0xff]
        %v1631 = vld [vmem:[%s279 + $0x1a0] sm:$0xff]
        %v1632 = vld [vmem:[%s279 + $0x1a8] sm:$0xff]
        %v1633 = vld [vmem:[%s279 + $0x1b0] sm:$0xff]
        %v1634 = vld [vmem:[%s279 + $0x1b8] sm:$0xff]
        %v1635 = vld [vmem:[%s279 + $0x1c0] sm:$0xff]
        %v1636 = vld [vmem:[%s279 + $0x1c8] sm:$0xff]
        %v1637 = vld [vmem:[%s279 + $0x1d0] sm:$0xff]
        %v1638 = vld [vmem:[%s279 + $0x1d8] sm:$0xff]
        %v1639 = vld [vmem:[%s279 + $0x1e0] sm:$0xff]
        %v1640 = vld [vmem:[%s279 + $0x1e8] sm:$0xff]
        %v1641 = vld [vmem:[%s279 + $0x1f0] sm:$0xff]
        %v1642 = vld [vmem:[%s279 + $0x1f8] sm:$0xff]
        %v1643 = vld [vmem:[%s279 + $0x200] sm:$0xff]
        %v1644 = vld [vmem:[%s279 + $0x208] sm:$0xff]
        %v1645 = vld [vmem:[%s279 + $0x210] sm:$0xff]
        %v1646 = vld [vmem:[%s279 + $0x218] sm:$0xff]
        %v1647 = vld [vmem:[%s279 + $0x220] sm:$0xff]
        %v1648 = vld [vmem:[%s279 + $0x228] sm:$0xff]
        %v1649 = vld [vmem:[%s279 + $0x230] sm:$0xff]
        %v1650 = vld [vmem:[%s279 + $0x238] sm:$0xff]
        %v1651 = vld [vmem:[%s279 + $0x240] sm:$0xff]
        %v1652 = vld [vmem:[%s279 + $0x248] sm:$0xff]
        %v1653 = vld [vmem:[%s279 + $0x250] sm:$0xff]
        %v1654 = vld [vmem:[%s279 + $0x258] sm:$0xff]
        %v1655 = vld [vmem:[%s279 + $0x260] sm:$0xff]
        %v1656 = vld [vmem:[%s279 + $0x268] sm:$0xff]
        %v1657 = vld [vmem:[%s279 + $0x270] sm:$0xff]
        %v1658 = vld [vmem:[%s279 + $0x278] sm:$0xff]
        %v1659 = vld [vmem:[%s279 + $0x280] sm:$0xff]
        %v1660 = vld [vmem:[%s279 + $0x288] sm:$0xff]
        %v1661 = vld [vmem:[%s279 + $0x290] sm:$0xff]
        %v1662 = vld [vmem:[%s279 + $0x298] sm:$0xff]
        %v1663 = vld [vmem:[%s279 + $0x2a0] sm:$0xff]
        %v1664 = vld [vmem:[%s279 + $0x2a8] sm:$0xff]
        %v1665 = vld [vmem:[%s279 + $0x2b0] sm:$0xff]
        %v1666 = vld [vmem:[%s279 + $0x2b8] sm:$0xff]
        %v1667 = vld [vmem:[%s279 + $0x2c0] sm:$0xff]
        %v1668 = vld [vmem:[%s279 + $0x2c8] sm:$0xff]
        %v1669 = vld [vmem:[%s279 + $0x2d0] sm:$0xff]
        %v1670 = vld [vmem:[%s279 + $0x2d8] sm:$0xff]
        %v1671 = vld [vmem:[%s279 + $0x2e0] sm:$0xff]
        %v1672 = vld [vmem:[%s279 + $0x2e8] sm:$0xff]
        %v1673 = vld [vmem:[%s279 + $0x2f0] sm:$0xff]
        %v1674 = vld [vmem:[%s279 + $0x2f8] sm:$0xff]
        %v1675 = vld [vmem:[%s279 + $0x300] sm:$0xff]
        %v1676 = vld [vmem:[%s279 + $0x308] sm:$0xff]
        %v1677 = vld [vmem:[%s279 + $0x310] sm:$0xff]
        %v1678 = vld [vmem:[%s279 + $0x318] sm:$0xff]
        %v1679 = vld [vmem:[%s279 + $0x320] sm:$0xff]
        %v1680 = vld [vmem:[%s279 + $0x328] sm:$0xff]
        %v1681 = vld [vmem:[%s279 + $0x330] sm:$0xff]
        %v1682 = vld [vmem:[%s279 + $0x338] sm:$0xff]
        %v1683 = vld [vmem:[%s279 + $0x340] sm:$0xff]
        %v1684 = vld [vmem:[%s279 + $0x348] sm:$0xff]
        %v1685 = vld [vmem:[%s279 + $0x350] sm:$0xff]
        %v1686 = vld [vmem:[%s279 + $0x358] sm:$0xff]
        %v1687 = vld [vmem:[%s279 + $0x360] sm:$0xff]
        %v1688 = vld [vmem:[%s279 + $0x368] sm:$0xff]
        %v1689 = vld [vmem:[%s279 + $0x370] sm:$0xff]
        %v1690 = vld [vmem:[%s279 + $0x378] sm:$0xff]
        %v1691 = vld [vmem:[%s279 + $0x380] sm:$0xff]
        %v1692 = vld [vmem:[%s279 + $0x388] sm:$0xff]
        %v1693 = vld [vmem:[%s279 + $0x390] sm:$0xff]
        %v1694 = vld [vmem:[%s279 + $0x398] sm:$0xff]
        %v1695 = vld [vmem:[%s279 + $0x3a0] sm:$0xff]
        %v1696 = vld [vmem:[%s279 + $0x3a8] sm:$0xff]
        %v1697 = vld [vmem:[%s279 + $0x3b0] sm:$0xff]
        %v1698 = vld [vmem:[%s279 + $0x3b8] sm:$0xff]
        %v1699 = vld [vmem:[%s279 + $0x3c0] sm:$0xff]
        %v1700 = vld [vmem:[%s279 + $0x3c8] sm:$0xff]
        %v1701 = vld [vmem:[%s279 + $0x3d0] sm:$0xff]
        %v1702 = vld [vmem:[%s279 + $0x3d8] sm:$0xff]
        %v1703 = vld [vmem:[%s279 + $0x3e0] sm:$0xff]
        %v1704 = vld [vmem:[%s279 + $0x3e8] sm:$0xff]
        %v1705 = vld [vmem:[%s279 + $0x3f0] sm:$0xff]
        %v1706 = vld [vmem:[%s279 + $0x3f8] sm:$0xff]
        %v1707 = vld [vmem:[%s279 + $0x400] sm:$0xff]
        %v1708 = vld [vmem:[%s279 + $0x408] sm:$0xff]
        %v1709 = vld [vmem:[%s279 + $0x410] sm:$0xff]
        %v1710 = vld [vmem:[%s279 + $0x418] sm:$0xff]
        %v1711 = vld [vmem:[%s279 + $0x420] sm:$0xff]
        %v1712 = vld [vmem:[%s279 + $0x428] sm:$0xff]
        %v1713 = vld [vmem:[%s279 + $0x430] sm:$0xff]
        %v1714 = vld [vmem:[%s279 + $0x438] sm:$0xff]
        %v1715 = vld [vmem:[%s279 + $0x440] sm:$0xff]
        %v1716 = vld [vmem:[%s279 + $0x448] sm:$0xff]
        %v1717 = vld [vmem:[%s279 + $0x450] sm:$0xff]
        %v1718 = vld [vmem:[%s279 + $0x458] sm:$0xff]
        %v1719 = vld [vmem:[%s279 + $0x460] sm:$0xff]
        %v1720 = vld [vmem:[%s279 + $0x468] sm:$0xff]
        %v1721 = vld [vmem:[%s279 + $0x470] sm:$0xff]
        %v1722 = vld [vmem:[%s279 + $0x478] sm:$0xff]
        %v1723 = vld [vmem:[%s279 + $0x480] sm:$0xff]
        %v1724 = vld [vmem:[%s279 + $0x488] sm:$0xff]
        %v1725 = vld [vmem:[%s279 + $0x490] sm:$0xff]
        %v1726 = vld [vmem:[%s279 + $0x498] sm:$0xff]
        %v1727 = vld [vmem:[%s279 + $0x4a0] sm:$0xff]
        %v1728 = vld [vmem:[%s279 + $0x4a8] sm:$0xff]
        %v1729 = vld [vmem:[%s279 + $0x4b0] sm:$0xff]
        %v1730 = vld [vmem:[%s279 + $0x4b8] sm:$0xff]
        %v1731 = vld [vmem:[%s279 + $0x4c0] sm:$0xff]
        %v1732 = vld [vmem:[%s279 + $0x4c8] sm:$0xff]
        %v1733 = vld [vmem:[%s279 + $0x4d0] sm:$0xff]
        %v1734 = vld [vmem:[%s279 + $0x4d8] sm:$0xff]
        %v1735 = vld [vmem:[%s279 + $0x4e0] sm:$0xff]
        %v1736 = vld [vmem:[%s279 + $0x4e8] sm:$0xff]
        %v1737 = vld [vmem:[%s279 + $0x4f0] sm:$0xff]
        %v1738 = vld [vmem:[%s279 + $0x4f8] sm:$0xff]
        %v1739 = vld [vmem:[%s279 + $0x500] sm:$0xff]
        %v1740 = vld [vmem:[%s279 + $0x508] sm:$0xff]
        %v1741 = vld [vmem:[%s279 + $0x510] sm:$0xff]
        %v1742 = vld [vmem:[%s279 + $0x518] sm:$0xff]
        %v1743 = vld [vmem:[%s279 + $0x520] sm:$0xff]
        %v1744 = vld [vmem:[%s279 + $0x528] sm:$0xff]
        %v1745 = vld [vmem:[%s279 + $0x530] sm:$0xff]
        %v1746 = vld [vmem:[%s279 + $0x538] sm:$0xff]
        %v1747 = vld [vmem:[%s279 + $0x540] sm:$0xff]
        %v1748 = vld [vmem:[%s279 + $0x548] sm:$0xff]
        %v1749 = vld [vmem:[%s279 + $0x550] sm:$0xff]
        %v1750 = vld [vmem:[%s279 + $0x558] sm:$0xff]
        %v1751 = vld [vmem:[%s279 + $0x560] sm:$0xff]
        %v1752 = vld [vmem:[%s279 + $0x568] sm:$0xff]
        %v1753 = vld [vmem:[%s279 + $0x570] sm:$0xff]
        %v1754 = vld [vmem:[%s279 + $0x578] sm:$0xff]
        %v1755 = vld [vmem:[%s279 + $0x580] sm:$0xff]
        %v1756 = vld [vmem:[%s279 + $0x588] sm:$0xff]
        %v1757 = vld [vmem:[%s279 + $0x590] sm:$0xff]
        %v1758 = vld [vmem:[%s279 + $0x598] sm:$0xff]
        %v1759 = vld [vmem:[%s279 + $0x5a0] sm:$0xff]
        %v1760 = vld [vmem:[%s279 + $0x5a8] sm:$0xff]
        %v1761 = vld [vmem:[%s279 + $0x5b0] sm:$0xff]
        %v1762 = vld [vmem:[%s279 + $0x5b8] sm:$0xff]
        %v1763 = vld [vmem:[%s279 + $0x5c0] sm:$0xff]
        %v1764 = vld [vmem:[%s279 + $0x5c8] sm:$0xff]
        %v1765 = vld [vmem:[%s279 + $0x5d0] sm:$0xff]
        %v1766 = vld [vmem:[%s279 + $0x5d8] sm:$0xff]
        %v1767 = vld [vmem:[%s279 + $0x5e0] sm:$0xff]
        %v1768 = vld [vmem:[%s279 + $0x5e8] sm:$0xff]
        %v1769 = vld [vmem:[%s279 + $0x5f0] sm:$0xff]
        %v1770 = vld [vmem:[%s279 + $0x5f8] sm:$0xff]
        %v1771 = vld [vmem:[%s279 + $0x600] sm:$0xff]
        %v1772 = vld [vmem:[%s279 + $0x608] sm:$0xff]
        %v1773 = vld [vmem:[%s279 + $0x610] sm:$0xff]
        %v1774 = vld [vmem:[%s279 + $0x618] sm:$0xff]
        %v1775 = vld [vmem:[%s279 + $0x620] sm:$0xff]
        %v1776 = vld [vmem:[%s279 + $0x628] sm:$0xff]
        %v1777 = vld [vmem:[%s279 + $0x630] sm:$0xff]
        %v1778 = vld [vmem:[%s279 + $0x638] sm:$0xff]
        %v1779 = vld [vmem:[%s279 + $0x640] sm:$0xff]
        %v1780 = vld [vmem:[%s279 + $0x648] sm:$0xff]
        %v1781 = vld [vmem:[%s279 + $0x650] sm:$0xff]
        %v1782 = vld [vmem:[%s279 + $0x658] sm:$0xff]
        %v1783 = vld [vmem:[%s279 + $0x660] sm:$0xff]
        %v1784 = vld [vmem:[%s279 + $0x668] sm:$0xff]
        %v1785 = vld [vmem:[%s279 + $0x670] sm:$0xff]
        %v1786 = vld [vmem:[%s279 + $0x678] sm:$0xff]
        %v1787 = vld [vmem:[%s279 + $0x680] sm:$0xff]
        %v1788 = vld [vmem:[%s279 + $0x688] sm:$0xff]
        %v1789 = vld [vmem:[%s279 + $0x690] sm:$0xff]
        %v1790 = vld [vmem:[%s279 + $0x698] sm:$0xff]
        %v1791 = vld [vmem:[%s279 + $0x6a0] sm:$0xff]
        %v1792 = vld [vmem:[%s279 + $0x6a8] sm:$0xff]
        %v1793 = vld [vmem:[%s279 + $0x6b0] sm:$0xff]
        %v1794 = vld [vmem:[%s279 + $0x6b8] sm:$0xff]
        %v1795 = vld [vmem:[%s279 + $0x6c0] sm:$0xff]
        %v1796 = vld [vmem:[%s279 + $0x6c8] sm:$0xff]
        %v1797 = vld [vmem:[%s279 + $0x6d0] sm:$0xff]
        %v1798 = vld [vmem:[%s279 + $0x6d8] sm:$0xff]
        %v1799 = vld [vmem:[%s279 + $0x6e0] sm:$0xff]
        %v1800 = vld [vmem:[%s279 + $0x6e8] sm:$0xff]
        %v1801 = vld [vmem:[%s279 + $0x6f0] sm:$0xff]
        %v1802 = vld [vmem:[%s279 + $0x6f8] sm:$0xff]
        %v1803 = vld [vmem:[%s279 + $0x700] sm:$0xff]
        %v1804 = vld [vmem:[%s279 + $0x708] sm:$0xff]
        %v1805 = vld [vmem:[%s279 + $0x710] sm:$0xff]
        %v1806 = vld [vmem:[%s279 + $0x718] sm:$0xff]
        %v1807 = vld [vmem:[%s279 + $0x720] sm:$0xff]
        %v1808 = vld [vmem:[%s279 + $0x728] sm:$0xff]
        %v1809 = vld [vmem:[%s279 + $0x730] sm:$0xff]
        %v1810 = vld [vmem:[%s279 + $0x738] sm:$0xff]
        %v1811 = vld [vmem:[%s279 + $0x740] sm:$0xff]
        %v1812 = vld [vmem:[%s279 + $0x748] sm:$0xff]
        %v1813 = vld [vmem:[%s279 + $0x750] sm:$0xff]
        %v1814 = vld [vmem:[%s279 + $0x758] sm:$0xff]
        %v1815 = vld [vmem:[%s279 + $0x760] sm:$0xff]
        %v1816 = vld [vmem:[%s279 + $0x768] sm:$0xff]
        %v1817 = vld [vmem:[%s279 + $0x770] sm:$0xff]
        %v1818 = vld [vmem:[%s279 + $0x778] sm:$0xff]
        %v1819 = vld [vmem:[%s279 + $0x780] sm:$0xff]
        %v1820 = vld [vmem:[%s279 + $0x788] sm:$0xff]
        %v1821 = vld [vmem:[%s279 + $0x790] sm:$0xff]
        %v1822 = vld [vmem:[%s279 + $0x798] sm:$0xff]
        %v1823 = vld [vmem:[%s279 + $0x7a0] sm:$0xff]
        %v1824 = vld [vmem:[%s279 + $0x7a8] sm:$0xff]
        %v1825 = vld [vmem:[%s279 + $0x7b0] sm:$0xff]
        %v1826 = vld [vmem:[%s279 + $0x7b8] sm:$0xff]
        %v1827 = vld [vmem:[%s279 + $0x7c0] sm:$0xff]
        %v1828 = vld [vmem:[%s279 + $0x7c8] sm:$0xff]
        %v1829 = vld [vmem:[%s279 + $0x7d0] sm:$0xff]
        %v1830 = vld [vmem:[%s279 + $0x7d8] sm:$0xff]
        %v1831 = vld [vmem:[%s279 + $0x7e0] sm:$0xff]
        %v1832 = vld [vmem:[%s279 + $0x7e8] sm:$0xff]
        %v1833 = vld [vmem:[%s279 + $0x7f0] sm:$0xff]
        %v1834 = vld [vmem:[%s279 + $0x7f8] sm:$0xff]
        %v1835 = vmul.f32 %v1579, %v811
        %v1836 = vmul.f32 %v1580, %v812
        %v1837 = vmul.f32 %v1581, %v813
        %v1838 = vmul.f32 %v1582, %v814
        %v1839 = vmul.f32 %v1583, %v815
        %v1840 = vmul.f32 %v1584, %v816
        %v1841 = vmul.f32 %v1585, %v817
        %v1842 = vmul.f32 %v1586, %v818
        %v1843 = vmul.f32 %v1587, %v819
        %v1844 = vmul.f32 %v1588, %v820
        %v1845 = vmul.f32 %v1589, %v821
        %v1846 = vmul.f32 %v1590, %v822
        %v1847 = vmul.f32 %v1591, %v823
        %v1848 = vmul.f32 %v1592, %v824
        %v1849 = vmul.f32 %v1593, %v825
        %v1850 = vmul.f32 %v1594, %v826
        %v1851 = vmul.f32 %v1595, %v827
        %v1852 = vmul.f32 %v1596, %v828
        %v1853 = vmul.f32 %v1597, %v829
        %v1854 = vmul.f32 %v1598, %v830
        %v1855 = vmul.f32 %v1599, %v831
        %v1856 = vmul.f32 %v1600, %v832
        %v1857 = vmul.f32 %v1601, %v833
        %v1858 = vmul.f32 %v1602, %v834
        %v1859 = vmul.f32 %v1603, %v835
        %v1860 = vmul.f32 %v1604, %v836
        %v1861 = vmul.f32 %v1605, %v837
        %v1862 = vmul.f32 %v1606, %v838
        %v1863 = vmul.f32 %v1607, %v839
        %v1864 = vmul.f32 %v1608, %v840
        %v1865 = vmul.f32 %v1609, %v841
        %v1866 = vmul.f32 %v1610, %v842
        %v1867 = vmul.f32 %v1611, %v843
        %v1868 = vmul.f32 %v1612, %v844
        %v1869 = vmul.f32 %v1613, %v845
        %v1870 = vmul.f32 %v1614, %v846
        %v1871 = vmul.f32 %v1615, %v847
        %v1872 = vmul.f32 %v1616, %v848
        %v1873 = vmul.f32 %v1617, %v849
        %v1874 = vmul.f32 %v1618, %v850
        %v1875 = vmul.f32 %v1619, %v851
        %v1876 = vmul.f32 %v1620, %v852
        %v1877 = vmul.f32 %v1621, %v853
        %v1878 = vmul.f32 %v1622, %v854
        %v1879 = vmul.f32 %v1623, %v855
        %v1880 = vmul.f32 %v1624, %v856
        %v1881 = vmul.f32 %v1625, %v857
        %v1882 = vmul.f32 %v1626, %v858
        %v1883 = vmul.f32 %v1627, %v859
        %v1884 = vmul.f32 %v1628, %v860
        %v1885 = vmul.f32 %v1629, %v861
        %v1886 = vmul.f32 %v1630, %v862
        %v1887 = vmul.f32 %v1631, %v863
        %v1888 = vmul.f32 %v1632, %v864
        %v1889 = vmul.f32 %v1633, %v865
        %v1890 = vmul.f32 %v1634, %v866
        %v1891 = vmul.f32 %v1635, %v867
        %v1892 = vmul.f32 %v1636, %v868
        %v1893 = vmul.f32 %v1637, %v869
        %v1894 = vmul.f32 %v1638, %v870
        %v1895 = vmul.f32 %v1639, %v871
        %v1896 = vmul.f32 %v1640, %v872
        %v1897 = vmul.f32 %v1641, %v873
        %v1898 = vmul.f32 %v1642, %v874
        %v1899 = vmul.f32 %v1643, %v875
        %v1900 = vmul.f32 %v1644, %v876
        %v1901 = vmul.f32 %v1645, %v877
        %v1902 = vmul.f32 %v1646, %v878
        %v1903 = vmul.f32 %v1647, %v879
        %v1904 = vmul.f32 %v1648, %v880
        %v1905 = vmul.f32 %v1649, %v881
        %v1906 = vmul.f32 %v1650, %v882
        %v1907 = vmul.f32 %v1651, %v883
        %v1908 = vmul.f32 %v1652, %v884
        %v1909 = vmul.f32 %v1653, %v885
        %v1910 = vmul.f32 %v1654, %v886
        %v1911 = vmul.f32 %v1655, %v887
        %v1912 = vmul.f32 %v1656, %v888
        %v1913 = vmul.f32 %v1657, %v889
        %v1914 = vmul.f32 %v1658, %v890
        %v1915 = vmul.f32 %v1659, %v891
        %v1916 = vmul.f32 %v1660, %v892
        %v1917 = vmul.f32 %v1661, %v893
        %v1918 = vmul.f32 %v1662, %v894
        %v1919 = vmul.f32 %v1663, %v895
        %v1920 = vmul.f32 %v1664, %v896
        %v1921 = vmul.f32 %v1665, %v897
        %v1922 = vmul.f32 %v1666, %v898
        %v1923 = vmul.f32 %v1667, %v899
        %v1924 = vmul.f32 %v1668, %v900
        %v1925 = vmul.f32 %v1669, %v901
        %v1926 = vmul.f32 %v1670, %v902
        %v1927 = vmul.f32 %v1671, %v903
        %v1928 = vmul.f32 %v1672, %v904
        %v1929 = vmul.f32 %v1673, %v905
        %v1930 = vmul.f32 %v1674, %v906
        %v1931 = vmul.f32 %v1675, %v907
        %v1932 = vmul.f32 %v1676, %v908
        %v1933 = vmul.f32 %v1677, %v909
        %v1934 = vmul.f32 %v1678, %v910
        %v1935 = vmul.f32 %v1679, %v911
        %v1936 = vmul.f32 %v1680, %v912
        %v1937 = vmul.f32 %v1681, %v913
        %v1938 = vmul.f32 %v1682, %v914
        %v1939 = vmul.f32 %v1683, %v915
        %v1940 = vmul.f32 %v1684, %v916
        %v1941 = vmul.f32 %v1685, %v917
        %v1942 = vmul.f32 %v1686, %v918
        %v1943 = vmul.f32 %v1687, %v919
        %v1944 = vmul.f32 %v1688, %v920
        %v1945 = vmul.f32 %v1689, %v921
        %v1946 = vmul.f32 %v1690, %v922
        %v1947 = vmul.f32 %v1691, %v923
        %v1948 = vmul.f32 %v1692, %v924
        %v1949 = vmul.f32 %v1693, %v925
        %v1950 = vmul.f32 %v1694, %v926
        %v1951 = vmul.f32 %v1695, %v927
        %v1952 = vmul.f32 %v1696, %v928
        %v1953 = vmul.f32 %v1697, %v929
        %v1954 = vmul.f32 %v1698, %v930
        %v1955 = vmul.f32 %v1699, %v931
        %v1956 = vmul.f32 %v1700, %v932
        %v1957 = vmul.f32 %v1701, %v933
        %v1958 = vmul.f32 %v1702, %v934
        %v1959 = vmul.f32 %v1703, %v935
        %v1960 = vmul.f32 %v1704, %v936
        %v1961 = vmul.f32 %v1705, %v937
        %v1962 = vmul.f32 %v1706, %v938
        %v1963 = vmul.f32 %v1707, %v939
        %v1964 = vmul.f32 %v1708, %v940
        %v1965 = vmul.f32 %v1709, %v941
        %v1966 = vmul.f32 %v1710, %v942
        %v1967 = vmul.f32 %v1711, %v943
        %v1968 = vmul.f32 %v1712, %v944
        %v1969 = vmul.f32 %v1713, %v945
        %v1970 = vmul.f32 %v1714, %v946
        %v1971 = vmul.f32 %v1715, %v947
        %v1972 = vmul.f32 %v1716, %v948
        %v1973 = vmul.f32 %v1717, %v949
        %v1974 = vmul.f32 %v1718, %v950
        %v1975 = vmul.f32 %v1719, %v951
        %v1976 = vmul.f32 %v1720, %v952
        %v1977 = vmul.f32 %v1721, %v953
        %v1978 = vmul.f32 %v1722, %v954
        %v1979 = vmul.f32 %v1723, %v955
        %v1980 = vmul.f32 %v1724, %v956
        %v1981 = vmul.f32 %v1725, %v957
        %v1982 = vmul.f32 %v1726, %v958
        %v1983 = vmul.f32 %v1727, %v959
        %v1984 = vmul.f32 %v1728, %v960
        %v1985 = vmul.f32 %v1729, %v961
        %v1986 = vmul.f32 %v1730, %v962
        %v1987 = vmul.f32 %v1731, %v963
        %v1988 = vmul.f32 %v1732, %v964
        %v1989 = vmul.f32 %v1733, %v965
        %v1990 = vmul.f32 %v1734, %v966
        %v1991 = vmul.f32 %v1735, %v967
        %v1992 = vmul.f32 %v1736, %v968
        %v1993 = vmul.f32 %v1737, %v969
        %v1994 = vmul.f32 %v1738, %v970
        %v1995 = vmul.f32 %v1739, %v971
        %v1996 = vmul.f32 %v1740, %v972
        %v1997 = vmul.f32 %v1741, %v973
        %v1998 = vmul.f32 %v1742, %v974
        %v1999 = vmul.f32 %v1743, %v975
        %v2000 = vmul.f32 %v1744, %v976
        %v2001 = vmul.f32 %v1745, %v977
        %v2002 = vmul.f32 %v1746, %v978
        %v2003 = vmul.f32 %v1747, %v979
        %v2004 = vmul.f32 %v1748, %v980
        %v2005 = vmul.f32 %v1749, %v981
        %v2006 = vmul.f32 %v1750, %v982
        %v2007 = vmul.f32 %v1751, %v983
        %v2008 = vmul.f32 %v1752, %v984
        %v2009 = vmul.f32 %v1753, %v985
        %v2010 = vmul.f32 %v1754, %v986
        %v2011 = vmul.f32 %v1755, %v987
        %v2012 = vmul.f32 %v1756, %v988
        %v2013 = vmul.f32 %v1757, %v989
        %v2014 = vmul.f32 %v1758, %v990
        %v2015 = vmul.f32 %v1759, %v991
        %v2016 = vmul.f32 %v1760, %v992
        %v2017 = vmul.f32 %v1761, %v993
        %v2018 = vmul.f32 %v1762, %v994
        %v2019 = vmul.f32 %v1763, %v995
        %v2020 = vmul.f32 %v1764, %v996
        %v2021 = vmul.f32 %v1765, %v997
        %v2022 = vmul.f32 %v1766, %v998
        %v2023 = vmul.f32 %v1767, %v999
        %v2024 = vmul.f32 %v1768, %v1000
        %v2025 = vmul.f32 %v1769, %v1001
        %v2026 = vmul.f32 %v1770, %v1002
        %v2027 = vmul.f32 %v1771, %v1003
        %v2028 = vmul.f32 %v1772, %v1004
        %v2029 = vmul.f32 %v1773, %v1005
        %v2030 = vmul.f32 %v1774, %v1006
        %v2031 = vmul.f32 %v1775, %v1007
        %v2032 = vmul.f32 %v1776, %v1008
        %v2033 = vmul.f32 %v1777, %v1009
        %v2034 = vmul.f32 %v1778, %v1010
        %v2035 = vmul.f32 %v1779, %v1011
        %v2036 = vmul.f32 %v1780, %v1012
        %v2037 = vmul.f32 %v1781, %v1013
        %v2038 = vmul.f32 %v1782, %v1014
        %v2039 = vmul.f32 %v1783, %v1015
        %v2040 = vmul.f32 %v1784, %v1016
        %v2041 = vmul.f32 %v1785, %v1017
        %v2042 = vmul.f32 %v1786, %v1018
        %v2043 = vmul.f32 %v1787, %v1019
        %v2044 = vmul.f32 %v1788, %v1020
        %v2045 = vmul.f32 %v1789, %v1021
        %v2046 = vmul.f32 %v1790, %v1022
        %v2047 = vmul.f32 %v1791, %v1023
        %v2048 = vmul.f32 %v1792, %v1024
        %v2049 = vmul.f32 %v1793, %v1025
        %v2050 = vmul.f32 %v1794, %v1026
        %v2051 = vmul.f32 %v1795, %v1027
        %v2052 = vmul.f32 %v1796, %v1028
        %v2053 = vmul.f32 %v1797, %v1029
        %v2054 = vmul.f32 %v1798, %v1030
        %v2055 = vmul.f32 %v1799, %v1031
        %v2056 = vmul.f32 %v1800, %v1032
        %v2057 = vmul.f32 %v1801, %v1033
        %v2058 = vmul.f32 %v1802, %v1034
        %v2059 = vmul.f32 %v1803, %v1035
        %v2060 = vmul.f32 %v1804, %v1036
        %v2061 = vmul.f32 %v1805, %v1037
        %v2062 = vmul.f32 %v1806, %v1038
        %v2063 = vmul.f32 %v1807, %v1039
        %v2064 = vmul.f32 %v1808, %v1040
        %v2065 = vmul.f32 %v1809, %v1041
        %v2066 = vmul.f32 %v1810, %v1042
        %v2067 = vmul.f32 %v1811, %v1043
        %v2068 = vmul.f32 %v1812, %v1044
        %v2069 = vmul.f32 %v1813, %v1045
        %v2070 = vmul.f32 %v1814, %v1046
        %v2071 = vmul.f32 %v1815, %v1047
        %v2072 = vmul.f32 %v1816, %v1048
        %v2073 = vmul.f32 %v1817, %v1049
        %v2074 = vmul.f32 %v1818, %v1050
        %v2075 = vmul.f32 %v1819, %v1051
        %v2076 = vmul.f32 %v1820, %v1052
        %v2077 = vmul.f32 %v1821, %v1053
        %v2078 = vmul.f32 %v1822, %v1054
        %v2079 = vmul.f32 %v1823, %v1055
        %v2080 = vmul.f32 %v1824, %v1056
        %v2081 = vmul.f32 %v1825, %v1057
        %v2082 = vmul.f32 %v1826, %v1058
        %v2083 = vmul.f32 %v1827, %v1059
        %v2084 = vmul.f32 %v1828, %v1060
        %v2085 = vmul.f32 %v1829, %v1061
        %v2086 = vmul.f32 %v1830, %v1062
        %v2087 = vmul.f32 %v1831, %v1063
        %v2088 = vmul.f32 %v1832, %v1064
        %v2089 = vmul.f32 %v1833, %v1065
        %v2090 = vmul.f32 %v1834, %v1066
        %v2091 = vld [vmem:[#allocation2] sm:$0xff]
        %v2092 = vld [vmem:[#allocation2 + $0x8] sm:$0xff]
        %v2093 = vld [vmem:[#allocation2 + $0x10] sm:$0xff]
        %v2094 = vld [vmem:[#allocation2 + $0x18] sm:$0xff]
        %v2095 = vld [vmem:[#allocation2 + $0x20] sm:$0xff]
        %v2096 = vld [vmem:[#allocation2 + $0x28] sm:$0xff]
        %v2097 = vld [vmem:[#allocation2 + $0x30] sm:$0xff]
        %v2098 = vld [vmem:[#allocation2 + $0x38] sm:$0xff]
        %v2099 = vld [vmem:[#allocation2 + $0x40] sm:$0xff]
        %v2100 = vld [vmem:[#allocation2 + $0x48] sm:$0xff]
        %v2101 = vld [vmem:[#allocation2 + $0x50] sm:$0xff]
        %v2102 = vld [vmem:[#allocation2 + $0x58] sm:$0xff]
        %v2103 = vld [vmem:[#allocation2 + $0x60] sm:$0xff]
        %v2104 = vld [vmem:[#allocation2 + $0x68] sm:$0xff]
        %v2105 = vld [vmem:[#allocation2 + $0x70] sm:$0xff]
        %v2106 = vld [vmem:[#allocation2 + $0x78] sm:$0xff]
        %v2107 = vld [vmem:[#allocation2 + $0x80] sm:$0xff]
        %v2108 = vld [vmem:[#allocation2 + $0x88] sm:$0xff]
        %v2109 = vld [vmem:[#allocation2 + $0x90] sm:$0xff]
        %v2110 = vld [vmem:[#allocation2 + $0x98] sm:$0xff]
        %v2111 = vld [vmem:[#allocation2 + $0xa0] sm:$0xff]
        %v2112 = vld [vmem:[#allocation2 + $0xa8] sm:$0xff]
        %v2113 = vld [vmem:[#allocation2 + $0xb0] sm:$0xff]
        %v2114 = vld [vmem:[#allocation2 + $0xb8] sm:$0xff]
        %v2115 = vld [vmem:[#allocation2 + $0xc0] sm:$0xff]
        %v2116 = vld [vmem:[#allocation2 + $0xc8] sm:$0xff]
        %v2117 = vld [vmem:[#allocation2 + $0xd0] sm:$0xff]
        %v2118 = vld [vmem:[#allocation2 + $0xd8] sm:$0xff]
        %v2119 = vld [vmem:[#allocation2 + $0xe0] sm:$0xff]
        %v2120 = vld [vmem:[#allocation2 + $0xe8] sm:$0xff]
        %v2121 = vld [vmem:[#allocation2 + $0xf0] sm:$0xff]
        %v2122 = vld [vmem:[#allocation2 + $0xf8] sm:$0xff]
        %v2123 = vld [vmem:[#allocation2 + $0x100] sm:$0xff]
        %v2124 = vld [vmem:[#allocation2 + $0x108] sm:$0xff]
        %v2125 = vld [vmem:[#allocation2 + $0x110] sm:$0xff]
        %v2126 = vld [vmem:[#allocation2 + $0x118] sm:$0xff]
        %v2127 = vld [vmem:[#allocation2 + $0x120] sm:$0xff]
        %v2128 = vld [vmem:[#allocation2 + $0x128] sm:$0xff]
        %v2129 = vld [vmem:[#allocation2 + $0x130] sm:$0xff]
        %v2130 = vld [vmem:[#allocation2 + $0x138] sm:$0xff]
        %v2131 = vld [vmem:[#allocation2 + $0x140] sm:$0xff]
        %v2132 = vld [vmem:[#allocation2 + $0x148] sm:$0xff]
        %v2133 = vld [vmem:[#allocation2 + $0x150] sm:$0xff]
        %v2134 = vld [vmem:[#allocation2 + $0x158] sm:$0xff]
        %v2135 = vld [vmem:[#allocation2 + $0x160] sm:$0xff]
        %v2136 = vld [vmem:[#allocation2 + $0x168] sm:$0xff]
        %v2137 = vld [vmem:[#allocation2 + $0x170] sm:$0xff]
        %v2138 = vld [vmem:[#allocation2 + $0x178] sm:$0xff]
        %v2139 = vld [vmem:[#allocation2 + $0x180] sm:$0xff]
        %v2140 = vld [vmem:[#allocation2 + $0x188] sm:$0xff]
        %v2141 = vld [vmem:[#allocation2 + $0x190] sm:$0xff]
        %v2142 = vld [vmem:[#allocation2 + $0x198] sm:$0xff]
        %v2143 = vld [vmem:[#allocation2 + $0x1a0] sm:$0xff]
        %v2144 = vld [vmem:[#allocation2 + $0x1a8] sm:$0xff]
        %v2145 = vld [vmem:[#allocation2 + $0x1b0] sm:$0xff]
        %v2146 = vld [vmem:[#allocation2 + $0x1b8] sm:$0xff]
        %v2147 = vld [vmem:[#allocation2 + $0x1c0] sm:$0xff]
        %v2148 = vld [vmem:[#allocation2 + $0x1c8] sm:$0xff]
        %v2149 = vld [vmem:[#allocation2 + $0x1d0] sm:$0xff]
        %v2150 = vld [vmem:[#allocation2 + $0x1d8] sm:$0xff]
        %v2151 = vld [vmem:[#allocation2 + $0x1e0] sm:$0xff]
        %v2152 = vld [vmem:[#allocation2 + $0x1e8] sm:$0xff]
        %v2153 = vld [vmem:[#allocation2 + $0x1f0] sm:$0xff]
        %v2154 = vld [vmem:[#allocation2 + $0x1f8] sm:$0xff]
        %v2155 = vld [vmem:[#allocation2 + $0x200] sm:$0xff]
        %v2156 = vld [vmem:[#allocation2 + $0x208] sm:$0xff]
        %v2157 = vld [vmem:[#allocation2 + $0x210] sm:$0xff]
        %v2158 = vld [vmem:[#allocation2 + $0x218] sm:$0xff]
        %v2159 = vld [vmem:[#allocation2 + $0x220] sm:$0xff]
        %v2160 = vld [vmem:[#allocation2 + $0x228] sm:$0xff]
        %v2161 = vld [vmem:[#allocation2 + $0x230] sm:$0xff]
        %v2162 = vld [vmem:[#allocation2 + $0x238] sm:$0xff]
        %v2163 = vld [vmem:[#allocation2 + $0x240] sm:$0xff]
        %v2164 = vld [vmem:[#allocation2 + $0x248] sm:$0xff]
        %v2165 = vld [vmem:[#allocation2 + $0x250] sm:$0xff]
        %v2166 = vld [vmem:[#allocation2 + $0x258] sm:$0xff]
        %v2167 = vld [vmem:[#allocation2 + $0x260] sm:$0xff]
        %v2168 = vld [vmem:[#allocation2 + $0x268] sm:$0xff]
        %v2169 = vld [vmem:[#allocation2 + $0x270] sm:$0xff]
        %v2170 = vld [vmem:[#allocation2 + $0x278] sm:$0xff]
        %v2171 = vld [vmem:[#allocation2 + $0x280] sm:$0xff]
        %v2172 = vld [vmem:[#allocation2 + $0x288] sm:$0xff]
        %v2173 = vld [vmem:[#allocation2 + $0x290] sm:$0xff]
        %v2174 = vld [vmem:[#allocation2 + $0x298] sm:$0xff]
        %v2175 = vld [vmem:[#allocation2 + $0x2a0] sm:$0xff]
        %v2176 = vld [vmem:[#allocation2 + $0x2a8] sm:$0xff]
        %v2177 = vld [vmem:[#allocation2 + $0x2b0] sm:$0xff]
        %v2178 = vld [vmem:[#allocation2 + $0x2b8] sm:$0xff]
        %v2179 = vld [vmem:[#allocation2 + $0x2c0] sm:$0xff]
        %v2180 = vld [vmem:[#allocation2 + $0x2c8] sm:$0xff]
        %v2181 = vld [vmem:[#allocation2 + $0x2d0] sm:$0xff]
        %v2182 = vld [vmem:[#allocation2 + $0x2d8] sm:$0xff]
        %v2183 = vld [vmem:[#allocation2 + $0x2e0] sm:$0xff]
        %v2184 = vld [vmem:[#allocation2 + $0x2e8] sm:$0xff]
        %v2185 = vld [vmem:[#allocation2 + $0x2f0] sm:$0xff]
        %v2186 = vld [vmem:[#allocation2 + $0x2f8] sm:$0xff]
        %v2187 = vld [vmem:[#allocation2 + $0x300] sm:$0xff]
        %v2188 = vld [vmem:[#allocation2 + $0x308] sm:$0xff]
        %v2189 = vld [vmem:[#allocation2 + $0x310] sm:$0xff]
        %v2190 = vld [vmem:[#allocation2 + $0x318] sm:$0xff]
        %v2191 = vld [vmem:[#allocation2 + $0x320] sm:$0xff]
        %v2192 = vld [vmem:[#allocation2 + $0x328] sm:$0xff]
        %v2193 = vld [vmem:[#allocation2 + $0x330] sm:$0xff]
        %v2194 = vld [vmem:[#allocation2 + $0x338] sm:$0xff]
        %v2195 = vld [vmem:[#allocation2 + $0x340] sm:$0xff]
        %v2196 = vld [vmem:[#allocation2 + $0x348] sm:$0xff]
        %v2197 = vld [vmem:[#allocation2 + $0x350] sm:$0xff]
        %v2198 = vld [vmem:[#allocation2 + $0x358] sm:$0xff]
        %v2199 = vld [vmem:[#allocation2 + $0x360] sm:$0xff]
        %v2200 = vld [vmem:[#allocation2 + $0x368] sm:$0xff]
        %v2201 = vld [vmem:[#allocation2 + $0x370] sm:$0xff]
        %v2202 = vld [vmem:[#allocation2 + $0x378] sm:$0xff]
        %v2203 = vld [vmem:[#allocation2 + $0x380] sm:$0xff]
        %v2204 = vld [vmem:[#allocation2 + $0x388] sm:$0xff]
        %v2205 = vld [vmem:[#allocation2 + $0x390] sm:$0xff]
        %v2206 = vld [vmem:[#allocation2 + $0x398] sm:$0xff]
        %v2207 = vld [vmem:[#allocation2 + $0x3a0] sm:$0xff]
        %v2208 = vld [vmem:[#allocation2 + $0x3a8] sm:$0xff]
        %v2209 = vld [vmem:[#allocation2 + $0x3b0] sm:$0xff]
        %v2210 = vld [vmem:[#allocation2 + $0x3b8] sm:$0xff]
        %v2211 = vld [vmem:[#allocation2 + $0x3c0] sm:$0xff]
        %v2212 = vld [vmem:[#allocation2 + $0x3c8] sm:$0xff]
        %v2213 = vld [vmem:[#allocation2 + $0x3d0] sm:$0xff]
        %v2214 = vld [vmem:[#allocation2 + $0x3d8] sm:$0xff]
        %v2215 = vld [vmem:[#allocation2 + $0x3e0] sm:$0xff]
        %v2216 = vld [vmem:[#allocation2 + $0x3e8] sm:$0xff]
        %v2217 = vld [vmem:[#allocation2 + $0x3f0] sm:$0xff]
        %v2218 = vld [vmem:[#allocation2 + $0x3f8] sm:$0xff]
        %v2219 = vld [vmem:[#allocation2 + $0x400] sm:$0xff]
        %v2220 = vld [vmem:[#allocation2 + $0x408] sm:$0xff]
        %v2221 = vld [vmem:[#allocation2 + $0x410] sm:$0xff]
        %v2222 = vld [vmem:[#allocation2 + $0x418] sm:$0xff]
        %v2223 = vld [vmem:[#allocation2 + $0x420] sm:$0xff]
        %v2224 = vld [vmem:[#allocation2 + $0x428] sm:$0xff]
        %v2225 = vld [vmem:[#allocation2 + $0x430] sm:$0xff]
        %v2226 = vld [vmem:[#allocation2 + $0x438] sm:$0xff]
        %v2227 = vld [vmem:[#allocation2 + $0x440] sm:$0xff]
        %v2228 = vld [vmem:[#allocation2 + $0x448] sm:$0xff]
        %v2229 = vld [vmem:[#allocation2 + $0x450] sm:$0xff]
        %v2230 = vld [vmem:[#allocation2 + $0x458] sm:$0xff]
        %v2231 = vld [vmem:[#allocation2 + $0x460] sm:$0xff]
        %v2232 = vld [vmem:[#allocation2 + $0x468] sm:$0xff]
        %v2233 = vld [vmem:[#allocation2 + $0x470] sm:$0xff]
        %v2234 = vld [vmem:[#allocation2 + $0x478] sm:$0xff]
        %v2235 = vld [vmem:[#allocation2 + $0x480] sm:$0xff]
        %v2236 = vld [vmem:[#allocation2 + $0x488] sm:$0xff]
        %v2237 = vld [vmem:[#allocation2 + $0x490] sm:$0xff]
        %v2238 = vld [vmem:[#allocation2 + $0x498] sm:$0xff]
        %v2239 = vld [vmem:[#allocation2 + $0x4a0] sm:$0xff]
        %v2240 = vld [vmem:[#allocation2 + $0x4a8] sm:$0xff]
        %v2241 = vld [vmem:[#allocation2 + $0x4b0] sm:$0xff]
        %v2242 = vld [vmem:[#allocation2 + $0x4b8] sm:$0xff]
        %v2243 = vld [vmem:[#allocation2 + $0x4c0] sm:$0xff]
        %v2244 = vld [vmem:[#allocation2 + $0x4c8] sm:$0xff]
        %v2245 = vld [vmem:[#allocation2 + $0x4d0] sm:$0xff]
        %v2246 = vld [vmem:[#allocation2 + $0x4d8] sm:$0xff]
        %v2247 = vld [vmem:[#allocation2 + $0x4e0] sm:$0xff]
        %v2248 = vld [vmem:[#allocation2 + $0x4e8] sm:$0xff]
        %v2249 = vld [vmem:[#allocation2 + $0x4f0] sm:$0xff]
        %v2250 = vld [vmem:[#allocation2 + $0x4f8] sm:$0xff]
        %v2251 = vld [vmem:[#allocation2 + $0x500] sm:$0xff]
        %v2252 = vld [vmem:[#allocation2 + $0x508] sm:$0xff]
        %v2253 = vld [vmem:[#allocation2 + $0x510] sm:$0xff]
        %v2254 = vld [vmem:[#allocation2 + $0x518] sm:$0xff]
        %v2255 = vld [vmem:[#allocation2 + $0x520] sm:$0xff]
        %v2256 = vld [vmem:[#allocation2 + $0x528] sm:$0xff]
        %v2257 = vld [vmem:[#allocation2 + $0x530] sm:$0xff]
        %v2258 = vld [vmem:[#allocation2 + $0x538] sm:$0xff]
        %v2259 = vld [vmem:[#allocation2 + $0x540] sm:$0xff]
        %v2260 = vld [vmem:[#allocation2 + $0x548] sm:$0xff]
        %v2261 = vld [vmem:[#allocation2 + $0x550] sm:$0xff]
        %v2262 = vld [vmem:[#allocation2 + $0x558] sm:$0xff]
        %v2263 = vld [vmem:[#allocation2 + $0x560] sm:$0xff]
        %v2264 = vld [vmem:[#allocation2 + $0x568] sm:$0xff]
        %v2265 = vld [vmem:[#allocation2 + $0x570] sm:$0xff]
        %v2266 = vld [vmem:[#allocation2 + $0x578] sm:$0xff]
        %v2267 = vld [vmem:[#allocation2 + $0x580] sm:$0xff]
        %v2268 = vld [vmem:[#allocation2 + $0x588] sm:$0xff]
        %v2269 = vld [vmem:[#allocation2 + $0x590] sm:$0xff]
        %v2270 = vld [vmem:[#allocation2 + $0x598] sm:$0xff]
        %v2271 = vld [vmem:[#allocation2 + $0x5a0] sm:$0xff]
        %v2272 = vld [vmem:[#allocation2 + $0x5a8] sm:$0xff]
        %v2273 = vld [vmem:[#allocation2 + $0x5b0] sm:$0xff]
        %v2274 = vld [vmem:[#allocation2 + $0x5b8] sm:$0xff]
        %v2275 = vld [vmem:[#allocation2 + $0x5c0] sm:$0xff]
        %v2276 = vld [vmem:[#allocation2 + $0x5c8] sm:$0xff]
        %v2277 = vld [vmem:[#allocation2 + $0x5d0] sm:$0xff]
        %v2278 = vld [vmem:[#allocation2 + $0x5d8] sm:$0xff]
        %v2279 = vld [vmem:[#allocation2 + $0x5e0] sm:$0xff]
        %v2280 = vld [vmem:[#allocation2 + $0x5e8] sm:$0xff]
        %v2281 = vld [vmem:[#allocation2 + $0x5f0] sm:$0xff]
        %v2282 = vld [vmem:[#allocation2 + $0x5f8] sm:$0xff]
        %v2283 = vld [vmem:[#allocation2 + $0x600] sm:$0xff]
        %v2284 = vld [vmem:[#allocation2 + $0x608] sm:$0xff]
        %v2285 = vld [vmem:[#allocation2 + $0x610] sm:$0xff]
        %v2286 = vld [vmem:[#allocation2 + $0x618] sm:$0xff]
        %v2287 = vld [vmem:[#allocation2 + $0x620] sm:$0xff]
        %v2288 = vld [vmem:[#allocation2 + $0x628] sm:$0xff]
        %v2289 = vld [vmem:[#allocation2 + $0x630] sm:$0xff]
        %v2290 = vld [vmem:[#allocation2 + $0x638] sm:$0xff]
        %v2291 = vld [vmem:[#allocation2 + $0x640] sm:$0xff]
        %v2292 = vld [vmem:[#allocation2 + $0x648] sm:$0xff]
        %v2293 = vld [vmem:[#allocation2 + $0x650] sm:$0xff]
        %v2294 = vld [vmem:[#allocation2 + $0x658] sm:$0xff]
        %v2295 = vld [vmem:[#allocation2 + $0x660] sm:$0xff]
        %v2296 = vld [vmem:[#allocation2 + $0x668] sm:$0xff]
        %v2297 = vld [vmem:[#allocation2 + $0x670] sm:$0xff]
        %v2298 = vld [vmem:[#allocation2 + $0x678] sm:$0xff]
        %v2299 = vld [vmem:[#allocation2 + $0x680] sm:$0xff]
        %v2300 = vld [vmem:[#allocation2 + $0x688] sm:$0xff]
        %v2301 = vld [vmem:[#allocation2 + $0x690] sm:$0xff]
        %v2302 = vld [vmem:[#allocation2 + $0x698] sm:$0xff]
        %v2303 = vld [vmem:[#allocation2 + $0x6a0] sm:$0xff]
        %v2304 = vld [vmem:[#allocation2 + $0x6a8] sm:$0xff]
        %v2305 = vld [vmem:[#allocation2 + $0x6b0] sm:$0xff]
        %v2306 = vld [vmem:[#allocation2 + $0x6b8] sm:$0xff]
        %v2307 = vld [vmem:[#allocation2 + $0x6c0] sm:$0xff]
        %v2308 = vld [vmem:[#allocation2 + $0x6c8] sm:$0xff]
        %v2309 = vld [vmem:[#allocation2 + $0x6d0] sm:$0xff]
        %v2310 = vld [vmem:[#allocation2 + $0x6d8] sm:$0xff]
        %v2311 = vld [vmem:[#allocation2 + $0x6e0] sm:$0xff]
        %v2312 = vld [vmem:[#allocation2 + $0x6e8] sm:$0xff]
        %v2313 = vld [vmem:[#allocation2 + $0x6f0] sm:$0xff]
        %v2314 = vld [vmem:[#allocation2 + $0x6f8] sm:$0xff]
        %v2315 = vld [vmem:[#allocation2 + $0x700] sm:$0xff]
        %v2316 = vld [vmem:[#allocation2 + $0x708] sm:$0xff]
        %v2317 = vld [vmem:[#allocation2 + $0x710] sm:$0xff]
        %v2318 = vld [vmem:[#allocation2 + $0x718] sm:$0xff]
        %v2319 = vld [vmem:[#allocation2 + $0x720] sm:$0xff]
        %v2320 = vld [vmem:[#allocation2 + $0x728] sm:$0xff]
        %v2321 = vld [vmem:[#allocation2 + $0x730] sm:$0xff]
        %v2322 = vld [vmem:[#allocation2 + $0x738] sm:$0xff]
        %v2323 = vld [vmem:[#allocation2 + $0x740] sm:$0xff]
        %v2324 = vld [vmem:[#allocation2 + $0x748] sm:$0xff]
        %v2325 = vld [vmem:[#allocation2 + $0x750] sm:$0xff]
        %v2326 = vld [vmem:[#allocation2 + $0x758] sm:$0xff]
        %v2327 = vld [vmem:[#allocation2 + $0x760] sm:$0xff]
        %v2328 = vld [vmem:[#allocation2 + $0x768] sm:$0xff]
        %v2329 = vld [vmem:[#allocation2 + $0x770] sm:$0xff]
        %v2330 = vld [vmem:[#allocation2 + $0x778] sm:$0xff]
        %v2331 = vld [vmem:[#allocation2 + $0x780] sm:$0xff]
        %v2332 = vld [vmem:[#allocation2 + $0x788] sm:$0xff]
        %v2333 = vld [vmem:[#allocation2 + $0x790] sm:$0xff]
        %v2334 = vld [vmem:[#allocation2 + $0x798] sm:$0xff]
        %v2335 = vld [vmem:[#allocation2 + $0x7a0] sm:$0xff]
        %v2336 = vld [vmem:[#allocation2 + $0x7a8] sm:$0xff]
        %v2337 = vld [vmem:[#allocation2 + $0x7b0] sm:$0xff]
        %v2338 = vld [vmem:[#allocation2 + $0x7b8] sm:$0xff]
        %v2339 = vld [vmem:[#allocation2 + $0x7c0] sm:$0xff]
        %v2340 = vld [vmem:[#allocation2 + $0x7c8] sm:$0xff]
        %v2341 = vld [vmem:[#allocation2 + $0x7d0] sm:$0xff]
        %v2342 = vld [vmem:[#allocation2 + $0x7d8] sm:$0xff]
        %v2343 = vld [vmem:[#allocation2 + $0x7e0] sm:$0xff]
        %v2344 = vld [vmem:[#allocation2 + $0x7e8] sm:$0xff]
        %v2345 = vld [vmem:[#allocation2 + $0x7f0] sm:$0xff]
        %v2346 = vld [vmem:[#allocation2 + $0x7f8] sm:$0xff]
        %v2347 = vsub.f32 %v1323, %v1835
        %v2348 = vsub.f32 %v1324, %v1836
        %v2349 = vsub.f32 %v1325, %v1837
        %v2350 = vsub.f32 %v1326, %v1838
        %v2351 = vsub.f32 %v1327, %v1839
        %v2352 = vsub.f32 %v1328, %v1840
        %v2353 = vsub.f32 %v1329, %v1841
        %v2354 = vsub.f32 %v1330, %v1842
        %v2355 = vsub.f32 %v1331, %v1843
        %v2356 = vsub.f32 %v1332, %v1844
        %v2357 = vsub.f32 %v1333, %v1845
        %v2358 = vsub.f32 %v1334, %v1846
        %v2359 = vsub.f32 %v1335, %v1847
        %v2360 = vsub.f32 %v1336, %v1848
        %v2361 = vsub.f32 %v1337, %v1849
        %v2362 = vsub.f32 %v1338, %v1850
        %v2363 = vsub.f32 %v1339, %v1851
        %v2364 = vsub.f32 %v1340, %v1852
        %v2365 = vsub.f32 %v1341, %v1853
        %v2366 = vsub.f32 %v1342, %v1854
        %v2367 = vsub.f32 %v1343, %v1855
        %v2368 = vsub.f32 %v1344, %v1856
        %v2369 = vsub.f32 %v1345, %v1857
        %v2370 = vsub.f32 %v1346, %v1858
        %v2371 = vsub.f32 %v1347, %v1859
        %v2372 = vsub.f32 %v1348, %v1860
        %v2373 = vsub.f32 %v1349, %v1861
        %v2374 = vsub.f32 %v1350, %v1862
        %v2375 = vsub.f32 %v1351, %v1863
        %v2376 = vsub.f32 %v1352, %v1864
        %v2377 = vsub.f32 %v1353, %v1865
        %v2378 = vsub.f32 %v1354, %v1866
        %v2379 = vsub.f32 %v1355, %v1867
        %v2380 = vsub.f32 %v1356, %v1868
        %v2381 = vsub.f32 %v1357, %v1869
        %v2382 = vsub.f32 %v1358, %v1870
        %v2383 = vsub.f32 %v1359, %v1871
        %v2384 = vsub.f32 %v1360, %v1872
        %v2385 = vsub.f32 %v1361, %v1873
        %v2386 = vsub.f32 %v1362, %v1874
        %v2387 = vsub.f32 %v1363, %v1875
        %v2388 = vsub.f32 %v1364, %v1876
        %v2389 = vsub.f32 %v1365, %v1877
        %v2390 = vsub.f32 %v1366, %v1878
        %v2391 = vsub.f32 %v1367, %v1879
        %v2392 = vsub.f32 %v1368, %v1880
        %v2393 = vsub.f32 %v1369, %v1881
        %v2394 = vsub.f32 %v1370, %v1882
        %v2395 = vsub.f32 %v1371, %v1883
        %v2396 = vsub.f32 %v1372, %v1884
        %v2397 = vsub.f32 %v1373, %v1885
        %v2398 = vsub.f32 %v1374, %v1886
        %v2399 = vsub.f32 %v1375, %v1887
        %v2400 = vsub.f32 %v1376, %v1888
        %v2401 = vsub.f32 %v1377, %v1889
        %v2402 = vsub.f32 %v1378, %v1890
        %v2403 = vsub.f32 %v1379, %v1891
        %v2404 = vsub.f32 %v1380, %v1892
        %v2405 = vsub.f32 %v1381, %v1893
        %v2406 = vsub.f32 %v1382, %v1894
        %v2407 = vsub.f32 %v1383, %v1895
        %v2408 = vsub.f32 %v1384, %v1896
        %v2409 = vsub.f32 %v1385, %v1897
        %v2410 = vsub.f32 %v1386, %v1898
        %v2411 = vsub.f32 %v1387, %v1899
        %v2412 = vsub.f32 %v1388, %v1900
        %v2413 = vsub.f32 %v1389, %v1901
        %v2414 = vsub.f32 %v1390, %v1902
        %v2415 = vsub.f32 %v1391, %v1903
        %v2416 = vsub.f32 %v1392, %v1904
        %v2417 = vsub.f32 %v1393, %v1905
        %v2418 = vsub.f32 %v1394, %v1906
        %v2419 = vsub.f32 %v1395, %v1907
        %v2420 = vsub.f32 %v1396, %v1908
        %v2421 = vsub.f32 %v1397, %v1909
        %v2422 = vsub.f32 %v1398, %v1910
        %v2423 = vsub.f32 %v1399, %v1911
        %v2424 = vsub.f32 %v1400, %v1912
        %v2425 = vsub.f32 %v1401, %v1913
        %v2426 = vsub.f32 %v1402, %v1914
        %v2427 = vsub.f32 %v1403, %v1915
        %v2428 = vsub.f32 %v1404, %v1916
        %v2429 = vsub.f32 %v1405, %v1917
        %v2430 = vsub.f32 %v1406, %v1918
        %v2431 = vsub.f32 %v1407, %v1919
        %v2432 = vsub.f32 %v1408, %v1920
        %v2433 = vsub.f32 %v1409, %v1921
        %v2434 = vsub.f32 %v1410, %v1922
        %v2435 = vsub.f32 %v1411, %v1923
        %v2436 = vsub.f32 %v1412, %v1924
        %v2437 = vsub.f32 %v1413, %v1925
        %v2438 = vsub.f32 %v1414, %v1926
        %v2439 = vsub.f32 %v1415, %v1927
        %v2440 = vsub.f32 %v1416, %v1928
        %v2441 = vsub.f32 %v1417, %v1929
        %v2442 = vsub.f32 %v1418, %v1930
        %v2443 = vsub.f32 %v1419, %v1931
        %v2444 = vsub.f32 %v1420, %v1932
        %v2445 = vsub.f32 %v1421, %v1933
        %v2446 = vsub.f32 %v1422, %v1934
        %v2447 = vsub.f32 %v1423, %v1935
        %v2448 = vsub.f32 %v1424, %v1936
        %v2449 = vsub.f32 %v1425, %v1937
        %v2450 = vsub.f32 %v1426, %v1938
        %v2451 = vsub.f32 %v1427, %v1939
        %v2452 = vsub.f32 %v1428, %v1940
        %v2453 = vsub.f32 %v1429, %v1941
        %v2454 = vsub.f32 %v1430, %v1942
        %v2455 = vsub.f32 %v1431, %v1943
        %v2456 = vsub.f32 %v1432, %v1944
        %v2457 = vsub.f32 %v1433, %v1945
        %v2458 = vsub.f32 %v1434, %v1946
        %v2459 = vsub.f32 %v1435, %v1947
        %v2460 = vsub.f32 %v1436, %v1948
        %v2461 = vsub.f32 %v1437, %v1949
        %v2462 = vsub.f32 %v1438, %v1950
        %v2463 = vsub.f32 %v1439, %v1951
        %v2464 = vsub.f32 %v1440, %v1952
        %v2465 = vsub.f32 %v1441, %v1953
        %v2466 = vsub.f32 %v1442, %v1954
        %v2467 = vsub.f32 %v1443, %v1955
        %v2468 = vsub.f32 %v1444, %v1956
        %v2469 = vsub.f32 %v1445, %v1957
        %v2470 = vsub.f32 %v1446, %v1958
        %v2471 = vsub.f32 %v1447, %v1959
        %v2472 = vsub.f32 %v1448, %v1960
        %v2473 = vsub.f32 %v1449, %v1961
        %v2474 = vsub.f32 %v1450, %v1962
        %v2475 = vsub.f32 %v1451, %v1963
        %v2476 = vsub.f32 %v1452, %v1964
        %v2477 = vsub.f32 %v1453, %v1965
        %v2478 = vsub.f32 %v1454, %v1966
        %v2479 = vsub.f32 %v1455, %v1967
        %v2480 = vsub.f32 %v1456, %v1968
        %v2481 = vsub.f32 %v1457, %v1969
        %v2482 = vsub.f32 %v1458, %v1970
        %v2483 = vsub.f32 %v1459, %v1971
        %v2484 = vsub.f32 %v1460, %v1972
        %v2485 = vsub.f32 %v1461, %v1973
        %v2486 = vsub.f32 %v1462, %v1974
        %v2487 = vsub.f32 %v1463, %v1975
        %v2488 = vsub.f32 %v1464, %v1976
        %v2489 = vsub.f32 %v1465, %v1977
        %v2490 = vsub.f32 %v1466, %v1978
        %v2491 = vsub.f32 %v1467, %v1979
        %v2492 = vsub.f32 %v1468, %v1980
        %v2493 = vsub.f32 %v1469, %v1981
        %v2494 = vsub.f32 %v1470, %v1982
        %v2495 = vsub.f32 %v1471, %v1983
        %v2496 = vsub.f32 %v1472, %v1984
        %v2497 = vsub.f32 %v1473, %v1985
        %v2498 = vsub.f32 %v1474, %v1986
        %v2499 = vsub.f32 %v1475, %v1987
        %v2500 = vsub.f32 %v1476, %v1988
        %v2501 = vsub.f32 %v1477, %v1989
        %v2502 = vsub.f32 %v1478, %v1990
        %v2503 = vsub.f32 %v1479, %v1991
        %v2504 = vsub.f32 %v1480, %v1992
        %v2505 = vsub.f32 %v1481, %v1993
        %v2506 = vsub.f32 %v1482, %v1994
        %v2507 = vsub.f32 %v1483, %v1995
        %v2508 = vsub.f32 %v1484, %v1996
        %v2509 = vsub.f32 %v1485, %v1997
        %v2510 = vsub.f32 %v1486, %v1998
        %v2511 = vsub.f32 %v1487, %v1999
        %v2512 = vsub.f32 %v1488, %v2000
        %v2513 = vsub.f32 %v1489, %v2001
        %v2514 = vsub.f32 %v1490, %v2002
        %v2515 = vsub.f32 %v1491, %v2003
        %v2516 = vsub.f32 %v1492, %v2004
        %v2517 = vsub.f32 %v1493, %v2005
        %v2518 = vsub.f32 %v1494, %v2006
        %v2519 = vsub.f32 %v1495, %v2007
        %v2520 = vsub.f32 %v1496, %v2008
        %v2521 = vsub.f32 %v1497, %v2009
        %v2522 = vsub.f32 %v1498, %v2010
        %v2523 = vsub.f32 %v1499, %v2011
        %v2524 = vsub.f32 %v1500, %v2012
        %v2525 = vsub.f32 %v1501, %v2013
        %v2526 = vsub.f32 %v1502, %v2014
        %v2527 = vsub.f32 %v1503, %v2015
        %v2528 = vsub.f32 %v1504, %v2016
        %v2529 = vsub.f32 %v1505, %v2017
        %v2530 = vsub.f32 %v1506, %v2018
        %v2531 = vsub.f32 %v1507, %v2019
        %v2532 = vsub.f32 %v1508, %v2020
        %v2533 = vsub.f32 %v1509, %v2021
        %v2534 = vsub.f32 %v1510, %v2022
        %v2535 = vsub.f32 %v1511, %v2023
        %v2536 = vsub.f32 %v1512, %v2024
        %v2537 = vsub.f32 %v1513, %v2025
        %v2538 = vsub.f32 %v1514, %v2026
        %v2539 = vsub.f32 %v1515, %v2027
        %v2540 = vsub.f32 %v1516, %v2028
        %v2541 = vsub.f32 %v1517, %v2029
        %v2542 = vsub.f32 %v1518, %v2030
        %v2543 = vsub.f32 %v1519, %v2031
        %v2544 = vsub.f32 %v1520, %v2032
        %v2545 = vsub.f32 %v1521, %v2033
        %v2546 = vsub.f32 %v1522, %v2034
        %v2547 = vsub.f32 %v1523, %v2035
        %v2548 = vsub.f32 %v1524, %v2036
        %v2549 = vsub.f32 %v1525, %v2037
        %v2550 = vsub.f32 %v1526, %v2038
        %v2551 = vsub.f32 %v1527, %v2039
        %v2552 = vsub.f32 %v1528, %v2040
        %v2553 = vsub.f32 %v1529, %v2041
        %v2554 = vsub.f32 %v1530, %v2042
        %v2555 = vsub.f32 %v1531, %v2043
        %v2556 = vsub.f32 %v1532, %v2044
        %v2557 = vsub.f32 %v1533, %v2045
        %v2558 = vsub.f32 %v1534, %v2046
        %v2559 = vsub.f32 %v1535, %v2047
        %v2560 = vsub.f32 %v1536, %v2048
        %v2561 = vsub.f32 %v1537, %v2049
        %v2562 = vsub.f32 %v1538, %v2050
        %v2563 = vsub.f32 %v1539, %v2051
        %v2564 = vsub.f32 %v1540, %v2052
        %v2565 = vsub.f32 %v1541, %v2053
        %v2566 = vsub.f32 %v1542, %v2054
        %v2567 = vsub.f32 %v1543, %v2055
        %v2568 = vsub.f32 %v1544, %v2056
        %v2569 = vsub.f32 %v1545, %v2057
        %v2570 = vsub.f32 %v1546, %v2058
        %v2571 = vsub.f32 %v1547, %v2059
        %v2572 = vsub.f32 %v1548, %v2060
        %v2573 = vsub.f32 %v1549, %v2061
        %v2574 = vsub.f32 %v1550, %v2062
        %v2575 = vsub.f32 %v1551, %v2063
        %v2576 = vsub.f32 %v1552, %v2064
        %v2577 = vsub.f32 %v1553, %v2065
        %v2578 = vsub.f32 %v1554, %v2066
        %v2579 = vsub.f32 %v1555, %v2067
        %v2580 = vsub.f32 %v1556, %v2068
        %v2581 = vsub.f32 %v1557, %v2069
        %v2582 = vsub.f32 %v1558, %v2070
        %v2583 = vsub.f32 %v1559, %v2071
        %v2584 = vsub.f32 %v1560, %v2072
        %v2585 = vsub.f32 %v1561, %v2073
        %v2586 = vsub.f32 %v1562, %v2074
        %v2587 = vsub.f32 %v1563, %v2075
        %v2588 = vsub.f32 %v1564, %v2076
        %v2589 = vsub.f32 %v1565, %v2077
        %v2590 = vsub.f32 %v1566, %v2078
        %v2591 = vsub.f32 %v1567, %v2079
        %v2592 = vsub.f32 %v1568, %v2080
        %v2593 = vsub.f32 %v1569, %v2081
        %v2594 = vsub.f32 %v1570, %v2082
        %v2595 = vsub.f32 %v1571, %v2083
        %v2596 = vsub.f32 %v1572, %v2084
        %v2597 = vsub.f32 %v1573, %v2085
        %v2598 = vsub.f32 %v1574, %v2086
        %v2599 = vsub.f32 %v1575, %v2087
        %v2600 = vsub.f32 %v1576, %v2088
        %v2601 = vsub.f32 %v1577, %v2089
        %v2602 = vsub.f32 %v1578, %v2090
        %v2603 = vand.u32 2147483647, %v2347
        %v2604 = vand.u32 2147483647, %v2348
        %v2605 = vand.u32 2147483647, %v2349
        %v2606 = vand.u32 2147483647, %v2350
        %v2607 = vand.u32 2147483647, %v2351
        %v2608 = vand.u32 2147483647, %v2352
        %v2609 = vand.u32 2147483647, %v2353
        %v2610 = vand.u32 2147483647, %v2354
        %v2611 = vand.u32 2147483647, %v2355
        %v2612 = vand.u32 2147483647, %v2356
        %v2613 = vand.u32 2147483647, %v2357
        %v2614 = vand.u32 2147483647, %v2358
        %v2615 = vand.u32 2147483647, %v2359
        %v2616 = vand.u32 2147483647, %v2360
        %v2617 = vand.u32 2147483647, %v2361
        %v2618 = vand.u32 2147483647, %v2362
        %v2619 = vand.u32 2147483647, %v2363
        %v2620 = vand.u32 2147483647, %v2364
        %v2621 = vand.u32 2147483647, %v2365
        %v2622 = vand.u32 2147483647, %v2366
        %v2623 = vand.u32 2147483647, %v2367
        %v2624 = vand.u32 2147483647, %v2368
        %v2625 = vand.u32 2147483647, %v2369
        %v2626 = vand.u32 2147483647, %v2370
        %v2627 = vand.u32 2147483647, %v2371
        %v2628 = vand.u32 2147483647, %v2372
        %v2629 = vand.u32 2147483647, %v2373
        %v2630 = vand.u32 2147483647, %v2374
        %v2631 = vand.u32 2147483647, %v2375
        %v2632 = vand.u32 2147483647, %v2376
        %v2633 = vand.u32 2147483647, %v2377
        %v2634 = vand.u32 2147483647, %v2378
        %v2635 = vand.u32 2147483647, %v2379
        %v2636 = vand.u32 2147483647, %v2380
        %v2637 = vand.u32 2147483647, %v2381
        %v2638 = vand.u32 2147483647, %v2382
        %v2639 = vand.u32 2147483647, %v2383
        %v2640 = vand.u32 2147483647, %v2384
        %v2641 = vand.u32 2147483647, %v2385
        %v2642 = vand.u32 2147483647, %v2386
        %v2643 = vand.u32 2147483647, %v2387
        %v2644 = vand.u32 2147483647, %v2388
        %v2645 = vand.u32 2147483647, %v2389
        %v2646 = vand.u32 2147483647, %v2390
        %v2647 = vand.u32 2147483647, %v2391
        %v2648 = vand.u32 2147483647, %v2392
        %v2649 = vand.u32 2147483647, %v2393
        %v2650 = vand.u32 2147483647, %v2394
        %v2651 = vand.u32 2147483647, %v2395
        %v2652 = vand.u32 2147483647, %v2396
        %v2653 = vand.u32 2147483647, %v2397
        %v2654 = vand.u32 2147483647, %v2398
        %v2655 = vand.u32 2147483647, %v2399
        %v2656 = vand.u32 2147483647, %v2400
        %v2657 = vand.u32 2147483647, %v2401
        %v2658 = vand.u32 2147483647, %v2402
        %v2659 = vand.u32 2147483647, %v2403
        %v2660 = vand.u32 2147483647, %v2404
        %v2661 = vand.u32 2147483647, %v2405
        %v2662 = vand.u32 2147483647, %v2406
        %v2663 = vand.u32 2147483647, %v2407
        %v2664 = vand.u32 2147483647, %v2408
        %v2665 = vand.u32 2147483647, %v2409
        %v2666 = vand.u32 2147483647, %v2410
        %v2667 = vand.u32 2147483647, %v2411
        %v2668 = vand.u32 2147483647, %v2412
        %v2669 = vand.u32 2147483647, %v2413
        %v2670 = vand.u32 2147483647, %v2414
        %v2671 = vand.u32 2147483647, %v2415
        %v2672 = vand.u32 2147483647, %v2416
        %v2673 = vand.u32 2147483647, %v2417
        %v2674 = vand.u32 2147483647, %v2418
        %v2675 = vand.u32 2147483647, %v2419
        %v2676 = vand.u32 2147483647, %v2420
        %v2677 = vand.u32 2147483647, %v2421
        %v2678 = vand.u32 2147483647, %v2422
        %v2679 = vand.u32 2147483647, %v2423
        %v2680 = vand.u32 2147483647, %v2424
        %v2681 = vand.u32 2147483647, %v2425
        %v2682 = vand.u32 2147483647, %v2426
        %v2683 = vand.u32 2147483647, %v2427
        %v2684 = vand.u32 2147483647, %v2428
        %v2685 = vand.u32 2147483647, %v2429
        %v2686 = vand.u32 2147483647, %v2430
        %v2687 = vand.u32 2147483647, %v2431
        %v2688 = vand.u32 2147483647, %v2432
        %v2689 = vand.u32 2147483647, %v2433
        %v2690 = vand.u32 2147483647, %v2434
        %v2691 = vand.u32 2147483647, %v2435
        %v2692 = vand.u32 2147483647, %v2436
        %v2693 = vand.u32 2147483647, %v2437
        %v2694 = vand.u32 2147483647, %v2438
        %v2695 = vand.u32 2147483647, %v2439
        %v2696 = vand.u32 2147483647, %v2440
        %v2697 = vand.u32 2147483647, %v2441
        %v2698 = vand.u32 2147483647, %v2442
        %v2699 = vand.u32 2147483647, %v2443
        %v2700 = vand.u32 2147483647, %v2444
        %v2701 = vand.u32 2147483647, %v2445
        %v2702 = vand.u32 2147483647, %v2446
        %v2703 = vand.u32 2147483647, %v2447
        %v2704 = vand.u32 2147483647, %v2448
        %v2705 = vand.u32 2147483647, %v2449
        %v2706 = vand.u32 2147483647, %v2450
        %v2707 = vand.u32 2147483647, %v2451
        %v2708 = vand.u32 2147483647, %v2452
        %v2709 = vand.u32 2147483647, %v2453
        %v2710 = vand.u32 2147483647, %v2454
        %v2711 = vand.u32 2147483647, %v2455
        %v2712 = vand.u32 2147483647, %v2456
        %v2713 = vand.u32 2147483647, %v2457
        %v2714 = vand.u32 2147483647, %v2458
        %v2715 = vand.u32 2147483647, %v2459
        %v2716 = vand.u32 2147483647, %v2460
        %v2717 = vand.u32 2147483647, %v2461
        %v2718 = vand.u32 2147483647, %v2462
        %v2719 = vand.u32 2147483647, %v2463
        %v2720 = vand.u32 2147483647, %v2464
        %v2721 = vand.u32 2147483647, %v2465
        %v2722 = vand.u32 2147483647, %v2466
        %v2723 = vand.u32 2147483647, %v2467
        %v2724 = vand.u32 2147483647, %v2468
        %v2725 = vand.u32 2147483647, %v2469
        %v2726 = vand.u32 2147483647, %v2470
        %v2727 = vand.u32 2147483647, %v2471
        %v2728 = vand.u32 2147483647, %v2472
        %v2729 = vand.u32 2147483647, %v2473
        %v2730 = vand.u32 2147483647, %v2474
        %v2731 = vand.u32 2147483647, %v2475
        %v2732 = vand.u32 2147483647, %v2476
        %v2733 = vand.u32 2147483647, %v2477
        %v2734 = vand.u32 2147483647, %v2478
        %v2735 = vand.u32 2147483647, %v2479
        %v2736 = vand.u32 2147483647, %v2480
        %v2737 = vand.u32 2147483647, %v2481
        %v2738 = vand.u32 2147483647, %v2482
        %v2739 = vand.u32 2147483647, %v2483
        %v2740 = vand.u32 2147483647, %v2484
        %v2741 = vand.u32 2147483647, %v2485
        %v2742 = vand.u32 2147483647, %v2486
        %v2743 = vand.u32 2147483647, %v2487
        %v2744 = vand.u32 2147483647, %v2488
        %v2745 = vand.u32 2147483647, %v2489
        %v2746 = vand.u32 2147483647, %v2490
        %v2747 = vand.u32 2147483647, %v2491
        %v2748 = vand.u32 2147483647, %v2492
        %v2749 = vand.u32 2147483647, %v2493
        %v2750 = vand.u32 2147483647, %v2494
        %v2751 = vand.u32 2147483647, %v2495
        %v2752 = vand.u32 2147483647, %v2496
        %v2753 = vand.u32 2147483647, %v2497
        %v2754 = vand.u32 2147483647, %v2498
        %v2755 = vand.u32 2147483647, %v2499
        %v2756 = vand.u32 2147483647, %v2500
        %v2757 = vand.u32 2147483647, %v2501
        %v2758 = vand.u32 2147483647, %v2502
        %v2759 = vand.u32 2147483647, %v2503
        %v2760 = vand.u32 2147483647, %v2504
        %v2761 = vand.u32 2147483647, %v2505
        %v2762 = vand.u32 2147483647, %v2506
        %v2763 = vand.u32 2147483647, %v2507
        %v2764 = vand.u32 2147483647, %v2508
        %v2765 = vand.u32 2147483647, %v2509
        %v2766 = vand.u32 2147483647, %v2510
        %v2767 = vand.u32 2147483647, %v2511
        %v2768 = vand.u32 2147483647, %v2512
        %v2769 = vand.u32 2147483647, %v2513
        %v2770 = vand.u32 2147483647, %v2514
        %v2771 = vand.u32 2147483647, %v2515
        %v2772 = vand.u32 2147483647, %v2516
        %v2773 = vand.u32 2147483647, %v2517
        %v2774 = vand.u32 2147483647, %v2518
        %v2775 = vand.u32 2147483647, %v2519
        %v2776 = vand.u32 2147483647, %v2520
        %v2777 = vand.u32 2147483647, %v2521
        %v2778 = vand.u32 2147483647, %v2522
        %v2779 = vand.u32 2147483647, %v2523
        %v2780 = vand.u32 2147483647, %v2524
        %v2781 = vand.u32 2147483647, %v2525
        %v2782 = vand.u32 2147483647, %v2526
        %v2783 = vand.u32 2147483647, %v2527
        %v2784 = vand.u32 2147483647, %v2528
        %v2785 = vand.u32 2147483647, %v2529
        %v2786 = vand.u32 2147483647, %v2530
        %v2787 = vand.u32 2147483647, %v2531
        %v2788 = vand.u32 2147483647, %v2532
        %v2789 = vand.u32 2147483647, %v2533
        %v2790 = vand.u32 2147483647, %v2534
        %v2791 = vand.u32 2147483647, %v2535
        %v2792 = vand.u32 2147483647, %v2536
        %v2793 = vand.u32 2147483647, %v2537
        %v2794 = vand.u32 2147483647, %v2538
        %v2795 = vand.u32 2147483647, %v2539
        %v2796 = vand.u32 2147483647, %v2540
        %v2797 = vand.u32 2147483647, %v2541
        %v2798 = vand.u32 2147483647, %v2542
        %v2799 = vand.u32 2147483647, %v2543
        %v2800 = vand.u32 2147483647, %v2544
        %v2801 = vand.u32 2147483647, %v2545
        %v2802 = vand.u32 2147483647, %v2546
        %v2803 = vand.u32 2147483647, %v2547
        %v2804 = vand.u32 2147483647, %v2548
        %v2805 = vand.u32 2147483647, %v2549
        %v2806 = vand.u32 2147483647, %v2550
        %v2807 = vand.u32 2147483647, %v2551
        %v2808 = vand.u32 2147483647, %v2552
        %v2809 = vand.u32 2147483647, %v2553
        %v2810 = vand.u32 2147483647, %v2554
        %v2811 = vand.u32 2147483647, %v2555
        %v2812 = vand.u32 2147483647, %v2556
        %v2813 = vand.u32 2147483647, %v2557
        %v2814 = vand.u32 2147483647, %v2558
        %v2815 = vand.u32 2147483647, %v2559
        %v2816 = vand.u32 2147483647, %v2560
        %v2817 = vand.u32 2147483647, %v2561
        %v2818 = vand.u32 2147483647, %v2562
        %v2819 = vand.u32 2147483647, %v2563
        %v2820 = vand.u32 2147483647, %v2564
        %v2821 = vand.u32 2147483647, %v2565
        %v2822 = vand.u32 2147483647, %v2566
        %v2823 = vand.u32 2147483647, %v2567
        %v2824 = vand.u32 2147483647, %v2568
        %v2825 = vand.u32 2147483647, %v2569
        %v2826 = vand.u32 2147483647, %v2570
        %v2827 = vand.u32 2147483647, %v2571
        %v2828 = vand.u32 2147483647, %v2572
        %v2829 = vand.u32 2147483647, %v2573
        %v2830 = vand.u32 2147483647, %v2574
        %v2831 = vand.u32 2147483647, %v2575
        %v2832 = vand.u32 2147483647, %v2576
        %v2833 = vand.u32 2147483647, %v2577
        %v2834 = vand.u32 2147483647, %v2578
        %v2835 = vand.u32 2147483647, %v2579
        %v2836 = vand.u32 2147483647, %v2580
        %v2837 = vand.u32 2147483647, %v2581
        %v2838 = vand.u32 2147483647, %v2582
        %v2839 = vand.u32 2147483647, %v2583
        %v2840 = vand.u32 2147483647, %v2584
        %v2841 = vand.u32 2147483647, %v2585
        %v2842 = vand.u32 2147483647, %v2586
        %v2843 = vand.u32 2147483647, %v2587
        %v2844 = vand.u32 2147483647, %v2588
        %v2845 = vand.u32 2147483647, %v2589
        %v2846 = vand.u32 2147483647, %v2590
        %v2847 = vand.u32 2147483647, %v2591
        %v2848 = vand.u32 2147483647, %v2592
        %v2849 = vand.u32 2147483647, %v2593
        %v2850 = vand.u32 2147483647, %v2594
        %v2851 = vand.u32 2147483647, %v2595
        %v2852 = vand.u32 2147483647, %v2596
        %v2853 = vand.u32 2147483647, %v2597
        %v2854 = vand.u32 2147483647, %v2598
        %v2855 = vand.u32 2147483647, %v2599
        %v2856 = vand.u32 2147483647, %v2600
        %v2857 = vand.u32 2147483647, %v2601
        %v2858 = vand.u32 2147483647, %v2602
        %v2859 = vadd.f32 %v2091, %v2603
        %v2860 = vadd.f32 %v2092, %v2604
        %v2861 = vadd.f32 %v2093, %v2605
        %v2862 = vadd.f32 %v2094, %v2606
        %v2863 = vadd.f32 %v2095, %v2607
        %v2864 = vadd.f32 %v2096, %v2608
        %v2865 = vadd.f32 %v2097, %v2609
        %v2866 = vadd.f32 %v2098, %v2610
        %v2867 = vadd.f32 %v2099, %v2611
        %v2868 = vadd.f32 %v2100, %v2612
        %v2869 = vadd.f32 %v2101, %v2613
        %v2870 = vadd.f32 %v2102, %v2614
        %v2871 = vadd.f32 %v2103, %v2615
        %v2872 = vadd.f32 %v2104, %v2616
        %v2873 = vadd.f32 %v2105, %v2617
        %v2874 = vadd.f32 %v2106, %v2618
        %v2875 = vadd.f32 %v2107, %v2619
        %v2876 = vadd.f32 %v2108, %v2620
        %v2877 = vadd.f32 %v2109, %v2621
        %v2878 = vadd.f32 %v2110, %v2622
        %v2879 = vadd.f32 %v2111, %v2623
        %v2880 = vadd.f32 %v2112, %v2624
        %v2881 = vadd.f32 %v2113, %v2625
        %v2882 = vadd.f32 %v2114, %v2626
        %v2883 = vadd.f32 %v2115, %v2627
        %v2884 = vadd.f32 %v2116, %v2628
        %v2885 = vadd.f32 %v2117, %v2629
        %v2886 = vadd.f32 %v2118, %v2630
        %v2887 = vadd.f32 %v2119, %v2631
        %v2888 = vadd.f32 %v2120, %v2632
        %v2889 = vadd.f32 %v2121, %v2633
        %v2890 = vadd.f32 %v2122, %v2634
        %v2891 = vadd.f32 %v2123, %v2635
        %v2892 = vadd.f32 %v2124, %v2636
        %v2893 = vadd.f32 %v2125, %v2637
        %v2894 = vadd.f32 %v2126, %v2638
        %v2895 = vadd.f32 %v2127, %v2639
        %v2896 = vadd.f32 %v2128, %v2640
        %v2897 = vadd.f32 %v2129, %v2641
        %v2898 = vadd.f32 %v2130, %v2642
        %v2899 = vadd.f32 %v2131, %v2643
        %v2900 = vadd.f32 %v2132, %v2644
        %v2901 = vadd.f32 %v2133, %v2645
        %v2902 = vadd.f32 %v2134, %v2646
        %v2903 = vadd.f32 %v2135, %v2647
        %v2904 = vadd.f32 %v2136, %v2648
        %v2905 = vadd.f32 %v2137, %v2649
        %v2906 = vadd.f32 %v2138, %v2650
        %v2907 = vadd.f32 %v2139, %v2651
        %v2908 = vadd.f32 %v2140, %v2652
        %v2909 = vadd.f32 %v2141, %v2653
        %v2910 = vadd.f32 %v2142, %v2654
        %v2911 = vadd.f32 %v2143, %v2655
        %v2912 = vadd.f32 %v2144, %v2656
        %v2913 = vadd.f32 %v2145, %v2657
        %v2914 = vadd.f32 %v2146, %v2658
        %v2915 = vadd.f32 %v2147, %v2659
        %v2916 = vadd.f32 %v2148, %v2660
        %v2917 = vadd.f32 %v2149, %v2661
        %v2918 = vadd.f32 %v2150, %v2662
        %v2919 = vadd.f32 %v2151, %v2663
        %v2920 = vadd.f32 %v2152, %v2664
        %v2921 = vadd.f32 %v2153, %v2665
        %v2922 = vadd.f32 %v2154, %v2666
        %v2923 = vadd.f32 %v2155, %v2667
        %v2924 = vadd.f32 %v2156, %v2668
        %v2925 = vadd.f32 %v2157, %v2669
        %v2926 = vadd.f32 %v2158, %v2670
        %v2927 = vadd.f32 %v2159, %v2671
        %v2928 = vadd.f32 %v2160, %v2672
        %v2929 = vadd.f32 %v2161, %v2673
        %v2930 = vadd.f32 %v2162, %v2674
        %v2931 = vadd.f32 %v2163, %v2675
        %v2932 = vadd.f32 %v2164, %v2676
        %v2933 = vadd.f32 %v2165, %v2677
        %v2934 = vadd.f32 %v2166, %v2678
        %v2935 = vadd.f32 %v2167, %v2679
        %v2936 = vadd.f32 %v2168, %v2680
        %v2937 = vadd.f32 %v2169, %v2681
        %v2938 = vadd.f32 %v2170, %v2682
        %v2939 = vadd.f32 %v2171, %v2683
        %v2940 = vadd.f32 %v2172, %v2684
        %v2941 = vadd.f32 %v2173, %v2685
        %v2942 = vadd.f32 %v2174, %v2686
        %v2943 = vadd.f32 %v2175, %v2687
        %v2944 = vadd.f32 %v2176, %v2688
        %v2945 = vadd.f32 %v2177, %v2689
        %v2946 = vadd.f32 %v2178, %v2690
        %v2947 = vadd.f32 %v2179, %v2691
        %v2948 = vadd.f32 %v2180, %v2692
        %v2949 = vadd.f32 %v2181, %v2693
        %v2950 = vadd.f32 %v2182, %v2694
        %v2951 = vadd.f32 %v2183, %v2695
        %v2952 = vadd.f32 %v2184, %v2696
        %v2953 = vadd.f32 %v2185, %v2697
        %v2954 = vadd.f32 %v2186, %v2698
        %v2955 = vadd.f32 %v2187, %v2699
        %v2956 = vadd.f32 %v2188, %v2700
        %v2957 = vadd.f32 %v2189, %v2701
        %v2958 = vadd.f32 %v2190, %v2702
        %v2959 = vadd.f32 %v2191, %v2703
        %v2960 = vadd.f32 %v2192, %v2704
        %v2961 = vadd.f32 %v2193, %v2705
        %v2962 = vadd.f32 %v2194, %v2706
        %v2963 = vadd.f32 %v2195, %v2707
        %v2964 = vadd.f32 %v2196, %v2708
        %v2965 = vadd.f32 %v2197, %v2709
        %v2966 = vadd.f32 %v2198, %v2710
        %v2967 = vadd.f32 %v2199, %v2711
        %v2968 = vadd.f32 %v2200, %v2712
        %v2969 = vadd.f32 %v2201, %v2713
        %v2970 = vadd.f32 %v2202, %v2714
        %v2971 = vadd.f32 %v2203, %v2715
        %v2972 = vadd.f32 %v2204, %v2716
        %v2973 = vadd.f32 %v2205, %v2717
        %v2974 = vadd.f32 %v2206, %v2718
        %v2975 = vadd.f32 %v2207, %v2719
        %v2976 = vadd.f32 %v2208, %v2720
        %v2977 = vadd.f32 %v2209, %v2721
        %v2978 = vadd.f32 %v2210, %v2722
        %v2979 = vadd.f32 %v2211, %v2723
        %v2980 = vadd.f32 %v2212, %v2724
        %v2981 = vadd.f32 %v2213, %v2725
        %v2982 = vadd.f32 %v2214, %v2726
        %v2983 = vadd.f32 %v2215, %v2727
        %v2984 = vadd.f32 %v2216, %v2728
        %v2985 = vadd.f32 %v2217, %v2729
        %v2986 = vadd.f32 %v2218, %v2730
        %v2987 = vadd.f32 %v2219, %v2731
        %v2988 = vadd.f32 %v2220, %v2732
        %v2989 = vadd.f32 %v2221, %v2733
        %v2990 = vadd.f32 %v2222, %v2734
        %v2991 = vadd.f32 %v2223, %v2735
        %v2992 = vadd.f32 %v2224, %v2736
        %v2993 = vadd.f32 %v2225, %v2737
        %v2994 = vadd.f32 %v2226, %v2738
        %v2995 = vadd.f32 %v2227, %v2739
        %v2996 = vadd.f32 %v2228, %v2740
        %v2997 = vadd.f32 %v2229, %v2741
        %v2998 = vadd.f32 %v2230, %v2742
        %v2999 = vadd.f32 %v2231, %v2743
        %v3000 = vadd.f32 %v2232, %v2744
        %v3001 = vadd.f32 %v2233, %v2745
        %v3002 = vadd.f32 %v2234, %v2746
        %v3003 = vadd.f32 %v2235, %v2747
        %v3004 = vadd.f32 %v2236, %v2748
        %v3005 = vadd.f32 %v2237, %v2749
        %v3006 = vadd.f32 %v2238, %v2750
        %v3007 = vadd.f32 %v2239, %v2751
        %v3008 = vadd.f32 %v2240, %v2752
        %v3009 = vadd.f32 %v2241, %v2753
        %v3010 = vadd.f32 %v2242, %v2754
        %v3011 = vadd.f32 %v2243, %v2755
        %v3012 = vadd.f32 %v2244, %v2756
        %v3013 = vadd.f32 %v2245, %v2757
        %v3014 = vadd.f32 %v2246, %v2758
        %v3015 = vadd.f32 %v2247, %v2759
        %v3016 = vadd.f32 %v2248, %v2760
        %v3017 = vadd.f32 %v2249, %v2761
        %v3018 = vadd.f32 %v2250, %v2762
        %v3019 = vadd.f32 %v2251, %v2763
        %v3020 = vadd.f32 %v2252, %v2764
        %v3021 = vadd.f32 %v2253, %v2765
        %v3022 = vadd.f32 %v2254, %v2766
        %v3023 = vadd.f32 %v2255, %v2767
        %v3024 = vadd.f32 %v2256, %v2768
        %v3025 = vadd.f32 %v2257, %v2769
        %v3026 = vadd.f32 %v2258, %v2770
        %v3027 = vadd.f32 %v2259, %v2771
        %v3028 = vadd.f32 %v2260, %v2772
        %v3029 = vadd.f32 %v2261, %v2773
        %v3030 = vadd.f32 %v2262, %v2774
        %v3031 = vadd.f32 %v2263, %v2775
        %v3032 = vadd.f32 %v2264, %v2776
        %v3033 = vadd.f32 %v2265, %v2777
        %v3034 = vadd.f32 %v2266, %v2778
        %v3035 = vadd.f32 %v2267, %v2779
        %v3036 = vadd.f32 %v2268, %v2780
        %v3037 = vadd.f32 %v2269, %v2781
        %v3038 = vadd.f32 %v2270, %v2782
        %v3039 = vadd.f32 %v2271, %v2783
        %v3040 = vadd.f32 %v2272, %v2784
        %v3041 = vadd.f32 %v2273, %v2785
        %v3042 = vadd.f32 %v2274, %v2786
        %v3043 = vadd.f32 %v2275, %v2787
        %v3044 = vadd.f32 %v2276, %v2788
        %v3045 = vadd.f32 %v2277, %v2789
        %v3046 = vadd.f32 %v2278, %v2790
        %v3047 = vadd.f32 %v2279, %v2791
        %v3048 = vadd.f32 %v2280, %v2792
        %v3049 = vadd.f32 %v2281, %v2793
        %v3050 = vadd.f32 %v2282, %v2794
        %v3051 = vadd.f32 %v2283, %v2795
        %v3052 = vadd.f32 %v2284, %v2796
        %v3053 = vadd.f32 %v2285, %v2797
        %v3054 = vadd.f32 %v2286, %v2798
        %v3055 = vadd.f32 %v2287, %v2799
        %v3056 = vadd.f32 %v2288, %v2800
        %v3057 = vadd.f32 %v2289, %v2801
        %v3058 = vadd.f32 %v2290, %v2802
        %v3059 = vadd.f32 %v2291, %v2803
        %v3060 = vadd.f32 %v2292, %v2804
        %v3061 = vadd.f32 %v2293, %v2805
        %v3062 = vadd.f32 %v2294, %v2806
        %v3063 = vadd.f32 %v2295, %v2807
        %v3064 = vadd.f32 %v2296, %v2808
        %v3065 = vadd.f32 %v2297, %v2809
        %v3066 = vadd.f32 %v2298, %v2810
        %v3067 = vadd.f32 %v2299, %v2811
        %v3068 = vadd.f32 %v2300, %v2812
        %v3069 = vadd.f32 %v2301, %v2813
        %v3070 = vadd.f32 %v2302, %v2814
        %v3071 = vadd.f32 %v2303, %v2815
        %v3072 = vadd.f32 %v2304, %v2816
        %v3073 = vadd.f32 %v2305, %v2817
        %v3074 = vadd.f32 %v2306, %v2818
        %v3075 = vadd.f32 %v2307, %v2819
        %v3076 = vadd.f32 %v2308, %v2820
        %v3077 = vadd.f32 %v2309, %v2821
        %v3078 = vadd.f32 %v2310, %v2822
        %v3079 = vadd.f32 %v2311, %v2823
        %v3080 = vadd.f32 %v2312, %v2824
        %v3081 = vadd.f32 %v2313, %v2825
        %v3082 = vadd.f32 %v2314, %v2826
        %v3083 = vadd.f32 %v2315, %v2827
        %v3084 = vadd.f32 %v2316, %v2828
        %v3085 = vadd.f32 %v2317, %v2829
        %v3086 = vadd.f32 %v2318, %v2830
        %v3087 = vadd.f32 %v2319, %v2831
        %v3088 = vadd.f32 %v2320, %v2832
        %v3089 = vadd.f32 %v2321, %v2833
        %v3090 = vadd.f32 %v2322, %v2834
        %v3091 = vadd.f32 %v2323, %v2835
        %v3092 = vadd.f32 %v2324, %v2836
        %v3093 = vadd.f32 %v2325, %v2837
        %v3094 = vadd.f32 %v2326, %v2838
        %v3095 = vadd.f32 %v2327, %v2839
        %v3096 = vadd.f32 %v2328, %v2840
        %v3097 = vadd.f32 %v2329, %v2841
        %v3098 = vadd.f32 %v2330, %v2842
        %v3099 = vadd.f32 %v2331, %v2843
        %v3100 = vadd.f32 %v2332, %v2844
        %v3101 = vadd.f32 %v2333, %v2845
        %v3102 = vadd.f32 %v2334, %v2846
        %v3103 = vadd.f32 %v2335, %v2847
        %v3104 = vadd.f32 %v2336, %v2848
        %v3105 = vadd.f32 %v2337, %v2849
        %v3106 = vadd.f32 %v2338, %v2850
        %v3107 = vadd.f32 %v2339, %v2851
        %v3108 = vadd.f32 %v2340, %v2852
        %v3109 = vadd.f32 %v2341, %v2853
        %v3110 = vadd.f32 %v2342, %v2854
        %v3111 = vadd.f32 %v2343, %v2855
        %v3112 = vadd.f32 %v2344, %v2856
        %v3113 = vadd.f32 %v2345, %v2857
        %v3114 = vadd.f32 %v2346, %v2858
        %3115 = vst [vmem:[#allocation2] sm:$0xff] %v2859
        %3116 = vst [vmem:[#allocation2 + $0x8] sm:$0xff] %v2860
        %3117 = vst [vmem:[#allocation2 + $0x10] sm:$0xff] %v2861
        %3118 = vst [vmem:[#allocation2 + $0x18] sm:$0xff] %v2862
        %3119 = vst [vmem:[#allocation2 + $0x20] sm:$0xff] %v2863
        %3120 = vst [vmem:[#allocation2 + $0x28] sm:$0xff] %v2864
        %3121 = vst [vmem:[#allocation2 + $0x30] sm:$0xff] %v2865
        %3122 = vst [vmem:[#allocation2 + $0x38] sm:$0xff] %v2866
        %3123 = vst [vmem:[#allocation2 + $0x40] sm:$0xff] %v2867
        %3124 = vst [vmem:[#allocation2 + $0x48] sm:$0xff] %v2868
        %3125 = vst [vmem:[#allocation2 + $0x50] sm:$0xff] %v2869
        %3126 = vst [vmem:[#allocation2 + $0x58] sm:$0xff] %v2870
        %3127 = vst [vmem:[#allocation2 + $0x60] sm:$0xff] %v2871
        %3128 = vst [vmem:[#allocation2 + $0x68] sm:$0xff] %v2872
        %3129 = vst [vmem:[#allocation2 + $0x70] sm:$0xff] %v2873
        %3130 = vst [vmem:[#allocation2 + $0x78] sm:$0xff] %v2874
        %3131 = vst [vmem:[#allocation2 + $0x80] sm:$0xff] %v2875
        %3132 = vst [vmem:[#allocation2 + $0x88] sm:$0xff] %v2876
        %3133 = vst [vmem:[#allocation2 + $0x90] sm:$0xff] %v2877
        %3134 = vst [vmem:[#allocation2 + $0x98] sm:$0xff] %v2878
        %3135 = vst [vmem:[#allocation2 + $0xa0] sm:$0xff] %v2879
        %3136 = vst [vmem:[#allocation2 + $0xa8] sm:$0xff] %v2880
        %3137 = vst [vmem:[#allocation2 + $0xb0] sm:$0xff] %v2881
        %3138 = vst [vmem:[#allocation2 + $0xb8] sm:$0xff] %v2882
        %3139 = vst [vmem:[#allocation2 + $0xc0] sm:$0xff] %v2883
        %3140 = vst [vmem:[#allocation2 + $0xc8] sm:$0xff] %v2884
        %3141 = vst [vmem:[#allocation2 + $0xd0] sm:$0xff] %v2885
        %3142 = vst [vmem:[#allocation2 + $0xd8] sm:$0xff] %v2886
        %3143 = vst [vmem:[#allocation2 + $0xe0] sm:$0xff] %v2887
        %3144 = vst [vmem:[#allocation2 + $0xe8] sm:$0xff] %v2888
        %3145 = vst [vmem:[#allocation2 + $0xf0] sm:$0xff] %v2889
        %3146 = vst [vmem:[#allocation2 + $0xf8] sm:$0xff] %v2890
        %3147 = vst [vmem:[#allocation2 + $0x100] sm:$0xff] %v2891
        %3148 = vst [vmem:[#allocation2 + $0x108] sm:$0xff] %v2892
        %3149 = vst [vmem:[#allocation2 + $0x110] sm:$0xff] %v2893
        %3150 = vst [vmem:[#allocation2 + $0x118] sm:$0xff] %v2894
        %3151 = vst [vmem:[#allocation2 + $0x120] sm:$0xff] %v2895
        %3152 = vst [vmem:[#allocation2 + $0x128] sm:$0xff] %v2896
        %3153 = vst [vmem:[#allocation2 + $0x130] sm:$0xff] %v2897
        %3154 = vst [vmem:[#allocation2 + $0x138] sm:$0xff] %v2898
        %3155 = vst [vmem:[#allocation2 + $0x140] sm:$0xff] %v2899
        %3156 = vst [vmem:[#allocation2 + $0x148] sm:$0xff] %v2900
        %3157 = vst [vmem:[#allocation2 + $0x150] sm:$0xff] %v2901
        %3158 = vst [vmem:[#allocation2 + $0x158] sm:$0xff] %v2902
        %3159 = vst [vmem:[#allocation2 + $0x160] sm:$0xff] %v2903
        %3160 = vst [vmem:[#allocation2 + $0x168] sm:$0xff] %v2904
        %3161 = vst [vmem:[#allocation2 + $0x170] sm:$0xff] %v2905
        %3162 = vst [vmem:[#allocation2 + $0x178] sm:$0xff] %v2906
        %3163 = vst [vmem:[#allocation2 + $0x180] sm:$0xff] %v2907
        %3164 = vst [vmem:[#allocation2 + $0x188] sm:$0xff] %v2908
        %3165 = vst [vmem:[#allocation2 + $0x190] sm:$0xff] %v2909
        %3166 = vst [vmem:[#allocation2 + $0x198] sm:$0xff] %v2910
        %3167 = vst [vmem:[#allocation2 + $0x1a0] sm:$0xff] %v2911
        %3168 = vst [vmem:[#allocation2 + $0x1a8] sm:$0xff] %v2912
        %3169 = vst [vmem:[#allocation2 + $0x1b0] sm:$0xff] %v2913
        %3170 = vst [vmem:[#allocation2 + $0x1b8] sm:$0xff] %v2914
        %3171 = vst [vmem:[#allocation2 + $0x1c0] sm:$0xff] %v2915
        %3172 = vst [vmem:[#allocation2 + $0x1c8] sm:$0xff] %v2916
        %3173 = vst [vmem:[#allocation2 + $0x1d0] sm:$0xff] %v2917
        %3174 = vst [vmem:[#allocation2 + $0x1d8] sm:$0xff] %v2918
        %3175 = vst [vmem:[#allocation2 + $0x1e0] sm:$0xff] %v2919
        %3176 = vst [vmem:[#allocation2 + $0x1e8] sm:$0xff] %v2920
        %3177 = vst [vmem:[#allocation2 + $0x1f0] sm:$0xff] %v2921
        %3178 = vst [vmem:[#allocation2 + $0x1f8] sm:$0xff] %v2922
        %3179 = vst [vmem:[#allocation2 + $0x200] sm:$0xff] %v2923
        %3180 = vst [vmem:[#allocation2 + $0x208] sm:$0xff] %v2924
        %3181 = vst [vmem:[#allocation2 + $0x210] sm:$0xff] %v2925
        %3182 = vst [vmem:[#allocation2 + $0x218] sm:$0xff] %v2926
        %3183 = vst [vmem:[#allocation2 + $0x220] sm:$0xff] %v2927
        %3184 = vst [vmem:[#allocation2 + $0x228] sm:$0xff] %v2928
        %3185 = vst [vmem:[#allocation2 + $0x230] sm:$0xff] %v2929
        %3186 = vst [vmem:[#allocation2 + $0x238] sm:$0xff] %v2930
        %3187 = vst [vmem:[#allocation2 + $0x240] sm:$0xff] %v2931
        %3188 = vst [vmem:[#allocation2 + $0x248] sm:$0xff] %v2932
        %3189 = vst [vmem:[#allocation2 + $0x250] sm:$0xff] %v2933
        %3190 = vst [vmem:[#allocation2 + $0x258] sm:$0xff] %v2934
        %3191 = vst [vmem:[#allocation2 + $0x260] sm:$0xff] %v2935
        %3192 = vst [vmem:[#allocation2 + $0x268] sm:$0xff] %v2936
        %3193 = vst [vmem:[#allocation2 + $0x270] sm:$0xff] %v2937
        %3194 = vst [vmem:[#allocation2 + $0x278] sm:$0xff] %v2938
        %3195 = vst [vmem:[#allocation2 + $0x280] sm:$0xff] %v2939
        %3196 = vst [vmem:[#allocation2 + $0x288] sm:$0xff] %v2940
        %3197 = vst [vmem:[#allocation2 + $0x290] sm:$0xff] %v2941
        %3198 = vst [vmem:[#allocation2 + $0x298] sm:$0xff] %v2942
        %3199 = vst [vmem:[#allocation2 + $0x2a0] sm:$0xff] %v2943
        %3200 = vst [vmem:[#allocation2 + $0x2a8] sm:$0xff] %v2944
        %3201 = vst [vmem:[#allocation2 + $0x2b0] sm:$0xff] %v2945
        %3202 = vst [vmem:[#allocation2 + $0x2b8] sm:$0xff] %v2946
        %3203 = vst [vmem:[#allocation2 + $0x2c0] sm:$0xff] %v2947
        %3204 = vst [vmem:[#allocation2 + $0x2c8] sm:$0xff] %v2948
        %3205 = vst [vmem:[#allocation2 + $0x2d0] sm:$0xff] %v2949
        %3206 = vst [vmem:[#allocation2 + $0x2d8] sm:$0xff] %v2950
        %3207 = vst [vmem:[#allocation2 + $0x2e0] sm:$0xff] %v2951
        %3208 = vst [vmem:[#allocation2 + $0x2e8] sm:$0xff] %v2952
        %3209 = vst [vmem:[#allocation2 + $0x2f0] sm:$0xff] %v2953
        %3210 = vst [vmem:[#allocation2 + $0x2f8] sm:$0xff] %v2954
        %3211 = vst [vmem:[#allocation2 + $0x300] sm:$0xff] %v2955
        %3212 = vst [vmem:[#allocation2 + $0x308] sm:$0xff] %v2956
        %3213 = vst [vmem:[#allocation2 + $0x310] sm:$0xff] %v2957
        %3214 = vst [vmem:[#allocation2 + $0x318] sm:$0xff] %v2958
        %3215 = vst [vmem:[#allocation2 + $0x320] sm:$0xff] %v2959
        %3216 = vst [vmem:[#allocation2 + $0x328] sm:$0xff] %v2960
        %3217 = vst [vmem:[#allocation2 + $0x330] sm:$0xff] %v2961
        %3218 = vst [vmem:[#allocation2 + $0x338] sm:$0xff] %v2962
        %3219 = vst [vmem:[#allocation2 + $0x340] sm:$0xff] %v2963
        %3220 = vst [vmem:[#allocation2 + $0x348] sm:$0xff] %v2964
        %3221 = vst [vmem:[#allocation2 + $0x350] sm:$0xff] %v2965
        %3222 = vst [vmem:[#allocation2 + $0x358] sm:$0xff] %v2966
        %3223 = vst [vmem:[#allocation2 + $0x360] sm:$0xff] %v2967
        %3224 = vst [vmem:[#allocation2 + $0x368] sm:$0xff] %v2968
        %3225 = vst [vmem:[#allocation2 + $0x370] sm:$0xff] %v2969
        %3226 = vst [vmem:[#allocation2 + $0x378] sm:$0xff] %v2970
        %3227 = vst [vmem:[#allocation2 + $0x380] sm:$0xff] %v2971
        %3228 = vst [vmem:[#allocation2 + $0x388] sm:$0xff] %v2972
        %3229 = vst [vmem:[#allocation2 + $0x390] sm:$0xff] %v2973
        %3230 = vst [vmem:[#allocation2 + $0x398] sm:$0xff] %v2974
        %3231 = vst [vmem:[#allocation2 + $0x3a0] sm:$0xff] %v2975
        %3232 = vst [vmem:[#allocation2 + $0x3a8] sm:$0xff] %v2976
        %3233 = vst [vmem:[#allocation2 + $0x3b0] sm:$0xff] %v2977
        %3234 = vst [vmem:[#allocation2 + $0x3b8] sm:$0xff] %v2978
        %3235 = vst [vmem:[#allocation2 + $0x3c0] sm:$0xff] %v2979
        %3236 = vst [vmem:[#allocation2 + $0x3c8] sm:$0xff] %v2980
        %3237 = vst [vmem:[#allocation2 + $0x3d0] sm:$0xff] %v2981
        %3238 = vst [vmem:[#allocation2 + $0x3d8] sm:$0xff] %v2982
        %3239 = vst [vmem:[#allocation2 + $0x3e0] sm:$0xff] %v2983
        %3240 = vst [vmem:[#allocation2 + $0x3e8] sm:$0xff] %v2984
        %3241 = vst [vmem:[#allocation2 + $0x3f0] sm:$0xff] %v2985
        %3242 = vst [vmem:[#allocation2 + $0x3f8] sm:$0xff] %v2986
        %3243 = vst [vmem:[#allocation2 + $0x400] sm:$0xff] %v2987
        %3244 = vst [vmem:[#allocation2 + $0x408] sm:$0xff] %v2988
        %3245 = vst [vmem:[#allocation2 + $0x410] sm:$0xff] %v2989
        %3246 = vst [vmem:[#allocation2 + $0x418] sm:$0xff] %v2990
        %3247 = vst [vmem:[#allocation2 + $0x420] sm:$0xff] %v2991
        %3248 = vst [vmem:[#allocation2 + $0x428] sm:$0xff] %v2992
        %3249 = vst [vmem:[#allocation2 + $0x430] sm:$0xff] %v2993
        %3250 = vst [vmem:[#allocation2 + $0x438] sm:$0xff] %v2994
        %3251 = vst [vmem:[#allocation2 + $0x440] sm:$0xff] %v2995
        %3252 = vst [vmem:[#allocation2 + $0x448] sm:$0xff] %v2996
        %3253 = vst [vmem:[#allocation2 + $0x450] sm:$0xff] %v2997
        %3254 = vst [vmem:[#allocation2 + $0x458] sm:$0xff] %v2998
        %3255 = vst [vmem:[#allocation2 + $0x460] sm:$0xff] %v2999
        %3256 = vst [vmem:[#allocation2 + $0x468] sm:$0xff] %v3000
        %3257 = vst [vmem:[#allocation2 + $0x470] sm:$0xff] %v3001
        %3258 = vst [vmem:[#allocation2 + $0x478] sm:$0xff] %v3002
        %3259 = vst [vmem:[#allocation2 + $0x480] sm:$0xff] %v3003
        %3260 = vst [vmem:[#allocation2 + $0x488] sm:$0xff] %v3004
        %3261 = vst [vmem:[#allocation2 + $0x490] sm:$0xff] %v3005
        %3262 = vst [vmem:[#allocation2 + $0x498] sm:$0xff] %v3006
        %3263 = vst [vmem:[#allocation2 + $0x4a0] sm:$0xff] %v3007
        %3264 = vst [vmem:[#allocation2 + $0x4a8] sm:$0xff] %v3008
        %3265 = vst [vmem:[#allocation2 + $0x4b0] sm:$0xff] %v3009
        %3266 = vst [vmem:[#allocation2 + $0x4b8] sm:$0xff] %v3010
        %3267 = vst [vmem:[#allocation2 + $0x4c0] sm:$0xff] %v3011
        %3268 = vst [vmem:[#allocation2 + $0x4c8] sm:$0xff] %v3012
        %3269 = vst [vmem:[#allocation2 + $0x4d0] sm:$0xff] %v3013
        %3270 = vst [vmem:[#allocation2 + $0x4d8] sm:$0xff] %v3014
        %3271 = vst [vmem:[#allocation2 + $0x4e0] sm:$0xff] %v3015
        %3272 = vst [vmem:[#allocation2 + $0x4e8] sm:$0xff] %v3016
        %3273 = vst [vmem:[#allocation2 + $0x4f0] sm:$0xff] %v3017
        %3274 = vst [vmem:[#allocation2 + $0x4f8] sm:$0xff] %v3018
        %3275 = vst [vmem:[#allocation2 + $0x500] sm:$0xff] %v3019
        %3276 = vst [vmem:[#allocation2 + $0x508] sm:$0xff] %v3020
        %3277 = vst [vmem:[#allocation2 + $0x510] sm:$0xff] %v3021
        %3278 = vst [vmem:[#allocation2 + $0x518] sm:$0xff] %v3022
        %3279 = vst [vmem:[#allocation2 + $0x520] sm:$0xff] %v3023
        %3280 = vst [vmem:[#allocation2 + $0x528] sm:$0xff] %v3024
        %3281 = vst [vmem:[#allocation2 + $0x530] sm:$0xff] %v3025
        %3282 = vst [vmem:[#allocation2 + $0x538] sm:$0xff] %v3026
        %3283 = vst [vmem:[#allocation2 + $0x540] sm:$0xff] %v3027
        %3284 = vst [vmem:[#allocation2 + $0x548] sm:$0xff] %v3028
        %3285 = vst [vmem:[#allocation2 + $0x550] sm:$0xff] %v3029
        %3286 = vst [vmem:[#allocation2 + $0x558] sm:$0xff] %v3030
        %3287 = vst [vmem:[#allocation2 + $0x560] sm:$0xff] %v3031
        %3288 = vst [vmem:[#allocation2 + $0x568] sm:$0xff] %v3032
        %3289 = vst [vmem:[#allocation2 + $0x570] sm:$0xff] %v3033
        %3290 = vst [vmem:[#allocation2 + $0x578] sm:$0xff] %v3034
        %3291 = vst [vmem:[#allocation2 + $0x580] sm:$0xff] %v3035
        %3292 = vst [vmem:[#allocation2 + $0x588] sm:$0xff] %v3036
        %3293 = vst [vmem:[#allocation2 + $0x590] sm:$0xff] %v3037
        %3294 = vst [vmem:[#allocation2 + $0x598] sm:$0xff] %v3038
        %3295 = vst [vmem:[#allocation2 + $0x5a0] sm:$0xff] %v3039
        %3296 = vst [vmem:[#allocation2 + $0x5a8] sm:$0xff] %v3040
        %3297 = vst [vmem:[#allocation2 + $0x5b0] sm:$0xff] %v3041
        %3298 = vst [vmem:[#allocation2 + $0x5b8] sm:$0xff] %v3042
        %3299 = vst [vmem:[#allocation2 + $0x5c0] sm:$0xff] %v3043
        %3300 = vst [vmem:[#allocation2 + $0x5c8] sm:$0xff] %v3044
        %3301 = vst [vmem:[#allocation2 + $0x5d0] sm:$0xff] %v3045
        %3302 = vst [vmem:[#allocation2 + $0x5d8] sm:$0xff] %v3046
        %3303 = vst [vmem:[#allocation2 + $0x5e0] sm:$0xff] %v3047
        %3304 = vst [vmem:[#allocation2 + $0x5e8] sm:$0xff] %v3048
        %3305 = vst [vmem:[#allocation2 + $0x5f0] sm:$0xff] %v3049
        %3306 = vst [vmem:[#allocation2 + $0x5f8] sm:$0xff] %v3050
        %3307 = vst [vmem:[#allocation2 + $0x600] sm:$0xff] %v3051
        %3308 = vst [vmem:[#allocation2 + $0x608] sm:$0xff] %v3052
        %3309 = vst [vmem:[#allocation2 + $0x610] sm:$0xff] %v3053
        %3310 = vst [vmem:[#allocation2 + $0x618] sm:$0xff] %v3054
        %3311 = vst [vmem:[#allocation2 + $0x620] sm:$0xff] %v3055
        %3312 = vst [vmem:[#allocation2 + $0x628] sm:$0xff] %v3056
        %3313 = vst [vmem:[#allocation2 + $0x630] sm:$0xff] %v3057
        %3314 = vst [vmem:[#allocation2 + $0x638] sm:$0xff] %v3058
        %3315 = vst [vmem:[#allocation2 + $0x640] sm:$0xff] %v3059
        %3316 = vst [vmem:[#allocation2 + $0x648] sm:$0xff] %v3060
        %3317 = vst [vmem:[#allocation2 + $0x650] sm:$0xff] %v3061
        %3318 = vst [vmem:[#allocation2 + $0x658] sm:$0xff] %v3062
        %3319 = vst [vmem:[#allocation2 + $0x660] sm:$0xff] %v3063
        %3320 = vst [vmem:[#allocation2 + $0x668] sm:$0xff] %v3064
        %3321 = vst [vmem:[#allocation2 + $0x670] sm:$0xff] %v3065
        %3322 = vst [vmem:[#allocation2 + $0x678] sm:$0xff] %v3066
        %3323 = vst [vmem:[#allocation2 + $0x680] sm:$0xff] %v3067
        %3324 = vst [vmem:[#allocation2 + $0x688] sm:$0xff] %v3068
        %3325 = vst [vmem:[#allocation2 + $0x690] sm:$0xff] %v3069
        %3326 = vst [vmem:[#allocation2 + $0x698] sm:$0xff] %v3070
        %3327 = vst [vmem:[#allocation2 + $0x6a0] sm:$0xff] %v3071
        %3328 = vst [vmem:[#allocation2 + $0x6a8] sm:$0xff] %v3072
        %3329 = vst [vmem:[#allocation2 + $0x6b0] sm:$0xff] %v3073
        %3330 = vst [vmem:[#allocation2 + $0x6b8] sm:$0xff] %v3074
        %3331 = vst [vmem:[#allocation2 + $0x6c0] sm:$0xff] %v3075
        %3332 = vst [vmem:[#allocation2 + $0x6c8] sm:$0xff] %v3076
        %3333 = vst [vmem:[#allocation2 + $0x6d0] sm:$0xff] %v3077
        %3334 = vst [vmem:[#allocation2 + $0x6d8] sm:$0xff] %v3078
        %3335 = vst [vmem:[#allocation2 + $0x6e0] sm:$0xff] %v3079
        %3336 = vst [vmem:[#allocation2 + $0x6e8] sm:$0xff] %v3080
        %3337 = vst [vmem:[#allocation2 + $0x6f0] sm:$0xff] %v3081
        %3338 = vst [vmem:[#allocation2 + $0x6f8] sm:$0xff] %v3082
        %3339 = vst [vmem:[#allocation2 + $0x700] sm:$0xff] %v3083
        %3340 = vst [vmem:[#allocation2 + $0x708] sm:$0xff] %v3084
        %3341 = vst [vmem:[#allocation2 + $0x710] sm:$0xff] %v3085
        %3342 = vst [vmem:[#allocation2 + $0x718] sm:$0xff] %v3086
        %3343 = vst [vmem:[#allocation2 + $0x720] sm:$0xff] %v3087
        %3344 = vst [vmem:[#allocation2 + $0x728] sm:$0xff] %v3088
        %3345 = vst [vmem:[#allocation2 + $0x730] sm:$0xff] %v3089
        %3346 = vst [vmem:[#allocation2 + $0x738] sm:$0xff] %v3090
        %3347 = vst [vmem:[#allocation2 + $0x740] sm:$0xff] %v3091
        %3348 = vst [vmem:[#allocation2 + $0x748] sm:$0xff] %v3092
        %3349 = vst [vmem:[#allocation2 + $0x750] sm:$0xff] %v3093
        %3350 = vst [vmem:[#allocation2 + $0x758] sm:$0xff] %v3094
        %3351 = vst [vmem:[#allocation2 + $0x760] sm:$0xff] %v3095
        %3352 = vst [vmem:[#allocation2 + $0x768] sm:$0xff] %v3096
        %3353 = vst [vmem:[#allocation2 + $0x770] sm:$0xff] %v3097
        %3354 = vst [vmem:[#allocation2 + $0x778] sm:$0xff] %v3098
        %3355 = vst [vmem:[#allocation2 + $0x780] sm:$0xff] %v3099
        %3356 = vst [vmem:[#allocation2 + $0x788] sm:$0xff] %v3100
        %3357 = vst [vmem:[#allocation2 + $0x790] sm:$0xff] %v3101
        %3358 = vst [vmem:[#allocation2 + $0x798] sm:$0xff] %v3102
        %3359 = vst [vmem:[#allocation2 + $0x7a0] sm:$0xff] %v3103
        %3360 = vst [vmem:[#allocation2 + $0x7a8] sm:$0xff] %v3104
        %3361 = vst [vmem:[#allocation2 + $0x7b0] sm:$0xff] %v3105
        %3362 = vst [vmem:[#allocation2 + $0x7b8] sm:$0xff] %v3106
        %3363 = vst [vmem:[#allocation2 + $0x7c0] sm:$0xff] %v3107
        %3364 = vst [vmem:[#allocation2 + $0x7c8] sm:$0xff] %v3108
        %3365 = vst [vmem:[#allocation2 + $0x7d0] sm:$0xff] %v3109
        %3366 = vst [vmem:[#allocation2 + $0x7d8] sm:$0xff] %v3110
        %3367 = vst [vmem:[#allocation2 + $0x7e0] sm:$0xff] %v3111
        %3368 = vst [vmem:[#allocation2 + $0x7e8] sm:$0xff] %v3112
        %3369 = vst [vmem:[#allocation2 + $0x7f0] sm:$0xff] %v3113
        %3370 = vst [vmem:[#allocation2 + $0x7f8] sm:$0xff] %v3114
        %v3371 = vld [vmem:[#allocation3] sm:$0xff]
        %v3372 = vld [vmem:[#allocation3 + $0x8] sm:$0xff]
        %v3373 = vld [vmem:[#allocation3 + $0x10] sm:$0xff]
        %v3374 = vld [vmem:[#allocation3 + $0x18] sm:$0xff]
        %v3375 = vld [vmem:[#allocation3 + $0x20] sm:$0xff]
        %v3376 = vld [vmem:[#allocation3 + $0x28] sm:$0xff]
        %v3377 = vld [vmem:[#allocation3 + $0x30] sm:$0xff]
        %v3378 = vld [vmem:[#allocation3 + $0x38] sm:$0xff]
        %v3379 = vld [vmem:[#allocation3 + $0x40] sm:$0xff]
        %v3380 = vld [vmem:[#allocation3 + $0x48] sm:$0xff]
        %v3381 = vld [vmem:[#allocation3 + $0x50] sm:$0xff]
        %v3382 = vld [vmem:[#allocation3 + $0x58] sm:$0xff]
        %v3383 = vld [vmem:[#allocation3 + $0x60] sm:$0xff]
        %v3384 = vld [vmem:[#allocation3 + $0x68] sm:$0xff]
        %v3385 = vld [vmem:[#allocation3 + $0x70] sm:$0xff]
        %v3386 = vld [vmem:[#allocation3 + $0x78] sm:$0xff]
        %v3387 = vld [vmem:[#allocation3 + $0x80] sm:$0xff]
        %v3388 = vld [vmem:[#allocation3 + $0x88] sm:$0xff]
        %v3389 = vld [vmem:[#allocation3 + $0x90] sm:$0xff]
        %v3390 = vld [vmem:[#allocation3 + $0x98] sm:$0xff]
        %v3391 = vld [vmem:[#allocation3 + $0xa0] sm:$0xff]
        %v3392 = vld [vmem:[#allocation3 + $0xa8] sm:$0xff]
        %v3393 = vld [vmem:[#allocation3 + $0xb0] sm:$0xff]
        %v3394 = vld [vmem:[#allocation3 + $0xb8] sm:$0xff]
        %v3395 = vld [vmem:[#allocation3 + $0xc0] sm:$0xff]
        %v3396 = vld [vmem:[#allocation3 + $0xc8] sm:$0xff]
        %v3397 = vld [vmem:[#allocation3 + $0xd0] sm:$0xff]
        %v3398 = vld [vmem:[#allocation3 + $0xd8] sm:$0xff]
        %v3399 = vld [vmem:[#allocation3 + $0xe0] sm:$0xff]
        %v3400 = vld [vmem:[#allocation3 + $0xe8] sm:$0xff]
        %v3401 = vld [vmem:[#allocation3 + $0xf0] sm:$0xff]
        %v3402 = vld [vmem:[#allocation3 + $0xf8] sm:$0xff]
        %v3403 = vld [vmem:[#allocation3 + $0x100] sm:$0xff]
        %v3404 = vld [vmem:[#allocation3 + $0x108] sm:$0xff]
        %v3405 = vld [vmem:[#allocation3 + $0x110] sm:$0xff]
        %v3406 = vld [vmem:[#allocation3 + $0x118] sm:$0xff]
        %v3407 = vld [vmem:[#allocation3 + $0x120] sm:$0xff]
        %v3408 = vld [vmem:[#allocation3 + $0x128] sm:$0xff]
        %v3409 = vld [vmem:[#allocation3 + $0x130] sm:$0xff]
        %v3410 = vld [vmem:[#allocation3 + $0x138] sm:$0xff]
        %v3411 = vld [vmem:[#allocation3 + $0x140] sm:$0xff]
        %v3412 = vld [vmem:[#allocation3 + $0x148] sm:$0xff]
        %v3413 = vld [vmem:[#allocation3 + $0x150] sm:$0xff]
        %v3414 = vld [vmem:[#allocation3 + $0x158] sm:$0xff]
        %v3415 = vld [vmem:[#allocation3 + $0x160] sm:$0xff]
        %v3416 = vld [vmem:[#allocation3 + $0x168] sm:$0xff]
        %v3417 = vld [vmem:[#allocation3 + $0x170] sm:$0xff]
        %v3418 = vld [vmem:[#allocation3 + $0x178] sm:$0xff]
        %v3419 = vld [vmem:[#allocation3 + $0x180] sm:$0xff]
        %v3420 = vld [vmem:[#allocation3 + $0x188] sm:$0xff]
        %v3421 = vld [vmem:[#allocation3 + $0x190] sm:$0xff]
        %v3422 = vld [vmem:[#allocation3 + $0x198] sm:$0xff]
        %v3423 = vld [vmem:[#allocation3 + $0x1a0] sm:$0xff]
        %v3424 = vld [vmem:[#allocation3 + $0x1a8] sm:$0xff]
        %v3425 = vld [vmem:[#allocation3 + $0x1b0] sm:$0xff]
        %v3426 = vld [vmem:[#allocation3 + $0x1b8] sm:$0xff]
        %v3427 = vld [vmem:[#allocation3 + $0x1c0] sm:$0xff]
        %v3428 = vld [vmem:[#allocation3 + $0x1c8] sm:$0xff]
        %v3429 = vld [vmem:[#allocation3 + $0x1d0] sm:$0xff]
        %v3430 = vld [vmem:[#allocation3 + $0x1d8] sm:$0xff]
        %v3431 = vld [vmem:[#allocation3 + $0x1e0] sm:$0xff]
        %v3432 = vld [vmem:[#allocation3 + $0x1e8] sm:$0xff]
        %v3433 = vld [vmem:[#allocation3 + $0x1f0] sm:$0xff]
        %v3434 = vld [vmem:[#allocation3 + $0x1f8] sm:$0xff]
        %v3435 = vld [vmem:[#allocation3 + $0x200] sm:$0xff]
        %v3436 = vld [vmem:[#allocation3 + $0x208] sm:$0xff]
        %v3437 = vld [vmem:[#allocation3 + $0x210] sm:$0xff]
        %v3438 = vld [vmem:[#allocation3 + $0x218] sm:$0xff]
        %v3439 = vld [vmem:[#allocation3 + $0x220] sm:$0xff]
        %v3440 = vld [vmem:[#allocation3 + $0x228] sm:$0xff]
        %v3441 = vld [vmem:[#allocation3 + $0x230] sm:$0xff]
        %v3442 = vld [vmem:[#allocation3 + $0x238] sm:$0xff]
        %v3443 = vld [vmem:[#allocation3 + $0x240] sm:$0xff]
        %v3444 = vld [vmem:[#allocation3 + $0x248] sm:$0xff]
        %v3445 = vld [vmem:[#allocation3 + $0x250] sm:$0xff]
        %v3446 = vld [vmem:[#allocation3 + $0x258] sm:$0xff]
        %v3447 = vld [vmem:[#allocation3 + $0x260] sm:$0xff]
        %v3448 = vld [vmem:[#allocation3 + $0x268] sm:$0xff]
        %v3449 = vld [vmem:[#allocation3 + $0x270] sm:$0xff]
        %v3450 = vld [vmem:[#allocation3 + $0x278] sm:$0xff]
        %v3451 = vld [vmem:[#allocation3 + $0x280] sm:$0xff]
        %v3452 = vld [vmem:[#allocation3 + $0x288] sm:$0xff]
        %v3453 = vld [vmem:[#allocation3 + $0x290] sm:$0xff]
        %v3454 = vld [vmem:[#allocation3 + $0x298] sm:$0xff]
        %v3455 = vld [vmem:[#allocation3 + $0x2a0] sm:$0xff]
        %v3456 = vld [vmem:[#allocation3 + $0x2a8] sm:$0xff]
        %v3457 = vld [vmem:[#allocation3 + $0x2b0] sm:$0xff]
        %v3458 = vld [vmem:[#allocation3 + $0x2b8] sm:$0xff]
        %v3459 = vld [vmem:[#allocation3 + $0x2c0] sm:$0xff]
        %v3460 = vld [vmem:[#allocation3 + $0x2c8] sm:$0xff]
        %v3461 = vld [vmem:[#allocation3 + $0x2d0] sm:$0xff]
        %v3462 = vld [vmem:[#allocation3 + $0x2d8] sm:$0xff]
        %v3463 = vld [vmem:[#allocation3 + $0x2e0] sm:$0xff]
        %v3464 = vld [vmem:[#allocation3 + $0x2e8] sm:$0xff]
        %v3465 = vld [vmem:[#allocation3 + $0x2f0] sm:$0xff]
        %v3466 = vld [vmem:[#allocation3 + $0x2f8] sm:$0xff]
        %v3467 = vld [vmem:[#allocation3 + $0x300] sm:$0xff]
        %v3468 = vld [vmem:[#allocation3 + $0x308] sm:$0xff]
        %v3469 = vld [vmem:[#allocation3 + $0x310] sm:$0xff]
        %v3470 = vld [vmem:[#allocation3 + $0x318] sm:$0xff]
        %v3471 = vld [vmem:[#allocation3 + $0x320] sm:$0xff]
        %v3472 = vld [vmem:[#allocation3 + $0x328] sm:$0xff]
        %v3473 = vld [vmem:[#allocation3 + $0x330] sm:$0xff]
        %v3474 = vld [vmem:[#allocation3 + $0x338] sm:$0xff]
        %v3475 = vld [vmem:[#allocation3 + $0x340] sm:$0xff]
        %v3476 = vld [vmem:[#allocation3 + $0x348] sm:$0xff]
        %v3477 = vld [vmem:[#allocation3 + $0x350] sm:$0xff]
        %v3478 = vld [vmem:[#allocation3 + $0x358] sm:$0xff]
        %v3479 = vld [vmem:[#allocation3 + $0x360] sm:$0xff]
        %v3480 = vld [vmem:[#allocation3 + $0x368] sm:$0xff]
        %v3481 = vld [vmem:[#allocation3 + $0x370] sm:$0xff]
        %v3482 = vld [vmem:[#allocation3 + $0x378] sm:$0xff]
        %v3483 = vld [vmem:[#allocation3 + $0x380] sm:$0xff]
        %v3484 = vld [vmem:[#allocation3 + $0x388] sm:$0xff]
        %v3485 = vld [vmem:[#allocation3 + $0x390] sm:$0xff]
        %v3486 = vld [vmem:[#allocation3 + $0x398] sm:$0xff]
        %v3487 = vld [vmem:[#allocation3 + $0x3a0] sm:$0xff]
        %v3488 = vld [vmem:[#allocation3 + $0x3a8] sm:$0xff]
        %v3489 = vld [vmem:[#allocation3 + $0x3b0] sm:$0xff]
        %v3490 = vld [vmem:[#allocation3 + $0x3b8] sm:$0xff]
        %v3491 = vld [vmem:[#allocation3 + $0x3c0] sm:$0xff]
        %v3492 = vld [vmem:[#allocation3 + $0x3c8] sm:$0xff]
        %v3493 = vld [vmem:[#allocation3 + $0x3d0] sm:$0xff]
        %v3494 = vld [vmem:[#allocation3 + $0x3d8] sm:$0xff]
        %v3495 = vld [vmem:[#allocation3 + $0x3e0] sm:$0xff]
        %v3496 = vld [vmem:[#allocation3 + $0x3e8] sm:$0xff]
        %v3497 = vld [vmem:[#allocation3 + $0x3f0] sm:$0xff]
        %v3498 = vld [vmem:[#allocation3 + $0x3f8] sm:$0xff]
        %v3499 = vld [vmem:[#allocation3 + $0x400] sm:$0xff]
        %v3500 = vld [vmem:[#allocation3 + $0x408] sm:$0xff]
        %v3501 = vld [vmem:[#allocation3 + $0x410] sm:$0xff]
        %v3502 = vld [vmem:[#allocation3 + $0x418] sm:$0xff]
        %v3503 = vld [vmem:[#allocation3 + $0x420] sm:$0xff]
        %v3504 = vld [vmem:[#allocation3 + $0x428] sm:$0xff]
        %v3505 = vld [vmem:[#allocation3 + $0x430] sm:$0xff]
        %v3506 = vld [vmem:[#allocation3 + $0x438] sm:$0xff]
        %v3507 = vld [vmem:[#allocation3 + $0x440] sm:$0xff]
        %v3508 = vld [vmem:[#allocation3 + $0x448] sm:$0xff]
        %v3509 = vld [vmem:[#allocation3 + $0x450] sm:$0xff]
        %v3510 = vld [vmem:[#allocation3 + $0x458] sm:$0xff]
        %v3511 = vld [vmem:[#allocation3 + $0x460] sm:$0xff]
        %v3512 = vld [vmem:[#allocation3 + $0x468] sm:$0xff]
        %v3513 = vld [vmem:[#allocation3 + $0x470] sm:$0xff]
        %v3514 = vld [vmem:[#allocation3 + $0x478] sm:$0xff]
        %v3515 = vld [vmem:[#allocation3 + $0x480] sm:$0xff]
        %v3516 = vld [vmem:[#allocation3 + $0x488] sm:$0xff]
        %v3517 = vld [vmem:[#allocation3 + $0x490] sm:$0xff]
        %v3518 = vld [vmem:[#allocation3 + $0x498] sm:$0xff]
        %v3519 = vld [vmem:[#allocation3 + $0x4a0] sm:$0xff]
        %v3520 = vld [vmem:[#allocation3 + $0x4a8] sm:$0xff]
        %v3521 = vld [vmem:[#allocation3 + $0x4b0] sm:$0xff]
        %v3522 = vld [vmem:[#allocation3 + $0x4b8] sm:$0xff]
        %v3523 = vld [vmem:[#allocation3 + $0x4c0] sm:$0xff]
        %v3524 = vld [vmem:[#allocation3 + $0x4c8] sm:$0xff]
        %v3525 = vld [vmem:[#allocation3 + $0x4d0] sm:$0xff]
        %v3526 = vld [vmem:[#allocation3 + $0x4d8] sm:$0xff]
        %v3527 = vld [vmem:[#allocation3 + $0x4e0] sm:$0xff]
        %v3528 = vld [vmem:[#allocation3 + $0x4e8] sm:$0xff]
        %v3529 = vld [vmem:[#allocation3 + $0x4f0] sm:$0xff]
        %v3530 = vld [vmem:[#allocation3 + $0x4f8] sm:$0xff]
        %v3531 = vld [vmem:[#allocation3 + $0x500] sm:$0xff]
        %v3532 = vld [vmem:[#allocation3 + $0x508] sm:$0xff]
        %v3533 = vld [vmem:[#allocation3 + $0x510] sm:$0xff]
        %v3534 = vld [vmem:[#allocation3 + $0x518] sm:$0xff]
        %v3535 = vld [vmem:[#allocation3 + $0x520] sm:$0xff]
        %v3536 = vld [vmem:[#allocation3 + $0x528] sm:$0xff]
        %v3537 = vld [vmem:[#allocation3 + $0x530] sm:$0xff]
        %v3538 = vld [vmem:[#allocation3 + $0x538] sm:$0xff]
        %v3539 = vld [vmem:[#allocation3 + $0x540] sm:$0xff]
        %v3540 = vld [vmem:[#allocation3 + $0x548] sm:$0xff]
        %v3541 = vld [vmem:[#allocation3 + $0x550] sm:$0xff]
        %v3542 = vld [vmem:[#allocation3 + $0x558] sm:$0xff]
        %v3543 = vld [vmem:[#allocation3 + $0x560] sm:$0xff]
        %v3544 = vld [vmem:[#allocation3 + $0x568] sm:$0xff]
        %v3545 = vld [vmem:[#allocation3 + $0x570] sm:$0xff]
        %v3546 = vld [vmem:[#allocation3 + $0x578] sm:$0xff]
        %v3547 = vld [vmem:[#allocation3 + $0x580] sm:$0xff]
        %v3548 = vld [vmem:[#allocation3 + $0x588] sm:$0xff]
        %v3549 = vld [vmem:[#allocation3 + $0x590] sm:$0xff]
        %v3550 = vld [vmem:[#allocation3 + $0x598] sm:$0xff]
        %v3551 = vld [vmem:[#allocation3 + $0x5a0] sm:$0xff]
        %v3552 = vld [vmem:[#allocation3 + $0x5a8] sm:$0xff]
        %v3553 = vld [vmem:[#allocation3 + $0x5b0] sm:$0xff]
        %v3554 = vld [vmem:[#allocation3 + $0x5b8] sm:$0xff]
        %v3555 = vld [vmem:[#allocation3 + $0x5c0] sm:$0xff]
        %v3556 = vld [vmem:[#allocation3 + $0x5c8] sm:$0xff]
        %v3557 = vld [vmem:[#allocation3 + $0x5d0] sm:$0xff]
        %v3558 = vld [vmem:[#allocation3 + $0x5d8] sm:$0xff]
        %v3559 = vld [vmem:[#allocation3 + $0x5e0] sm:$0xff]
        %v3560 = vld [vmem:[#allocation3 + $0x5e8] sm:$0xff]
        %v3561 = vld [vmem:[#allocation3 + $0x5f0] sm:$0xff]
        %v3562 = vld [vmem:[#allocation3 + $0x5f8] sm:$0xff]
        %v3563 = vld [vmem:[#allocation3 + $0x600] sm:$0xff]
        %v3564 = vld [vmem:[#allocation3 + $0x608] sm:$0xff]
        %v3565 = vld [vmem:[#allocation3 + $0x610] sm:$0xff]
        %v3566 = vld [vmem:[#allocation3 + $0x618] sm:$0xff]
        %v3567 = vld [vmem:[#allocation3 + $0x620] sm:$0xff]
        %v3568 = vld [vmem:[#allocation3 + $0x628] sm:$0xff]
        %v3569 = vld [vmem:[#allocation3 + $0x630] sm:$0xff]
        %v3570 = vld [vmem:[#allocation3 + $0x638] sm:$0xff]
        %v3571 = vld [vmem:[#allocation3 + $0x640] sm:$0xff]
        %v3572 = vld [vmem:[#allocation3 + $0x648] sm:$0xff]
        %v3573 = vld [vmem:[#allocation3 + $0x650] sm:$0xff]
        %v3574 = vld [vmem:[#allocation3 + $0x658] sm:$0xff]
        %v3575 = vld [vmem:[#allocation3 + $0x660] sm:$0xff]
        %v3576 = vld [vmem:[#allocation3 + $0x668] sm:$0xff]
        %v3577 = vld [vmem:[#allocation3 + $0x670] sm:$0xff]
        %v3578 = vld [vmem:[#allocation3 + $0x678] sm:$0xff]
        %v3579 = vld [vmem:[#allocation3 + $0x680] sm:$0xff]
        %v3580 = vld [vmem:[#allocation3 + $0x688] sm:$0xff]
        %v3581 = vld [vmem:[#allocation3 + $0x690] sm:$0xff]
        %v3582 = vld [vmem:[#allocation3 + $0x698] sm:$0xff]
        %v3583 = vld [vmem:[#allocation3 + $0x6a0] sm:$0xff]
        %v3584 = vld [vmem:[#allocation3 + $0x6a8] sm:$0xff]
        %v3585 = vld [vmem:[#allocation3 + $0x6b0] sm:$0xff]
        %v3586 = vld [vmem:[#allocation3 + $0x6b8] sm:$0xff]
        %v3587 = vld [vmem:[#allocation3 + $0x6c0] sm:$0xff]
        %v3588 = vld [vmem:[#allocation3 + $0x6c8] sm:$0xff]
        %v3589 = vld [vmem:[#allocation3 + $0x6d0] sm:$0xff]
        %v3590 = vld [vmem:[#allocation3 + $0x6d8] sm:$0xff]
        %v3591 = vld [vmem:[#allocation3 + $0x6e0] sm:$0xff]
        %v3592 = vld [vmem:[#allocation3 + $0x6e8] sm:$0xff]
        %v3593 = vld [vmem:[#allocation3 + $0x6f0] sm:$0xff]
        %v3594 = vld [vmem:[#allocation3 + $0x6f8] sm:$0xff]
        %v3595 = vld [vmem:[#allocation3 + $0x700] sm:$0xff]
        %v3596 = vld [vmem:[#allocation3 + $0x708] sm:$0xff]
        %v3597 = vld [vmem:[#allocation3 + $0x710] sm:$0xff]
        %v3598 = vld [vmem:[#allocation3 + $0x718] sm:$0xff]
        %v3599 = vld [vmem:[#allocation3 + $0x720] sm:$0xff]
        %v3600 = vld [vmem:[#allocation3 + $0x728] sm:$0xff]
        %v3601 = vld [vmem:[#allocation3 + $0x730] sm:$0xff]
        %v3602 = vld [vmem:[#allocation3 + $0x738] sm:$0xff]
        %v3603 = vld [vmem:[#allocation3 + $0x740] sm:$0xff]
        %v3604 = vld [vmem:[#allocation3 + $0x748] sm:$0xff]
        %v3605 = vld [vmem:[#allocation3 + $0x750] sm:$0xff]
        %v3606 = vld [vmem:[#allocation3 + $0x758] sm:$0xff]
        %v3607 = vld [vmem:[#allocation3 + $0x760] sm:$0xff]
        %v3608 = vld [vmem:[#allocation3 + $0x768] sm:$0xff]
        %v3609 = vld [vmem:[#allocation3 + $0x770] sm:$0xff]
        %v3610 = vld [vmem:[#allocation3 + $0x778] sm:$0xff]
        %v3611 = vld [vmem:[#allocation3 + $0x780] sm:$0xff]
        %v3612 = vld [vmem:[#allocation3 + $0x788] sm:$0xff]
        %v3613 = vld [vmem:[#allocation3 + $0x790] sm:$0xff]
        %v3614 = vld [vmem:[#allocation3 + $0x798] sm:$0xff]
        %v3615 = vld [vmem:[#allocation3 + $0x7a0] sm:$0xff]
        %v3616 = vld [vmem:[#allocation3 + $0x7a8] sm:$0xff]
        %v3617 = vld [vmem:[#allocation3 + $0x7b0] sm:$0xff]
        %v3618 = vld [vmem:[#allocation3 + $0x7b8] sm:$0xff]
        %v3619 = vld [vmem:[#allocation3 + $0x7c0] sm:$0xff]
        %v3620 = vld [vmem:[#allocation3 + $0x7c8] sm:$0xff]
        %v3621 = vld [vmem:[#allocation3 + $0x7d0] sm:$0xff]
        %v3622 = vld [vmem:[#allocation3 + $0x7d8] sm:$0xff]
        %v3623 = vld [vmem:[#allocation3 + $0x7e0] sm:$0xff]
        %v3624 = vld [vmem:[#allocation3 + $0x7e8] sm:$0xff]
        %v3625 = vld [vmem:[#allocation3 + $0x7f0] sm:$0xff]
        %v3626 = vld [vmem:[#allocation3 + $0x7f8] sm:$0xff]
        %v3627 = vadd.f32 %v3371, %v811
        %v3628 = vadd.f32 %v3372, %v812
        %v3629 = vadd.f32 %v3373, %v813
        %v3630 = vadd.f32 %v3374, %v814
        %v3631 = vadd.f32 %v3375, %v815
        %v3632 = vadd.f32 %v3376, %v816
        %v3633 = vadd.f32 %v3377, %v817
        %v3634 = vadd.f32 %v3378, %v818
        %v3635 = vadd.f32 %v3379, %v819
        %v3636 = vadd.f32 %v3380, %v820
        %v3637 = vadd.f32 %v3381, %v821
        %v3638 = vadd.f32 %v3382, %v822
        %v3639 = vadd.f32 %v3383, %v823
        %v3640 = vadd.f32 %v3384, %v824
        %v3641 = vadd.f32 %v3385, %v825
        %v3642 = vadd.f32 %v3386, %v826
        %v3643 = vadd.f32 %v3387, %v827
        %v3644 = vadd.f32 %v3388, %v828
        %v3645 = vadd.f32 %v3389, %v829
        %v3646 = vadd.f32 %v3390, %v830
        %v3647 = vadd.f32 %v3391, %v831
        %v3648 = vadd.f32 %v3392, %v832
        %v3649 = vadd.f32 %v3393, %v833
        %v3650 = vadd.f32 %v3394, %v834
        %v3651 = vadd.f32 %v3395, %v835
        %v3652 = vadd.f32 %v3396, %v836
        %v3653 = vadd.f32 %v3397, %v837
        %v3654 = vadd.f32 %v3398, %v838
        %v3655 = vadd.f32 %v3399, %v839
        %v3656 = vadd.f32 %v3400, %v840
        %v3657 = vadd.f32 %v3401, %v841
        %v3658 = vadd.f32 %v3402, %v842
        %v3659 = vadd.f32 %v3403, %v843
        %v3660 = vadd.f32 %v3404, %v844
        %v3661 = vadd.f32 %v3405, %v845
        %v3662 = vadd.f32 %v3406, %v846
        %v3663 = vadd.f32 %v3407, %v847
        %v3664 = vadd.f32 %v3408, %v848
        %v3665 = vadd.f32 %v3409, %v849
        %v3666 = vadd.f32 %v3410, %v850
        %v3667 = vadd.f32 %v3411, %v851
        %v3668 = vadd.f32 %v3412, %v852
        %v3669 = vadd.f32 %v3413, %v853
        %v3670 = vadd.f32 %v3414, %v854
        %v3671 = vadd.f32 %v3415, %v855
        %v3672 = vadd.f32 %v3416, %v856
        %v3673 = vadd.f32 %v3417, %v857
        %v3674 = vadd.f32 %v3418, %v858
        %v3675 = vadd.f32 %v3419, %v859
        %v3676 = vadd.f32 %v3420, %v860
        %v3677 = vadd.f32 %v3421, %v861
        %v3678 = vadd.f32 %v3422, %v862
        %v3679 = vadd.f32 %v3423, %v863
        %v3680 = vadd.f32 %v3424, %v864
        %v3681 = vadd.f32 %v3425, %v865
        %v3682 = vadd.f32 %v3426, %v866
        %v3683 = vadd.f32 %v3427, %v867
        %v3684 = vadd.f32 %v3428, %v868
        %v3685 = vadd.f32 %v3429, %v869
        %v3686 = vadd.f32 %v3430, %v870
        %v3687 = vadd.f32 %v3431, %v871
        %v3688 = vadd.f32 %v3432, %v872
        %v3689 = vadd.f32 %v3433, %v873
        %v3690 = vadd.f32 %v3434, %v874
        %v3691 = vadd.f32 %v3435, %v875
        %v3692 = vadd.f32 %v3436, %v876
        %v3693 = vadd.f32 %v3437, %v877
        %v3694 = vadd.f32 %v3438, %v878
        %v3695 = vadd.f32 %v3439, %v879
        %v3696 = vadd.f32 %v3440, %v880
        %v3697 = vadd.f32 %v3441, %v881
        %v3698 = vadd.f32 %v3442, %v882
        %v3699 = vadd.f32 %v3443, %v883
        %v3700 = vadd.f32 %v3444, %v884
        %v3701 = vadd.f32 %v3445, %v885
        %v3702 = vadd.f32 %v3446, %v886
        %v3703 = vadd.f32 %v3447, %v887
        %v3704 = vadd.f32 %v3448, %v888
        %v3705 = vadd.f32 %v3449, %v889
        %v3706 = vadd.f32 %v3450, %v890
        %v3707 = vadd.f32 %v3451, %v891
        %v3708 = vadd.f32 %v3452, %v892
        %v3709 = vadd.f32 %v3453, %v893
        %v3710 = vadd.f32 %v3454, %v894
        %v3711 = vadd.f32 %v3455, %v895
        %v3712 = vadd.f32 %v3456, %v896
        %v3713 = vadd.f32 %v3457, %v897
        %v3714 = vadd.f32 %v3458, %v898
        %v3715 = vadd.f32 %v3459, %v899
        %v3716 = vadd.f32 %v3460, %v900
        %v3717 = vadd.f32 %v3461, %v901
        %v3718 = vadd.f32 %v3462, %v902
        %v3719 = vadd.f32 %v3463, %v903
        %v3720 = vadd.f32 %v3464, %v904
        %v3721 = vadd.f32 %v3465, %v905
        %v3722 = vadd.f32 %v3466, %v906
        %v3723 = vadd.f32 %v3467, %v907
        %v3724 = vadd.f32 %v3468, %v908
        %v3725 = vadd.f32 %v3469, %v909
        %v3726 = vadd.f32 %v3470, %v910
        %v3727 = vadd.f32 %v3471, %v911
        %v3728 = vadd.f32 %v3472, %v912
        %v3729 = vadd.f32 %v3473, %v913
        %v3730 = vadd.f32 %v3474, %v914
        %v3731 = vadd.f32 %v3475, %v915
        %v3732 = vadd.f32 %v3476, %v916
        %v3733 = vadd.f32 %v3477, %v917
        %v3734 = vadd.f32 %v3478, %v918
        %v3735 = vadd.f32 %v3479, %v919
        %v3736 = vadd.f32 %v3480, %v920
        %v3737 = vadd.f32 %v3481, %v921
        %v3738 = vadd.f32 %v3482, %v922
        %v3739 = vadd.f32 %v3483, %v923
        %v3740 = vadd.f32 %v3484, %v924
        %v3741 = vadd.f32 %v3485, %v925
        %v3742 = vadd.f32 %v3486, %v926
        %v3743 = vadd.f32 %v3487, %v927
        %v3744 = vadd.f32 %v3488, %v928
        %v3745 = vadd.f32 %v3489, %v929
        %v3746 = vadd.f32 %v3490, %v930
        %v3747 = vadd.f32 %v3491, %v931
        %v3748 = vadd.f32 %v3492, %v932
        %v3749 = vadd.f32 %v3493, %v933
        %v3750 = vadd.f32 %v3494, %v934
        %v3751 = vadd.f32 %v3495, %v935
        %v3752 = vadd.f32 %v3496, %v936
        %v3753 = vadd.f32 %v3497, %v937
        %v3754 = vadd.f32 %v3498, %v938
        %v3755 = vadd.f32 %v3499, %v939
        %v3756 = vadd.f32 %v3500, %v940
        %v3757 = vadd.f32 %v3501, %v941
        %v3758 = vadd.f32 %v3502, %v942
        %v3759 = vadd.f32 %v3503, %v943
        %v3760 = vadd.f32 %v3504, %v944
        %v3761 = vadd.f32 %v3505, %v945
        %v3762 = vadd.f32 %v3506, %v946
        %v3763 = vadd.f32 %v3507, %v947
        %v3764 = vadd.f32 %v3508, %v948
        %v3765 = vadd.f32 %v3509, %v949
        %v3766 = vadd.f32 %v3510, %v950
        %v3767 = vadd.f32 %v3511, %v951
        %v3768 = vadd.f32 %v3512, %v952
        %v3769 = vadd.f32 %v3513, %v953
        %v3770 = vadd.f32 %v3514, %v954
        %v3771 = vadd.f32 %v3515, %v955
        %v3772 = vadd.f32 %v3516, %v956
        %v3773 = vadd.f32 %v3517, %v957
        %v3774 = vadd.f32 %v3518, %v958
        %v3775 = vadd.f32 %v3519, %v959
        %v3776 = vadd.f32 %v3520, %v960
        %v3777 = vadd.f32 %v3521, %v961
        %v3778 = vadd.f32 %v3522, %v962
        %v3779 = vadd.f32 %v3523, %v963
        %v3780 = vadd.f32 %v3524, %v964
        %v3781 = vadd.f32 %v3525, %v965
        %v3782 = vadd.f32 %v3526, %v966
        %v3783 = vadd.f32 %v3527, %v967
        %v3784 = vadd.f32 %v3528, %v968
        %v3785 = vadd.f32 %v3529, %v969
        %v3786 = vadd.f32 %v3530, %v970
        %v3787 = vadd.f32 %v3531, %v971
        %v3788 = vadd.f32 %v3532, %v972
        %v3789 = vadd.f32 %v3533, %v973
        %v3790 = vadd.f32 %v3534, %v974
        %v3791 = vadd.f32 %v3535, %v975
        %v3792 = vadd.f32 %v3536, %v976
        %v3793 = vadd.f32 %v3537, %v977
        %v3794 = vadd.f32 %v3538, %v978
        %v3795 = vadd.f32 %v3539, %v979
        %v3796 = vadd.f32 %v3540, %v980
        %v3797 = vadd.f32 %v3541, %v981
        %v3798 = vadd.f32 %v3542, %v982
        %v3799 = vadd.f32 %v3543, %v983
        %v3800 = vadd.f32 %v3544, %v984
        %v3801 = vadd.f32 %v3545, %v985
        %v3802 = vadd.f32 %v3546, %v986
        %v3803 = vadd.f32 %v3547, %v987
        %v3804 = vadd.f32 %v3548, %v988
        %v3805 = vadd.f32 %v3549, %v989
        %v3806 = vadd.f32 %v3550, %v990
        %v3807 = vadd.f32 %v3551, %v991
        %v3808 = vadd.f32 %v3552, %v992
        %v3809 = vadd.f32 %v3553, %v993
        %v3810 = vadd.f32 %v3554, %v994
        %v3811 = vadd.f32 %v3555, %v995
        %v3812 = vadd.f32 %v3556, %v996
        %v3813 = vadd.f32 %v3557, %v997
        %v3814 = vadd.f32 %v3558, %v998
        %v3815 = vadd.f32 %v3559, %v999
        %v3816 = vadd.f32 %v3560, %v1000
        %v3817 = vadd.f32 %v3561, %v1001
        %v3818 = vadd.f32 %v3562, %v1002
        %v3819 = vadd.f32 %v3563, %v1003
        %v3820 = vadd.f32 %v3564, %v1004
        %v3821 = vadd.f32 %v3565, %v1005
        %v3822 = vadd.f32 %v3566, %v1006
        %v3823 = vadd.f32 %v3567, %v1007
        %v3824 = vadd.f32 %v3568, %v1008
        %v3825 = vadd.f32 %v3569, %v1009
        %v3826 = vadd.f32 %v3570, %v1010
        %v3827 = vadd.f32 %v3571, %v1011
        %v3828 = vadd.f32 %v3572, %v1012
        %v3829 = vadd.f32 %v3573, %v1013
        %v3830 = vadd.f32 %v3574, %v1014
        %v3831 = vadd.f32 %v3575, %v1015
        %v3832 = vadd.f32 %v3576, %v1016
        %v3833 = vadd.f32 %v3577, %v1017
        %v3834 = vadd.f32 %v3578, %v1018
        %v3835 = vadd.f32 %v3579, %v1019
        %v3836 = vadd.f32 %v3580, %v1020
        %v3837 = vadd.f32 %v3581, %v1021
        %v3838 = vadd.f32 %v3582, %v1022
        %v3839 = vadd.f32 %v3583, %v1023
        %v3840 = vadd.f32 %v3584, %v1024
        %v3841 = vadd.f32 %v3585, %v1025
        %v3842 = vadd.f32 %v3586, %v1026
        %v3843 = vadd.f32 %v3587, %v1027
        %v3844 = vadd.f32 %v3588, %v1028
        %v3845 = vadd.f32 %v3589, %v1029
        %v3846 = vadd.f32 %v3590, %v1030
        %v3847 = vadd.f32 %v3591, %v1031
        %v3848 = vadd.f32 %v3592, %v1032
        %v3849 = vadd.f32 %v3593, %v1033
        %v3850 = vadd.f32 %v3594, %v1034
        %v3851 = vadd.f32 %v3595, %v1035
        %v3852 = vadd.f32 %v3596, %v1036
        %v3853 = vadd.f32 %v3597, %v1037
        %v3854 = vadd.f32 %v3598, %v1038
        %v3855 = vadd.f32 %v3599, %v1039
        %v3856 = vadd.f32 %v3600, %v1040
        %v3857 = vadd.f32 %v3601, %v1041
        %v3858 = vadd.f32 %v3602, %v1042
        %v3859 = vadd.f32 %v3603, %v1043
        %v3860 = vadd.f32 %v3604, %v1044
        %v3861 = vadd.f32 %v3605, %v1045
        %v3862 = vadd.f32 %v3606, %v1046
        %v3863 = vadd.f32 %v3607, %v1047
        %v3864 = vadd.f32 %v3608, %v1048
        %v3865 = vadd.f32 %v3609, %v1049
        %v3866 = vadd.f32 %v3610, %v1050
        %v3867 = vadd.f32 %v3611, %v1051
        %v3868 = vadd.f32 %v3612, %v1052
        %v3869 = vadd.f32 %v3613, %v1053
        %v3870 = vadd.f32 %v3614, %v1054
        %v3871 = vadd.f32 %v3615, %v1055
        %v3872 = vadd.f32 %v3616, %v1056
        %v3873 = vadd.f32 %v3617, %v1057
        %v3874 = vadd.f32 %v3618, %v1058
        %v3875 = vadd.f32 %v3619, %v1059
        %v3876 = vadd.f32 %v3620, %v1060
        %v3877 = vadd.f32 %v3621, %v1061
        %v3878 = vadd.f32 %v3622, %v1062
        %v3879 = vadd.f32 %v3623, %v1063
        %v3880 = vadd.f32 %v3624, %v1064
        %v3881 = vadd.f32 %v3625, %v1065
        %v3882 = vadd.f32 %v3626, %v1066
        %3883 = vst [vmem:[#allocation3] sm:$0xff] %v3627
        %3884 = vst [vmem:[#allocation3 + $0x8] sm:$0xff] %v3628
        %3885 = vst [vmem:[#allocation3 + $0x10] sm:$0xff] %v3629
        %3886 = vst [vmem:[#allocation3 + $0x18] sm:$0xff] %v3630
        %3887 = vst [vmem:[#allocation3 + $0x20] sm:$0xff] %v3631
        %3888 = vst [vmem:[#allocation3 + $0x28] sm:$0xff] %v3632
        %3889 = vst [vmem:[#allocation3 + $0x30] sm:$0xff] %v3633
        %3890 = vst [vmem:[#allocation3 + $0x38] sm:$0xff] %v3634
        %3891 = vst [vmem:[#allocation3 + $0x40] sm:$0xff] %v3635
        %3892 = vst [vmem:[#allocation3 + $0x48] sm:$0xff] %v3636
        %3893 = vst [vmem:[#allocation3 + $0x50] sm:$0xff] %v3637
        %3894 = vst [vmem:[#allocation3 + $0x58] sm:$0xff] %v3638
        %3895 = vst [vmem:[#allocation3 + $0x60] sm:$0xff] %v3639
        %3896 = vst [vmem:[#allocation3 + $0x68] sm:$0xff] %v3640
        %3897 = vst [vmem:[#allocation3 + $0x70] sm:$0xff] %v3641
        %3898 = vst [vmem:[#allocation3 + $0x78] sm:$0xff] %v3642
        %3899 = vst [vmem:[#allocation3 + $0x80] sm:$0xff] %v3643
        %3900 = vst [vmem:[#allocation3 + $0x88] sm:$0xff] %v3644
        %3901 = vst [vmem:[#allocation3 + $0x90] sm:$0xff] %v3645
        %3902 = vst [vmem:[#allocation3 + $0x98] sm:$0xff] %v3646
        %3903 = vst [vmem:[#allocation3 + $0xa0] sm:$0xff] %v3647
        %3904 = vst [vmem:[#allocation3 + $0xa8] sm:$0xff] %v3648
        %3905 = vst [vmem:[#allocation3 + $0xb0] sm:$0xff] %v3649
        %3906 = vst [vmem:[#allocation3 + $0xb8] sm:$0xff] %v3650
        %3907 = vst [vmem:[#allocation3 + $0xc0] sm:$0xff] %v3651
        %3908 = vst [vmem:[#allocation3 + $0xc8] sm:$0xff] %v3652
        %3909 = vst [vmem:[#allocation3 + $0xd0] sm:$0xff] %v3653
        %3910 = vst [vmem:[#allocation3 + $0xd8] sm:$0xff] %v3654
        %3911 = vst [vmem:[#allocation3 + $0xe0] sm:$0xff] %v3655
        %3912 = vst [vmem:[#allocation3 + $0xe8] sm:$0xff] %v3656
        %3913 = vst [vmem:[#allocation3 + $0xf0] sm:$0xff] %v3657
        %3914 = vst [vmem:[#allocation3 + $0xf8] sm:$0xff] %v3658
        %3915 = vst [vmem:[#allocation3 + $0x100] sm:$0xff] %v3659
        %3916 = vst [vmem:[#allocation3 + $0x108] sm:$0xff] %v3660
        %3917 = vst [vmem:[#allocation3 + $0x110] sm:$0xff] %v3661
        %3918 = vst [vmem:[#allocation3 + $0x118] sm:$0xff] %v3662
        %3919 = vst [vmem:[#allocation3 + $0x120] sm:$0xff] %v3663
        %3920 = vst [vmem:[#allocation3 + $0x128] sm:$0xff] %v3664
        %3921 = vst [vmem:[#allocation3 + $0x130] sm:$0xff] %v3665
        %3922 = vst [vmem:[#allocation3 + $0x138] sm:$0xff] %v3666
        %3923 = vst [vmem:[#allocation3 + $0x140] sm:$0xff] %v3667
        %3924 = vst [vmem:[#allocation3 + $0x148] sm:$0xff] %v3668
        %3925 = vst [vmem:[#allocation3 + $0x150] sm:$0xff] %v3669
        %3926 = vst [vmem:[#allocation3 + $0x158] sm:$0xff] %v3670
        %3927 = vst [vmem:[#allocation3 + $0x160] sm:$0xff] %v3671
        %3928 = vst [vmem:[#allocation3 + $0x168] sm:$0xff] %v3672
        %3929 = vst [vmem:[#allocation3 + $0x170] sm:$0xff] %v3673
        %3930 = vst [vmem:[#allocation3 + $0x178] sm:$0xff] %v3674
        %3931 = vst [vmem:[#allocation3 + $0x180] sm:$0xff] %v3675
        %3932 = vst [vmem:[#allocation3 + $0x188] sm:$0xff] %v3676
        %3933 = vst [vmem:[#allocation3 + $0x190] sm:$0xff] %v3677
        %3934 = vst [vmem:[#allocation3 + $0x198] sm:$0xff] %v3678
        %3935 = vst [vmem:[#allocation3 + $0x1a0] sm:$0xff] %v3679
        %3936 = vst [vmem:[#allocation3 + $0x1a8] sm:$0xff] %v3680
        %3937 = vst [vmem:[#allocation3 + $0x1b0] sm:$0xff] %v3681
        %3938 = vst [vmem:[#allocation3 + $0x1b8] sm:$0xff] %v3682
        %3939 = vst [vmem:[#allocation3 + $0x1c0] sm:$0xff] %v3683
        %3940 = vst [vmem:[#allocation3 + $0x1c8] sm:$0xff] %v3684
        %3941 = vst [vmem:[#allocation3 + $0x1d0] sm:$0xff] %v3685
        %3942 = vst [vmem:[#allocation3 + $0x1d8] sm:$0xff] %v3686
        %3943 = vst [vmem:[#allocation3 + $0x1e0] sm:$0xff] %v3687
        %3944 = vst [vmem:[#allocation3 + $0x1e8] sm:$0xff] %v3688
        %3945 = vst [vmem:[#allocation3 + $0x1f0] sm:$0xff] %v3689
        %3946 = vst [vmem:[#allocation3 + $0x1f8] sm:$0xff] %v3690
        %3947 = vst [vmem:[#allocation3 + $0x200] sm:$0xff] %v3691
        %3948 = vst [vmem:[#allocation3 + $0x208] sm:$0xff] %v3692
        %3949 = vst [vmem:[#allocation3 + $0x210] sm:$0xff] %v3693
        %3950 = vst [vmem:[#allocation3 + $0x218] sm:$0xff] %v3694
        %3951 = vst [vmem:[#allocation3 + $0x220] sm:$0xff] %v3695
        %3952 = vst [vmem:[#allocation3 + $0x228] sm:$0xff] %v3696
        %3953 = vst [vmem:[#allocation3 + $0x230] sm:$0xff] %v3697
        %3954 = vst [vmem:[#allocation3 + $0x238] sm:$0xff] %v3698
        %3955 = vst [vmem:[#allocation3 + $0x240] sm:$0xff] %v3699
        %3956 = vst [vmem:[#allocation3 + $0x248] sm:$0xff] %v3700
        %3957 = vst [vmem:[#allocation3 + $0x250] sm:$0xff] %v3701
        %3958 = vst [vmem:[#allocation3 + $0x258] sm:$0xff] %v3702
        %3959 = vst [vmem:[#allocation3 + $0x260] sm:$0xff] %v3703
        %3960 = vst [vmem:[#allocation3 + $0x268] sm:$0xff] %v3704
        %3961 = vst [vmem:[#allocation3 + $0x270] sm:$0xff] %v3705
        %3962 = vst [vmem:[#allocation3 + $0x278] sm:$0xff] %v3706
        %3963 = vst [vmem:[#allocation3 + $0x280] sm:$0xff] %v3707
        %3964 = vst [vmem:[#allocation3 + $0x288] sm:$0xff] %v3708
        %3965 = vst [vmem:[#allocation3 + $0x290] sm:$0xff] %v3709
        %3966 = vst [vmem:[#allocation3 + $0x298] sm:$0xff] %v3710
        %3967 = vst [vmem:[#allocation3 + $0x2a0] sm:$0xff] %v3711
        %3968 = vst [vmem:[#allocation3 + $0x2a8] sm:$0xff] %v3712
        %3969 = vst [vmem:[#allocation3 + $0x2b0] sm:$0xff] %v3713
        %3970 = vst [vmem:[#allocation3 + $0x2b8] sm:$0xff] %v3714
        %3971 = vst [vmem:[#allocation3 + $0x2c0] sm:$0xff] %v3715
        %3972 = vst [vmem:[#allocation3 + $0x2c8] sm:$0xff] %v3716
        %3973 = vst [vmem:[#allocation3 + $0x2d0] sm:$0xff] %v3717
        %3974 = vst [vmem:[#allocation3 + $0x2d8] sm:$0xff] %v3718
        %3975 = vst [vmem:[#allocation3 + $0x2e0] sm:$0xff] %v3719
        %3976 = vst [vmem:[#allocation3 + $0x2e8] sm:$0xff] %v3720
        %3977 = vst [vmem:[#allocation3 + $0x2f0] sm:$0xff] %v3721
        %3978 = vst [vmem:[#allocation3 + $0x2f8] sm:$0xff] %v3722
        %3979 = vst [vmem:[#allocation3 + $0x300] sm:$0xff] %v3723
        %3980 = vst [vmem:[#allocation3 + $0x308] sm:$0xff] %v3724
        %3981 = vst [vmem:[#allocation3 + $0x310] sm:$0xff] %v3725
        %3982 = vst [vmem:[#allocation3 + $0x318] sm:$0xff] %v3726
        %3983 = vst [vmem:[#allocation3 + $0x320] sm:$0xff] %v3727
        %3984 = vst [vmem:[#allocation3 + $0x328] sm:$0xff] %v3728
        %3985 = vst [vmem:[#allocation3 + $0x330] sm:$0xff] %v3729
        %3986 = vst [vmem:[#allocation3 + $0x338] sm:$0xff] %v3730
        %3987 = vst [vmem:[#allocation3 + $0x340] sm:$0xff] %v3731
        %3988 = vst [vmem:[#allocation3 + $0x348] sm:$0xff] %v3732
        %3989 = vst [vmem:[#allocation3 + $0x350] sm:$0xff] %v3733
        %3990 = vst [vmem:[#allocation3 + $0x358] sm:$0xff] %v3734
        %3991 = vst [vmem:[#allocation3 + $0x360] sm:$0xff] %v3735
        %3992 = vst [vmem:[#allocation3 + $0x368] sm:$0xff] %v3736
        %3993 = vst [vmem:[#allocation3 + $0x370] sm:$0xff] %v3737
        %3994 = vst [vmem:[#allocation3 + $0x378] sm:$0xff] %v3738
        %3995 = vst [vmem:[#allocation3 + $0x380] sm:$0xff] %v3739
        %3996 = vst [vmem:[#allocation3 + $0x388] sm:$0xff] %v3740
        %3997 = vst [vmem:[#allocation3 + $0x390] sm:$0xff] %v3741
        %3998 = vst [vmem:[#allocation3 + $0x398] sm:$0xff] %v3742
        %3999 = vst [vmem:[#allocation3 + $0x3a0] sm:$0xff] %v3743
        %4000 = vst [vmem:[#allocation3 + $0x3a8] sm:$0xff] %v3744
        %4001 = vst [vmem:[#allocation3 + $0x3b0] sm:$0xff] %v3745
        %4002 = vst [vmem:[#allocation3 + $0x3b8] sm:$0xff] %v3746
        %4003 = vst [vmem:[#allocation3 + $0x3c0] sm:$0xff] %v3747
        %4004 = vst [vmem:[#allocation3 + $0x3c8] sm:$0xff] %v3748
        %4005 = vst [vmem:[#allocation3 + $0x3d0] sm:$0xff] %v3749
        %4006 = vst [vmem:[#allocation3 + $0x3d8] sm:$0xff] %v3750
        %4007 = vst [vmem:[#allocation3 + $0x3e0] sm:$0xff] %v3751
        %4008 = vst [vmem:[#allocation3 + $0x3e8] sm:$0xff] %v3752
        %4009 = vst [vmem:[#allocation3 + $0x3f0] sm:$0xff] %v3753
        %4010 = vst [vmem:[#allocation3 + $0x3f8] sm:$0xff] %v3754
        %4011 = vst [vmem:[#allocation3 + $0x400] sm:$0xff] %v3755
        %4012 = vst [vmem:[#allocation3 + $0x408] sm:$0xff] %v3756
        %4013 = vst [vmem:[#allocation3 + $0x410] sm:$0xff] %v3757
        %4014 = vst [vmem:[#allocation3 + $0x418] sm:$0xff] %v3758
        %4015 = vst [vmem:[#allocation3 + $0x420] sm:$0xff] %v3759
        %4016 = vst [vmem:[#allocation3 + $0x428] sm:$0xff] %v3760
        %4017 = vst [vmem:[#allocation3 + $0x430] sm:$0xff] %v3761
        %4018 = vst [vmem:[#allocation3 + $0x438] sm:$0xff] %v3762
        %4019 = vst [vmem:[#allocation3 + $0x440] sm:$0xff] %v3763
        %4020 = vst [vmem:[#allocation3 + $0x448] sm:$0xff] %v3764
        %4021 = vst [vmem:[#allocation3 + $0x450] sm:$0xff] %v3765
        %4022 = vst [vmem:[#allocation3 + $0x458] sm:$0xff] %v3766
        %4023 = vst [vmem:[#allocation3 + $0x460] sm:$0xff] %v3767
        %4024 = vst [vmem:[#allocation3 + $0x468] sm:$0xff] %v3768
        %4025 = vst [vmem:[#allocation3 + $0x470] sm:$0xff] %v3769
        %4026 = vst [vmem:[#allocation3 + $0x478] sm:$0xff] %v3770
        %4027 = vst [vmem:[#allocation3 + $0x480] sm:$0xff] %v3771
        %4028 = vst [vmem:[#allocation3 + $0x488] sm:$0xff] %v3772
        %4029 = vst [vmem:[#allocation3 + $0x490] sm:$0xff] %v3773
        %4030 = vst [vmem:[#allocation3 + $0x498] sm:$0xff] %v3774
        %4031 = vst [vmem:[#allocation3 + $0x4a0] sm:$0xff] %v3775
        %4032 = vst [vmem:[#allocation3 + $0x4a8] sm:$0xff] %v3776
        %4033 = vst [vmem:[#allocation3 + $0x4b0] sm:$0xff] %v3777
        %4034 = vst [vmem:[#allocation3 + $0x4b8] sm:$0xff] %v3778
        %4035 = vst [vmem:[#allocation3 + $0x4c0] sm:$0xff] %v3779
        %4036 = vst [vmem:[#allocation3 + $0x4c8] sm:$0xff] %v3780
        %4037 = vst [vmem:[#allocation3 + $0x4d0] sm:$0xff] %v3781
        %4038 = vst [vmem:[#allocation3 + $0x4d8] sm:$0xff] %v3782
        %4039 = vst [vmem:[#allocation3 + $0x4e0] sm:$0xff] %v3783
        %4040 = vst [vmem:[#allocation3 + $0x4e8] sm:$0xff] %v3784
        %4041 = vst [vmem:[#allocation3 + $0x4f0] sm:$0xff] %v3785
        %4042 = vst [vmem:[#allocation3 + $0x4f8] sm:$0xff] %v3786
        %4043 = vst [vmem:[#allocation3 + $0x500] sm:$0xff] %v3787
        %4044 = vst [vmem:[#allocation3 + $0x508] sm:$0xff] %v3788
        %4045 = vst [vmem:[#allocation3 + $0x510] sm:$0xff] %v3789
        %4046 = vst [vmem:[#allocation3 + $0x518] sm:$0xff] %v3790
        %4047 = vst [vmem:[#allocation3 + $0x520] sm:$0xff] %v3791
        %4048 = vst [vmem:[#allocation3 + $0x528] sm:$0xff] %v3792
        %4049 = vst [vmem:[#allocation3 + $0x530] sm:$0xff] %v3793
        %4050 = vst [vmem:[#allocation3 + $0x538] sm:$0xff] %v3794
        %4051 = vst [vmem:[#allocation3 + $0x540] sm:$0xff] %v3795
        %4052 = vst [vmem:[#allocation3 + $0x548] sm:$0xff] %v3796
        %4053 = vst [vmem:[#allocation3 + $0x550] sm:$0xff] %v3797
        %4054 = vst [vmem:[#allocation3 + $0x558] sm:$0xff] %v3798
        %4055 = vst [vmem:[#allocation3 + $0x560] sm:$0xff] %v3799
        %4056 = vst [vmem:[#allocation3 + $0x568] sm:$0xff] %v3800
        %4057 = vst [vmem:[#allocation3 + $0x570] sm:$0xff] %v3801
        %4058 = vst [vmem:[#allocation3 + $0x578] sm:$0xff] %v3802
        %4059 = vst [vmem:[#allocation3 + $0x580] sm:$0xff] %v3803
        %4060 = vst [vmem:[#allocation3 + $0x588] sm:$0xff] %v3804
        %4061 = vst [vmem:[#allocation3 + $0x590] sm:$0xff] %v3805
        %4062 = vst [vmem:[#allocation3 + $0x598] sm:$0xff] %v3806
        %4063 = vst [vmem:[#allocation3 + $0x5a0] sm:$0xff] %v3807
        %4064 = vst [vmem:[#allocation3 + $0x5a8] sm:$0xff] %v3808
        %4065 = vst [vmem:[#allocation3 + $0x5b0] sm:$0xff] %v3809
        %4066 = vst [vmem:[#allocation3 + $0x5b8] sm:$0xff] %v3810
        %4067 = vst [vmem:[#allocation3 + $0x5c0] sm:$0xff] %v3811
        %4068 = vst [vmem:[#allocation3 + $0x5c8] sm:$0xff] %v3812
        %4069 = vst [vmem:[#allocation3 + $0x5d0] sm:$0xff] %v3813
        %4070 = vst [vmem:[#allocation3 + $0x5d8] sm:$0xff] %v3814
        %4071 = vst [vmem:[#allocation3 + $0x5e0] sm:$0xff] %v3815
        %4072 = vst [vmem:[#allocation3 + $0x5e8] sm:$0xff] %v3816
        %4073 = vst [vmem:[#allocation3 + $0x5f0] sm:$0xff] %v3817
        %4074 = vst [vmem:[#allocation3 + $0x5f8] sm:$0xff] %v3818
        %4075 = vst [vmem:[#allocation3 + $0x600] sm:$0xff] %v3819
        %4076 = vst [vmem:[#allocation3 + $0x608] sm:$0xff] %v3820
        %4077 = vst [vmem:[#allocation3 + $0x610] sm:$0xff] %v3821
        %4078 = vst [vmem:[#allocation3 + $0x618] sm:$0xff] %v3822
        %4079 = vst [vmem:[#allocation3 + $0x620] sm:$0xff] %v3823
        %4080 = vst [vmem:[#allocation3 + $0x628] sm:$0xff] %v3824
        %4081 = vst [vmem:[#allocation3 + $0x630] sm:$0xff] %v3825
        %4082 = vst [vmem:[#allocation3 + $0x638] sm:$0xff] %v3826
        %4083 = vst [vmem:[#allocation3 + $0x640] sm:$0xff] %v3827
        %4084 = vst [vmem:[#allocation3 + $0x648] sm:$0xff] %v3828
        %4085 = vst [vmem:[#allocation3 + $0x650] sm:$0xff] %v3829
        %4086 = vst [vmem:[#allocation3 + $0x658] sm:$0xff] %v3830
        %4087 = vst [vmem:[#allocation3 + $0x660] sm:$0xff] %v3831
        %4088 = vst [vmem:[#allocation3 + $0x668] sm:$0xff] %v3832
        %4089 = vst [vmem:[#allocation3 + $0x670] sm:$0xff] %v3833
        %4090 = vst [vmem:[#allocation3 + $0x678] sm:$0xff] %v3834
        %4091 = vst [vmem:[#allocation3 + $0x680] sm:$0xff] %v3835
        %4092 = vst [vmem:[#allocation3 + $0x688] sm:$0xff] %v3836
        %4093 = vst [vmem:[#allocation3 + $0x690] sm:$0xff] %v3837
        %4094 = vst [vmem:[#allocation3 + $0x698] sm:$0xff] %v3838
        %4095 = vst [vmem:[#allocation3 + $0x6a0] sm:$0xff] %v3839
        %4096 = vst [vmem:[#allocation3 + $0x6a8] sm:$0xff] %v3840
        %4097 = vst [vmem:[#allocation3 + $0x6b0] sm:$0xff] %v3841
        %4098 = vst [vmem:[#allocation3 + $0x6b8] sm:$0xff] %v3842
        %4099 = vst [vmem:[#allocation3 + $0x6c0] sm:$0xff] %v3843
        %4100 = vst [vmem:[#allocation3 + $0x6c8] sm:$0xff] %v3844
        %4101 = vst [vmem:[#allocation3 + $0x6d0] sm:$0xff] %v3845
        %4102 = vst [vmem:[#allocation3 + $0x6d8] sm:$0xff] %v3846
        %4103 = vst [vmem:[#allocation3 + $0x6e0] sm:$0xff] %v3847
        %4104 = vst [vmem:[#allocation3 + $0x6e8] sm:$0xff] %v3848
        %4105 = vst [vmem:[#allocation3 + $0x6f0] sm:$0xff] %v3849
        %4106 = vst [vmem:[#allocation3 + $0x6f8] sm:$0xff] %v3850
        %4107 = vst [vmem:[#allocation3 + $0x700] sm:$0xff] %v3851
        %4108 = vst [vmem:[#allocation3 + $0x708] sm:$0xff] %v3852
        %4109 = vst [vmem:[#allocation3 + $0x710] sm:$0xff] %v3853
        %4110 = vst [vmem:[#allocation3 + $0x718] sm:$0xff] %v3854
        %4111 = vst [vmem:[#allocation3 + $0x720] sm:$0xff] %v3855
        %4112 = vst [vmem:[#allocation3 + $0x728] sm:$0xff] %v3856
        %4113 = vst [vmem:[#allocation3 + $0x730] sm:$0xff] %v3857
        %4114 = vst [vmem:[#allocation3 + $0x738] sm:$0xff] %v3858
        %4115 = vst [vmem:[#allocation3 + $0x740] sm:$0xff] %v3859
        %4116 = vst [vmem:[#allocation3 + $0x748] sm:$0xff] %v3860
        %4117 = vst [vmem:[#allocation3 + $0x750] sm:$0xff] %v3861
        %4118 = vst [vmem:[#allocation3 + $0x758] sm:$0xff] %v3862
        %4119 = vst [vmem:[#allocation3 + $0x760] sm:$0xff] %v3863
        %4120 = vst [vmem:[#allocation3 + $0x768] sm:$0xff] %v3864
        %4121 = vst [vmem:[#allocation3 + $0x770] sm:$0xff] %v3865
        %4122 = vst [vmem:[#allocation3 + $0x778] sm:$0xff] %v3866
        %4123 = vst [vmem:[#allocation3 + $0x780] sm:$0xff] %v3867
        %4124 = vst [vmem:[#allocation3 + $0x788] sm:$0xff] %v3868
        %4125 = vst [vmem:[#allocation3 + $0x790] sm:$0xff] %v3869
        %4126 = vst [vmem:[#allocation3 + $0x798] sm:$0xff] %v3870
        %4127 = vst [vmem:[#allocation3 + $0x7a0] sm:$0xff] %v3871
        %4128 = vst [vmem:[#allocation3 + $0x7a8] sm:$0xff] %v3872
        %4129 = vst [vmem:[#allocation3 + $0x7b0] sm:$0xff] %v3873
        %4130 = vst [vmem:[#allocation3 + $0x7b8] sm:$0xff] %v3874
        %4131 = vst [vmem:[#allocation3 + $0x7c0] sm:$0xff] %v3875
        %4132 = vst [vmem:[#allocation3 + $0x7c8] sm:$0xff] %v3876
        %4133 = vst [vmem:[#allocation3 + $0x7d0] sm:$0xff] %v3877
        %4134 = vst [vmem:[#allocation3 + $0x7d8] sm:$0xff] %v3878
        %4135 = vst [vmem:[#allocation3 + $0x7e0] sm:$0xff] %v3879
        %4136 = vst [vmem:[#allocation3 + $0x7e8] sm:$0xff] %v3880
        %4137 = vst [vmem:[#allocation3 + $0x7f0] sm:$0xff] %v3881
        %4138 = vst [vmem:[#allocation3 + $0x7f8] sm:$0xff] %v3882
        // Predicated region
        $region37: #{masked_l1_loss.1} parent=31 // pred_check
          %p4139 = pneg %p295
        $region38: #{masked_l1_loss.1} parent=31 // pred_check_branch
          %4141 = sbr.rel (%p4139) target = $region40
        $region39: #{masked_l1_loss.1} parent=31 // pred_region
          %v4142 = vld [vmem:[#allocation2] sm:$0xff]
          %v4143 = vld [vmem:[#allocation2 + $0x8] sm:$0xff]
          %v4144 = vld [vmem:[#allocation2 + $0x10] sm:$0xff]
          %v4145 = vld [vmem:[#allocation2 + $0x18] sm:$0xff]
          %v4146 = vld [vmem:[#allocation2 + $0x20] sm:$0xff]
          %v4147 = vld [vmem:[#allocation2 + $0x28] sm:$0xff]
          %v4148 = vld [vmem:[#allocation2 + $0x30] sm:$0xff]
          %v4149 = vld [vmem:[#allocation2 + $0x38] sm:$0xff]
          %v4150 = vld [vmem:[#allocation2 + $0x40] sm:$0xff]
          %v4151 = vld [vmem:[#allocation2 + $0x48] sm:$0xff]
          %v4152 = vld [vmem:[#allocation2 + $0x50] sm:$0xff]
          %v4153 = vld [vmem:[#allocation2 + $0x58] sm:$0xff]
          %v4154 = vld [vmem:[#allocation2 + $0x60] sm:$0xff]
          %v4155 = vld [vmem:[#allocation2 + $0x68] sm:$0xff]
          %v4156 = vld [vmem:[#allocation2 + $0x70] sm:$0xff]
          %v4157 = vld [vmem:[#allocation2 + $0x78] sm:$0xff]
          %v4158 = vld [vmem:[#allocation2 + $0x80] sm:$0xff]
          %v4159 = vld [vmem:[#allocation2 + $0x88] sm:$0xff]
          %v4160 = vld [vmem:[#allocation2 + $0x90] sm:$0xff]
          %v4161 = vld [vmem:[#allocation2 + $0x98] sm:$0xff]
          %v4162 = vld [vmem:[#allocation2 + $0xa0] sm:$0xff]
          %v4163 = vld [vmem:[#allocation2 + $0xa8] sm:$0xff]
          %v4164 = vld [vmem:[#allocation2 + $0xb0] sm:$0xff]
          %v4165 = vld [vmem:[#allocation2 + $0xb8] sm:$0xff]
          %v4166 = vld [vmem:[#allocation2 + $0xc0] sm:$0xff]
          %v4167 = vld [vmem:[#allocation2 + $0xc8] sm:$0xff]
          %v4168 = vld [vmem:[#allocation2 + $0xd0] sm:$0xff]
          %v4169 = vld [vmem:[#allocation2 + $0xd8] sm:$0xff]
          %v4170 = vld [vmem:[#allocation2 + $0xe0] sm:$0xff]
          %v4171 = vld [vmem:[#allocation2 + $0xe8] sm:$0xff]
          %v4172 = vld [vmem:[#allocation2 + $0xf0] sm:$0xff]
          %v4173 = vld [vmem:[#allocation2 + $0xf8] sm:$0xff]
          %v4174 = vld [vmem:[#allocation2 + $0x100] sm:$0xff]
          %v4175 = vld [vmem:[#allocation2 + $0x108] sm:$0xff]
          %v4176 = vld [vmem:[#allocation2 + $0x110] sm:$0xff]
          %v4177 = vld [vmem:[#allocation2 + $0x118] sm:$0xff]
          %v4178 = vld [vmem:[#allocation2 + $0x120] sm:$0xff]
          %v4179 = vld [vmem:[#allocation2 + $0x128] sm:$0xff]
          %v4180 = vld [vmem:[#allocation2 + $0x130] sm:$0xff]
          %v4181 = vld [vmem:[#allocation2 + $0x138] sm:$0xff]
          %v4182 = vld [vmem:[#allocation2 + $0x140] sm:$0xff]
          %v4183 = vld [vmem:[#allocation2 + $0x148] sm:$0xff]
          %v4184 = vld [vmem:[#allocation2 + $0x150] sm:$0xff]
          %v4185 = vld [vmem:[#allocation2 + $0x158] sm:$0xff]
          %v4186 = vld [vmem:[#allocation2 + $0x160] sm:$0xff]
          %v4187 = vld [vmem:[#allocation2 + $0x168] sm:$0xff]
          %v4188 = vld [vmem:[#allocation2 + $0x170] sm:$0xff]
          %v4189 = vld [vmem:[#allocation2 + $0x178] sm:$0xff]
          %v4190 = vld [vmem:[#allocation2 + $0x180] sm:$0xff]
          %v4191 = vld [vmem:[#allocation2 + $0x188] sm:$0xff]
          %v4192 = vld [vmem:[#allocation2 + $0x190] sm:$0xff]
          %v4193 = vld [vmem:[#allocation2 + $0x198] sm:$0xff]
          %v4194 = vld [vmem:[#allocation2 + $0x1a0] sm:$0xff]
          %v4195 = vld [vmem:[#allocation2 + $0x1a8] sm:$0xff]
          %v4196 = vld [vmem:[#allocation2 + $0x1b0] sm:$0xff]
          %v4197 = vld [vmem:[#allocation2 + $0x1b8] sm:$0xff]
          %v4198 = vld [vmem:[#allocation2 + $0x1c0] sm:$0xff]
          %v4199 = vld [vmem:[#allocation2 + $0x1c8] sm:$0xff]
          %v4200 = vld [vmem:[#allocation2 + $0x1d0] sm:$0xff]
          %v4201 = vld [vmem:[#allocation2 + $0x1d8] sm:$0xff]
          %v4202 = vld [vmem:[#allocation2 + $0x1e0] sm:$0xff]
          %v4203 = vld [vmem:[#allocation2 + $0x1e8] sm:$0xff]
          %v4204 = vld [vmem:[#allocation2 + $0x1f0] sm:$0xff]
          %v4205 = vld [vmem:[#allocation2 + $0x1f8] sm:$0xff]
          %v4206 = vld [vmem:[#allocation2 + $0x200] sm:$0xff]
          %v4207 = vld [vmem:[#allocation2 + $0x208] sm:$0xff]
          %v4208 = vld [vmem:[#allocation2 + $0x210] sm:$0xff]
          %v4209 = vld [vmem:[#allocation2 + $0x218] sm:$0xff]
          %v4210 = vld [vmem:[#allocation2 + $0x220] sm:$0xff]
          %v4211 = vld [vmem:[#allocation2 + $0x228] sm:$0xff]
          %v4212 = vld [vmem:[#allocation2 + $0x230] sm:$0xff]
          %v4213 = vld [vmem:[#allocation2 + $0x238] sm:$0xff]
          %v4214 = vld [vmem:[#allocation2 + $0x240] sm:$0xff]
          %v4215 = vld [vmem:[#allocation2 + $0x248] sm:$0xff]
          %v4216 = vld [vmem:[#allocation2 + $0x250] sm:$0xff]
          %v4217 = vld [vmem:[#allocation2 + $0x258] sm:$0xff]
          %v4218 = vld [vmem:[#allocation2 + $0x260] sm:$0xff]
          %v4219 = vld [vmem:[#allocation2 + $0x268] sm:$0xff]
          %v4220 = vld [vmem:[#allocation2 + $0x270] sm:$0xff]
          %v4221 = vld [vmem:[#allocation2 + $0x278] sm:$0xff]
          %v4222 = vld [vmem:[#allocation2 + $0x280] sm:$0xff]
          %v4223 = vld [vmem:[#allocation2 + $0x288] sm:$0xff]
          %v4224 = vld [vmem:[#allocation2 + $0x290] sm:$0xff]
          %v4225 = vld [vmem:[#allocation2 + $0x298] sm:$0xff]
          %v4226 = vld [vmem:[#allocation2 + $0x2a0] sm:$0xff]
          %v4227 = vld [vmem:[#allocation2 + $0x2a8] sm:$0xff]
          %v4228 = vld [vmem:[#allocation2 + $0x2b0] sm:$0xff]
          %v4229 = vld [vmem:[#allocation2 + $0x2b8] sm:$0xff]
          %v4230 = vld [vmem:[#allocation2 + $0x2c0] sm:$0xff]
          %v4231 = vld [vmem:[#allocation2 + $0x2c8] sm:$0xff]
          %v4232 = vld [vmem:[#allocation2 + $0x2d0] sm:$0xff]
          %v4233 = vld [vmem:[#allocation2 + $0x2d8] sm:$0xff]
          %v4234 = vld [vmem:[#allocation2 + $0x2e0] sm:$0xff]
          %v4235 = vld [vmem:[#allocation2 + $0x2e8] sm:$0xff]
          %v4236 = vld [vmem:[#allocation2 + $0x2f0] sm:$0xff]
          %v4237 = vld [vmem:[#allocation2 + $0x2f8] sm:$0xff]
          %v4238 = vld [vmem:[#allocation2 + $0x300] sm:$0xff]
          %v4239 = vld [vmem:[#allocation2 + $0x308] sm:$0xff]
          %v4240 = vld [vmem:[#allocation2 + $0x310] sm:$0xff]
          %v4241 = vld [vmem:[#allocation2 + $0x318] sm:$0xff]
          %v4242 = vld [vmem:[#allocation2 + $0x320] sm:$0xff]
          %v4243 = vld [vmem:[#allocation2 + $0x328] sm:$0xff]
          %v4244 = vld [vmem:[#allocation2 + $0x330] sm:$0xff]
          %v4245 = vld [vmem:[#allocation2 + $0x338] sm:$0xff]
          %v4246 = vld [vmem:[#allocation2 + $0x340] sm:$0xff]
          %v4247 = vld [vmem:[#allocation2 + $0x348] sm:$0xff]
          %v4248 = vld [vmem:[#allocation2 + $0x350] sm:$0xff]
          %v4249 = vld [vmem:[#allocation2 + $0x358] sm:$0xff]
          %v4250 = vld [vmem:[#allocation2 + $0x360] sm:$0xff]
          %v4251 = vld [vmem:[#allocation2 + $0x368] sm:$0xff]
          %v4252 = vld [vmem:[#allocation2 + $0x370] sm:$0xff]
          %v4253 = vld [vmem:[#allocation2 + $0x378] sm:$0xff]
          %v4254 = vld [vmem:[#allocation2 + $0x380] sm:$0xff]
          %v4255 = vld [vmem:[#allocation2 + $0x388] sm:$0xff]
          %v4256 = vld [vmem:[#allocation2 + $0x390] sm:$0xff]
          %v4257 = vld [vmem:[#allocation2 + $0x398] sm:$0xff]
          %v4258 = vld [vmem:[#allocation2 + $0x3a0] sm:$0xff]
          %v4259 = vld [vmem:[#allocation2 + $0x3a8] sm:$0xff]
          %v4260 = vld [vmem:[#allocation2 + $0x3b0] sm:$0xff]
          %v4261 = vld [vmem:[#allocation2 + $0x3b8] sm:$0xff]
          %v4262 = vld [vmem:[#allocation2 + $0x3c0] sm:$0xff]
          %v4263 = vld [vmem:[#allocation2 + $0x3c8] sm:$0xff]
          %v4264 = vld [vmem:[#allocation2 + $0x3d0] sm:$0xff]
          %v4265 = vld [vmem:[#allocation2 + $0x3d8] sm:$0xff]
          %v4266 = vld [vmem:[#allocation2 + $0x3e0] sm:$0xff]
          %v4267 = vld [vmem:[#allocation2 + $0x3e8] sm:$0xff]
          %v4268 = vld [vmem:[#allocation2 + $0x3f0] sm:$0xff]
          %v4269 = vld [vmem:[#allocation2 + $0x3f8] sm:$0xff]
          %v4270 = vld [vmem:[#allocation2 + $0x400] sm:$0xff]
          %v4271 = vld [vmem:[#allocation2 + $0x408] sm:$0xff]
          %v4272 = vld [vmem:[#allocation2 + $0x410] sm:$0xff]
          %v4273 = vld [vmem:[#allocation2 + $0x418] sm:$0xff]
          %v4274 = vld [vmem:[#allocation2 + $0x420] sm:$0xff]
          %v4275 = vld [vmem:[#allocation2 + $0x428] sm:$0xff]
          %v4276 = vld [vmem:[#allocation2 + $0x430] sm:$0xff]
          %v4277 = vld [vmem:[#allocation2 + $0x438] sm:$0xff]
          %v4278 = vld [vmem:[#allocation2 + $0x440] sm:$0xff]
          %v4279 = vld [vmem:[#allocation2 + $0x448] sm:$0xff]
          %v4280 = vld [vmem:[#allocation2 + $0x450] sm:$0xff]
          %v4281 = vld [vmem:[#allocation2 + $0x458] sm:$0xff]
          %v4282 = vld [vmem:[#allocation2 + $0x460] sm:$0xff]
          %v4283 = vld [vmem:[#allocation2 + $0x468] sm:$0xff]
          %v4284 = vld [vmem:[#allocation2 + $0x470] sm:$0xff]
          %v4285 = vld [vmem:[#allocation2 + $0x478] sm:$0xff]
          %v4286 = vld [vmem:[#allocation2 + $0x480] sm:$0xff]
          %v4287 = vld [vmem:[#allocation2 + $0x488] sm:$0xff]
          %v4288 = vld [vmem:[#allocation2 + $0x490] sm:$0xff]
          %v4289 = vld [vmem:[#allocation2 + $0x498] sm:$0xff]
          %v4290 = vld [vmem:[#allocation2 + $0x4a0] sm:$0xff]
          %v4291 = vld [vmem:[#allocation2 + $0x4a8] sm:$0xff]
          %v4292 = vld [vmem:[#allocation2 + $0x4b0] sm:$0xff]
          %v4293 = vld [vmem:[#allocation2 + $0x4b8] sm:$0xff]
          %v4294 = vld [vmem:[#allocation2 + $0x4c0] sm:$0xff]
          %v4295 = vld [vmem:[#allocation2 + $0x4c8] sm:$0xff]
          %v4296 = vld [vmem:[#allocation2 + $0x4d0] sm:$0xff]
          %v4297 = vld [vmem:[#allocation2 + $0x4d8] sm:$0xff]
          %v4298 = vld [vmem:[#allocation2 + $0x4e0] sm:$0xff]
          %v4299 = vld [vmem:[#allocation2 + $0x4e8] sm:$0xff]
          %v4300 = vld [vmem:[#allocation2 + $0x4f0] sm:$0xff]
          %v4301 = vld [vmem:[#allocation2 + $0x4f8] sm:$0xff]
          %v4302 = vld [vmem:[#allocation2 + $0x500] sm:$0xff]
          %v4303 = vld [vmem:[#allocation2 + $0x508] sm:$0xff]
          %v4304 = vld [vmem:[#allocation2 + $0x510] sm:$0xff]
          %v4305 = vld [vmem:[#allocation2 + $0x518] sm:$0xff]
          %v4306 = vld [vmem:[#allocation2 + $0x520] sm:$0xff]
          %v4307 = vld [vmem:[#allocation2 + $0x528] sm:$0xff]
          %v4308 = vld [vmem:[#allocation2 + $0x530] sm:$0xff]
          %v4309 = vld [vmem:[#allocation2 + $0x538] sm:$0xff]
          %v4310 = vld [vmem:[#allocation2 + $0x540] sm:$0xff]
          %v4311 = vld [vmem:[#allocation2 + $0x548] sm:$0xff]
          %v4312 = vld [vmem:[#allocation2 + $0x550] sm:$0xff]
          %v4313 = vld [vmem:[#allocation2 + $0x558] sm:$0xff]
          %v4314 = vld [vmem:[#allocation2 + $0x560] sm:$0xff]
          %v4315 = vld [vmem:[#allocation2 + $0x568] sm:$0xff]
          %v4316 = vld [vmem:[#allocation2 + $0x570] sm:$0xff]
          %v4317 = vld [vmem:[#allocation2 + $0x578] sm:$0xff]
          %v4318 = vld [vmem:[#allocation2 + $0x580] sm:$0xff]
          %v4319 = vld [vmem:[#allocation2 + $0x588] sm:$0xff]
          %v4320 = vld [vmem:[#allocation2 + $0x590] sm:$0xff]
          %v4321 = vld [vmem:[#allocation2 + $0x598] sm:$0xff]
          %v4322 = vld [vmem:[#allocation2 + $0x5a0] sm:$0xff]
          %v4323 = vld [vmem:[#allocation2 + $0x5a8] sm:$0xff]
          %v4324 = vld [vmem:[#allocation2 + $0x5b0] sm:$0xff]
          %v4325 = vld [vmem:[#allocation2 + $0x5b8] sm:$0xff]
          %v4326 = vld [vmem:[#allocation2 + $0x5c0] sm:$0xff]
          %v4327 = vld [vmem:[#allocation2 + $0x5c8] sm:$0xff]
          %v4328 = vld [vmem:[#allocation2 + $0x5d0] sm:$0xff]
          %v4329 = vld [vmem:[#allocation2 + $0x5d8] sm:$0xff]
          %v4330 = vld [vmem:[#allocation2 + $0x5e0] sm:$0xff]
          %v4331 = vld [vmem:[#allocation2 + $0x5e8] sm:$0xff]
          %v4332 = vld [vmem:[#allocation2 + $0x5f0] sm:$0xff]
          %v4333 = vld [vmem:[#allocation2 + $0x5f8] sm:$0xff]
          %v4334 = vld [vmem:[#allocation2 + $0x600] sm:$0xff]
          %v4335 = vld [vmem:[#allocation2 + $0x608] sm:$0xff]
          %v4336 = vld [vmem:[#allocation2 + $0x610] sm:$0xff]
          %v4337 = vld [vmem:[#allocation2 + $0x618] sm:$0xff]
          %v4338 = vld [vmem:[#allocation2 + $0x620] sm:$0xff]
          %v4339 = vld [vmem:[#allocation2 + $0x628] sm:$0xff]
          %v4340 = vld [vmem:[#allocation2 + $0x630] sm:$0xff]
          %v4341 = vld [vmem:[#allocation2 + $0x638] sm:$0xff]
          %v4342 = vld [vmem:[#allocation2 + $0x640] sm:$0xff]
          %v4343 = vld [vmem:[#allocation2 + $0x648] sm:$0xff]
          %v4344 = vld [vmem:[#allocation2 + $0x650] sm:$0xff]
          %v4345 = vld [vmem:[#allocation2 + $0x658] sm:$0xff]
          %v4346 = vld [vmem:[#allocation2 + $0x660] sm:$0xff]
          %v4347 = vld [vmem:[#allocation2 + $0x668] sm:$0xff]
          %v4348 = vld [vmem:[#allocation2 + $0x670] sm:$0xff]
          %v4349 = vld [vmem:[#allocation2 + $0x678] sm:$0xff]
          %v4350 = vld [vmem:[#allocation2 + $0x680] sm:$0xff]
          %v4351 = vld [vmem:[#allocation2 + $0x688] sm:$0xff]
          %v4352 = vld [vmem:[#allocation2 + $0x690] sm:$0xff]
          %v4353 = vld [vmem:[#allocation2 + $0x698] sm:$0xff]
          %v4354 = vld [vmem:[#allocation2 + $0x6a0] sm:$0xff]
          %v4355 = vld [vmem:[#allocation2 + $0x6a8] sm:$0xff]
          %v4356 = vld [vmem:[#allocation2 + $0x6b0] sm:$0xff]
          %v4357 = vld [vmem:[#allocation2 + $0x6b8] sm:$0xff]
          %v4358 = vld [vmem:[#allocation2 + $0x6c0] sm:$0xff]
          %v4359 = vld [vmem:[#allocation2 + $0x6c8] sm:$0xff]
          %v4360 = vld [vmem:[#allocation2 + $0x6d0] sm:$0xff]
          %v4361 = vld [vmem:[#allocation2 + $0x6d8] sm:$0xff]
          %v4362 = vld [vmem:[#allocation2 + $0x6e0] sm:$0xff]
          %v4363 = vld [vmem:[#allocation2 + $0x6e8] sm:$0xff]
          %v4364 = vld [vmem:[#allocation2 + $0x6f0] sm:$0xff]
          %v4365 = vld [vmem:[#allocation2 + $0x6f8] sm:$0xff]
          %v4366 = vld [vmem:[#allocation2 + $0x700] sm:$0xff]
          %v4367 = vld [vmem:[#allocation2 + $0x708] sm:$0xff]
          %v4368 = vld [vmem:[#allocation2 + $0x710] sm:$0xff]
          %v4369 = vld [vmem:[#allocation2 + $0x718] sm:$0xff]
          %v4370 = vld [vmem:[#allocation2 + $0x720] sm:$0xff]
          %v4371 = vld [vmem:[#allocation2 + $0x728] sm:$0xff]
          %v4372 = vld [vmem:[#allocation2 + $0x730] sm:$0xff]
          %v4373 = vld [vmem:[#allocation2 + $0x738] sm:$0xff]
          %v4374 = vld [vmem:[#allocation2 + $0x740] sm:$0xff]
          %v4375 = vld [vmem:[#allocation2 + $0x748] sm:$0xff]
          %v4376 = vld [vmem:[#allocation2 + $0x750] sm:$0xff]
          %v4377 = vld [vmem:[#allocation2 + $0x758] sm:$0xff]
          %v4378 = vld [vmem:[#allocation2 + $0x760] sm:$0xff]
          %v4379 = vld [vmem:[#allocation2 + $0x768] sm:$0xff]
          %v4380 = vld [vmem:[#allocation2 + $0x770] sm:$0xff]
          %v4381 = vld [vmem:[#allocation2 + $0x778] sm:$0xff]
          %v4382 = vld [vmem:[#allocation2 + $0x780] sm:$0xff]
          %v4383 = vld [vmem:[#allocation2 + $0x788] sm:$0xff]
          %v4384 = vld [vmem:[#allocation2 + $0x790] sm:$0xff]
          %v4385 = vld [vmem:[#allocation2 + $0x798] sm:$0xff]
          %v4386 = vld [vmem:[#allocation2 + $0x7a0] sm:$0xff]
          %v4387 = vld [vmem:[#allocation2 + $0x7a8] sm:$0xff]
          %v4388 = vld [vmem:[#allocation2 + $0x7b0] sm:$0xff]
          %v4389 = vld [vmem:[#allocation2 + $0x7b8] sm:$0xff]
          %v4390 = vld [vmem:[#allocation2 + $0x7c0] sm:$0xff]
          %v4391 = vld [vmem:[#allocation2 + $0x7c8] sm:$0xff]
          %v4392 = vld [vmem:[#allocation2 + $0x7d0] sm:$0xff]
          %v4393 = vld [vmem:[#allocation2 + $0x7d8] sm:$0xff]
          %v4394 = vld [vmem:[#allocation2 + $0x7e0] sm:$0xff]
          %v4395 = vld [vmem:[#allocation2 + $0x7e8] sm:$0xff]
          %v4396 = vld [vmem:[#allocation2 + $0x7f0] sm:$0xff]
          %v4397 = vld [vmem:[#allocation2 + $0x7f8] sm:$0xff]
          %v4398 = vadd.f32 %v4142, %v4143
          %v4399 = vadd.f32 %v4398, %v4144
          %v4400 = vadd.f32 %v4399, %v4145
          %4401 = vadd.xlane.f32.xlu0 %v4400
          %v4402 = vpop.xlane.xlu0 %4401
          %v4403 = vadd.f32 %v4146, %v4147
          %v4404 = vadd.f32 %v4403, %v4148
          %v4405 = vadd.f32 %v4404, %v4149
          %4406 = vadd.xlane.f32.xlu0 %v4405
          %v4407 = vpop.xlane.xlu0 %4406
          %v4408 = vadd.f32 %v4150, %v4151
          %v4409 = vadd.f32 %v4408, %v4152
          %v4410 = vadd.f32 %v4409, %v4153
          %4411 = vadd.xlane.f32.xlu0 %v4410
          %v4412 = vpop.xlane.xlu0 %4411
          %v4413 = vadd.f32 %v4154, %v4155
          %v4414 = vadd.f32 %v4413, %v4156
          %v4415 = vadd.f32 %v4414, %v4157
          %4416 = vadd.xlane.f32.xlu0 %v4415
          %v4417 = vpop.xlane.xlu0 %4416
          %v4418 = vadd.f32 %v4158, %v4159
          %v4419 = vadd.f32 %v4418, %v4160
          %v4420 = vadd.f32 %v4419, %v4161
          %4421 = vadd.xlane.f32.xlu0 %v4420
          %v4422 = vpop.xlane.xlu0 %4421
          %v4423 = vadd.f32 %v4162, %v4163
          %v4424 = vadd.f32 %v4423, %v4164
          %v4425 = vadd.f32 %v4424, %v4165
          %4426 = vadd.xlane.f32.xlu0 %v4425
          %v4427 = vpop.xlane.xlu0 %4426
          %v4428 = vadd.f32 %v4166, %v4167
          %v4429 = vadd.f32 %v4428, %v4168
          %v4430 = vadd.f32 %v4429, %v4169
          %4431 = vadd.xlane.f32.xlu0 %v4430
          %v4432 = vpop.xlane.xlu0 %4431
          %v4433 = vadd.f32 %v4170, %v4171
          %v4434 = vadd.f32 %v4433, %v4172
          %v4435 = vadd.f32 %v4434, %v4173
          %4436 = vadd.xlane.f32.xlu0 %v4435
          %v4437 = vpop.xlane.xlu0 %4436
          %v4438 = vadd.f32 %v4174, %v4175
          %v4439 = vadd.f32 %v4438, %v4176
          %v4440 = vadd.f32 %v4439, %v4177
          %4441 = vadd.xlane.f32.xlu0 %v4440
          %v4442 = vpop.xlane.xlu0 %4441
          %v4443 = vadd.f32 %v4178, %v4179
          %v4444 = vadd.f32 %v4443, %v4180
          %v4445 = vadd.f32 %v4444, %v4181
          %4446 = vadd.xlane.f32.xlu0 %v4445
          %v4447 = vpop.xlane.xlu0 %4446
          %v4448 = vadd.f32 %v4182, %v4183
          %v4449 = vadd.f32 %v4448, %v4184
          %v4450 = vadd.f32 %v4449, %v4185
          %4451 = vadd.xlane.f32.xlu0 %v4450
          %v4452 = vpop.xlane.xlu0 %4451
          %v4453 = vadd.f32 %v4186, %v4187
          %v4454 = vadd.f32 %v4453, %v4188
          %v4455 = vadd.f32 %v4454, %v4189
          %4456 = vadd.xlane.f32.xlu0 %v4455
          %v4457 = vpop.xlane.xlu0 %4456
          %v4458 = vadd.f32 %v4190, %v4191
          %v4459 = vadd.f32 %v4458, %v4192
          %v4460 = vadd.f32 %v4459, %v4193
          %4461 = vadd.xlane.f32.xlu0 %v4460
          %v4462 = vpop.xlane.xlu0 %4461
          %v4463 = vadd.f32 %v4194, %v4195
          %v4464 = vadd.f32 %v4463, %v4196
          %v4465 = vadd.f32 %v4464, %v4197
          %4466 = vadd.xlane.f32.xlu0 %v4465
          %v4467 = vpop.xlane.xlu0 %4466
          %v4468 = vadd.f32 %v4198, %v4199
          %v4469 = vadd.f32 %v4468, %v4200
          %v4470 = vadd.f32 %v4469, %v4201
          %4471 = vadd.xlane.f32.xlu0 %v4470
          %v4472 = vpop.xlane.xlu0 %4471
          %v4473 = vadd.f32 %v4202, %v4203
          %v4474 = vadd.f32 %v4473, %v4204
          %v4475 = vadd.f32 %v4474, %v4205
          %4476 = vadd.xlane.f32.xlu0 %v4475
          %v4477 = vpop.xlane.xlu0 %4476
          %v4478 = vadd.f32 %v4206, %v4207
          %v4479 = vadd.f32 %v4478, %v4208
          %v4480 = vadd.f32 %v4479, %v4209
          %4481 = vadd.xlane.f32.xlu0 %v4480
          %v4482 = vpop.xlane.xlu0 %4481
          %v4483 = vadd.f32 %v4210, %v4211
          %v4484 = vadd.f32 %v4483, %v4212
          %v4485 = vadd.f32 %v4484, %v4213
          %4486 = vadd.xlane.f32.xlu0 %v4485
          %v4487 = vpop.xlane.xlu0 %4486
          %v4488 = vadd.f32 %v4214, %v4215
          %v4489 = vadd.f32 %v4488, %v4216
          %v4490 = vadd.f32 %v4489, %v4217
          %4491 = vadd.xlane.f32.xlu0 %v4490
          %v4492 = vpop.xlane.xlu0 %4491
          %v4493 = vadd.f32 %v4218, %v4219
          %v4494 = vadd.f32 %v4493, %v4220
          %v4495 = vadd.f32 %v4494, %v4221
          %4496 = vadd.xlane.f32.xlu0 %v4495
          %v4497 = vpop.xlane.xlu0 %4496
          %v4498 = vadd.f32 %v4222, %v4223
          %v4499 = vadd.f32 %v4498, %v4224
          %v4500 = vadd.f32 %v4499, %v4225
          %4501 = vadd.xlane.f32.xlu0 %v4500
          %v4502 = vpop.xlane.xlu0 %4501
          %v4503 = vadd.f32 %v4226, %v4227
          %v4504 = vadd.f32 %v4503, %v4228
          %v4505 = vadd.f32 %v4504, %v4229
          %4506 = vadd.xlane.f32.xlu0 %v4505
          %v4507 = vpop.xlane.xlu0 %4506
          %v4508 = vadd.f32 %v4230, %v4231
          %v4509 = vadd.f32 %v4508, %v4232
          %v4510 = vadd.f32 %v4509, %v4233
          %4511 = vadd.xlane.f32.xlu0 %v4510
          %v4512 = vpop.xlane.xlu0 %4511
          %v4513 = vadd.f32 %v4234, %v4235
          %v4514 = vadd.f32 %v4513, %v4236
          %v4515 = vadd.f32 %v4514, %v4237
          %4516 = vadd.xlane.f32.xlu0 %v4515
          %v4517 = vpop.xlane.xlu0 %4516
          %v4518 = vadd.f32 %v4238, %v4239
          %v4519 = vadd.f32 %v4518, %v4240
          %v4520 = vadd.f32 %v4519, %v4241
          %4521 = vadd.xlane.f32.xlu0 %v4520
          %v4522 = vpop.xlane.xlu0 %4521
          %v4523 = vadd.f32 %v4242, %v4243
          %v4524 = vadd.f32 %v4523, %v4244
          %v4525 = vadd.f32 %v4524, %v4245
          %4526 = vadd.xlane.f32.xlu0 %v4525
          %v4527 = vpop.xlane.xlu0 %4526
          %v4528 = vadd.f32 %v4246, %v4247
          %v4529 = vadd.f32 %v4528, %v4248
          %v4530 = vadd.f32 %v4529, %v4249
          %4531 = vadd.xlane.f32.xlu0 %v4530
          %v4532 = vpop.xlane.xlu0 %4531
          %v4533 = vadd.f32 %v4250, %v4251
          %v4534 = vadd.f32 %v4533, %v4252
          %v4535 = vadd.f32 %v4534, %v4253
          %4536 = vadd.xlane.f32.xlu0 %v4535
          %v4537 = vpop.xlane.xlu0 %4536
          %v4538 = vadd.f32 %v4254, %v4255
          %v4539 = vadd.f32 %v4538, %v4256
          %v4540 = vadd.f32 %v4539, %v4257
          %4541 = vadd.xlane.f32.xlu0 %v4540
          %v4542 = vpop.xlane.xlu0 %4541
          %v4543 = vadd.f32 %v4258, %v4259
          %v4544 = vadd.f32 %v4543, %v4260
          %v4545 = vadd.f32 %v4544, %v4261
          %4546 = vadd.xlane.f32.xlu0 %v4545
          %v4547 = vpop.xlane.xlu0 %4546
          %v4548 = vadd.f32 %v4262, %v4263
          %v4549 = vadd.f32 %v4548, %v4264
          %v4550 = vadd.f32 %v4549, %v4265
          %4551 = vadd.xlane.f32.xlu0 %v4550
          %v4552 = vpop.xlane.xlu0 %4551
          %v4553 = vadd.f32 %v4266, %v4267
          %v4554 = vadd.f32 %v4553, %v4268
          %v4555 = vadd.f32 %v4554, %v4269
          %4556 = vadd.xlane.f32.xlu0 %v4555
          %v4557 = vpop.xlane.xlu0 %4556
          %v4558 = vadd.f32 %v4270, %v4271
          %v4559 = vadd.f32 %v4558, %v4272
          %v4560 = vadd.f32 %v4559, %v4273
          %4561 = vadd.xlane.f32.xlu0 %v4560
          %v4562 = vpop.xlane.xlu0 %4561
          %v4563 = vadd.f32 %v4274, %v4275
          %v4564 = vadd.f32 %v4563, %v4276
          %v4565 = vadd.f32 %v4564, %v4277
          %4566 = vadd.xlane.f32.xlu0 %v4565
          %v4567 = vpop.xlane.xlu0 %4566
          %v4568 = vadd.f32 %v4278, %v4279
          %v4569 = vadd.f32 %v4568, %v4280
          %v4570 = vadd.f32 %v4569, %v4281
          %4571 = vadd.xlane.f32.xlu0 %v4570
          %v4572 = vpop.xlane.xlu0 %4571
          %v4573 = vadd.f32 %v4282, %v4283
          %v4574 = vadd.f32 %v4573, %v4284
          %v4575 = vadd.f32 %v4574, %v4285
          %4576 = vadd.xlane.f32.xlu0 %v4575
          %v4577 = vpop.xlane.xlu0 %4576
          %v4578 = vadd.f32 %v4286, %v4287
          %v4579 = vadd.f32 %v4578, %v4288
          %v4580 = vadd.f32 %v4579, %v4289
          %4581 = vadd.xlane.f32.xlu0 %v4580
          %v4582 = vpop.xlane.xlu0 %4581
          %v4583 = vadd.f32 %v4290, %v4291
          %v4584 = vadd.f32 %v4583, %v4292
          %v4585 = vadd.f32 %v4584, %v4293
          %4586 = vadd.xlane.f32.xlu0 %v4585
          %v4587 = vpop.xlane.xlu0 %4586
          %v4588 = vadd.f32 %v4294, %v4295
          %v4589 = vadd.f32 %v4588, %v4296
          %v4590 = vadd.f32 %v4589, %v4297
          %4591 = vadd.xlane.f32.xlu0 %v4590
          %v4592 = vpop.xlane.xlu0 %4591
          %v4593 = vadd.f32 %v4298, %v4299
          %v4594 = vadd.f32 %v4593, %v4300
          %v4595 = vadd.f32 %v4594, %v4301
          %4596 = vadd.xlane.f32.xlu0 %v4595
          %v4597 = vpop.xlane.xlu0 %4596
          %v4598 = vadd.f32 %v4302, %v4303
          %v4599 = vadd.f32 %v4598, %v4304
          %v4600 = vadd.f32 %v4599, %v4305
          %4601 = vadd.xlane.f32.xlu0 %v4600
          %v4602 = vpop.xlane.xlu0 %4601
          %v4603 = vadd.f32 %v4306, %v4307
          %v4604 = vadd.f32 %v4603, %v4308
          %v4605 = vadd.f32 %v4604, %v4309
          %4606 = vadd.xlane.f32.xlu0 %v4605
          %v4607 = vpop.xlane.xlu0 %4606
          %v4608 = vadd.f32 %v4310, %v4311
          %v4609 = vadd.f32 %v4608, %v4312
          %v4610 = vadd.f32 %v4609, %v4313
          %4611 = vadd.xlane.f32.xlu0 %v4610
          %v4612 = vpop.xlane.xlu0 %4611
          %v4613 = vadd.f32 %v4314, %v4315
          %v4614 = vadd.f32 %v4613, %v4316
          %v4615 = vadd.f32 %v4614, %v4317
          %4616 = vadd.xlane.f32.xlu0 %v4615
          %v4617 = vpop.xlane.xlu0 %4616
          %v4618 = vadd.f32 %v4318, %v4319
          %v4619 = vadd.f32 %v4618, %v4320
          %v4620 = vadd.f32 %v4619, %v4321
          %4621 = vadd.xlane.f32.xlu0 %v4620
          %v4622 = vpop.xlane.xlu0 %4621
          %v4623 = vadd.f32 %v4322, %v4323
          %v4624 = vadd.f32 %v4623, %v4324
          %v4625 = vadd.f32 %v4624, %v4325
          %4626 = vadd.xlane.f32.xlu0 %v4625
          %v4627 = vpop.xlane.xlu0 %4626
          %v4628 = vadd.f32 %v4326, %v4327
          %v4629 = vadd.f32 %v4628, %v4328
          %v4630 = vadd.f32 %v4629, %v4329
          %4631 = vadd.xlane.f32.xlu0 %v4630
          %v4632 = vpop.xlane.xlu0 %4631
          %v4633 = vadd.f32 %v4330, %v4331
          %v4634 = vadd.f32 %v4633, %v4332
          %v4635 = vadd.f32 %v4634, %v4333
          %4636 = vadd.xlane.f32.xlu0 %v4635
          %v4637 = vpop.xlane.xlu0 %4636
          %v4638 = vadd.f32 %v4334, %v4335
          %v4639 = vadd.f32 %v4638, %v4336
          %v4640 = vadd.f32 %v4639, %v4337
          %4641 = vadd.xlane.f32.xlu0 %v4640
          %v4642 = vpop.xlane.xlu0 %4641
          %v4643 = vadd.f32 %v4338, %v4339
          %v4644 = vadd.f32 %v4643, %v4340
          %v4645 = vadd.f32 %v4644, %v4341
          %4646 = vadd.xlane.f32.xlu0 %v4645
          %v4647 = vpop.xlane.xlu0 %4646
          %v4648 = vadd.f32 %v4342, %v4343
          %v4649 = vadd.f32 %v4648, %v4344
          %v4650 = vadd.f32 %v4649, %v4345
          %4651 = vadd.xlane.f32.xlu0 %v4650
          %v4652 = vpop.xlane.xlu0 %4651
          %v4653 = vadd.f32 %v4346, %v4347
          %v4654 = vadd.f32 %v4653, %v4348
          %v4655 = vadd.f32 %v4654, %v4349
          %4656 = vadd.xlane.f32.xlu0 %v4655
          %v4657 = vpop.xlane.xlu0 %4656
          %v4658 = vadd.f32 %v4350, %v4351
          %v4659 = vadd.f32 %v4658, %v4352
          %v4660 = vadd.f32 %v4659, %v4353
          %4661 = vadd.xlane.f32.xlu0 %v4660
          %v4662 = vpop.xlane.xlu0 %4661
          %v4663 = vadd.f32 %v4354, %v4355
          %v4664 = vadd.f32 %v4663, %v4356
          %v4665 = vadd.f32 %v4664, %v4357
          %4666 = vadd.xlane.f32.xlu0 %v4665
          %v4667 = vpop.xlane.xlu0 %4666
          %v4668 = vadd.f32 %v4358, %v4359
          %v4669 = vadd.f32 %v4668, %v4360
          %v4670 = vadd.f32 %v4669, %v4361
          %4671 = vadd.xlane.f32.xlu0 %v4670
          %v4672 = vpop.xlane.xlu0 %4671
          %v4673 = vadd.f32 %v4362, %v4363
          %v4674 = vadd.f32 %v4673, %v4364
          %v4675 = vadd.f32 %v4674, %v4365
          %4676 = vadd.xlane.f32.xlu0 %v4675
          %v4677 = vpop.xlane.xlu0 %4676
          %v4678 = vadd.f32 %v4366, %v4367
          %v4679 = vadd.f32 %v4678, %v4368
          %v4680 = vadd.f32 %v4679, %v4369
          %4681 = vadd.xlane.f32.xlu0 %v4680
          %v4682 = vpop.xlane.xlu0 %4681
          %v4683 = vadd.f32 %v4370, %v4371
          %v4684 = vadd.f32 %v4683, %v4372
          %v4685 = vadd.f32 %v4684, %v4373
          %4686 = vadd.xlane.f32.xlu0 %v4685
          %v4687 = vpop.xlane.xlu0 %4686
          %v4688 = vadd.f32 %v4374, %v4375
          %v4689 = vadd.f32 %v4688, %v4376
          %v4690 = vadd.f32 %v4689, %v4377
          %4691 = vadd.xlane.f32.xlu0 %v4690
          %v4692 = vpop.xlane.xlu0 %4691
          %v4693 = vadd.f32 %v4378, %v4379
          %v4694 = vadd.f32 %v4693, %v4380
          %v4695 = vadd.f32 %v4694, %v4381
          %4696 = vadd.xlane.f32.xlu0 %v4695
          %v4697 = vpop.xlane.xlu0 %4696
          %v4698 = vadd.f32 %v4382, %v4383
          %v4699 = vadd.f32 %v4698, %v4384
          %v4700 = vadd.f32 %v4699, %v4385
          %4701 = vadd.xlane.f32.xlu0 %v4700
          %v4702 = vpop.xlane.xlu0 %4701
          %v4703 = vadd.f32 %v4386, %v4387
          %v4704 = vadd.f32 %v4703, %v4388
          %v4705 = vadd.f32 %v4704, %v4389
          %4706 = vadd.xlane.f32.xlu0 %v4705
          %v4707 = vpop.xlane.xlu0 %4706
          %v4708 = vadd.f32 %v4390, %v4391
          %v4709 = vadd.f32 %v4708, %v4392
          %v4710 = vadd.f32 %v4709, %v4393
          %4711 = vadd.xlane.f32.xlu0 %v4710
          %v4712 = vpop.xlane.xlu0 %4711
          %v4713 = vadd.f32 %v4394, %v4395
          %v4714 = vadd.f32 %v4713, %v4396
          %v4715 = vadd.f32 %v4714, %v4397
          %4716 = vadd.xlane.f32.xlu0 %v4715
          %v4717 = vpop.xlane.xlu0 %4716
          %v4718 = vadd.f32 %v4402, %v4407
          %v4719 = vadd.f32 %v4718, %v4412
          %v4720 = vadd.f32 %v4719, %v4417
          %v4721 = vadd.f32 %v4720, %v4422
          %v4722 = vadd.f32 %v4721, %v4427
          %v4723 = vadd.f32 %v4722, %v4432
          %v4724 = vadd.f32 %v4723, %v4437
          %v4725 = vadd.f32 %v4724, %v4442
          %v4726 = vadd.f32 %v4725, %v4447
          %v4727 = vadd.f32 %v4726, %v4452
          %v4728 = vadd.f32 %v4727, %v4457
          %v4729 = vadd.f32 %v4728, %v4462
          %v4730 = vadd.f32 %v4729, %v4467
          %v4731 = vadd.f32 %v4730, %v4472
          %v4732 = vadd.f32 %v4731, %v4477
          %v4733 = vadd.f32 %v4732, %v4482
          %v4734 = vadd.f32 %v4733, %v4487
          %v4735 = vadd.f32 %v4734, %v4492
          %v4736 = vadd.f32 %v4735, %v4497
          %v4737 = vadd.f32 %v4736, %v4502
          %v4738 = vadd.f32 %v4737, %v4507
          %v4739 = vadd.f32 %v4738, %v4512
          %v4740 = vadd.f32 %v4739, %v4517
          %v4741 = vadd.f32 %v4740, %v4522
          %v4742 = vadd.f32 %v4741, %v4527
          %v4743 = vadd.f32 %v4742, %v4532
          %v4744 = vadd.f32 %v4743, %v4537
          %v4745 = vadd.f32 %v4744, %v4542
          %v4746 = vadd.f32 %v4745, %v4547
          %v4747 = vadd.f32 %v4746, %v4552
          %v4748 = vadd.f32 %v4747, %v4557
          %v4749 = vadd.f32 %v4748, %v4562
          %v4750 = vadd.f32 %v4749, %v4567
          %v4751 = vadd.f32 %v4750, %v4572
          %v4752 = vadd.f32 %v4751, %v4577
          %v4753 = vadd.f32 %v4752, %v4582
          %v4754 = vadd.f32 %v4753, %v4587
          %v4755 = vadd.f32 %v4754, %v4592
          %v4756 = vadd.f32 %v4755, %v4597
          %v4757 = vadd.f32 %v4756, %v4602
          %v4758 = vadd.f32 %v4757, %v4607
          %v4759 = vadd.f32 %v4758, %v4612
          %v4760 = vadd.f32 %v4759, %v4617
          %v4761 = vadd.f32 %v4760, %v4622
          %v4762 = vadd.f32 %v4761, %v4627
          %v4763 = vadd.f32 %v4762, %v4632
          %v4764 = vadd.f32 %v4763, %v4637
          %v4765 = vadd.f32 %v4764, %v4642
          %v4766 = vadd.f32 %v4765, %v4647
          %v4767 = vadd.f32 %v4766, %v4652
          %v4768 = vadd.f32 %v4767, %v4657
          %v4769 = vadd.f32 %v4768, %v4662
          %v4770 = vadd.f32 %v4769, %v4667
          %v4771 = vadd.f32 %v4770, %v4672
          %v4772 = vadd.f32 %v4771, %v4677
          %v4773 = vadd.f32 %v4772, %v4682
          %v4774 = vadd.f32 %v4773, %v4687
          %v4775 = vadd.f32 %v4774, %v4692
          %v4776 = vadd.f32 %v4775, %v4697
          %v4777 = vadd.f32 %v4776, %v4702
          %v4778 = vadd.f32 %v4777, %v4707
          %v4779 = vadd.f32 %v4778, %v4712
          %v4780 = vadd.f32 %v4779, %v4717
          %v4781 = vrot.slane %v4780, 4
          %v4782 = vadd.f32 %v4780, %v4781
          %v4783 = vrot.slane %v4782, 2
          %v4784 = vadd.f32 %v4782, %v4783
          %v4785 = vrot.slane %v4784, 1
          %v4786 = vadd.f32 %v4784, %v4785
          %4787 = vst [vmem:[%s294] sm:$0xff] %v4786
          %v4788 = vld [vmem:[#allocation3] sm:$0xff]
          %v4789 = vld [vmem:[#allocation3 + $0x8] sm:$0xff]
          %v4790 = vld [vmem:[#allocation3 + $0x10] sm:$0xff]
          %v4791 = vld [vmem:[#allocation3 + $0x18] sm:$0xff]
          %v4792 = vld [vmem:[#allocation3 + $0x20] sm:$0xff]
          %v4793 = vld [vmem:[#allocation3 + $0x28] sm:$0xff]
          %v4794 = vld [vmem:[#allocation3 + $0x30] sm:$0xff]
          %v4795 = vld [vmem:[#allocation3 + $0x38] sm:$0xff]
          %v4796 = vld [vmem:[#allocation3 + $0x40] sm:$0xff]
          %v4797 = vld [vmem:[#allocation3 + $0x48] sm:$0xff]
          %v4798 = vld [vmem:[#allocation3 + $0x50] sm:$0xff]
          %v4799 = vld [vmem:[#allocation3 + $0x58] sm:$0xff]
          %v4800 = vld [vmem:[#allocation3 + $0x60] sm:$0xff]
          %v4801 = vld [vmem:[#allocation3 + $0x68] sm:$0xff]
          %v4802 = vld [vmem:[#allocation3 + $0x70] sm:$0xff]
          %v4803 = vld [vmem:[#allocation3 + $0x78] sm:$0xff]
          %v4804 = vld [vmem:[#allocation3 + $0x80] sm:$0xff]
          %v4805 = vld [vmem:[#allocation3 + $0x88] sm:$0xff]
          %v4806 = vld [vmem:[#allocation3 + $0x90] sm:$0xff]
          %v4807 = vld [vmem:[#allocation3 + $0x98] sm:$0xff]
          %v4808 = vld [vmem:[#allocation3 + $0xa0] sm:$0xff]
          %v4809 = vld [vmem:[#allocation3 + $0xa8] sm:$0xff]
          %v4810 = vld [vmem:[#allocation3 + $0xb0] sm:$0xff]
          %v4811 = vld [vmem:[#allocation3 + $0xb8] sm:$0xff]
          %v4812 = vld [vmem:[#allocation3 + $0xc0] sm:$0xff]
          %v4813 = vld [vmem:[#allocation3 + $0xc8] sm:$0xff]
          %v4814 = vld [vmem:[#allocation3 + $0xd0] sm:$0xff]
          %v4815 = vld [vmem:[#allocation3 + $0xd8] sm:$0xff]
          %v4816 = vld [vmem:[#allocation3 + $0xe0] sm:$0xff]
          %v4817 = vld [vmem:[#allocation3 + $0xe8] sm:$0xff]
          %v4818 = vld [vmem:[#allocation3 + $0xf0] sm:$0xff]
          %v4819 = vld [vmem:[#allocation3 + $0xf8] sm:$0xff]
          %v4820 = vld [vmem:[#allocation3 + $0x100] sm:$0xff]
          %v4821 = vld [vmem:[#allocation3 + $0x108] sm:$0xff]
          %v4822 = vld [vmem:[#allocation3 + $0x110] sm:$0xff]
          %v4823 = vld [vmem:[#allocation3 + $0x118] sm:$0xff]
          %v4824 = vld [vmem:[#allocation3 + $0x120] sm:$0xff]
          %v4825 = vld [vmem:[#allocation3 + $0x128] sm:$0xff]
          %v4826 = vld [vmem:[#allocation3 + $0x130] sm:$0xff]
          %v4827 = vld [vmem:[#allocation3 + $0x138] sm:$0xff]
          %v4828 = vld [vmem:[#allocation3 + $0x140] sm:$0xff]
          %v4829 = vld [vmem:[#allocation3 + $0x148] sm:$0xff]
          %v4830 = vld [vmem:[#allocation3 + $0x150] sm:$0xff]
          %v4831 = vld [vmem:[#allocation3 + $0x158] sm:$0xff]
          %v4832 = vld [vmem:[#allocation3 + $0x160] sm:$0xff]
          %v4833 = vld [vmem:[#allocation3 + $0x168] sm:$0xff]
          %v4834 = vld [vmem:[#allocation3 + $0x170] sm:$0xff]
          %v4835 = vld [vmem:[#allocation3 + $0x178] sm:$0xff]
          %v4836 = vld [vmem:[#allocation3 + $0x180] sm:$0xff]
          %v4837 = vld [vmem:[#allocation3 + $0x188] sm:$0xff]
          %v4838 = vld [vmem:[#allocation3 + $0x190] sm:$0xff]
          %v4839 = vld [vmem:[#allocation3 + $0x198] sm:$0xff]
          %v4840 = vld [vmem:[#allocation3 + $0x1a0] sm:$0xff]
          %v4841 = vld [vmem:[#allocation3 + $0x1a8] sm:$0xff]
          %v4842 = vld [vmem:[#allocation3 + $0x1b0] sm:$0xff]
          %v4843 = vld [vmem:[#allocation3 + $0x1b8] sm:$0xff]
          %v4844 = vld [vmem:[#allocation3 + $0x1c0] sm:$0xff]
          %v4845 = vld [vmem:[#allocation3 + $0x1c8] sm:$0xff]
          %v4846 = vld [vmem:[#allocation3 + $0x1d0] sm:$0xff]
          %v4847 = vld [vmem:[#allocation3 + $0x1d8] sm:$0xff]
          %v4848 = vld [vmem:[#allocation3 + $0x1e0] sm:$0xff]
          %v4849 = vld [vmem:[#allocation3 + $0x1e8] sm:$0xff]
          %v4850 = vld [vmem:[#allocation3 + $0x1f0] sm:$0xff]
          %v4851 = vld [vmem:[#allocation3 + $0x1f8] sm:$0xff]
          %v4852 = vld [vmem:[#allocation3 + $0x200] sm:$0xff]
          %v4853 = vld [vmem:[#allocation3 + $0x208] sm:$0xff]
          %v4854 = vld [vmem:[#allocation3 + $0x210] sm:$0xff]
          %v4855 = vld [vmem:[#allocation3 + $0x218] sm:$0xff]
          %v4856 = vld [vmem:[#allocation3 + $0x220] sm:$0xff]
          %v4857 = vld [vmem:[#allocation3 + $0x228] sm:$0xff]
          %v4858 = vld [vmem:[#allocation3 + $0x230] sm:$0xff]
          %v4859 = vld [vmem:[#allocation3 + $0x238] sm:$0xff]
          %v4860 = vld [vmem:[#allocation3 + $0x240] sm:$0xff]
          %v4861 = vld [vmem:[#allocation3 + $0x248] sm:$0xff]
          %v4862 = vld [vmem:[#allocation3 + $0x250] sm:$0xff]
          %v4863 = vld [vmem:[#allocation3 + $0x258] sm:$0xff]
          %v4864 = vld [vmem:[#allocation3 + $0x260] sm:$0xff]
          %v4865 = vld [vmem:[#allocation3 + $0x268] sm:$0xff]
          %v4866 = vld [vmem:[#allocation3 + $0x270] sm:$0xff]
          %v4867 = vld [vmem:[#allocation3 + $0x278] sm:$0xff]
          %v4868 = vld [vmem:[#allocation3 + $0x280] sm:$0xff]
          %v4869 = vld [vmem:[#allocation3 + $0x288] sm:$0xff]
          %v4870 = vld [vmem:[#allocation3 + $0x290] sm:$0xff]
          %v4871 = vld [vmem:[#allocation3 + $0x298] sm:$0xff]
          %v4872 = vld [vmem:[#allocation3 + $0x2a0] sm:$0xff]
          %v4873 = vld [vmem:[#allocation3 + $0x2a8] sm:$0xff]
          %v4874 = vld [vmem:[#allocation3 + $0x2b0] sm:$0xff]
          %v4875 = vld [vmem:[#allocation3 + $0x2b8] sm:$0xff]
          %v4876 = vld [vmem:[#allocation3 + $0x2c0] sm:$0xff]
          %v4877 = vld [vmem:[#allocation3 + $0x2c8] sm:$0xff]
          %v4878 = vld [vmem:[#allocation3 + $0x2d0] sm:$0xff]
          %v4879 = vld [vmem:[#allocation3 + $0x2d8] sm:$0xff]
          %v4880 = vld [vmem:[#allocation3 + $0x2e0] sm:$0xff]
          %v4881 = vld [vmem:[#allocation3 + $0x2e8] sm:$0xff]
          %v4882 = vld [vmem:[#allocation3 + $0x2f0] sm:$0xff]
          %v4883 = vld [vmem:[#allocation3 + $0x2f8] sm:$0xff]
          %v4884 = vld [vmem:[#allocation3 + $0x300] sm:$0xff]
          %v4885 = vld [vmem:[#allocation3 + $0x308] sm:$0xff]
          %v4886 = vld [vmem:[#allocation3 + $0x310] sm:$0xff]
          %v4887 = vld [vmem:[#allocation3 + $0x318] sm:$0xff]
          %v4888 = vld [vmem:[#allocation3 + $0x320] sm:$0xff]
          %v4889 = vld [vmem:[#allocation3 + $0x328] sm:$0xff]
          %v4890 = vld [vmem:[#allocation3 + $0x330] sm:$0xff]
          %v4891 = vld [vmem:[#allocation3 + $0x338] sm:$0xff]
          %v4892 = vld [vmem:[#allocation3 + $0x340] sm:$0xff]
          %v4893 = vld [vmem:[#allocation3 + $0x348] sm:$0xff]
          %v4894 = vld [vmem:[#allocation3 + $0x350] sm:$0xff]
          %v4895 = vld [vmem:[#allocation3 + $0x358] sm:$0xff]
          %v4896 = vld [vmem:[#allocation3 + $0x360] sm:$0xff]
          %v4897 = vld [vmem:[#allocation3 + $0x368] sm:$0xff]
          %v4898 = vld [vmem:[#allocation3 + $0x370] sm:$0xff]
          %v4899 = vld [vmem:[#allocation3 + $0x378] sm:$0xff]
          %v4900 = vld [vmem:[#allocation3 + $0x380] sm:$0xff]
          %v4901 = vld [vmem:[#allocation3 + $0x388] sm:$0xff]
          %v4902 = vld [vmem:[#allocation3 + $0x390] sm:$0xff]
          %v4903 = vld [vmem:[#allocation3 + $0x398] sm:$0xff]
          %v4904 = vld [vmem:[#allocation3 + $0x3a0] sm:$0xff]
          %v4905 = vld [vmem:[#allocation3 + $0x3a8] sm:$0xff]
          %v4906 = vld [vmem:[#allocation3 + $0x3b0] sm:$0xff]
          %v4907 = vld [vmem:[#allocation3 + $0x3b8] sm:$0xff]
          %v4908 = vld [vmem:[#allocation3 + $0x3c0] sm:$0xff]
          %v4909 = vld [vmem:[#allocation3 + $0x3c8] sm:$0xff]
          %v4910 = vld [vmem:[#allocation3 + $0x3d0] sm:$0xff]
          %v4911 = vld [vmem:[#allocation3 + $0x3d8] sm:$0xff]
          %v4912 = vld [vmem:[#allocation3 + $0x3e0] sm:$0xff]
          %v4913 = vld [vmem:[#allocation3 + $0x3e8] sm:$0xff]
          %v4914 = vld [vmem:[#allocation3 + $0x3f0] sm:$0xff]
          %v4915 = vld [vmem:[#allocation3 + $0x3f8] sm:$0xff]
          %v4916 = vld [vmem:[#allocation3 + $0x400] sm:$0xff]
          %v4917 = vld [vmem:[#allocation3 + $0x408] sm:$0xff]
          %v4918 = vld [vmem:[#allocation3 + $0x410] sm:$0xff]
          %v4919 = vld [vmem:[#allocation3 + $0x418] sm:$0xff]
          %v4920 = vld [vmem:[#allocation3 + $0x420] sm:$0xff]
          %v4921 = vld [vmem:[#allocation3 + $0x428] sm:$0xff]
          %v4922 = vld [vmem:[#allocation3 + $0x430] sm:$0xff]
          %v4923 = vld [vmem:[#allocation3 + $0x438] sm:$0xff]
          %v4924 = vld [vmem:[#allocation3 + $0x440] sm:$0xff]
          %v4925 = vld [vmem:[#allocation3 + $0x448] sm:$0xff]
          %v4926 = vld [vmem:[#allocation3 + $0x450] sm:$0xff]
          %v4927 = vld [vmem:[#allocation3 + $0x458] sm:$0xff]
          %v4928 = vld [vmem:[#allocation3 + $0x460] sm:$0xff]
          %v4929 = vld [vmem:[#allocation3 + $0x468] sm:$0xff]
          %v4930 = vld [vmem:[#allocation3 + $0x470] sm:$0xff]
          %v4931 = vld [vmem:[#allocation3 + $0x478] sm:$0xff]
          %v4932 = vld [vmem:[#allocation3 + $0x480] sm:$0xff]
          %v4933 = vld [vmem:[#allocation3 + $0x488] sm:$0xff]
          %v4934 = vld [vmem:[#allocation3 + $0x490] sm:$0xff]
          %v4935 = vld [vmem:[#allocation3 + $0x498] sm:$0xff]
          %v4936 = vld [vmem:[#allocation3 + $0x4a0] sm:$0xff]
          %v4937 = vld [vmem:[#allocation3 + $0x4a8] sm:$0xff]
          %v4938 = vld [vmem:[#allocation3 + $0x4b0] sm:$0xff]
          %v4939 = vld [vmem:[#allocation3 + $0x4b8] sm:$0xff]
          %v4940 = vld [vmem:[#allocation3 + $0x4c0] sm:$0xff]
          %v4941 = vld [vmem:[#allocation3 + $0x4c8] sm:$0xff]
          %v4942 = vld [vmem:[#allocation3 + $0x4d0] sm:$0xff]
          %v4943 = vld [vmem:[#allocation3 + $0x4d8] sm:$0xff]
          %v4944 = vld [vmem:[#allocation3 + $0x4e0] sm:$0xff]
          %v4945 = vld [vmem:[#allocation3 + $0x4e8] sm:$0xff]
          %v4946 = vld [vmem:[#allocation3 + $0x4f0] sm:$0xff]
          %v4947 = vld [vmem:[#allocation3 + $0x4f8] sm:$0xff]
          %v4948 = vld [vmem:[#allocation3 + $0x500] sm:$0xff]
          %v4949 = vld [vmem:[#allocation3 + $0x508] sm:$0xff]
          %v4950 = vld [vmem:[#allocation3 + $0x510] sm:$0xff]
          %v4951 = vld [vmem:[#allocation3 + $0x518] sm:$0xff]
          %v4952 = vld [vmem:[#allocation3 + $0x520] sm:$0xff]
          %v4953 = vld [vmem:[#allocation3 + $0x528] sm:$0xff]
          %v4954 = vld [vmem:[#allocation3 + $0x530] sm:$0xff]
          %v4955 = vld [vmem:[#allocation3 + $0x538] sm:$0xff]
          %v4956 = vld [vmem:[#allocation3 + $0x540] sm:$0xff]
          %v4957 = vld [vmem:[#allocation3 + $0x548] sm:$0xff]
          %v4958 = vld [vmem:[#allocation3 + $0x550] sm:$0xff]
          %v4959 = vld [vmem:[#allocation3 + $0x558] sm:$0xff]
          %v4960 = vld [vmem:[#allocation3 + $0x560] sm:$0xff]
          %v4961 = vld [vmem:[#allocation3 + $0x568] sm:$0xff]
          %v4962 = vld [vmem:[#allocation3 + $0x570] sm:$0xff]
          %v4963 = vld [vmem:[#allocation3 + $0x578] sm:$0xff]
          %v4964 = vld [vmem:[#allocation3 + $0x580] sm:$0xff]
          %v4965 = vld [vmem:[#allocation3 + $0x588] sm:$0xff]
          %v4966 = vld [vmem:[#allocation3 + $0x590] sm:$0xff]
          %v4967 = vld [vmem:[#allocation3 + $0x598] sm:$0xff]
          %v4968 = vld [vmem:[#allocation3 + $0x5a0] sm:$0xff]
          %v4969 = vld [vmem:[#allocation3 + $0x5a8] sm:$0xff]
          %v4970 = vld [vmem:[#allocation3 + $0x5b0] sm:$0xff]
          %v4971 = vld [vmem:[#allocation3 + $0x5b8] sm:$0xff]
          %v4972 = vld [vmem:[#allocation3 + $0x5c0] sm:$0xff]
          %v4973 = vld [vmem:[#allocation3 + $0x5c8] sm:$0xff]
          %v4974 = vld [vmem:[#allocation3 + $0x5d0] sm:$0xff]
          %v4975 = vld [vmem:[#allocation3 + $0x5d8] sm:$0xff]
          %v4976 = vld [vmem:[#allocation3 + $0x5e0] sm:$0xff]
          %v4977 = vld [vmem:[#allocation3 + $0x5e8] sm:$0xff]
          %v4978 = vld [vmem:[#allocation3 + $0x5f0] sm:$0xff]
          %v4979 = vld [vmem:[#allocation3 + $0x5f8] sm:$0xff]
          %v4980 = vld [vmem:[#allocation3 + $0x600] sm:$0xff]
          %v4981 = vld [vmem:[#allocation3 + $0x608] sm:$0xff]
          %v4982 = vld [vmem:[#allocation3 + $0x610] sm:$0xff]
          %v4983 = vld [vmem:[#allocation3 + $0x618] sm:$0xff]
          %v4984 = vld [vmem:[#allocation3 + $0x620] sm:$0xff]
          %v4985 = vld [vmem:[#allocation3 + $0x628] sm:$0xff]
          %v4986 = vld [vmem:[#allocation3 + $0x630] sm:$0xff]
          %v4987 = vld [vmem:[#allocation3 + $0x638] sm:$0xff]
          %v4988 = vld [vmem:[#allocation3 + $0x640] sm:$0xff]
          %v4989 = vld [vmem:[#allocation3 + $0x648] sm:$0xff]
          %v4990 = vld [vmem:[#allocation3 + $0x650] sm:$0xff]
          %v4991 = vld [vmem:[#allocation3 + $0x658] sm:$0xff]
          %v4992 = vld [vmem:[#allocation3 + $0x660] sm:$0xff]
          %v4993 = vld [vmem:[#allocation3 + $0x668] sm:$0xff]
          %v4994 = vld [vmem:[#allocation3 + $0x670] sm:$0xff]
          %v4995 = vld [vmem:[#allocation3 + $0x678] sm:$0xff]
          %v4996 = vld [vmem:[#allocation3 + $0x680] sm:$0xff]
          %v4997 = vld [vmem:[#allocation3 + $0x688] sm:$0xff]
          %v4998 = vld [vmem:[#allocation3 + $0x690] sm:$0xff]
          %v4999 = vld [vmem:[#allocation3 + $0x698] sm:$0xff]
          %v5000 = vld [vmem:[#allocation3 + $0x6a0] sm:$0xff]
          %v5001 = vld [vmem:[#allocation3 + $0x6a8] sm:$0xff]
          %v5002 = vld [vmem:[#allocation3 + $0x6b0] sm:$0xff]
          %v5003 = vld [vmem:[#allocation3 + $0x6b8] sm:$0xff]
          %v5004 = vld [vmem:[#allocation3 + $0x6c0] sm:$0xff]
          %v5005 = vld [vmem:[#allocation3 + $0x6c8] sm:$0xff]
          %v5006 = vld [vmem:[#allocation3 + $0x6d0] sm:$0xff]
          %v5007 = vld [vmem:[#allocation3 + $0x6d8] sm:$0xff]
          %v5008 = vld [vmem:[#allocation3 + $0x6e0] sm:$0xff]
          %v5009 = vld [vmem:[#allocation3 + $0x6e8] sm:$0xff]
          %v5010 = vld [vmem:[#allocation3 + $0x6f0] sm:$0xff]
          %v5011 = vld [vmem:[#allocation3 + $0x6f8] sm:$0xff]
          %v5012 = vld [vmem:[#allocation3 + $0x700] sm:$0xff]
          %v5013 = vld [vmem:[#allocation3 + $0x708] sm:$0xff]
          %v5014 = vld [vmem:[#allocation3 + $0x710] sm:$0xff]
          %v5015 = vld [vmem:[#allocation3 + $0x718] sm:$0xff]
          %v5016 = vld [vmem:[#allocation3 + $0x720] sm:$0xff]
          %v5017 = vld [vmem:[#allocation3 + $0x728] sm:$0xff]
          %v5018 = vld [vmem:[#allocation3 + $0x730] sm:$0xff]
          %v5019 = vld [vmem:[#allocation3 + $0x738] sm:$0xff]
          %v5020 = vld [vmem:[#allocation3 + $0x740] sm:$0xff]
          %v5021 = vld [vmem:[#allocation3 + $0x748] sm:$0xff]
          %v5022 = vld [vmem:[#allocation3 + $0x750] sm:$0xff]
          %v5023 = vld [vmem:[#allocation3 + $0x758] sm:$0xff]
          %v5024 = vld [vmem:[#allocation3 + $0x760] sm:$0xff]
          %v5025 = vld [vmem:[#allocation3 + $0x768] sm:$0xff]
          %v5026 = vld [vmem:[#allocation3 + $0x770] sm:$0xff]
          %v5027 = vld [vmem:[#allocation3 + $0x778] sm:$0xff]
          %v5028 = vld [vmem:[#allocation3 + $0x780] sm:$0xff]
          %v5029 = vld [vmem:[#allocation3 + $0x788] sm:$0xff]
          %v5030 = vld [vmem:[#allocation3 + $0x790] sm:$0xff]
          %v5031 = vld [vmem:[#allocation3 + $0x798] sm:$0xff]
          %v5032 = vld [vmem:[#allocation3 + $0x7a0] sm:$0xff]
          %v5033 = vld [vmem:[#allocation3 + $0x7a8] sm:$0xff]
          %v5034 = vld [vmem:[#allocation3 + $0x7b0] sm:$0xff]
          %v5035 = vld [vmem:[#allocation3 + $0x7b8] sm:$0xff]
          %v5036 = vld [vmem:[#allocation3 + $0x7c0] sm:$0xff]
          %v5037 = vld [vmem:[#allocation3 + $0x7c8] sm:$0xff]
          %v5038 = vld [vmem:[#allocation3 + $0x7d0] sm:$0xff]
          %v5039 = vld [vmem:[#allocation3 + $0x7d8] sm:$0xff]
          %v5040 = vld [vmem:[#allocation3 + $0x7e0] sm:$0xff]
          %v5041 = vld [vmem:[#allocation3 + $0x7e8] sm:$0xff]
          %v5042 = vld [vmem:[#allocation3 + $0x7f0] sm:$0xff]
          %v5043 = vld [vmem:[#allocation3 + $0x7f8] sm:$0xff]
          %v5044 = vadd.f32 %v4788, %v4789
          %v5045 = vadd.f32 %v5044, %v4790
          %v5046 = vadd.f32 %v5045, %v4791
          %5047 = vadd.xlane.f32.xlu0 %v5046
          %v5048 = vpop.xlane.xlu0 %5047
          %v5049 = vadd.f32 %v4792, %v4793
          %v5050 = vadd.f32 %v5049, %v4794
          %v5051 = vadd.f32 %v5050, %v4795
          %5052 = vadd.xlane.f32.xlu0 %v5051
          %v5053 = vpop.xlane.xlu0 %5052
          %v5054 = vadd.f32 %v4796, %v4797
          %v5055 = vadd.f32 %v5054, %v4798
          %v5056 = vadd.f32 %v5055, %v4799
          %5057 = vadd.xlane.f32.xlu0 %v5056
          %v5058 = vpop.xlane.xlu0 %5057
          %v5059 = vadd.f32 %v4800, %v4801
          %v5060 = vadd.f32 %v5059, %v4802
          %v5061 = vadd.f32 %v5060, %v4803
          %5062 = vadd.xlane.f32.xlu0 %v5061
          %v5063 = vpop.xlane.xlu0 %5062
          %v5064 = vadd.f32 %v4804, %v4805
          %v5065 = vadd.f32 %v5064, %v4806
          %v5066 = vadd.f32 %v5065, %v4807
          %5067 = vadd.xlane.f32.xlu0 %v5066
          %v5068 = vpop.xlane.xlu0 %5067
          %v5069 = vadd.f32 %v4808, %v4809
          %v5070 = vadd.f32 %v5069, %v4810
          %v5071 = vadd.f32 %v5070, %v4811
          %5072 = vadd.xlane.f32.xlu0 %v5071
          %v5073 = vpop.xlane.xlu0 %5072
          %v5074 = vadd.f32 %v4812, %v4813
          %v5075 = vadd.f32 %v5074, %v4814
          %v5076 = vadd.f32 %v5075, %v4815
          %5077 = vadd.xlane.f32.xlu0 %v5076
          %v5078 = vpop.xlane.xlu0 %5077
          %v5079 = vadd.f32 %v4816, %v4817
          %v5080 = vadd.f32 %v5079, %v4818
          %v5081 = vadd.f32 %v5080, %v4819
          %5082 = vadd.xlane.f32.xlu0 %v5081
          %v5083 = vpop.xlane.xlu0 %5082
          %v5084 = vadd.f32 %v4820, %v4821
          %v5085 = vadd.f32 %v5084, %v4822
          %v5086 = vadd.f32 %v5085, %v4823
          %5087 = vadd.xlane.f32.xlu0 %v5086
          %v5088 = vpop.xlane.xlu0 %5087
          %v5089 = vadd.f32 %v4824, %v4825
          %v5090 = vadd.f32 %v5089, %v4826
          %v5091 = vadd.f32 %v5090, %v4827
          %5092 = vadd.xlane.f32.xlu0 %v5091
          %v5093 = vpop.xlane.xlu0 %5092
          %v5094 = vadd.f32 %v4828, %v4829
          %v5095 = vadd.f32 %v5094, %v4830
          %v5096 = vadd.f32 %v5095, %v4831
          %5097 = vadd.xlane.f32.xlu0 %v5096
          %v5098 = vpop.xlane.xlu0 %5097
          %v5099 = vadd.f32 %v4832, %v4833
          %v5100 = vadd.f32 %v5099, %v4834
          %v5101 = vadd.f32 %v5100, %v4835
          %5102 = vadd.xlane.f32.xlu0 %v5101
          %v5103 = vpop.xlane.xlu0 %5102
          %v5104 = vadd.f32 %v4836, %v4837
          %v5105 = vadd.f32 %v5104, %v4838
          %v5106 = vadd.f32 %v5105, %v4839
          %5107 = vadd.xlane.f32.xlu0 %v5106
          %v5108 = vpop.xlane.xlu0 %5107
          %v5109 = vadd.f32 %v4840, %v4841
          %v5110 = vadd.f32 %v5109, %v4842
          %v5111 = vadd.f32 %v5110, %v4843
          %5112 = vadd.xlane.f32.xlu0 %v5111
          %v5113 = vpop.xlane.xlu0 %5112
          %v5114 = vadd.f32 %v4844, %v4845
          %v5115 = vadd.f32 %v5114, %v4846
          %v5116 = vadd.f32 %v5115, %v4847
          %5117 = vadd.xlane.f32.xlu0 %v5116
          %v5118 = vpop.xlane.xlu0 %5117
          %v5119 = vadd.f32 %v4848, %v4849
          %v5120 = vadd.f32 %v5119, %v4850
          %v5121 = vadd.f32 %v5120, %v4851
          %5122 = vadd.xlane.f32.xlu0 %v5121
          %v5123 = vpop.xlane.xlu0 %5122
          %v5124 = vadd.f32 %v4852, %v4853
          %v5125 = vadd.f32 %v5124, %v4854
          %v5126 = vadd.f32 %v5125, %v4855
          %5127 = vadd.xlane.f32.xlu0 %v5126
          %v5128 = vpop.xlane.xlu0 %5127
          %v5129 = vadd.f32 %v4856, %v4857
          %v5130 = vadd.f32 %v5129, %v4858
          %v5131 = vadd.f32 %v5130, %v4859
          %5132 = vadd.xlane.f32.xlu0 %v5131
          %v5133 = vpop.xlane.xlu0 %5132
          %v5134 = vadd.f32 %v4860, %v4861
          %v5135 = vadd.f32 %v5134, %v4862
          %v5136 = vadd.f32 %v5135, %v4863
          %5137 = vadd.xlane.f32.xlu0 %v5136
          %v5138 = vpop.xlane.xlu0 %5137
          %v5139 = vadd.f32 %v4864, %v4865
          %v5140 = vadd.f32 %v5139, %v4866
          %v5141 = vadd.f32 %v5140, %v4867
          %5142 = vadd.xlane.f32.xlu0 %v5141
          %v5143 = vpop.xlane.xlu0 %5142
          %v5144 = vadd.f32 %v4868, %v4869
          %v5145 = vadd.f32 %v5144, %v4870
          %v5146 = vadd.f32 %v5145, %v4871
          %5147 = vadd.xlane.f32.xlu0 %v5146
          %v5148 = vpop.xlane.xlu0 %5147
          %v5149 = vadd.f32 %v4872, %v4873
          %v5150 = vadd.f32 %v5149, %v4874
          %v5151 = vadd.f32 %v5150, %v4875
          %5152 = vadd.xlane.f32.xlu0 %v5151
          %v5153 = vpop.xlane.xlu0 %5152
          %v5154 = vadd.f32 %v4876, %v4877
          %v5155 = vadd.f32 %v5154, %v4878
          %v5156 = vadd.f32 %v5155, %v4879
          %5157 = vadd.xlane.f32.xlu0 %v5156
          %v5158 = vpop.xlane.xlu0 %5157
          %v5159 = vadd.f32 %v4880, %v4881
          %v5160 = vadd.f32 %v5159, %v4882
          %v5161 = vadd.f32 %v5160, %v4883
          %5162 = vadd.xlane.f32.xlu0 %v5161
          %v5163 = vpop.xlane.xlu0 %5162
          %v5164 = vadd.f32 %v4884, %v4885
          %v5165 = vadd.f32 %v5164, %v4886
          %v5166 = vadd.f32 %v5165, %v4887
          %5167 = vadd.xlane.f32.xlu0 %v5166
          %v5168 = vpop.xlane.xlu0 %5167
          %v5169 = vadd.f32 %v4888, %v4889
          %v5170 = vadd.f32 %v5169, %v4890
          %v5171 = vadd.f32 %v5170, %v4891
          %5172 = vadd.xlane.f32.xlu0 %v5171
          %v5173 = vpop.xlane.xlu0 %5172
          %v5174 = vadd.f32 %v4892, %v4893
          %v5175 = vadd.f32 %v5174, %v4894
          %v5176 = vadd.f32 %v5175, %v4895
          %5177 = vadd.xlane.f32.xlu0 %v5176
          %v5178 = vpop.xlane.xlu0 %5177
          %v5179 = vadd.f32 %v4896, %v4897
          %v5180 = vadd.f32 %v5179, %v4898
          %v5181 = vadd.f32 %v5180, %v4899
          %5182 = vadd.xlane.f32.xlu0 %v5181
          %v5183 = vpop.xlane.xlu0 %5182
          %v5184 = vadd.f32 %v4900, %v4901
          %v5185 = vadd.f32 %v5184, %v4902
          %v5186 = vadd.f32 %v5185, %v4903
          %5187 = vadd.xlane.f32.xlu0 %v5186
          %v5188 = vpop.xlane.xlu0 %5187
          %v5189 = vadd.f32 %v4904, %v4905
          %v5190 = vadd.f32 %v5189, %v4906
          %v5191 = vadd.f32 %v5190, %v4907
          %5192 = vadd.xlane.f32.xlu0 %v5191
          %v5193 = vpop.xlane.xlu0 %5192
          %v5194 = vadd.f32 %v4908, %v4909
          %v5195 = vadd.f32 %v5194, %v4910
          %v5196 = vadd.f32 %v5195, %v4911
          %5197 = vadd.xlane.f32.xlu0 %v5196
          %v5198 = vpop.xlane.xlu0 %5197
          %v5199 = vadd.f32 %v4912, %v4913
          %v5200 = vadd.f32 %v5199, %v4914
          %v5201 = vadd.f32 %v5200, %v4915
          %5202 = vadd.xlane.f32.xlu0 %v5201
          %v5203 = vpop.xlane.xlu0 %5202
          %v5204 = vadd.f32 %v4916, %v4917
          %v5205 = vadd.f32 %v5204, %v4918
          %v5206 = vadd.f32 %v5205, %v4919
          %5207 = vadd.xlane.f32.xlu0 %v5206
          %v5208 = vpop.xlane.xlu0 %5207
          %v5209 = vadd.f32 %v4920, %v4921
          %v5210 = vadd.f32 %v5209, %v4922
          %v5211 = vadd.f32 %v5210, %v4923
          %5212 = vadd.xlane.f32.xlu0 %v5211
          %v5213 = vpop.xlane.xlu0 %5212
          %v5214 = vadd.f32 %v4924, %v4925
          %v5215 = vadd.f32 %v5214, %v4926
          %v5216 = vadd.f32 %v5215, %v4927
          %5217 = vadd.xlane.f32.xlu0 %v5216
          %v5218 = vpop.xlane.xlu0 %5217
          %v5219 = vadd.f32 %v4928, %v4929
          %v5220 = vadd.f32 %v5219, %v4930
          %v5221 = vadd.f32 %v5220, %v4931
          %5222 = vadd.xlane.f32.xlu0 %v5221
          %v5223 = vpop.xlane.xlu0 %5222
          %v5224 = vadd.f32 %v4932, %v4933
          %v5225 = vadd.f32 %v5224, %v4934
          %v5226 = vadd.f32 %v5225, %v4935
          %5227 = vadd.xlane.f32.xlu0 %v5226
          %v5228 = vpop.xlane.xlu0 %5227
          %v5229 = vadd.f32 %v4936, %v4937
          %v5230 = vadd.f32 %v5229, %v4938
          %v5231 = vadd.f32 %v5230, %v4939
          %5232 = vadd.xlane.f32.xlu0 %v5231
          %v5233 = vpop.xlane.xlu0 %5232
          %v5234 = vadd.f32 %v4940, %v4941
          %v5235 = vadd.f32 %v5234, %v4942
          %v5236 = vadd.f32 %v5235, %v4943
          %5237 = vadd.xlane.f32.xlu0 %v5236
          %v5238 = vpop.xlane.xlu0 %5237
          %v5239 = vadd.f32 %v4944, %v4945
          %v5240 = vadd.f32 %v5239, %v4946
          %v5241 = vadd.f32 %v5240, %v4947
          %5242 = vadd.xlane.f32.xlu0 %v5241
          %v5243 = vpop.xlane.xlu0 %5242
          %v5244 = vadd.f32 %v4948, %v4949
          %v5245 = vadd.f32 %v5244, %v4950
          %v5246 = vadd.f32 %v5245, %v4951
          %5247 = vadd.xlane.f32.xlu0 %v5246
          %v5248 = vpop.xlane.xlu0 %5247
          %v5249 = vadd.f32 %v4952, %v4953
          %v5250 = vadd.f32 %v5249, %v4954
          %v5251 = vadd.f32 %v5250, %v4955
          %5252 = vadd.xlane.f32.xlu0 %v5251
          %v5253 = vpop.xlane.xlu0 %5252
          %v5254 = vadd.f32 %v4956, %v4957
          %v5255 = vadd.f32 %v5254, %v4958
          %v5256 = vadd.f32 %v5255, %v4959
          %5257 = vadd.xlane.f32.xlu0 %v5256
          %v5258 = vpop.xlane.xlu0 %5257
          %v5259 = vadd.f32 %v4960, %v4961
          %v5260 = vadd.f32 %v5259, %v4962
          %v5261 = vadd.f32 %v5260, %v4963
          %5262 = vadd.xlane.f32.xlu0 %v5261
          %v5263 = vpop.xlane.xlu0 %5262
          %v5264 = vadd.f32 %v4964, %v4965
          %v5265 = vadd.f32 %v5264, %v4966
          %v5266 = vadd.f32 %v5265, %v4967
          %5267 = vadd.xlane.f32.xlu0 %v5266
          %v5268 = vpop.xlane.xlu0 %5267
          %v5269 = vadd.f32 %v4968, %v4969
          %v5270 = vadd.f32 %v5269, %v4970
          %v5271 = vadd.f32 %v5270, %v4971
          %5272 = vadd.xlane.f32.xlu0 %v5271
          %v5273 = vpop.xlane.xlu0 %5272
          %v5274 = vadd.f32 %v4972, %v4973
          %v5275 = vadd.f32 %v5274, %v4974
          %v5276 = vadd.f32 %v5275, %v4975
          %5277 = vadd.xlane.f32.xlu0 %v5276
          %v5278 = vpop.xlane.xlu0 %5277
          %v5279 = vadd.f32 %v4976, %v4977
          %v5280 = vadd.f32 %v5279, %v4978
          %v5281 = vadd.f32 %v5280, %v4979
          %5282 = vadd.xlane.f32.xlu0 %v5281
          %v5283 = vpop.xlane.xlu0 %5282
          %v5284 = vadd.f32 %v4980, %v4981
          %v5285 = vadd.f32 %v5284, %v4982
          %v5286 = vadd.f32 %v5285, %v4983
          %5287 = vadd.xlane.f32.xlu0 %v5286
          %v5288 = vpop.xlane.xlu0 %5287
          %v5289 = vadd.f32 %v4984, %v4985
          %v5290 = vadd.f32 %v5289, %v4986
          %v5291 = vadd.f32 %v5290, %v4987
          %5292 = vadd.xlane.f32.xlu0 %v5291
          %v5293 = vpop.xlane.xlu0 %5292
          %v5294 = vadd.f32 %v4988, %v4989
          %v5295 = vadd.f32 %v5294, %v4990
          %v5296 = vadd.f32 %v5295, %v4991
          %5297 = vadd.xlane.f32.xlu0 %v5296
          %v5298 = vpop.xlane.xlu0 %5297
          %v5299 = vadd.f32 %v4992, %v4993
          %v5300 = vadd.f32 %v5299, %v4994
          %v5301 = vadd.f32 %v5300, %v4995
          %5302 = vadd.xlane.f32.xlu0 %v5301
          %v5303 = vpop.xlane.xlu0 %5302
          %v5304 = vadd.f32 %v4996, %v4997
          %v5305 = vadd.f32 %v5304, %v4998
          %v5306 = vadd.f32 %v5305, %v4999
          %5307 = vadd.xlane.f32.xlu0 %v5306
          %v5308 = vpop.xlane.xlu0 %5307
          %v5309 = vadd.f32 %v5000, %v5001
          %v5310 = vadd.f32 %v5309, %v5002
          %v5311 = vadd.f32 %v5310, %v5003
          %5312 = vadd.xlane.f32.xlu0 %v5311
          %v5313 = vpop.xlane.xlu0 %5312
          %v5314 = vadd.f32 %v5004, %v5005
          %v5315 = vadd.f32 %v5314, %v5006
          %v5316 = vadd.f32 %v5315, %v5007
          %5317 = vadd.xlane.f32.xlu0 %v5316
          %v5318 = vpop.xlane.xlu0 %5317
          %v5319 = vadd.f32 %v5008, %v5009
          %v5320 = vadd.f32 %v5319, %v5010
          %v5321 = vadd.f32 %v5320, %v5011
          %5322 = vadd.xlane.f32.xlu0 %v5321
          %v5323 = vpop.xlane.xlu0 %5322
          %v5324 = vadd.f32 %v5012, %v5013
          %v5325 = vadd.f32 %v5324, %v5014
          %v5326 = vadd.f32 %v5325, %v5015
          %5327 = vadd.xlane.f32.xlu0 %v5326
          %v5328 = vpop.xlane.xlu0 %5327
          %v5329 = vadd.f32 %v5016, %v5017
          %v5330 = vadd.f32 %v5329, %v5018
          %v5331 = vadd.f32 %v5330, %v5019
          %5332 = vadd.xlane.f32.xlu0 %v5331
          %v5333 = vpop.xlane.xlu0 %5332
          %v5334 = vadd.f32 %v5020, %v5021
          %v5335 = vadd.f32 %v5334, %v5022
          %v5336 = vadd.f32 %v5335, %v5023
          %5337 = vadd.xlane.f32.xlu0 %v5336
          %v5338 = vpop.xlane.xlu0 %5337
          %v5339 = vadd.f32 %v5024, %v5025
          %v5340 = vadd.f32 %v5339, %v5026
          %v5341 = vadd.f32 %v5340, %v5027
          %5342 = vadd.xlane.f32.xlu0 %v5341
          %v5343 = vpop.xlane.xlu0 %5342
          %v5344 = vadd.f32 %v5028, %v5029
          %v5345 = vadd.f32 %v5344, %v5030
          %v5346 = vadd.f32 %v5345, %v5031
          %5347 = vadd.xlane.f32.xlu0 %v5346
          %v5348 = vpop.xlane.xlu0 %5347
          %v5349 = vadd.f32 %v5032, %v5033
          %v5350 = vadd.f32 %v5349, %v5034
          %v5351 = vadd.f32 %v5350, %v5035
          %5352 = vadd.xlane.f32.xlu0 %v5351
          %v5353 = vpop.xlane.xlu0 %5352
          %v5354 = vadd.f32 %v5036, %v5037
          %v5355 = vadd.f32 %v5354, %v5038
          %v5356 = vadd.f32 %v5355, %v5039
          %5357 = vadd.xlane.f32.xlu0 %v5356
          %v5358 = vpop.xlane.xlu0 %5357
          %v5359 = vadd.f32 %v5040, %v5041
          %v5360 = vadd.f32 %v5359, %v5042
          %v5361 = vadd.f32 %v5360, %v5043
          %5362 = vadd.xlane.f32.xlu0 %v5361
          %v5363 = vpop.xlane.xlu0 %5362
          %v5364 = vadd.f32 %v5048, %v5053
          %v5365 = vadd.f32 %v5364, %v5058
          %v5366 = vadd.f32 %v5365, %v5063
          %v5367 = vadd.f32 %v5366, %v5068
          %v5368 = vadd.f32 %v5367, %v5073
          %v5369 = vadd.f32 %v5368, %v5078
          %v5370 = vadd.f32 %v5369, %v5083
          %v5371 = vadd.f32 %v5370, %v5088
          %v5372 = vadd.f32 %v5371, %v5093
          %v5373 = vadd.f32 %v5372, %v5098
          %v5374 = vadd.f32 %v5373, %v5103
          %v5375 = vadd.f32 %v5374, %v5108
          %v5376 = vadd.f32 %v5375, %v5113
          %v5377 = vadd.f32 %v5376, %v5118
          %v5378 = vadd.f32 %v5377, %v5123
          %v5379 = vadd.f32 %v5378, %v5128
          %v5380 = vadd.f32 %v5379, %v5133
          %v5381 = vadd.f32 %v5380, %v5138
          %v5382 = vadd.f32 %v5381, %v5143
          %v5383 = vadd.f32 %v5382, %v5148
          %v5384 = vadd.f32 %v5383, %v5153
          %v5385 = vadd.f32 %v5384, %v5158
          %v5386 = vadd.f32 %v5385, %v5163
          %v5387 = vadd.f32 %v5386, %v5168
          %v5388 = vadd.f32 %v5387, %v5173
          %v5389 = vadd.f32 %v5388, %v5178
          %v5390 = vadd.f32 %v5389, %v5183
          %v5391 = vadd.f32 %v5390, %v5188
          %v5392 = vadd.f32 %v5391, %v5193
          %v5393 = vadd.f32 %v5392, %v5198
          %v5394 = vadd.f32 %v5393, %v5203
          %v5395 = vadd.f32 %v5394, %v5208
          %v5396 = vadd.f32 %v5395, %v5213
          %v5397 = vadd.f32 %v5396, %v5218
          %v5398 = vadd.f32 %v5397, %v5223
          %v5399 = vadd.f32 %v5398, %v5228
          %v5400 = vadd.f32 %v5399, %v5233
          %v5401 = vadd.f32 %v5400, %v5238
          %v5402 = vadd.f32 %v5401, %v5243
          %v5403 = vadd.f32 %v5402, %v5248
          %v5404 = vadd.f32 %v5403, %v5253
          %v5405 = vadd.f32 %v5404, %v5258
          %v5406 = vadd.f32 %v5405, %v5263
          %v5407 = vadd.f32 %v5406, %v5268
          %v5408 = vadd.f32 %v5407, %v5273
          %v5409 = vadd.f32 %v5408, %v5278
          %v5410 = vadd.f32 %v5409, %v5283
          %v5411 = vadd.f32 %v5410, %v5288
          %v5412 = vadd.f32 %v5411, %v5293
          %v5413 = vadd.f32 %v5412, %v5298
          %v5414 = vadd.f32 %v5413, %v5303
          %v5415 = vadd.f32 %v5414, %v5308
          %v5416 = vadd.f32 %v5415, %v5313
          %v5417 = vadd.f32 %v5416, %v5318
          %v5418 = vadd.f32 %v5417, %v5323
          %v5419 = vadd.f32 %v5418, %v5328
          %v5420 = vadd.f32 %v5419, %v5333
          %v5421 = vadd.f32 %v5420, %v5338
          %v5422 = vadd.f32 %v5421, %v5343
          %v5423 = vadd.f32 %v5422, %v5348
          %v5424 = vadd.f32 %v5423, %v5353
          %v5425 = vadd.f32 %v5424, %v5358
          %v5426 = vadd.f32 %v5425, %v5363
          %v5427 = vrot.slane %v5426, 4
          %v5428 = vadd.f32 %v5426, %v5427
          %v5429 = vrot.slane %v5428, 2
          %v5430 = vadd.f32 %v5428, %v5429
          %v5431 = vrot.slane %v5430, 1
          %v5432 = vadd.f32 %v5430, %v5431
          %5433 = vst [vmem:[%s263] sm:$0xff] %v5432
        $region40: #{masked_l1_loss.1} parent=31 // pred_fallthru
          _
        %p5434 = scmp.lt.s32.totalorder %s23, 1
        %s5435 = scalar_select %p5434, %s23, 1
        %s5436 = smul.addr %s5435, 8
        %s5437 = scalar_lea.vmem %s3, %s5436
        %s5438 = sand.u32 %s149, 1
        %s5439 = scalar_lea.sflag [#allocation5], %s5438
        %s5440 = sand.u32 %s149, 1
        %s5441 = smul.addr %s5440, 8
        %s5442 = scalar_lea.vmem [#allocation4], %s5441
        // Predicated region
        $region41: #{masked_l1_loss.1} parent=31 // pred_check
          %p5443 = pneg %p133
        $region42: #{masked_l1_loss.1} parent=31 // pred_check_branch
          %5445 = sbr.rel (%p5443) target = $region44
        $region43: #{masked_l1_loss.1} parent=31 // pred_region
          _
        $region44: #{masked_l1_loss.1} parent=31 // pred_fallthru
          _
        // Predicated region
        $region45: #{masked_l1_loss.1} parent=31 // pred_check
          %p5446 = pneg %p159
        $region46: #{masked_l1_loss.1} parent=31 // pred_check_branch
          %5448 = sbr.rel (%p5446) target = $region48
        $region47: #{masked_l1_loss.1} parent=31 // pred_region
          %s5450 = ssub.s32 128, 128
          %5451 = vsyncadd %s5439, %s5450
          %s5452 = smul.addr %s23, 128
          %s5453 = scalar_lea.hbm %s4, %s5452
          %s5455 = sshll.u32 %s5442, 4
          %s5456 = int_to_ptr.vmem [resolvable:$true] %s5455
          %5458 = dma.vmem_to_hbm [thread:$0]  %s5456, 128, %s5453, %s5439
        $region48: #{masked_l1_loss.1} parent=31 // pred_fallthru
          _
      $region32: #{masked_l1_loss.1} parent=5 // pred_fallthru
        _
      %p5459 = scmp.le.s32.totalorder 2, %s14
      // Predicated region
      $region49: #{masked_l1_loss.1} parent=5 // pred_check
        %p5460 = pneg %p5459
      $region50: #{masked_l1_loss.1} parent=5 // pred_check_branch
        %5462 = sbr.rel (%p5460) target = $region52
      $region51: #{masked_l1_loss.1} parent=5 // pred_region
        %s5463 = ssub.s32 %s14, 2
        // Predicated region
        $region53: #{masked_l1_loss.1} parent=51 // pred_check
          %p5464 = pneg %p139
        $region54: #{masked_l1_loss.1} parent=51 // pred_check_branch
          %5466 = sbr.rel (%p5464) target = $region56
        $region55: #{masked_l1_loss.1} parent=51 // pred_region
          %p5467 = scmp.lt.s32.totalorder %s25, 1
          %s5468 = scalar_select %p5467, %s25, 1
          %s5469 = smul.addr %s5468, 8
          %s5470 = scalar_lea.vmem %s3, %s5469
        $region56: #{masked_l1_loss.1} parent=51 // pred_fallthru
          _
        // Predicated region
        $region57: #{masked_l1_loss.1} parent=51 // pred_check
          %p5471 = pneg %p165
        $region58: #{masked_l1_loss.1} parent=51 // pred_check_branch
          %5473 = sbr.rel (%p5471) target = $region60
        $region59: #{masked_l1_loss.1} parent=51 // pred_region
          %s5474 = sand.u32 %s150, 1
          %s5475 = scalar_lea.sflag [#allocation5], %s5474
          %s5476 = sand.u32 %s150, 1
          %s5477 = smul.addr %s5476, 8
          %s5478 = scalar_lea.vmem [#allocation4], %s5477
          %5479 = dma.done %s5475, 128
        $region60: #{masked_l1_loss.1} parent=51 // pred_fallthru
          _
      $region52: #{masked_l1_loss.1} parent=5 // pred_fallthru
        _
    $region6: #{masked_l1_loss.1} parent=1 // loop_footer
      %s18 = sadd.s32 1, %s14
    $region7: #{masked_l1_loss.1} parent=1 // loop_footer_branch
      %13 = sbr.rel target = $region3
    $region8: #{masked_l1_loss.1} parent=1 // loop_exit
      _
    %5480 = vsyncpa [#allocation5], 1
    %s5481 = scalar_lea.sflag [#allocation5], 1
    %5482 = vsyncpa %s5481, 1

</llo_original>
